<compile_context>
chip_gen: v5e
topology: v5e:2x2
jax: 0.10.0
libtpu: 0.0.40
codegen_flags: <defaults>
</compile_context>

<pallas_src>
import math
import functools

import jax
import jax.numpy as jnp
from jax import lax
from jax.experimental import pallas as pl
from jax.experimental.pallas import tpu as pltpu


# ----------------------------------------------------------------------------
# Helpers
# ----------------------------------------------------------------------------

def _full_spec(shape):
    """BlockSpec covering the whole array (single grid step)."""
    n = len(shape)
    return pl.BlockSpec(tuple(shape), lambda i, _n=n: (0,) * _n)


_COMPILER_PARAMS = pltpu.CompilerParams(dimension_semantics=("arbitrary",))
# TODO(synk): on v7x a 'parallel' grid axis over row tiles could use the 2nd
# TensorCore; at B=2, S<=16 the whole model is one tile, so it is omitted.


def _layernorm(x):
    """LayerNorm over last dim, single-pass stats. Affine (g, b) is folded
    into the following projection weights at prepare time (torch eps=1e-5,
    biased variance)."""
    mean = jnp.mean(x, axis=-1, keepdims=True)
    msq = jnp.mean(x * x, axis=-1, keepdims=True)
    var = msq - mean * mean
    return (x - mean) * lax.rsqrt(var + 1e-5)


# ----------------------------------------------------------------------------
# The single fused kernel
# ----------------------------------------------------------------------------

def _transformer_kernel(*refs, B, S_en, S_de, D, H, Dh, L,
                        enc_mask_mode, cross_mask_mode, dec_mask_mode):
    (enc_emb_ref, dec_emb_ref,
     e_wqkv, e_bqkv, e_wo, e_bo, e_w1, e_b1, e_w2, e_b2,
     d_wqkv, d_bqkv, d_wo, d_bo,
     c_wq, c_bq, c_wkv, c_bkv, c_wo, c_bo,
     d_w1, d_b1, d_w2, d_b2,
     out_w, out_b, *rest) = refs

    # Optional additive mask-bias inputs (only present in "array" mode),
    # followed by the single output ref.
    idx = 0
    enc_bias = cross_bias = dec_bias = None
    if enc_mask_mode == "array":
        enc_bias = rest[idx][...]; idx += 1
    if cross_mask_mode == "array":
        cross_bias = rest[idx][...]; idx += 1
    if dec_mask_mode == "array":
        dec_bias = rest[idx][...]; idx += 1
    out_ref = rest[idx]

    def attention(q, k, v, w_o_l, b_o_l, Sq, Sk, mask_mode, mask_bias):
        """q: (B*Sq, D) f32 (already 1/sqrt(Dh)-scaled), k/v: (B*Sk, D) f32.
        Returns w_o(concat_heads(softmax(qk)v)) + b_o as (B*Sq, D) f32."""
        if mask_mode == "causal":
            rows = lax.broadcasted_iota(jnp.int32, (B, Sq, Sk), 1)
            cols = lax.broadcasted_iota(jnp.int32, (B, Sq, Sk), 2)
            causal = jnp.where(cols > rows, -1000000.0, 0.0)
        heads = []
        for h in range(H):
            sl = slice(h * Dh, (h + 1) * Dh)
            qh = q[:, sl].reshape(B, Sq, Dh).astype(jnp.bfloat16)
            kh = k[:, sl].reshape(B, Sk, Dh).astype(jnp.bfloat16)
            vh = v[:, sl].reshape(B, Sk, Dh).astype(jnp.bfloat16)
            s = jnp.einsum("bqd,bkd->bqk", qh, kh,
                           preferred_element_type=jnp.float32)
            if mask_mode == "causal":
                s = s + causal
            elif mask_mode == "array":
                s = s + mask_bias[:, h]
            # softmax (masked entries carry -1e6, matching masked_fill)
            s = s - jnp.max(s, axis=-1, keepdims=True)
            e = jnp.exp(s)
            p = e * pl.reciprocal(jnp.sum(e, axis=-1, keepdims=True),
                                  approx=True)
            oh = jnp.einsum("bqk,bkd->bqd", p.astype(jnp.bfloat16), vh,
                            preferred_element_type=jnp.float32)
            heads.append(oh.reshape(B * Sq, Dh))
        # Lane-concat all heads -> one full-width (K=D) output projection.
        o = jnp.concatenate(heads, axis=-1).astype(jnp.bfloat16)
        return jnp.dot(o, w_o_l, preferred_element_type=jnp.float32) + b_o_l

    # ------------------------ encoder stack ---------------------------------
    x = enc_emb_ref[...].astype(jnp.float32).reshape(B * S_en, D)
    for l in range(L):
        xn = _layernorm(x).astype(jnp.bfloat16)
        qkv = jnp.dot(xn, e_wqkv[l],
                      preferred_element_type=jnp.float32) + e_bqkv[l]
        x = x + attention(qkv[:, :D], qkv[:, D:2 * D], qkv[:, 2 * D:],
                          e_wo[l], e_bo[l], S_en, S_en,
                          enc_mask_mode, enc_bias)
        xn = _layernorm(x).astype(jnp.bfloat16)
        hdn = jnp.dot(xn, e_w1[l],
                      preferred_element_type=jnp.float32) + e_b1[l]
        hdn = jnp.maximum(hdn, 0.0).astype(jnp.bfloat16)
        x = x + jnp.dot(hdn, e_w2[l],
                        preferred_element_type=jnp.float32) + e_b2[l]
    enc_out_bf = x.astype(jnp.bfloat16)          # K/V source for cross-attn

    # ------------------------ decoder stack ---------------------------------
    y = dec_emb_ref[...].astype(jnp.float32).reshape(B * S_de, D)
    for l in range(L):
        # masked self-attention
        yn = _layernorm(y).astype(jnp.bfloat16)
        qkv = jnp.dot(yn, d_wqkv[l],
                      preferred_element_type=jnp.float32) + d_bqkv[l]
        y = y + attention(qkv[:, :D], qkv[:, D:2 * D], qkv[:, 2 * D:],
                          d_wo[l], d_bo[l], S_de, S_de,
                          dec_mask_mode, dec_bias)
        # cross-attention (K/V from raw encoder outputs, per reference)
        yn = _layernorm(y).astype(jnp.bfloat16)
        q = jnp.dot(yn, c_wq[l],
                    preferred_element_type=jnp.float32) + c_bq[l]
        kv = jnp.dot(enc_out_bf, c_wkv[l],
                     preferred_element_type=jnp.float32) + c_bkv[l]
        y = y + attention(q, kv[:, :D], kv[:, D:],
                          c_wo[l], c_bo[l], S_de, S_en,
                          cross_mask_mode, cross_bias)
        # feed-forward
        yn = _layernorm(y).astype(jnp.bfloat16)
        hdn = jnp.dot(yn, d_w1[l],
                      preferred_element_type=jnp.float32) + d_b1[l]
        hdn = jnp.maximum(hdn, 0.0).astype(jnp.bfloat16)
        y = y + jnp.dot(hdn, d_w2[l],
                        preferred_element_type=jnp.float32) + d_b2[l]

    # ------------------ final (lane-dense, pre-padded) projection -----------
    logits = jnp.dot(y.astype(jnp.bfloat16), out_w[...],
                     preferred_element_type=jnp.float32) + out_b[...]
    out_ref[...] = logits.reshape(B, S_de, logits.shape[-1]).astype(out_ref.dtype)


# ----------------------------------------------------------------------------
# Wrapper: one pallas_call per forward
# ----------------------------------------------------------------------------

def _mask_to_bias(mask, B, H, Sq, Sk):
    """mask: None | 'causal' | 4-D bool/num array (True/1 == masked).
    Returns (mode, additive_bias)."""
    if mask is None:
        return "none", None
    if isinstance(mask, str):
        assert mask == "causal"
        return "causal", None
    assert mask.ndim == 4
    m = jnp.broadcast_to(mask.astype(bool), (B, H, Sq, Sk))
    return "array", jnp.where(m, -1000000.0, 0.0).astype(jnp.float32)


def transformer_forward(fp, enc_X, dec_X, *, num_heads, head_dim, vocab_de,
                        en_tgt_mask=None, de_tgt_mask=None):
    B, S_en = enc_X.shape
    _, S_de = dec_X.shape
    D = fp["emb_en"].shape[1]
    L = fp["enc_w_qkv"].shape[0]
    Vp = fp["out_w"].shape[1]
    H, Dh = num_heads, head_dim

    # TODO(synk): embedding gather stays as plain-JAX jnp.take (tiny tables;
    # no clean rectangular BlockSpec equivalent for a token gather).
    enc_emb = jnp.take(fp["emb_en"], enc_X, axis=0)      # (B, S_en, D)
    dec_emb = jnp.take(fp["emb_de"], dec_X, axis=0)      # (B, S_de, D)

    enc_mode, enc_bias = _mask_to_bias(en_tgt_mask, B, H, S_en, S_en)
    cross_mode, cross_bias = _mask_to_bias(en_tgt_mask, B, H, S_de, S_en)
    dec_mode, dec_bias = _mask_to_bias(de_tgt_mask, B, H, S_de, S_de)

    inputs = [
        enc_emb, dec_emb,
        fp["enc_w_qkv"], fp["enc_b_qkv"], fp["enc_w_o"], fp["enc_b_o"],
        fp["enc_w1"], fp["enc_b1"], fp["enc_w2"], fp["enc_b2"],
        fp["dec_sa_w_qkv"], fp["dec_sa_b_qkv"], fp["dec_sa_w_o"], fp["dec_sa_b_o"],
        fp["dec_ca_w_q"], fp["dec_ca_b_q"], fp["dec_ca_w_kv"], fp["dec_ca_b_kv"],
        fp["dec_ca_w_o"], fp["dec_ca_b_o"],
        fp["dec_w1"], fp["dec_b1"], fp["dec_w2"], fp["dec_b2"],
        fp["out_w"], fp["out_b"],
    ]
    for bias in (enc_bias, cross_bias, dec_bias):
        if bias is not None:
            inputs.append(bias)

    kernel = functools.partial(
        _transformer_kernel, B=B, S_en=S_en, S_de=S_de, D=D, H=H, Dh=Dh, L=L,
        enc_mask_mode=enc_mode, cross_mask_mode=cross_mode,
        dec_mask_mode=dec_mode)

    logits_padded = pl.pallas_call(
        kernel,
        grid=(1,),
        out_shape=jax.ShapeDtypeStruct((B, S_de, Vp), jnp.float32),
        in_specs=[_full_spec(a.shape) for a in inputs],
        out_specs=_full_spec((B, S_de, Vp)),
        compiler_params=_COMPILER_PARAMS,
    )(*inputs)
    return logits_padded[:, :, :vocab_de]


# ----------------------------------------------------------------------------
# Module-faithful parameter init + one-time fusion/folding/casting
# ----------------------------------------------------------------------------

def _init_linear(key, d_in, d_out):
    kw, kb = jax.random.split(key)
    w = jax.random.normal(kw, (d_in, d_out), jnp.float32) * 0.02
    b = jax.random.normal(kb, (d_out,), jnp.float32) * 0.02
    return w, b


def _init_mha(key, dim):
    ks = jax.random.split(key, 4)
    wq, bq = _init_linear(ks[0], dim, dim)
    wk, bk = _init_linear(ks[1], dim, dim)
    wv, bv = _init_linear(ks[2], dim, dim)
    wo, bo = _init_linear(ks[3], dim, dim)
    return dict(w_q=wq, b_q=bq, w_k=wk, b_k=bk, w_v=wv, b_v=bv, w_o=wo, b_o=bo)


def _init_encoder_cell(key, dim):
    ks = jax.random.split(key, 3)
    w1, b1 = _init_linear(ks[1], dim, 4 * dim)
    w2, b2 = _init_linear(ks[2], 4 * dim, dim)
    ones, zeros = jnp.ones((dim,), jnp.float32), jnp.zeros((dim,), jnp.float32)
    return dict(ln1_g=ones, ln1_b=zeros, ln2_g=ones, ln2_b=zeros,
                attn=_init_mha(ks[0], dim),
                ffn_w1=w1, ffn_b1=b1, ffn_w2=w2, ffn_b2=b2)


def _init_decoder_cell(key, dim):
    ks = jax.random.split(key, 4)
    w1, b1 = _init_linear(ks[2], dim, 4 * dim)
    w2, b2 = _init_linear(ks[3], 4 * dim, dim)
    ones, zeros = jnp.ones((dim,), jnp.float32), jnp.zeros((dim,), jnp.float32)
    return dict(ln1_g=ones, ln1_b=zeros, ln2_g=ones, ln2_b=zeros,
                ln3_g=ones, ln3_b=zeros,
                self_attn=_init_mha(ks[0], dim),
                cross_attn=_init_mha(ks[1], dim),
                ffn_w1=w1, ffn_b1=b1, ffn_w2=w2, ffn_b2=b2)


def init_transformer(key, input_dim, num_heads, qkv_dim, num_layers,
                     vocab_size_en, vocab_size_de):
    assert input_dim == num_heads * qkv_dim
    keys = jax.random.split(key, 2 * num_layers + 3)
    params = dict(
        emb_en=jax.random.normal(keys[0], (vocab_size_en, input_dim),
                                 jnp.float32) * 0.02,
        emb_de=jax.random.normal(keys[1], (vocab_size_de, input_dim),
                                 jnp.float32) * 0.02,
        encoders=[_init_encoder_cell(keys[2 + i], input_dim)
                  for i in range(num_layers)],
        decoders=[_init_decoder_cell(keys[2 + num_layers + i], input_dim)
                  for i in range(num_layers)],
    )
    out_w, out_b = _init_linear(keys[-1], input_dim, vocab_size_de)
    params["out_w"], params["out_b"] = out_w, out_b
    return params


def prepare_fused_params(params, num_heads, head_dim):
    """Fold LN affine + score scale into weights, fuse QKV/KV, stack layers on
    a leading L axis, cast weights to bf16, pre-pad the vocab projection."""
    scale = 1.0 / math.sqrt(head_dim)

    def fold(g, b_ln, w, b):
        # ln(x) @ w + b == norm(x) @ (g[:,None]*w) + (b_ln @ w + b)
        return g[:, None] * w, b_ln @ w + b

    def enc_layer(p):
        a = p["attn"]
        wq, bq = fold(p["ln1_g"], p["ln1_b"], a["w_q"], a["b_q"])
        wk, bk = fold(p["ln1_g"], p["ln1_b"], a["w_k"], a["b_k"])
        wv, bv = fold(p["ln1_g"], p["ln1_b"], a["w_v"], a["b_v"])
        wq, bq = wq * scale, bq * scale                 # fold 1/sqrt(Dh) into Q
        w1, b1 = fold(p["ln2_g"], p["ln2_b"], p["ffn_w1"], p["ffn_b1"])
        return dict(w_qkv=jnp.concatenate([wq, wk, wv], axis=1),
                    b_qkv=jnp.concatenate([bq, bk, bv]),
                    w_o=a["w_o"], b_o=a["b_o"],
                    w1=w1, b1=b1, w2=p["ffn_w2"], b2=p["ffn_b2"])

    def dec_layer(p):
        sa, ca = p["self_attn"], p["cross_attn"]
        wq, bq = fold(p["ln1_g"], p["ln1_b"], sa["w_q"], sa["b_q"])
        wk, bk = fold(p["ln1_g"], p["ln1_b"], sa["w_k"], sa["b_k"])
        wv, bv = fold(p["ln1_g"], p["ln1_b"], sa["w_v"], sa["b_v"])
        wq, bq = wq * scale, bq * scale
        cwq, cbq = fold(p["ln2_g"], p["ln2_b"], ca["w_q"], ca["b_q"])
        cwq, cbq = cwq * scale, cbq * scale
        w1, b1 = fold(p["ln3_g"], p["ln3_b"], p["ffn_w1"], p["ffn_b1"])
        return dict(sa_w_qkv=jnp.concatenate([wq, wk, wv], axis=1),
                    sa_b_qkv=jnp.concatenate([bq, bk, bv]),
                    sa_w_o=sa["w_o"], sa_b_o=sa["b_o"],
                    ca_w_q=cwq, ca_b_q=cbq,
                    ca_w_kv=jnp.concatenate([ca["w_k"], ca["w_v"]], axis=1),
                    ca_b_kv=jnp.concatenate([ca["b_k"], ca["b_v"]]),
                    ca_w_o=ca["w_o"], ca_b_o=ca["b_o"],
                    w1=w1, b1=b1, w2=p["ffn_w2"], b2=p["ffn_b2"])

    enc = [enc_layer(p) for p in params["encoders"]]
    dec = [dec_layer(p) for p in params["decoders"]]

    def stack_w(layers, k):
        return jnp.stack([l[k] for l in layers]).astype(jnp.bfloat16)

    def stack_b(layers, k):
        return jnp.stack([l[k][None, :] for l in layers]).astype(jnp.float32)

    vocab = params["out_w"].shape[1]
    vp = ((vocab + 127) // 128) * 128
    out_w = jnp.pad(params["out_w"], ((0, 0), (0, vp - vocab))).astype(jnp.bfloat16)
    out_b = jnp.pad(params["out_b"], (0, vp - vocab)).reshape(1, vp).astype(jnp.float32)

    return dict(
        emb_en=params["emb_en"], emb_de=params["emb_de"],
        enc_w_qkv=stack_w(enc, "w_qkv"), enc_b_qkv=stack_b(enc, "b_qkv"),
        enc_w_o=stack_w(enc, "w_o"), enc_b_o=stack_b(enc, "b_o"),
        enc_w1=stack_w(enc, "w1"), enc_b1=stack_b(enc, "b1"),
        enc_w2=stack_w(enc, "w2"), enc_b2=stack_b(enc, "b2"),
        dec_sa_w_qkv=stack_w(dec, "sa_w_qkv"), dec_sa_b_qkv=stack_b(dec, "sa_b_qkv"),
        dec_sa_w_o=stack_w(dec, "sa_w_o"), dec_sa_b_o=stack_b(dec, "sa_b_o"),
        dec_ca_w_q=stack_w(dec, "ca_w_q"), dec_ca_b_q=stack_b(dec, "ca_b_q"),
        dec_ca_w_kv=stack_w(dec, "ca_w_kv"), dec_ca_b_kv=stack_b(dec, "ca_b_kv"),
        dec_ca_w_o=stack_w(dec, "ca_w_o"), dec_ca_b_o=stack_b(dec, "ca_b_o"),
        dec_w1=stack_w(dec, "w1"), dec_b1=stack_b(dec, "b1"),
        dec_w2=stack_w(dec, "w2"), dec_b2=stack_b(dec, "b2"),
        out_w=out_w, out_b=out_b,
    )


# ----------------------------------------------------------------------------
# Main
# ----------------------------------------------------------------------------

if __name__ == "__main__":
    INPUT_DIM = 32
    NUM_HEADS = 4
    QKV_DIM = 8
    NUM_LAYERS = 2
    VOCAB_EN = 50
    VOCAB_DE = 60
    BATCH = 2
    S_EN = 16
    S_DE = 8

    key = jax.random.PRNGKey(0)
    kp, ke, kd = jax.random.split(key, 3)

    raw_params = init_transformer(kp, INPUT_DIM, NUM_HEADS, QKV_DIM,
                                  NUM_LAYERS, VOCAB_EN, VOCAB_DE)
    fused_params = prepare_fused_params(raw_params, NUM_HEADS, QKV_DIM)

    enc_X = jax.random.randint(ke, (BATCH, S_EN), 0, VOCAB_EN, dtype=jnp.int32)
    dec_X = jax.random.randint(kd, (BATCH, S_DE), 0, VOCAB_DE, dtype=jnp.int32)

    # Decoder self-attention: causal mask (== torch triu(k=1) masked_fill -1e6),
    # generated in-kernel via iota.  Encoder / cross masks are None.
    fwd = jax.jit(functools.partial(
        transformer_forward,
        num_heads=NUM_HEADS, head_dim=QKV_DIM, vocab_de=VOCAB_DE,
        en_tgt_mask=None, de_tgt_mask="causal"))

    out = jax.block_until_ready(fwd(fused_params, enc_X, dec_X))

    assert out.shape == (BATCH, S_DE, VOCAB_DE)
    assert bool(jnp.all(jnp.isfinite(out)))
    print("KERNEL_OK")
</pallas_src>

<mosaic_0001>
module attributes {stable_mosaic.version = 11 : i64} {
  func.func @_transformer_kernel(%arg0: i32, %arg1: memref<2x16x32xf32, #tpu.memory_space<vmem>>, %arg2: memref<2x8x32xf32, #tpu.memory_space<vmem>>, %arg3: memref<2x32x96xbf16, #tpu.memory_space<vmem>>, %arg4: memref<2x1x96xf32, #tpu.memory_space<vmem>>, %arg5: memref<2x32x32xbf16, #tpu.memory_space<vmem>>, %arg6: memref<2x1x32xf32, #tpu.memory_space<vmem>>, %arg7: memref<2x32x128xbf16, #tpu.memory_space<vmem>>, %arg8: memref<2x1x128xf32, #tpu.memory_space<vmem>>, %arg9: memref<2x128x32xbf16, #tpu.memory_space<vmem>>, %arg10: memref<2x1x32xf32, #tpu.memory_space<vmem>>, %arg11: memref<2x32x96xbf16, #tpu.memory_space<vmem>>, %arg12: memref<2x1x96xf32, #tpu.memory_space<vmem>>, %arg13: memref<2x32x32xbf16, #tpu.memory_space<vmem>>, %arg14: memref<2x1x32xf32, #tpu.memory_space<vmem>>, %arg15: memref<2x32x32xbf16, #tpu.memory_space<vmem>>, %arg16: memref<2x1x32xf32, #tpu.memory_space<vmem>>, %arg17: memref<2x32x64xbf16, #tpu.memory_space<vmem>>, %arg18: memref<2x1x64xf32, #tpu.memory_space<vmem>>, %arg19: memref<2x32x32xbf16, #tpu.memory_space<vmem>>, %arg20: memref<2x1x32xf32, #tpu.memory_space<vmem>>, %arg21: memref<2x32x128xbf16, #tpu.memory_space<vmem>>, %arg22: memref<2x1x128xf32, #tpu.memory_space<vmem>>, %arg23: memref<2x128x32xbf16, #tpu.memory_space<vmem>>, %arg24: memref<2x1x32xf32, #tpu.memory_space<vmem>>, %arg25: memref<32x128xbf16, #tpu.memory_space<vmem>>, %arg26: memref<1x128xf32, #tpu.memory_space<vmem>>, %arg27: memref<2x8x128xf32, #tpu.memory_space<vmem>>) attributes {dimension_semantics = [#tpu.dimension_semantics<arbitrary>], iteration_bounds = array<i64: 1>, scalar_prefetch = 0 : i64, scratch_operands = 0 : i64, tpu.core_type = #tpu.core_type<tc>, window_params = [{pipeline_mode = #tpu.pipeline_mode<synchronous>, transform_indices = @transform_0, window_bounds = array<i64: 2, 16, 32>}, {pipeline_mode = #tpu.pipeline_mode<synchronous>, transform_indices = @transform_1, window_bounds = array<i64: 2, 8, 32>}, {pipeline_mode = #tpu.pipeline_mode<synchronous>, transform_indices = @transform_2, window_bounds = array<i64: 2, 32, 96>}, {pipeline_mode = #tpu.pipeline_mode<synchronous>, transform_indices = @transform_3, window_bounds = array<i64: 2, 1, 96>}, {pipeline_mode = #tpu.pipeline_mode<synchronous>, transform_indices = @transform_4, window_bounds = array<i64: 2, 32, 32>}, {pipeline_mode = #tpu.pipeline_mode<synchronous>, transform_indices = @transform_5, window_bounds = array<i64: 2, 1, 32>}, {pipeline_mode = #tpu.pipeline_mode<synchronous>, transform_indices = @transform_6, window_bounds = array<i64: 2, 32, 128>}, {pipeline_mode = #tpu.pipeline_mode<synchronous>, transform_indices = @transform_7, window_bounds = array<i64: 2, 1, 128>}, {pipeline_mode = #tpu.pipeline_mode<synchronous>, transform_indices = @transform_8, window_bounds = array<i64: 2, 128, 32>}, {pipeline_mode = #tpu.pipeline_mode<synchronous>, transform_indices = @transform_9, window_bounds = array<i64: 2, 1, 32>}, {pipeline_mode = #tpu.pipeline_mode<synchronous>, transform_indices = @transform_10, window_bounds = array<i64: 2, 32, 96>}, {pipeline_mode = #tpu.pipeline_mode<synchronous>, transform_indices = @transform_11, window_bounds = array<i64: 2, 1, 96>}, {pipeline_mode = #tpu.pipeline_mode<synchronous>, transform_indices = @transform_12, window_bounds = array<i64: 2, 32, 32>}, {pipeline_mode = #tpu.pipeline_mode<synchronous>, transform_indices = @transform_13, window_bounds = array<i64: 2, 1, 32>}, {pipeline_mode = #tpu.pipeline_mode<synchronous>, transform_indices = @transform_14, window_bounds = array<i64: 2, 32, 32>}, {pipeline_mode = #tpu.pipeline_mode<synchronous>, transform_indices = @transform_15, window_bounds = array<i64: 2, 1, 32>}, {pipeline_mode = #tpu.pipeline_mode<synchronous>, transform_indices = @transform_16, window_bounds = array<i64: 2, 32, 64>}, {pipeline_mode = #tpu.pipeline_mode<synchronous>, transform_indices = @transform_17, window_bounds = array<i64: 2, 1, 64>}, {pipeline_mode = #tpu.pipeline_mode<synchronous>, transform_indices = @transform_18, window_bounds = array<i64: 2, 32, 32>}, {pipeline_mode = #tpu.pipeline_mode<synchronous>, transform_indices = @transform_19, window_bounds = array<i64: 2, 1, 32>}, {pipeline_mode = #tpu.pipeline_mode<synchronous>, transform_indices = @transform_20, window_bounds = array<i64: 2, 32, 128>}, {pipeline_mode = #tpu.pipeline_mode<synchronous>, transform_indices = @transform_21, window_bounds = array<i64: 2, 1, 128>}, {pipeline_mode = #tpu.pipeline_mode<synchronous>, transform_indices = @transform_22, window_bounds = array<i64: 2, 128, 32>}, {pipeline_mode = #tpu.pipeline_mode<synchronous>, transform_indices = @transform_23, window_bounds = array<i64: 2, 1, 32>}, {pipeline_mode = #tpu.pipeline_mode<synchronous>, transform_indices = @transform_24, window_bounds = array<i64: 32, 128>}, {pipeline_mode = #tpu.pipeline_mode<synchronous>, transform_indices = @transform_25, window_bounds = array<i64: 1, 128>}, {pipeline_mode = #tpu.pipeline_mode<synchronous>, transform_indices = @transform_26, window_bounds = array<i64: 2, 8, 128>}]} {
    %c0 = arith.constant 0 : index
    %c0_0 = arith.constant 0 : index
    %c0_1 = arith.constant 0 : index
    %0 = vector.load %arg1[%c0, %c0_0, %c0_1] : memref<2x16x32xf32, #tpu.memory_space<vmem>>, vector<2x16x32xf32>
    %1 = vector.shape_cast %0 : vector<2x16x32xf32> to vector<32x32xf32>
    %cst = arith.constant dense<0.000000e+00> : vector<32xf32>
    %2 = vector.multi_reduction <add>, %1, %cst [1] : vector<32x32xf32> to vector<32xf32>
    %3 = vector.shape_cast %2 : vector<32xf32> to vector<32x1xf32>
    %cst_2 = arith.constant 3.200000e+01 : f32
    %4 = vector.broadcast %cst_2 : f32 to vector<32x1xf32>
    %5 = arith.divf %3, %4 : vector<32x1xf32>
    %6 = arith.mulf %1, %1 : vector<32x32xf32>
    %cst_3 = arith.constant dense<0.000000e+00> : vector<32xf32>
    %7 = vector.multi_reduction <add>, %6, %cst_3 [1] : vector<32x32xf32> to vector<32xf32>
    %8 = vector.shape_cast %7 : vector<32xf32> to vector<32x1xf32>
    %cst_4 = arith.constant 3.200000e+01 : f32
    %9 = vector.broadcast %cst_4 : f32 to vector<32x1xf32>
    %10 = arith.divf %8, %9 : vector<32x1xf32>
    %11 = arith.mulf %5, %5 : vector<32x1xf32>
    %12 = arith.subf %10, %11 : vector<32x1xf32>
    %13 = vector.broadcast %5 : vector<32x1xf32> to vector<32x32xf32>
    %14 = arith.subf %1, %13 : vector<32x32xf32>
    %cst_5 = arith.constant 9.99999974E-6 : f32
    %15 = vector.broadcast %cst_5 : f32 to vector<32x1xf32>
    %16 = arith.addf %12, %15 : vector<32x1xf32>
    %17 = math.rsqrt %16 : vector<32x1xf32>
    %18 = vector.broadcast %17 : vector<32x1xf32> to vector<32x32xf32>
    %19 = arith.mulf %14, %18 : vector<32x32xf32>
    %20 = arith.truncf %19 : vector<32x32xf32> to vector<32x32xbf16>
    %c0_6 = arith.constant 0 : index
    %c0_7 = arith.constant 0 : index
    %c0_8 = arith.constant 0 : index
    %21 = vector.load %arg3[%c0_6, %c0_7, %c0_8] : memref<2x32x96xbf16, #tpu.memory_space<vmem>>, vector<1x32x96xbf16>
    %22 = vector.shape_cast %21 : vector<1x32x96xbf16> to vector<32x96xbf16>
    %cst_9 = arith.constant dense<0.000000e+00> : vector<32x96xf32>
    %23 = tpu.matmul %20, %22, %cst_9 {dimension_numbers = #tpu.dot_dimension_numbers<[1], [0], [0], [1], [0, 0, 1, 1], [], []>} : vector<32x32xbf16>, vector<32x96xbf16>, vector<32x96xf32> -> vector<32x96xf32>
    %c0_10 = arith.constant 0 : index
    %c0_11 = arith.constant 0 : index
    %c0_12 = arith.constant 0 : index
    %24 = vector.load %arg4[%c0_10, %c0_11, %c0_12] : memref<2x1x96xf32, #tpu.memory_space<vmem>>, vector<1x1x96xf32>
    %25 = vector.shape_cast %24 : vector<1x1x96xf32> to vector<1x96xf32>
    %26 = vector.broadcast %25 : vector<1x96xf32> to vector<32x96xf32>
    %27 = arith.addf %23, %26 : vector<32x96xf32>
    %28 = vector.extract_strided_slice %27 {offsets = [0, 0], sizes = [32, 32], strides = [1, 1]} : vector<32x96xf32> to vector<32x32xf32>
    %29 = vector.extract_strided_slice %27 {offsets = [0, 32], sizes = [32, 32], strides = [1, 1]} : vector<32x96xf32> to vector<32x32xf32>
    %30 = vector.extract_strided_slice %27 {offsets = [0, 64], sizes = [32, 32], strides = [1, 1]} : vector<32x96xf32> to vector<32x32xf32>
    %c0_13 = arith.constant 0 : index
    %c0_14 = arith.constant 0 : index
    %c0_15 = arith.constant 0 : index
    %31 = vector.load %arg5[%c0_13, %c0_14, %c0_15] : memref<2x32x32xbf16, #tpu.memory_space<vmem>>, vector<1x32x32xbf16>
    %32 = vector.shape_cast %31 : vector<1x32x32xbf16> to vector<32x32xbf16>
    %c0_16 = arith.constant 0 : index
    %c0_17 = arith.constant 0 : index
    %c0_18 = arith.constant 0 : index
    %33 = vector.load %arg6[%c0_16, %c0_17, %c0_18] : memref<2x1x32xf32, #tpu.memory_space<vmem>>, vector<1x1x32xf32>
    %34 = vector.shape_cast %33 : vector<1x1x32xf32> to vector<1x32xf32>
    %35 = vector.extract_strided_slice %28 {offsets = [0, 0], sizes = [32, 8], strides = [1, 1]} : vector<32x32xf32> to vector<32x8xf32>
    %36 = vector.shape_cast %35 : vector<32x8xf32> to vector<2x16x8xf32>
    %37 = arith.truncf %36 : vector<2x16x8xf32> to vector<2x16x8xbf16>
    %38 = vector.extract_strided_slice %29 {offsets = [0, 0], sizes = [32, 8], strides = [1, 1]} : vector<32x32xf32> to vector<32x8xf32>
    %39 = vector.shape_cast %38 : vector<32x8xf32> to vector<2x16x8xf32>
    %40 = arith.truncf %39 : vector<2x16x8xf32> to vector<2x16x8xbf16>
    %41 = vector.extract_strided_slice %30 {offsets = [0, 0], sizes = [32, 8], strides = [1, 1]} : vector<32x32xf32> to vector<32x8xf32>
    %42 = vector.shape_cast %41 : vector<32x8xf32> to vector<2x16x8xf32>
    %43 = arith.truncf %42 : vector<2x16x8xf32> to vector<2x16x8xbf16>
    "tpu.trace_start"() <{level = 10 : i32, message = "bqd,bkd->bqk"}> : () -> ()
    %cst_19 = arith.constant dense<0.000000e+00> : vector<2x16x16xf32>
    %44 = tpu.matmul %37, %40, %cst_19 {dimension_numbers = #tpu.dot_dimension_numbers<[2], [2], [1], [1], [0, 0, 0, 1, 1, 1], [0], [0]>} : vector<2x16x8xbf16>, vector<2x16x8xbf16>, vector<2x16x16xf32> -> vector<2x16x16xf32>
    "tpu.trace_stop"() : () -> ()
    %cst_20 = arith.constant dense<0xFF800000> : vector<2x16xf32>
    %45 = vector.multi_reduction <maximumf>, %44, %cst_20 [2] : vector<2x16x16xf32> to vector<2x16xf32>
    %46 = vector.shape_cast %45 : vector<2x16xf32> to vector<2x16x1xf32>
    %47 = vector.broadcast %46 : vector<2x16x1xf32> to vector<2x16x16xf32>
    %48 = arith.subf %44, %47 : vector<2x16x16xf32>
    %49 = math.exp %48 : vector<2x16x16xf32>
    %cst_21 = arith.constant dense<0.000000e+00> : vector<2x16xf32>
    %50 = vector.multi_reduction <add>, %49, %cst_21 [2] : vector<2x16x16xf32> to vector<2x16xf32>
    %51 = vector.shape_cast %50 : vector<2x16xf32> to vector<2x16x1xf32>
    %52 = tpu.reciprocal %51 {approx = true} : vector<2x16x1xf32> -> vector<2x16x1xf32>
    %53 = vector.broadcast %52 : vector<2x16x1xf32> to vector<2x16x16xf32>
    %54 = arith.mulf %49, %53 : vector<2x16x16xf32>
    %55 = arith.truncf %54 : vector<2x16x16xf32> to vector<2x16x16xbf16>
    "tpu.trace_start"() <{level = 10 : i32, message = "bqk,bkd->bqd"}> : () -> ()
    %cst_22 = arith.constant dense<0.000000e+00> : vector<2x16x8xf32>
    %56 = tpu.matmul %55, %43, %cst_22 {dimension_numbers = #tpu.dot_dimension_numbers<[2], [1], [1], [2], [0, 0, 0, 1, 1, 2], [0], [0]>} : vector<2x16x16xbf16>, vector<2x16x8xbf16>, vector<2x16x8xf32> -> vector<2x16x8xf32>
    "tpu.trace_stop"() : () -> ()
    %57 = vector.shape_cast %56 : vector<2x16x8xf32> to vector<32x8xf32>
    %58 = vector.extract_strided_slice %28 {offsets = [0, 8], sizes = [32, 8], strides = [1, 1]} : vector<32x32xf32> to vector<32x8xf32>
    %59 = vector.shape_cast %58 : vector<32x8xf32> to vector<2x16x8xf32>
    %60 = arith.truncf %59 : vector<2x16x8xf32> to vector<2x16x8xbf16>
    %61 = vector.extract_strided_slice %29 {offsets = [0, 8], sizes = [32, 8], strides = [1, 1]} : vector<32x32xf32> to vector<32x8xf32>
    %62 = vector.shape_cast %61 : vector<32x8xf32> to vector<2x16x8xf32>
    %63 = arith.truncf %62 : vector<2x16x8xf32> to vector<2x16x8xbf16>
    %64 = vector.extract_strided_slice %30 {offsets = [0, 8], sizes = [32, 8], strides = [1, 1]} : vector<32x32xf32> to vector<32x8xf32>
    %65 = vector.shape_cast %64 : vector<32x8xf32> to vector<2x16x8xf32>
    %66 = arith.truncf %65 : vector<2x16x8xf32> to vector<2x16x8xbf16>
    "tpu.trace_start"() <{level = 10 : i32, message = "bqd,bkd->bqk"}> : () -> ()
    %cst_23 = arith.constant dense<0.000000e+00> : vector<2x16x16xf32>
    %67 = tpu.matmul %60, %63, %cst_23 {dimension_numbers = #tpu.dot_dimension_numbers<[2], [2], [1], [1], [0, 0, 0, 1, 1, 1], [0], [0]>} : vector<2x16x8xbf16>, vector<2x16x8xbf16>, vector<2x16x16xf32> -> vector<2x16x16xf32>
    "tpu.trace_stop"() : () -> ()
    %cst_24 = arith.constant dense<0xFF800000> : vector<2x16xf32>
    %68 = vector.multi_reduction <maximumf>, %67, %cst_24 [2] : vector<2x16x16xf32> to vector<2x16xf32>
    %69 = vector.shape_cast %68 : vector<2x16xf32> to vector<2x16x1xf32>
    %70 = vector.broadcast %69 : vector<2x16x1xf32> to vector<2x16x16xf32>
    %71 = arith.subf %67, %70 : vector<2x16x16xf32>
    %72 = math.exp %71 : vector<2x16x16xf32>
    %cst_25 = arith.constant dense<0.000000e+00> : vector<2x16xf32>
    %73 = vector.multi_reduction <add>, %72, %cst_25 [2] : vector<2x16x16xf32> to vector<2x16xf32>
    %74 = vector.shape_cast %73 : vector<2x16xf32> to vector<2x16x1xf32>
    %75 = tpu.reciprocal %74 {approx = true} : vector<2x16x1xf32> -> vector<2x16x1xf32>
    %76 = vector.broadcast %75 : vector<2x16x1xf32> to vector<2x16x16xf32>
    %77 = arith.mulf %72, %76 : vector<2x16x16xf32>
    %78 = arith.truncf %77 : vector<2x16x16xf32> to vector<2x16x16xbf16>
    "tpu.trace_start"() <{level = 10 : i32, message = "bqk,bkd->bqd"}> : () -> ()
    %cst_26 = arith.constant dense<0.000000e+00> : vector<2x16x8xf32>
    %79 = tpu.matmul %78, %66, %cst_26 {dimension_numbers = #tpu.dot_dimension_numbers<[2], [1], [1], [2], [0, 0, 0, 1, 1, 2], [0], [0]>} : vector<2x16x16xbf16>, vector<2x16x8xbf16>, vector<2x16x8xf32> -> vector<2x16x8xf32>
    "tpu.trace_stop"() : () -> ()
    %80 = vector.shape_cast %79 : vector<2x16x8xf32> to vector<32x8xf32>
    %81 = vector.extract_strided_slice %28 {offsets = [0, 16], sizes = [32, 8], strides = [1, 1]} : vector<32x32xf32> to vector<32x8xf32>
    %82 = vector.shape_cast %81 : vector<32x8xf32> to vector<2x16x8xf32>
    %83 = arith.truncf %82 : vector<2x16x8xf32> to vector<2x16x8xbf16>
    %84 = vector.extract_strided_slice %29 {offsets = [0, 16], sizes = [32, 8], strides = [1, 1]} : vector<32x32xf32> to vector<32x8xf32>
    %85 = vector.shape_cast %84 : vector<32x8xf32> to vector<2x16x8xf32>
    %86 = arith.truncf %85 : vector<2x16x8xf32> to vector<2x16x8xbf16>
    %87 = vector.extract_strided_slice %30 {offsets = [0, 16], sizes = [32, 8], strides = [1, 1]} : vector<32x32xf32> to vector<32x8xf32>
    %88 = vector.shape_cast %87 : vector<32x8xf32> to vector<2x16x8xf32>
    %89 = arith.truncf %88 : vector<2x16x8xf32> to vector<2x16x8xbf16>
    "tpu.trace_start"() <{level = 10 : i32, message = "bqd,bkd->bqk"}> : () -> ()
    %cst_27 = arith.constant dense<0.000000e+00> : vector<2x16x16xf32>
    %90 = tpu.matmul %83, %86, %cst_27 {dimension_numbers = #tpu.dot_dimension_numbers<[2], [2], [1], [1], [0, 0, 0, 1, 1, 1], [0], [0]>} : vector<2x16x8xbf16>, vector<2x16x8xbf16>, vector<2x16x16xf32> -> vector<2x16x16xf32>
    "tpu.trace_stop"() : () -> ()
    %cst_28 = arith.constant dense<0xFF800000> : vector<2x16xf32>
    %91 = vector.multi_reduction <maximumf>, %90, %cst_28 [2] : vector<2x16x16xf32> to vector<2x16xf32>
    %92 = vector.shape_cast %91 : vector<2x16xf32> to vector<2x16x1xf32>
    %93 = vector.broadcast %92 : vector<2x16x1xf32> to vector<2x16x16xf32>
    %94 = arith.subf %90, %93 : vector<2x16x16xf32>
    %95 = math.exp %94 : vector<2x16x16xf32>
    %cst_29 = arith.constant dense<0.000000e+00> : vector<2x16xf32>
    %96 = vector.multi_reduction <add>, %95, %cst_29 [2] : vector<2x16x16xf32> to vector<2x16xf32>
    %97 = vector.shape_cast %96 : vector<2x16xf32> to vector<2x16x1xf32>
    %98 = tpu.reciprocal %97 {approx = true} : vector<2x16x1xf32> -> vector<2x16x1xf32>
    %99 = vector.broadcast %98 : vector<2x16x1xf32> to vector<2x16x16xf32>
    %100 = arith.mulf %95, %99 : vector<2x16x16xf32>
    %101 = arith.truncf %100 : vector<2x16x16xf32> to vector<2x16x16xbf16>
    "tpu.trace_start"() <{level = 10 : i32, message = "bqk,bkd->bqd"}> : () -> ()
    %cst_30 = arith.constant dense<0.000000e+00> : vector<2x16x8xf32>
    %102 = tpu.matmul %101, %89, %cst_30 {dimension_numbers = #tpu.dot_dimension_numbers<[2], [1], [1], [2], [0, 0, 0, 1, 1, 2], [0], [0]>} : vector<2x16x16xbf16>, vector<2x16x8xbf16>, vector<2x16x8xf32> -> vector<2x16x8xf32>
    "tpu.trace_stop"() : () -> ()
    %103 = vector.shape_cast %102 : vector<2x16x8xf32> to vector<32x8xf32>
    %104 = vector.extract_strided_slice %28 {offsets = [0, 24], sizes = [32, 8], strides = [1, 1]} : vector<32x32xf32> to vector<32x8xf32>
    %105 = vector.shape_cast %104 : vector<32x8xf32> to vector<2x16x8xf32>
    %106 = arith.truncf %105 : vector<2x16x8xf32> to vector<2x16x8xbf16>
    %107 = vector.extract_strided_slice %29 {offsets = [0, 24], sizes = [32, 8], strides = [1, 1]} : vector<32x32xf32> to vector<32x8xf32>
    %108 = vector.shape_cast %107 : vector<32x8xf32> to vector<2x16x8xf32>
    %109 = arith.truncf %108 : vector<2x16x8xf32> to vector<2x16x8xbf16>
    %110 = vector.extract_strided_slice %30 {offsets = [0, 24], sizes = [32, 8], strides = [1, 1]} : vector<32x32xf32> to vector<32x8xf32>
    %111 = vector.shape_cast %110 : vector<32x8xf32> to vector<2x16x8xf32>
    %112 = arith.truncf %111 : vector<2x16x8xf32> to vector<2x16x8xbf16>
    "tpu.trace_start"() <{level = 10 : i32, message = "bqd,bkd->bqk"}> : () -> ()
    %cst_31 = arith.constant dense<0.000000e+00> : vector<2x16x16xf32>
    %113 = tpu.matmul %106, %109, %cst_31 {dimension_numbers = #tpu.dot_dimension_numbers<[2], [2], [1], [1], [0, 0, 0, 1, 1, 1], [0], [0]>} : vector<2x16x8xbf16>, vector<2x16x8xbf16>, vector<2x16x16xf32> -> vector<2x16x16xf32>
    "tpu.trace_stop"() : () -> ()
    %cst_32 = arith.constant dense<0xFF800000> : vector<2x16xf32>
    %114 = vector.multi_reduction <maximumf>, %113, %cst_32 [2] : vector<2x16x16xf32> to vector<2x16xf32>
    %115 = vector.shape_cast %114 : vector<2x16xf32> to vector<2x16x1xf32>
    %116 = vector.broadcast %115 : vector<2x16x1xf32> to vector<2x16x16xf32>
    %117 = arith.subf %113, %116 : vector<2x16x16xf32>
    %118 = math.exp %117 : vector<2x16x16xf32>
    %cst_33 = arith.constant dense<0.000000e+00> : vector<2x16xf32>
    %119 = vector.multi_reduction <add>, %118, %cst_33 [2] : vector<2x16x16xf32> to vector<2x16xf32>
    %120 = vector.shape_cast %119 : vector<2x16xf32> to vector<2x16x1xf32>
    %121 = tpu.reciprocal %120 {approx = true} : vector<2x16x1xf32> -> vector<2x16x1xf32>
    %122 = vector.broadcast %121 : vector<2x16x1xf32> to vector<2x16x16xf32>
    %123 = arith.mulf %118, %122 : vector<2x16x16xf32>
    %124 = arith.truncf %123 : vector<2x16x16xf32> to vector<2x16x16xbf16>
    "tpu.trace_start"() <{level = 10 : i32, message = "bqk,bkd->bqd"}> : () -> ()
    %cst_34 = arith.constant dense<0.000000e+00> : vector<2x16x8xf32>
    %125 = tpu.matmul %124, %112, %cst_34 {dimension_numbers = #tpu.dot_dimension_numbers<[2], [1], [1], [2], [0, 0, 0, 1, 1, 2], [0], [0]>} : vector<2x16x16xbf16>, vector<2x16x8xbf16>, vector<2x16x8xf32> -> vector<2x16x8xf32>
    "tpu.trace_stop"() : () -> ()
    %126 = vector.shape_cast %125 : vector<2x16x8xf32> to vector<32x8xf32>
    %127 = tpu.concatenate %57, %80, %103, %126 in 1 : vector<32x8xf32>, vector<32x8xf32>, vector<32x8xf32>, vector<32x8xf32> -> vector<32x32xf32>
    %128 = arith.truncf %127 : vector<32x32xf32> to vector<32x32xbf16>
    %cst_35 = arith.constant dense<0.000000e+00> : vector<32x32xf32>
    %129 = tpu.matmul %128, %32, %cst_35 {dimension_numbers = #tpu.dot_dimension_numbers<[1], [0], [0], [1], [0, 0, 1, 1], [], []>} : vector<32x32xbf16>, vector<32x32xbf16>, vector<32x32xf32> -> vector<32x32xf32>
    %130 = vector.broadcast %34 : vector<1x32xf32> to vector<32x32xf32>
    %131 = arith.addf %129, %130 : vector<32x32xf32>
    %132 = arith.addf %1, %131 : vector<32x32xf32>
    %cst_36 = arith.constant dense<0.000000e+00> : vector<32xf32>
    %133 = vector.multi_reduction <add>, %132, %cst_36 [1] : vector<32x32xf32> to vector<32xf32>
    %134 = vector.shape_cast %133 : vector<32xf32> to vector<32x1xf32>
    %cst_37 = arith.constant 3.200000e+01 : f32
    %135 = vector.broadcast %cst_37 : f32 to vector<32x1xf32>
    %136 = arith.divf %134, %135 : vector<32x1xf32>
    %137 = arith.mulf %132, %132 : vector<32x32xf32>
    %cst_38 = arith.constant dense<0.000000e+00> : vector<32xf32>
    %138 = vector.multi_reduction <add>, %137, %cst_38 [1] : vector<32x32xf32> to vector<32xf32>
    %139 = vector.shape_cast %138 : vector<32xf32> to vector<32x1xf32>
    %cst_39 = arith.constant 3.200000e+01 : f32
    %140 = vector.broadcast %cst_39 : f32 to vector<32x1xf32>
    %141 = arith.divf %139, %140 : vector<32x1xf32>
    %142 = arith.mulf %136, %136 : vector<32x1xf32>
    %143 = arith.subf %141, %142 : vector<32x1xf32>
    %144 = vector.broadcast %136 : vector<32x1xf32> to vector<32x32xf32>
    %145 = arith.subf %132, %144 : vector<32x32xf32>
    %cst_40 = arith.constant 9.99999974E-6 : f32
    %146 = vector.broadcast %cst_40 : f32 to vector<32x1xf32>
    %147 = arith.addf %143, %146 : vector<32x1xf32>
    %148 = math.rsqrt %147 : vector<32x1xf32>
    %149 = vector.broadcast %148 : vector<32x1xf32> to vector<32x32xf32>
    %150 = arith.mulf %145, %149 : vector<32x32xf32>
    %151 = arith.truncf %150 : vector<32x32xf32> to vector<32x32xbf16>
    %c0_41 = arith.constant 0 : index
    %c0_42 = arith.constant 0 : index
    %c0_43 = arith.constant 0 : index
    %152 = vector.load %arg7[%c0_41, %c0_42, %c0_43] : memref<2x32x128xbf16, #tpu.memory_space<vmem>>, vector<1x32x128xbf16>
    %153 = vector.shape_cast %152 : vector<1x32x128xbf16> to vector<32x128xbf16>
    %cst_44 = arith.constant dense<0.000000e+00> : vector<32x128xf32>
    %154 = tpu.matmul %151, %153, %cst_44 {dimension_numbers = #tpu.dot_dimension_numbers<[1], [0], [0], [1], [0, 0, 1, 1], [], []>} : vector<32x32xbf16>, vector<32x128xbf16>, vector<32x128xf32> -> vector<32x128xf32>
    %c0_45 = arith.constant 0 : index
    %c0_46 = arith.constant 0 : index
    %c0_47 = arith.constant 0 : index
    %155 = vector.load %arg8[%c0_45, %c0_46, %c0_47] : memref<2x1x128xf32, #tpu.memory_space<vmem>>, vector<1x1x128xf32>
    %156 = vector.shape_cast %155 : vector<1x1x128xf32> to vector<1x128xf32>
    %157 = vector.broadcast %156 : vector<1x128xf32> to vector<32x128xf32>
    %158 = arith.addf %154, %157 : vector<32x128xf32>
    %cst_48 = arith.constant 0.000000e+00 : f32
    %159 = vector.broadcast %cst_48 : f32 to vector<32x128xf32>
    %160 = arith.maximumf %158, %159 : vector<32x128xf32>
    %161 = arith.truncf %160 : vector<32x128xf32> to vector<32x128xbf16>
    %c0_49 = arith.constant 0 : index
    %c0_50 = arith.constant 0 : index
    %c0_51 = arith.constant 0 : index
    %162 = vector.load %arg9[%c0_49, %c0_50, %c0_51] : memref<2x128x32xbf16, #tpu.memory_space<vmem>>, vector<1x128x32xbf16>
    %163 = vector.shape_cast %162 : vector<1x128x32xbf16> to vector<128x32xbf16>
    %cst_52 = arith.constant dense<0.000000e+00> : vector<32x32xf32>
    %164 = tpu.matmul %161, %163, %cst_52 {dimension_numbers = #tpu.dot_dimension_numbers<[1], [0], [0], [1], [0, 0, 1, 1], [], []>} : vector<32x128xbf16>, vector<128x32xbf16>, vector<32x32xf32> -> vector<32x32xf32>
    %165 = arith.addf %132, %164 : vector<32x32xf32>
    %c0_53 = arith.constant 0 : index
    %c0_54 = arith.constant 0 : index
    %c0_55 = arith.constant 0 : index
    %166 = vector.load %arg10[%c0_53, %c0_54, %c0_55] : memref<2x1x32xf32, #tpu.memory_space<vmem>>, vector<1x1x32xf32>
    %167 = vector.shape_cast %166 : vector<1x1x32xf32> to vector<1x32xf32>
    %168 = vector.broadcast %167 : vector<1x32xf32> to vector<32x32xf32>
    %169 = arith.addf %165, %168 : vector<32x32xf32>
    %cst_56 = arith.constant dense<0.000000e+00> : vector<32xf32>
    %170 = vector.multi_reduction <add>, %169, %cst_56 [1] : vector<32x32xf32> to vector<32xf32>
    %171 = vector.shape_cast %170 : vector<32xf32> to vector<32x1xf32>
    %cst_57 = arith.constant 3.200000e+01 : f32
    %172 = vector.broadcast %cst_57 : f32 to vector<32x1xf32>
    %173 = arith.divf %171, %172 : vector<32x1xf32>
    %174 = arith.mulf %169, %169 : vector<32x32xf32>
    %cst_58 = arith.constant dense<0.000000e+00> : vector<32xf32>
    %175 = vector.multi_reduction <add>, %174, %cst_58 [1] : vector<32x32xf32> to vector<32xf32>
    %176 = vector.shape_cast %175 : vector<32xf32> to vector<32x1xf32>
    %cst_59 = arith.constant 3.200000e+01 : f32
    %177 = vector.broadcast %cst_59 : f32 to vector<32x1xf32>
    %178 = arith.divf %176, %177 : vector<32x1xf32>
    %179 = arith.mulf %173, %173 : vector<32x1xf32>
    %180 = arith.subf %178, %179 : vector<32x1xf32>
    %181 = vector.broadcast %173 : vector<32x1xf32> to vector<32x32xf32>
    %182 = arith.subf %169, %181 : vector<32x32xf32>
    %cst_60 = arith.constant 9.99999974E-6 : f32
    %183 = vector.broadcast %cst_60 : f32 to vector<32x1xf32>
    %184 = arith.addf %180, %183 : vector<32x1xf32>
    %185 = math.rsqrt %184 : vector<32x1xf32>
    %186 = vector.broadcast %185 : vector<32x1xf32> to vector<32x32xf32>
    %187 = arith.mulf %182, %186 : vector<32x32xf32>
    %188 = arith.truncf %187 : vector<32x32xf32> to vector<32x32xbf16>
    %c1 = arith.constant 1 : index
    %c0_61 = arith.constant 0 : index
    %c0_62 = arith.constant 0 : index
    %189 = vector.load %arg3[%c1, %c0_61, %c0_62] : memref<2x32x96xbf16, #tpu.memory_space<vmem>>, vector<1x32x96xbf16>
    %190 = vector.shape_cast %189 : vector<1x32x96xbf16> to vector<32x96xbf16>
    %cst_63 = arith.constant dense<0.000000e+00> : vector<32x96xf32>
    %191 = tpu.matmul %188, %190, %cst_63 {dimension_numbers = #tpu.dot_dimension_numbers<[1], [0], [0], [1], [0, 0, 1, 1], [], []>} : vector<32x32xbf16>, vector<32x96xbf16>, vector<32x96xf32> -> vector<32x96xf32>
    %c1_64 = arith.constant 1 : index
    %c0_65 = arith.constant 0 : index
    %c0_66 = arith.constant 0 : index
    %192 = vector.load %arg4[%c1_64, %c0_65, %c0_66] : memref<2x1x96xf32, #tpu.memory_space<vmem>>, vector<1x1x96xf32>
    %193 = vector.shape_cast %192 : vector<1x1x96xf32> to vector<1x96xf32>
    %194 = vector.broadcast %193 : vector<1x96xf32> to vector<32x96xf32>
    %195 = arith.addf %191, %194 : vector<32x96xf32>
    %196 = vector.extract_strided_slice %195 {offsets = [0, 0], sizes = [32, 32], strides = [1, 1]} : vector<32x96xf32> to vector<32x32xf32>
    %197 = vector.extract_strided_slice %195 {offsets = [0, 32], sizes = [32, 32], strides = [1, 1]} : vector<32x96xf32> to vector<32x32xf32>
    %198 = vector.extract_strided_slice %195 {offsets = [0, 64], sizes = [32, 32], strides = [1, 1]} : vector<32x96xf32> to vector<32x32xf32>
    %c1_67 = arith.constant 1 : index
    %c0_68 = arith.constant 0 : index
    %c0_69 = arith.constant 0 : index
    %199 = vector.load %arg5[%c1_67, %c0_68, %c0_69] : memref<2x32x32xbf16, #tpu.memory_space<vmem>>, vector<1x32x32xbf16>
    %200 = vector.shape_cast %199 : vector<1x32x32xbf16> to vector<32x32xbf16>
    %c1_70 = arith.constant 1 : index
    %c0_71 = arith.constant 0 : index
    %c0_72 = arith.constant 0 : index
    %201 = vector.load %arg6[%c1_70, %c0_71, %c0_72] : memref<2x1x32xf32, #tpu.memory_space<vmem>>, vector<1x1x32xf32>
    %202 = vector.shape_cast %201 : vector<1x1x32xf32> to vector<1x32xf32>
    %203 = vector.extract_strided_slice %196 {offsets = [0, 0], sizes = [32, 8], strides = [1, 1]} : vector<32x32xf32> to vector<32x8xf32>
    %204 = vector.shape_cast %203 : vector<32x8xf32> to vector<2x16x8xf32>
    %205 = arith.truncf %204 : vector<2x16x8xf32> to vector<2x16x8xbf16>
    %206 = vector.extract_strided_slice %197 {offsets = [0, 0], sizes = [32, 8], strides = [1, 1]} : vector<32x32xf32> to vector<32x8xf32>
    %207 = vector.shape_cast %206 : vector<32x8xf32> to vector<2x16x8xf32>
    %208 = arith.truncf %207 : vector<2x16x8xf32> to vector<2x16x8xbf16>
    %209 = vector.extract_strided_slice %198 {offsets = [0, 0], sizes = [32, 8], strides = [1, 1]} : vector<32x32xf32> to vector<32x8xf32>
    %210 = vector.shape_cast %209 : vector<32x8xf32> to vector<2x16x8xf32>
    %211 = arith.truncf %210 : vector<2x16x8xf32> to vector<2x16x8xbf16>
    "tpu.trace_start"() <{level = 10 : i32, message = "bqd,bkd->bqk"}> : () -> ()
    %cst_73 = arith.constant dense<0.000000e+00> : vector<2x16x16xf32>
    %212 = tpu.matmul %205, %208, %cst_73 {dimension_numbers = #tpu.dot_dimension_numbers<[2], [2], [1], [1], [0, 0, 0, 1, 1, 1], [0], [0]>} : vector<2x16x8xbf16>, vector<2x16x8xbf16>, vector<2x16x16xf32> -> vector<2x16x16xf32>
    "tpu.trace_stop"() : () -> ()
    %cst_74 = arith.constant dense<0xFF800000> : vector<2x16xf32>
    %213 = vector.multi_reduction <maximumf>, %212, %cst_74 [2] : vector<2x16x16xf32> to vector<2x16xf32>
    %214 = vector.shape_cast %213 : vector<2x16xf32> to vector<2x16x1xf32>
    %215 = vector.broadcast %214 : vector<2x16x1xf32> to vector<2x16x16xf32>
    %216 = arith.subf %212, %215 : vector<2x16x16xf32>
    %217 = math.exp %216 : vector<2x16x16xf32>
    %cst_75 = arith.constant dense<0.000000e+00> : vector<2x16xf32>
    %218 = vector.multi_reduction <add>, %217, %cst_75 [2] : vector<2x16x16xf32> to vector<2x16xf32>
    %219 = vector.shape_cast %218 : vector<2x16xf32> to vector<2x16x1xf32>
    %220 = tpu.reciprocal %219 {approx = true} : vector<2x16x1xf32> -> vector<2x16x1xf32>
    %221 = vector.broadcast %220 : vector<2x16x1xf32> to vector<2x16x16xf32>
    %222 = arith.mulf %217, %221 : vector<2x16x16xf32>
    %223 = arith.truncf %222 : vector<2x16x16xf32> to vector<2x16x16xbf16>
    "tpu.trace_start"() <{level = 10 : i32, message = "bqk,bkd->bqd"}> : () -> ()
    %cst_76 = arith.constant dense<0.000000e+00> : vector<2x16x8xf32>
    %224 = tpu.matmul %223, %211, %cst_76 {dimension_numbers = #tpu.dot_dimension_numbers<[2], [1], [1], [2], [0, 0, 0, 1, 1, 2], [0], [0]>} : vector<2x16x16xbf16>, vector<2x16x8xbf16>, vector<2x16x8xf32> -> vector<2x16x8xf32>
    "tpu.trace_stop"() : () -> ()
    %225 = vector.shape_cast %224 : vector<2x16x8xf32> to vector<32x8xf32>
    %226 = vector.extract_strided_slice %196 {offsets = [0, 8], sizes = [32, 8], strides = [1, 1]} : vector<32x32xf32> to vector<32x8xf32>
    %227 = vector.shape_cast %226 : vector<32x8xf32> to vector<2x16x8xf32>
    %228 = arith.truncf %227 : vector<2x16x8xf32> to vector<2x16x8xbf16>
    %229 = vector.extract_strided_slice %197 {offsets = [0, 8], sizes = [32, 8], strides = [1, 1]} : vector<32x32xf32> to vector<32x8xf32>
    %230 = vector.shape_cast %229 : vector<32x8xf32> to vector<2x16x8xf32>
    %231 = arith.truncf %230 : vector<2x16x8xf32> to vector<2x16x8xbf16>
    %232 = vector.extract_strided_slice %198 {offsets = [0, 8], sizes = [32, 8], strides = [1, 1]} : vector<32x32xf32> to vector<32x8xf32>
    %233 = vector.shape_cast %232 : vector<32x8xf32> to vector<2x16x8xf32>
    %234 = arith.truncf %233 : vector<2x16x8xf32> to vector<2x16x8xbf16>
    "tpu.trace_start"() <{level = 10 : i32, message = "bqd,bkd->bqk"}> : () -> ()
    %cst_77 = arith.constant dense<0.000000e+00> : vector<2x16x16xf32>
    %235 = tpu.matmul %228, %231, %cst_77 {dimension_numbers = #tpu.dot_dimension_numbers<[2], [2], [1], [1], [0, 0, 0, 1, 1, 1], [0], [0]>} : vector<2x16x8xbf16>, vector<2x16x8xbf16>, vector<2x16x16xf32> -> vector<2x16x16xf32>
    "tpu.trace_stop"() : () -> ()
    %cst_78 = arith.constant dense<0xFF800000> : vector<2x16xf32>
    %236 = vector.multi_reduction <maximumf>, %235, %cst_78 [2] : vector<2x16x16xf32> to vector<2x16xf32>
    %237 = vector.shape_cast %236 : vector<2x16xf32> to vector<2x16x1xf32>
    %238 = vector.broadcast %237 : vector<2x16x1xf32> to vector<2x16x16xf32>
    %239 = arith.subf %235, %238 : vector<2x16x16xf32>
    %240 = math.exp %239 : vector<2x16x16xf32>
    %cst_79 = arith.constant dense<0.000000e+00> : vector<2x16xf32>
    %241 = vector.multi_reduction <add>, %240, %cst_79 [2] : vector<2x16x16xf32> to vector<2x16xf32>
    %242 = vector.shape_cast %241 : vector<2x16xf32> to vector<2x16x1xf32>
    %243 = tpu.reciprocal %242 {approx = true} : vector<2x16x1xf32> -> vector<2x16x1xf32>
    %244 = vector.broadcast %243 : vector<2x16x1xf32> to vector<2x16x16xf32>
    %245 = arith.mulf %240, %244 : vector<2x16x16xf32>
    %246 = arith.truncf %245 : vector<2x16x16xf32> to vector<2x16x16xbf16>
    "tpu.trace_start"() <{level = 10 : i32, message = "bqk,bkd->bqd"}> : () -> ()
    %cst_80 = arith.constant dense<0.000000e+00> : vector<2x16x8xf32>
    %247 = tpu.matmul %246, %234, %cst_80 {dimension_numbers = #tpu.dot_dimension_numbers<[2], [1], [1], [2], [0, 0, 0, 1, 1, 2], [0], [0]>} : vector<2x16x16xbf16>, vector<2x16x8xbf16>, vector<2x16x8xf32> -> vector<2x16x8xf32>
    "tpu.trace_stop"() : () -> ()
    %248 = vector.shape_cast %247 : vector<2x16x8xf32> to vector<32x8xf32>
    %249 = vector.extract_strided_slice %196 {offsets = [0, 16], sizes = [32, 8], strides = [1, 1]} : vector<32x32xf32> to vector<32x8xf32>
    %250 = vector.shape_cast %249 : vector<32x8xf32> to vector<2x16x8xf32>
    %251 = arith.truncf %250 : vector<2x16x8xf32> to vector<2x16x8xbf16>
    %252 = vector.extract_strided_slice %197 {offsets = [0, 16], sizes = [32, 8], strides = [1, 1]} : vector<32x32xf32> to vector<32x8xf32>
    %253 = vector.shape_cast %252 : vector<32x8xf32> to vector<2x16x8xf32>
    %254 = arith.truncf %253 : vector<2x16x8xf32> to vector<2x16x8xbf16>
    %255 = vector.extract_strided_slice %198 {offsets = [0, 16], sizes = [32, 8], strides = [1, 1]} : vector<32x32xf32> to vector<32x8xf32>
    %256 = vector.shape_cast %255 : vector<32x8xf32> to vector<2x16x8xf32>
    %257 = arith.truncf %256 : vector<2x16x8xf32> to vector<2x16x8xbf16>
    "tpu.trace_start"() <{level = 10 : i32, message = "bqd,bkd->bqk"}> : () -> ()
    %cst_81 = arith.constant dense<0.000000e+00> : vector<2x16x16xf32>
    %258 = tpu.matmul %251, %254, %cst_81 {dimension_numbers = #tpu.dot_dimension_numbers<[2], [2], [1], [1], [0, 0, 0, 1, 1, 1], [0], [0]>} : vector<2x16x8xbf16>, vector<2x16x8xbf16>, vector<2x16x16xf32> -> vector<2x16x16xf32>
    "tpu.trace_stop"() : () -> ()
    %cst_82 = arith.constant dense<0xFF800000> : vector<2x16xf32>
    %259 = vector.multi_reduction <maximumf>, %258, %cst_82 [2] : vector<2x16x16xf32> to vector<2x16xf32>
    %260 = vector.shape_cast %259 : vector<2x16xf32> to vector<2x16x1xf32>
    %261 = vector.broadcast %260 : vector<2x16x1xf32> to vector<2x16x16xf32>
    %262 = arith.subf %258, %261 : vector<2x16x16xf32>
    %263 = math.exp %262 : vector<2x16x16xf32>
    %cst_83 = arith.constant dense<0.000000e+00> : vector<2x16xf32>
    %264 = vector.multi_reduction <add>, %263, %cst_83 [2] : vector<2x16x16xf32> to vector<2x16xf32>
    %265 = vector.shape_cast %264 : vector<2x16xf32> to vector<2x16x1xf32>
    %266 = tpu.reciprocal %265 {approx = true} : vector<2x16x1xf32> -> vector<2x16x1xf32>
    %267 = vector.broadcast %266 : vector<2x16x1xf32> to vector<2x16x16xf32>
    %268 = arith.mulf %263, %267 : vector<2x16x16xf32>
    %269 = arith.truncf %268 : vector<2x16x16xf32> to vector<2x16x16xbf16>
    "tpu.trace_start"() <{level = 10 : i32, message = "bqk,bkd->bqd"}> : () -> ()
    %cst_84 = arith.constant dense<0.000000e+00> : vector<2x16x8xf32>
    %270 = tpu.matmul %269, %257, %cst_84 {dimension_numbers = #tpu.dot_dimension_numbers<[2], [1], [1], [2], [0, 0, 0, 1, 1, 2], [0], [0]>} : vector<2x16x16xbf16>, vector<2x16x8xbf16>, vector<2x16x8xf32> -> vector<2x16x8xf32>
    "tpu.trace_stop"() : () -> ()
    %271 = vector.shape_cast %270 : vector<2x16x8xf32> to vector<32x8xf32>
    %272 = vector.extract_strided_slice %196 {offsets = [0, 24], sizes = [32, 8], strides = [1, 1]} : vector<32x32xf32> to vector<32x8xf32>
    %273 = vector.shape_cast %272 : vector<32x8xf32> to vector<2x16x8xf32>
    %274 = arith.truncf %273 : vector<2x16x8xf32> to vector<2x16x8xbf16>
    %275 = vector.extract_strided_slice %197 {offsets = [0, 24], sizes = [32, 8], strides = [1, 1]} : vector<32x32xf32> to vector<32x8xf32>
    %276 = vector.shape_cast %275 : vector<32x8xf32> to vector<2x16x8xf32>
    %277 = arith.truncf %276 : vector<2x16x8xf32> to vector<2x16x8xbf16>
    %278 = vector.extract_strided_slice %198 {offsets = [0, 24], sizes = [32, 8], strides = [1, 1]} : vector<32x32xf32> to vector<32x8xf32>
    %279 = vector.shape_cast %278 : vector<32x8xf32> to vector<2x16x8xf32>
    %280 = arith.truncf %279 : vector<2x16x8xf32> to vector<2x16x8xbf16>
    "tpu.trace_start"() <{level = 10 : i32, message = "bqd,bkd->bqk"}> : () -> ()
    %cst_85 = arith.constant dense<0.000000e+00> : vector<2x16x16xf32>
    %281 = tpu.matmul %274, %277, %cst_85 {dimension_numbers = #tpu.dot_dimension_numbers<[2], [2], [1], [1], [0, 0, 0, 1, 1, 1], [0], [0]>} : vector<2x16x8xbf16>, vector<2x16x8xbf16>, vector<2x16x16xf32> -> vector<2x16x16xf32>
    "tpu.trace_stop"() : () -> ()
    %cst_86 = arith.constant dense<0xFF800000> : vector<2x16xf32>
    %282 = vector.multi_reduction <maximumf>, %281, %cst_86 [2] : vector<2x16x16xf32> to vector<2x16xf32>
    %283 = vector.shape_cast %282 : vector<2x16xf32> to vector<2x16x1xf32>
    %284 = vector.broadcast %283 : vector<2x16x1xf32> to vector<2x16x16xf32>
    %285 = arith.subf %281, %284 : vector<2x16x16xf32>
    %286 = math.exp %285 : vector<2x16x16xf32>
    %cst_87 = arith.constant dense<0.000000e+00> : vector<2x16xf32>
    %287 = vector.multi_reduction <add>, %286, %cst_87 [2] : vector<2x16x16xf32> to vector<2x16xf32>
    %288 = vector.shape_cast %287 : vector<2x16xf32> to vector<2x16x1xf32>
    %289 = tpu.reciprocal %288 {approx = true} : vector<2x16x1xf32> -> vector<2x16x1xf32>
    %290 = vector.broadcast %289 : vector<2x16x1xf32> to vector<2x16x16xf32>
    %291 = arith.mulf %286, %290 : vector<2x16x16xf32>
    %292 = arith.truncf %291 : vector<2x16x16xf32> to vector<2x16x16xbf16>
    "tpu.trace_start"() <{level = 10 : i32, message = "bqk,bkd->bqd"}> : () -> ()
    %cst_88 = arith.constant dense<0.000000e+00> : vector<2x16x8xf32>
    %293 = tpu.matmul %292, %280, %cst_88 {dimension_numbers = #tpu.dot_dimension_numbers<[2], [1], [1], [2], [0, 0, 0, 1, 1, 2], [0], [0]>} : vector<2x16x16xbf16>, vector<2x16x8xbf16>, vector<2x16x8xf32> -> vector<2x16x8xf32>
    "tpu.trace_stop"() : () -> ()
    %294 = vector.shape_cast %293 : vector<2x16x8xf32> to vector<32x8xf32>
    %295 = tpu.concatenate %225, %248, %271, %294 in 1 : vector<32x8xf32>, vector<32x8xf32>, vector<32x8xf32>, vector<32x8xf32> -> vector<32x32xf32>
    %296 = arith.truncf %295 : vector<32x32xf32> to vector<32x32xbf16>
    %cst_89 = arith.constant dense<0.000000e+00> : vector<32x32xf32>
    %297 = tpu.matmul %296, %200, %cst_89 {dimension_numbers = #tpu.dot_dimension_numbers<[1], [0], [0], [1], [0, 0, 1, 1], [], []>} : vector<32x32xbf16>, vector<32x32xbf16>, vector<32x32xf32> -> vector<32x32xf32>
    %298 = vector.broadcast %202 : vector<1x32xf32> to vector<32x32xf32>
    %299 = arith.addf %297, %298 : vector<32x32xf32>
    %300 = arith.addf %169, %299 : vector<32x32xf32>
    %cst_90 = arith.constant dense<0.000000e+00> : vector<32xf32>
    %301 = vector.multi_reduction <add>, %300, %cst_90 [1] : vector<32x32xf32> to vector<32xf32>
    %302 = vector.shape_cast %301 : vector<32xf32> to vector<32x1xf32>
    %cst_91 = arith.constant 3.200000e+01 : f32
    %303 = vector.broadcast %cst_91 : f32 to vector<32x1xf32>
    %304 = arith.divf %302, %303 : vector<32x1xf32>
    %305 = arith.mulf %300, %300 : vector<32x32xf32>
    %cst_92 = arith.constant dense<0.000000e+00> : vector<32xf32>
    %306 = vector.multi_reduction <add>, %305, %cst_92 [1] : vector<32x32xf32> to vector<32xf32>
    %307 = vector.shape_cast %306 : vector<32xf32> to vector<32x1xf32>
    %cst_93 = arith.constant 3.200000e+01 : f32
    %308 = vector.broadcast %cst_93 : f32 to vector<32x1xf32>
    %309 = arith.divf %307, %308 : vector<32x1xf32>
    %310 = arith.mulf %304, %304 : vector<32x1xf32>
    %311 = arith.subf %309, %310 : vector<32x1xf32>
    %312 = vector.broadcast %304 : vector<32x1xf32> to vector<32x32xf32>
    %313 = arith.subf %300, %312 : vector<32x32xf32>
    %cst_94 = arith.constant 9.99999974E-6 : f32
    %314 = vector.broadcast %cst_94 : f32 to vector<32x1xf32>
    %315 = arith.addf %311, %314 : vector<32x1xf32>
    %316 = math.rsqrt %315 : vector<32x1xf32>
    %317 = vector.broadcast %316 : vector<32x1xf32> to vector<32x32xf32>
    %318 = arith.mulf %313, %317 : vector<32x32xf32>
    %319 = arith.truncf %318 : vector<32x32xf32> to vector<32x32xbf16>
    %c1_95 = arith.constant 1 : index
    %c0_96 = arith.constant 0 : index
    %c0_97 = arith.constant 0 : index
    %320 = vector.load %arg7[%c1_95, %c0_96, %c0_97] : memref<2x32x128xbf16, #tpu.memory_space<vmem>>, vector<1x32x128xbf16>
    %321 = vector.shape_cast %320 : vector<1x32x128xbf16> to vector<32x128xbf16>
    %cst_98 = arith.constant dense<0.000000e+00> : vector<32x128xf32>
    %322 = tpu.matmul %319, %321, %cst_98 {dimension_numbers = #tpu.dot_dimension_numbers<[1], [0], [0], [1], [0, 0, 1, 1], [], []>} : vector<32x32xbf16>, vector<32x128xbf16>, vector<32x128xf32> -> vector<32x128xf32>
    %c1_99 = arith.constant 1 : index
    %c0_100 = arith.constant 0 : index
    %c0_101 = arith.constant 0 : index
    %323 = vector.load %arg8[%c1_99, %c0_100, %c0_101] : memref<2x1x128xf32, #tpu.memory_space<vmem>>, vector<1x1x128xf32>
    %324 = vector.shape_cast %323 : vector<1x1x128xf32> to vector<1x128xf32>
    %325 = vector.broadcast %324 : vector<1x128xf32> to vector<32x128xf32>
    %326 = arith.addf %322, %325 : vector<32x128xf32>
    %cst_102 = arith.constant 0.000000e+00 : f32
    %327 = vector.broadcast %cst_102 : f32 to vector<32x128xf32>
    %328 = arith.maximumf %326, %327 : vector<32x128xf32>
    %329 = arith.truncf %328 : vector<32x128xf32> to vector<32x128xbf16>
    %c1_103 = arith.constant 1 : index
    %c0_104 = arith.constant 0 : index
    %c0_105 = arith.constant 0 : index
    %330 = vector.load %arg9[%c1_103, %c0_104, %c0_105] : memref<2x128x32xbf16, #tpu.memory_space<vmem>>, vector<1x128x32xbf16>
    %331 = vector.shape_cast %330 : vector<1x128x32xbf16> to vector<128x32xbf16>
    %cst_106 = arith.constant dense<0.000000e+00> : vector<32x32xf32>
    %332 = tpu.matmul %329, %331, %cst_106 {dimension_numbers = #tpu.dot_dimension_numbers<[1], [0], [0], [1], [0, 0, 1, 1], [], []>} : vector<32x128xbf16>, vector<128x32xbf16>, vector<32x32xf32> -> vector<32x32xf32>
    %333 = arith.addf %300, %332 : vector<32x32xf32>
    %c1_107 = arith.constant 1 : index
    %c0_108 = arith.constant 0 : index
    %c0_109 = arith.constant 0 : index
    %334 = vector.load %arg10[%c1_107, %c0_108, %c0_109] : memref<2x1x32xf32, #tpu.memory_space<vmem>>, vector<1x1x32xf32>
    %335 = vector.shape_cast %334 : vector<1x1x32xf32> to vector<1x32xf32>
    %336 = vector.broadcast %335 : vector<1x32xf32> to vector<32x32xf32>
    %337 = arith.addf %333, %336 : vector<32x32xf32>
    %338 = arith.truncf %337 : vector<32x32xf32> to vector<32x32xbf16>
    %c0_110 = arith.constant 0 : index
    %c0_111 = arith.constant 0 : index
    %c0_112 = arith.constant 0 : index
    %339 = vector.load %arg2[%c0_110, %c0_111, %c0_112] : memref<2x8x32xf32, #tpu.memory_space<vmem>>, vector<2x8x32xf32>
    %340 = vector.shape_cast %339 : vector<2x8x32xf32> to vector<16x32xf32>
    %cst_113 = arith.constant dense<0.000000e+00> : vector<16xf32>
    %341 = vector.multi_reduction <add>, %340, %cst_113 [1] : vector<16x32xf32> to vector<16xf32>
    %342 = vector.shape_cast %341 : vector<16xf32> to vector<16x1xf32>
    %cst_114 = arith.constant 3.200000e+01 : f32
    %343 = vector.broadcast %cst_114 : f32 to vector<16x1xf32>
    %344 = arith.divf %342, %343 : vector<16x1xf32>
    %345 = arith.mulf %340, %340 : vector<16x32xf32>
    %cst_115 = arith.constant dense<0.000000e+00> : vector<16xf32>
    %346 = vector.multi_reduction <add>, %345, %cst_115 [1] : vector<16x32xf32> to vector<16xf32>
    %347 = vector.shape_cast %346 : vector<16xf32> to vector<16x1xf32>
    %cst_116 = arith.constant 3.200000e+01 : f32
    %348 = vector.broadcast %cst_116 : f32 to vector<16x1xf32>
    %349 = arith.divf %347, %348 : vector<16x1xf32>
    %350 = arith.mulf %344, %344 : vector<16x1xf32>
    %351 = arith.subf %349, %350 : vector<16x1xf32>
    %352 = vector.broadcast %344 : vector<16x1xf32> to vector<16x32xf32>
    %353 = arith.subf %340, %352 : vector<16x32xf32>
    %cst_117 = arith.constant 9.99999974E-6 : f32
    %354 = vector.broadcast %cst_117 : f32 to vector<16x1xf32>
    %355 = arith.addf %351, %354 : vector<16x1xf32>
    %356 = math.rsqrt %355 : vector<16x1xf32>
    %357 = vector.broadcast %356 : vector<16x1xf32> to vector<16x32xf32>
    %358 = arith.mulf %353, %357 : vector<16x32xf32>
    %359 = arith.truncf %358 : vector<16x32xf32> to vector<16x32xbf16>
    %c0_118 = arith.constant 0 : index
    %c0_119 = arith.constant 0 : index
    %c0_120 = arith.constant 0 : index
    %360 = vector.load %arg11[%c0_118, %c0_119, %c0_120] : memref<2x32x96xbf16, #tpu.memory_space<vmem>>, vector<1x32x96xbf16>
    %361 = vector.shape_cast %360 : vector<1x32x96xbf16> to vector<32x96xbf16>
    %cst_121 = arith.constant dense<0.000000e+00> : vector<16x96xf32>
    %362 = tpu.matmul %359, %361, %cst_121 {dimension_numbers = #tpu.dot_dimension_numbers<[1], [0], [0], [1], [0, 0, 1, 1], [], []>} : vector<16x32xbf16>, vector<32x96xbf16>, vector<16x96xf32> -> vector<16x96xf32>
    %c0_122 = arith.constant 0 : index
    %c0_123 = arith.constant 0 : index
    %c0_124 = arith.constant 0 : index
    %363 = vector.load %arg12[%c0_122, %c0_123, %c0_124] : memref<2x1x96xf32, #tpu.memory_space<vmem>>, vector<1x1x96xf32>
    %364 = vector.shape_cast %363 : vector<1x1x96xf32> to vector<1x96xf32>
    %365 = vector.broadcast %364 : vector<1x96xf32> to vector<16x96xf32>
    %366 = arith.addf %362, %365 : vector<16x96xf32>
    %367 = vector.extract_strided_slice %366 {offsets = [0, 0], sizes = [16, 32], strides = [1, 1]} : vector<16x96xf32> to vector<16x32xf32>
    %368 = vector.extract_strided_slice %366 {offsets = [0, 32], sizes = [16, 32], strides = [1, 1]} : vector<16x96xf32> to vector<16x32xf32>
    %369 = vector.extract_strided_slice %366 {offsets = [0, 64], sizes = [16, 32], strides = [1, 1]} : vector<16x96xf32> to vector<16x32xf32>
    %c0_125 = arith.constant 0 : index
    %c0_126 = arith.constant 0 : index
    %c0_127 = arith.constant 0 : index
    %370 = vector.load %arg13[%c0_125, %c0_126, %c0_127] : memref<2x32x32xbf16, #tpu.memory_space<vmem>>, vector<1x32x32xbf16>
    %371 = vector.shape_cast %370 : vector<1x32x32xbf16> to vector<32x32xbf16>
    %c0_128 = arith.constant 0 : index
    %c0_129 = arith.constant 0 : index
    %c0_130 = arith.constant 0 : index
    %372 = vector.load %arg14[%c0_128, %c0_129, %c0_130] : memref<2x1x32xf32, #tpu.memory_space<vmem>>, vector<1x1x32xf32>
    %373 = vector.shape_cast %372 : vector<1x1x32xf32> to vector<1x32xf32>
    %374 = tpu.iota {dimensions = array<i32: 1>} : vector<2x8x8xi32>
    %375 = tpu.iota {dimensions = array<i32: 2>} : vector<2x8x8xi32>
    %376 = arith.cmpi sgt, %375, %374 : vector<2x8x8xi32>
    %cst_131 = arith.constant -1.000000e+06 : f32
    %cst_132 = arith.constant 0.000000e+00 : f32
    %377 = vector.broadcast %cst_131 : f32 to vector<2x8x8xf32>
    %378 = vector.broadcast %cst_132 : f32 to vector<2x8x8xf32>
    %379 = arith.select %376, %377, %378 : vector<2x8x8xi1>, vector<2x8x8xf32>
    %380 = vector.extract_strided_slice %367 {offsets = [0, 0], sizes = [16, 8], strides = [1, 1]} : vector<16x32xf32> to vector<16x8xf32>
    %381 = vector.shape_cast %380 : vector<16x8xf32> to vector<2x8x8xf32>
    %382 = arith.truncf %381 : vector<2x8x8xf32> to vector<2x8x8xbf16>
    %383 = vector.extract_strided_slice %368 {offsets = [0, 0], sizes = [16, 8], strides = [1, 1]} : vector<16x32xf32> to vector<16x8xf32>
    %384 = vector.shape_cast %383 : vector<16x8xf32> to vector<2x8x8xf32>
    %385 = arith.truncf %384 : vector<2x8x8xf32> to vector<2x8x8xbf16>
    %386 = vector.extract_strided_slice %369 {offsets = [0, 0], sizes = [16, 8], strides = [1, 1]} : vector<16x32xf32> to vector<16x8xf32>
    %387 = vector.shape_cast %386 : vector<16x8xf32> to vector<2x8x8xf32>
    %388 = arith.truncf %387 : vector<2x8x8xf32> to vector<2x8x8xbf16>
    "tpu.trace_start"() <{level = 10 : i32, message = "bqd,bkd->bqk"}> : () -> ()
    %cst_133 = arith.constant dense<0.000000e+00> : vector<2x8x8xf32>
    %389 = tpu.matmul %382, %385, %cst_133 {dimension_numbers = #tpu.dot_dimension_numbers<[2], [2], [1], [1], [0, 0, 0, 1, 1, 1], [0], [0]>} : vector<2x8x8xbf16>, vector<2x8x8xbf16>, vector<2x8x8xf32> -> vector<2x8x8xf32>
    "tpu.trace_stop"() : () -> ()
    %390 = arith.addf %389, %379 : vector<2x8x8xf32>
    %cst_134 = arith.constant dense<0xFF800000> : vector<2x8xf32>
    %391 = vector.multi_reduction <maximumf>, %390, %cst_134 [2] : vector<2x8x8xf32> to vector<2x8xf32>
    %392 = vector.shape_cast %391 : vector<2x8xf32> to vector<2x8x1xf32>
    %393 = vector.broadcast %392 : vector<2x8x1xf32> to vector<2x8x8xf32>
    %394 = arith.subf %390, %393 : vector<2x8x8xf32>
    %395 = math.exp %394 : vector<2x8x8xf32>
    %cst_135 = arith.constant dense<0.000000e+00> : vector<2x8xf32>
    %396 = vector.multi_reduction <add>, %395, %cst_135 [2] : vector<2x8x8xf32> to vector<2x8xf32>
    %397 = vector.shape_cast %396 : vector<2x8xf32> to vector<2x8x1xf32>
    %398 = tpu.reciprocal %397 {approx = true} : vector<2x8x1xf32> -> vector<2x8x1xf32>
    %399 = vector.broadcast %398 : vector<2x8x1xf32> to vector<2x8x8xf32>
    %400 = arith.mulf %395, %399 : vector<2x8x8xf32>
    %401 = arith.truncf %400 : vector<2x8x8xf32> to vector<2x8x8xbf16>
    "tpu.trace_start"() <{level = 10 : i32, message = "bqk,bkd->bqd"}> : () -> ()
    %cst_136 = arith.constant dense<0.000000e+00> : vector<2x8x8xf32>
    %402 = tpu.matmul %401, %388, %cst_136 {dimension_numbers = #tpu.dot_dimension_numbers<[2], [1], [1], [2], [0, 0, 0, 1, 1, 2], [0], [0]>} : vector<2x8x8xbf16>, vector<2x8x8xbf16>, vector<2x8x8xf32> -> vector<2x8x8xf32>
    "tpu.trace_stop"() : () -> ()
    %403 = vector.shape_cast %402 : vector<2x8x8xf32> to vector<16x8xf32>
    %404 = vector.extract_strided_slice %367 {offsets = [0, 8], sizes = [16, 8], strides = [1, 1]} : vector<16x32xf32> to vector<16x8xf32>
    %405 = vector.shape_cast %404 : vector<16x8xf32> to vector<2x8x8xf32>
    %406 = arith.truncf %405 : vector<2x8x8xf32> to vector<2x8x8xbf16>
    %407 = vector.extract_strided_slice %368 {offsets = [0, 8], sizes = [16, 8], strides = [1, 1]} : vector<16x32xf32> to vector<16x8xf32>
    %408 = vector.shape_cast %407 : vector<16x8xf32> to vector<2x8x8xf32>
    %409 = arith.truncf %408 : vector<2x8x8xf32> to vector<2x8x8xbf16>
    %410 = vector.extract_strided_slice %369 {offsets = [0, 8], sizes = [16, 8], strides = [1, 1]} : vector<16x32xf32> to vector<16x8xf32>
    %411 = vector.shape_cast %410 : vector<16x8xf32> to vector<2x8x8xf32>
    %412 = arith.truncf %411 : vector<2x8x8xf32> to vector<2x8x8xbf16>
    "tpu.trace_start"() <{level = 10 : i32, message = "bqd,bkd->bqk"}> : () -> ()
    %cst_137 = arith.constant dense<0.000000e+00> : vector<2x8x8xf32>
    %413 = tpu.matmul %406, %409, %cst_137 {dimension_numbers = #tpu.dot_dimension_numbers<[2], [2], [1], [1], [0, 0, 0, 1, 1, 1], [0], [0]>} : vector<2x8x8xbf16>, vector<2x8x8xbf16>, vector<2x8x8xf32> -> vector<2x8x8xf32>
    "tpu.trace_stop"() : () -> ()
    %414 = arith.addf %413, %379 : vector<2x8x8xf32>
    %cst_138 = arith.constant dense<0xFF800000> : vector<2x8xf32>
    %415 = vector.multi_reduction <maximumf>, %414, %cst_138 [2] : vector<2x8x8xf32> to vector<2x8xf32>
    %416 = vector.shape_cast %415 : vector<2x8xf32> to vector<2x8x1xf32>
    %417 = vector.broadcast %416 : vector<2x8x1xf32> to vector<2x8x8xf32>
    %418 = arith.subf %414, %417 : vector<2x8x8xf32>
    %419 = math.exp %418 : vector<2x8x8xf32>
    %cst_139 = arith.constant dense<0.000000e+00> : vector<2x8xf32>
    %420 = vector.multi_reduction <add>, %419, %cst_139 [2] : vector<2x8x8xf32> to vector<2x8xf32>
    %421 = vector.shape_cast %420 : vector<2x8xf32> to vector<2x8x1xf32>
    %422 = tpu.reciprocal %421 {approx = true} : vector<2x8x1xf32> -> vector<2x8x1xf32>
    %423 = vector.broadcast %422 : vector<2x8x1xf32> to vector<2x8x8xf32>
    %424 = arith.mulf %419, %423 : vector<2x8x8xf32>
    %425 = arith.truncf %424 : vector<2x8x8xf32> to vector<2x8x8xbf16>
    "tpu.trace_start"() <{level = 10 : i32, message = "bqk,bkd->bqd"}> : () -> ()
    %cst_140 = arith.constant dense<0.000000e+00> : vector<2x8x8xf32>
    %426 = tpu.matmul %425, %412, %cst_140 {dimension_numbers = #tpu.dot_dimension_numbers<[2], [1], [1], [2], [0, 0, 0, 1, 1, 2], [0], [0]>} : vector<2x8x8xbf16>, vector<2x8x8xbf16>, vector<2x8x8xf32> -> vector<2x8x8xf32>
    "tpu.trace_stop"() : () -> ()
    %427 = vector.shape_cast %426 : vector<2x8x8xf32> to vector<16x8xf32>
    %428 = vector.extract_strided_slice %367 {offsets = [0, 16], sizes = [16, 8], strides = [1, 1]} : vector<16x32xf32> to vector<16x8xf32>
    %429 = vector.shape_cast %428 : vector<16x8xf32> to vector<2x8x8xf32>
    %430 = arith.truncf %429 : vector<2x8x8xf32> to vector<2x8x8xbf16>
    %431 = vector.extract_strided_slice %368 {offsets = [0, 16], sizes = [16, 8], strides = [1, 1]} : vector<16x32xf32> to vector<16x8xf32>
    %432 = vector.shape_cast %431 : vector<16x8xf32> to vector<2x8x8xf32>
    %433 = arith.truncf %432 : vector<2x8x8xf32> to vector<2x8x8xbf16>
    %434 = vector.extract_strided_slice %369 {offsets = [0, 16], sizes = [16, 8], strides = [1, 1]} : vector<16x32xf32> to vector<16x8xf32>
    %435 = vector.shape_cast %434 : vector<16x8xf32> to vector<2x8x8xf32>
    %436 = arith.truncf %435 : vector<2x8x8xf32> to vector<2x8x8xbf16>
    "tpu.trace_start"() <{level = 10 : i32, message = "bqd,bkd->bqk"}> : () -> ()
    %cst_141 = arith.constant dense<0.000000e+00> : vector<2x8x8xf32>
    %437 = tpu.matmul %430, %433, %cst_141 {dimension_numbers = #tpu.dot_dimension_numbers<[2], [2], [1], [1], [0, 0, 0, 1, 1, 1], [0], [0]>} : vector<2x8x8xbf16>, vector<2x8x8xbf16>, vector<2x8x8xf32> -> vector<2x8x8xf32>
    "tpu.trace_stop"() : () -> ()
    %438 = arith.addf %437, %379 : vector<2x8x8xf32>
    %cst_142 = arith.constant dense<0xFF800000> : vector<2x8xf32>
    %439 = vector.multi_reduction <maximumf>, %438, %cst_142 [2] : vector<2x8x8xf32> to vector<2x8xf32>
    %440 = vector.shape_cast %439 : vector<2x8xf32> to vector<2x8x1xf32>
    %441 = vector.broadcast %440 : vector<2x8x1xf32> to vector<2x8x8xf32>
    %442 = arith.subf %438, %441 : vector<2x8x8xf32>
    %443 = math.exp %442 : vector<2x8x8xf32>
    %cst_143 = arith.constant dense<0.000000e+00> : vector<2x8xf32>
    %444 = vector.multi_reduction <add>, %443, %cst_143 [2] : vector<2x8x8xf32> to vector<2x8xf32>
    %445 = vector.shape_cast %444 : vector<2x8xf32> to vector<2x8x1xf32>
    %446 = tpu.reciprocal %445 {approx = true} : vector<2x8x1xf32> -> vector<2x8x1xf32>
    %447 = vector.broadcast %446 : vector<2x8x1xf32> to vector<2x8x8xf32>
    %448 = arith.mulf %443, %447 : vector<2x8x8xf32>
    %449 = arith.truncf %448 : vector<2x8x8xf32> to vector<2x8x8xbf16>
    "tpu.trace_start"() <{level = 10 : i32, message = "bqk,bkd->bqd"}> : () -> ()
    %cst_144 = arith.constant dense<0.000000e+00> : vector<2x8x8xf32>
    %450 = tpu.matmul %449, %436, %cst_144 {dimension_numbers = #tpu.dot_dimension_numbers<[2], [1], [1], [2], [0, 0, 0, 1, 1, 2], [0], [0]>} : vector<2x8x8xbf16>, vector<2x8x8xbf16>, vector<2x8x8xf32> -> vector<2x8x8xf32>
    "tpu.trace_stop"() : () -> ()
    %451 = vector.shape_cast %450 : vector<2x8x8xf32> to vector<16x8xf32>
    %452 = vector.extract_strided_slice %367 {offsets = [0, 24], sizes = [16, 8], strides = [1, 1]} : vector<16x32xf32> to vector<16x8xf32>
    %453 = vector.shape_cast %452 : vector<16x8xf32> to vector<2x8x8xf32>
    %454 = arith.truncf %453 : vector<2x8x8xf32> to vector<2x8x8xbf16>
    %455 = vector.extract_strided_slice %368 {offsets = [0, 24], sizes = [16, 8], strides = [1, 1]} : vector<16x32xf32> to vector<16x8xf32>
    %456 = vector.shape_cast %455 : vector<16x8xf32> to vector<2x8x8xf32>
    %457 = arith.truncf %456 : vector<2x8x8xf32> to vector<2x8x8xbf16>
    %458 = vector.extract_strided_slice %369 {offsets = [0, 24], sizes = [16, 8], strides = [1, 1]} : vector<16x32xf32> to vector<16x8xf32>
    %459 = vector.shape_cast %458 : vector<16x8xf32> to vector<2x8x8xf32>
    %460 = arith.truncf %459 : vector<2x8x8xf32> to vector<2x8x8xbf16>
    "tpu.trace_start"() <{level = 10 : i32, message = "bqd,bkd->bqk"}> : () -> ()
    %cst_145 = arith.constant dense<0.000000e+00> : vector<2x8x8xf32>
    %461 = tpu.matmul %454, %457, %cst_145 {dimension_numbers = #tpu.dot_dimension_numbers<[2], [2], [1], [1], [0, 0, 0, 1, 1, 1], [0], [0]>} : vector<2x8x8xbf16>, vector<2x8x8xbf16>, vector<2x8x8xf32> -> vector<2x8x8xf32>
    "tpu.trace_stop"() : () -> ()
    %462 = arith.addf %461, %379 : vector<2x8x8xf32>
    %cst_146 = arith.constant dense<0xFF800000> : vector<2x8xf32>
    %463 = vector.multi_reduction <maximumf>, %462, %cst_146 [2] : vector<2x8x8xf32> to vector<2x8xf32>
    %464 = vector.shape_cast %463 : vector<2x8xf32> to vector<2x8x1xf32>
    %465 = vector.broadcast %464 : vector<2x8x1xf32> to vector<2x8x8xf32>
    %466 = arith.subf %462, %465 : vector<2x8x8xf32>
    %467 = math.exp %466 : vector<2x8x8xf32>
    %cst_147 = arith.constant dense<0.000000e+00> : vector<2x8xf32>
    %468 = vector.multi_reduction <add>, %467, %cst_147 [2] : vector<2x8x8xf32> to vector<2x8xf32>
    %469 = vector.shape_cast %468 : vector<2x8xf32> to vector<2x8x1xf32>
    %470 = tpu.reciprocal %469 {approx = true} : vector<2x8x1xf32> -> vector<2x8x1xf32>
    %471 = vector.broadcast %470 : vector<2x8x1xf32> to vector<2x8x8xf32>
    %472 = arith.mulf %467, %471 : vector<2x8x8xf32>
    %473 = arith.truncf %472 : vector<2x8x8xf32> to vector<2x8x8xbf16>
    "tpu.trace_start"() <{level = 10 : i32, message = "bqk,bkd->bqd"}> : () -> ()
    %cst_148 = arith.constant dense<0.000000e+00> : vector<2x8x8xf32>
    %474 = tpu.matmul %473, %460, %cst_148 {dimension_numbers = #tpu.dot_dimension_numbers<[2], [1], [1], [2], [0, 0, 0, 1, 1, 2], [0], [0]>} : vector<2x8x8xbf16>, vector<2x8x8xbf16>, vector<2x8x8xf32> -> vector<2x8x8xf32>
    "tpu.trace_stop"() : () -> ()
    %475 = vector.shape_cast %474 : vector<2x8x8xf32> to vector<16x8xf32>
    %476 = tpu.concatenate %403, %427, %451, %475 in 1 : vector<16x8xf32>, vector<16x8xf32>, vector<16x8xf32>, vector<16x8xf32> -> vector<16x32xf32>
    %477 = arith.truncf %476 : vector<16x32xf32> to vector<16x32xbf16>
    %cst_149 = arith.constant dense<0.000000e+00> : vector<16x32xf32>
    %478 = tpu.matmul %477, %371, %cst_149 {dimension_numbers = #tpu.dot_dimension_numbers<[1], [0], [0], [1], [0, 0, 1, 1], [], []>} : vector<16x32xbf16>, vector<32x32xbf16>, vector<16x32xf32> -> vector<16x32xf32>
    %479 = vector.broadcast %373 : vector<1x32xf32> to vector<16x32xf32>
    %480 = arith.addf %478, %479 : vector<16x32xf32>
    %481 = arith.addf %340, %480 : vector<16x32xf32>
    %cst_150 = arith.constant dense<0.000000e+00> : vector<16xf32>
    %482 = vector.multi_reduction <add>, %481, %cst_150 [1] : vector<16x32xf32> to vector<16xf32>
    %483 = vector.shape_cast %482 : vector<16xf32> to vector<16x1xf32>
    %cst_151 = arith.constant 3.200000e+01 : f32
    %484 = vector.broadcast %cst_151 : f32 to vector<16x1xf32>
    %485 = arith.divf %483, %484 : vector<16x1xf32>
    %486 = arith.mulf %481, %481 : vector<16x32xf32>
    %cst_152 = arith.constant dense<0.000000e+00> : vector<16xf32>
    %487 = vector.multi_reduction <add>, %486, %cst_152 [1] : vector<16x32xf32> to vector<16xf32>
    %488 = vector.shape_cast %487 : vector<16xf32> to vector<16x1xf32>
    %cst_153 = arith.constant 3.200000e+01 : f32
    %489 = vector.broadcast %cst_153 : f32 to vector<16x1xf32>
    %490 = arith.divf %488, %489 : vector<16x1xf32>
    %491 = arith.mulf %485, %485 : vector<16x1xf32>
    %492 = arith.subf %490, %491 : vector<16x1xf32>
    %493 = vector.broadcast %485 : vector<16x1xf32> to vector<16x32xf32>
    %494 = arith.subf %481, %493 : vector<16x32xf32>
    %cst_154 = arith.constant 9.99999974E-6 : f32
    %495 = vector.broadcast %cst_154 : f32 to vector<16x1xf32>
    %496 = arith.addf %492, %495 : vector<16x1xf32>
    %497 = math.rsqrt %496 : vector<16x1xf32>
    %498 = vector.broadcast %497 : vector<16x1xf32> to vector<16x32xf32>
    %499 = arith.mulf %494, %498 : vector<16x32xf32>
    %500 = arith.truncf %499 : vector<16x32xf32> to vector<16x32xbf16>
    %c0_155 = arith.constant 0 : index
    %c0_156 = arith.constant 0 : index
    %c0_157 = arith.constant 0 : index
    %501 = vector.load %arg15[%c0_155, %c0_156, %c0_157] : memref<2x32x32xbf16, #tpu.memory_space<vmem>>, vector<1x32x32xbf16>
    %502 = vector.shape_cast %501 : vector<1x32x32xbf16> to vector<32x32xbf16>
    %cst_158 = arith.constant dense<0.000000e+00> : vector<16x32xf32>
    %503 = tpu.matmul %500, %502, %cst_158 {dimension_numbers = #tpu.dot_dimension_numbers<[1], [0], [0], [1], [0, 0, 1, 1], [], []>} : vector<16x32xbf16>, vector<32x32xbf16>, vector<16x32xf32> -> vector<16x32xf32>
    %c0_159 = arith.constant 0 : index
    %c0_160 = arith.constant 0 : index
    %c0_161 = arith.constant 0 : index
    %504 = vector.load %arg16[%c0_159, %c0_160, %c0_161] : memref<2x1x32xf32, #tpu.memory_space<vmem>>, vector<1x1x32xf32>
    %505 = vector.shape_cast %504 : vector<1x1x32xf32> to vector<1x32xf32>
    %506 = vector.broadcast %505 : vector<1x32xf32> to vector<16x32xf32>
    %507 = arith.addf %503, %506 : vector<16x32xf32>
    %c0_162 = arith.constant 0 : index
    %c0_163 = arith.constant 0 : index
    %c0_164 = arith.constant 0 : index
    %508 = vector.load %arg17[%c0_162, %c0_163, %c0_164] : memref<2x32x64xbf16, #tpu.memory_space<vmem>>, vector<1x32x64xbf16>
    %509 = vector.shape_cast %508 : vector<1x32x64xbf16> to vector<32x64xbf16>
    %cst_165 = arith.constant dense<0.000000e+00> : vector<32x64xf32>
    %510 = tpu.matmul %338, %509, %cst_165 {dimension_numbers = #tpu.dot_dimension_numbers<[1], [0], [0], [1], [0, 0, 1, 1], [], []>} : vector<32x32xbf16>, vector<32x64xbf16>, vector<32x64xf32> -> vector<32x64xf32>
    %c0_166 = arith.constant 0 : index
    %c0_167 = arith.constant 0 : index
    %c0_168 = arith.constant 0 : index
    %511 = vector.load %arg18[%c0_166, %c0_167, %c0_168] : memref<2x1x64xf32, #tpu.memory_space<vmem>>, vector<1x1x64xf32>
    %512 = vector.shape_cast %511 : vector<1x1x64xf32> to vector<1x64xf32>
    %513 = vector.broadcast %512 : vector<1x64xf32> to vector<32x64xf32>
    %514 = arith.addf %510, %513 : vector<32x64xf32>
    %515 = vector.extract_strided_slice %514 {offsets = [0, 0], sizes = [32, 32], strides = [1, 1]} : vector<32x64xf32> to vector<32x32xf32>
    %516 = vector.extract_strided_slice %514 {offsets = [0, 32], sizes = [32, 32], strides = [1, 1]} : vector<32x64xf32> to vector<32x32xf32>
    %c0_169 = arith.constant 0 : index
    %c0_170 = arith.constant 0 : index
    %c0_171 = arith.constant 0 : index
    %517 = vector.load %arg19[%c0_169, %c0_170, %c0_171] : memref<2x32x32xbf16, #tpu.memory_space<vmem>>, vector<1x32x32xbf16>
    %518 = vector.shape_cast %517 : vector<1x32x32xbf16> to vector<32x32xbf16>
    %c0_172 = arith.constant 0 : index
    %c0_173 = arith.constant 0 : index
    %c0_174 = arith.constant 0 : index
    %519 = vector.load %arg20[%c0_172, %c0_173, %c0_174] : memref<2x1x32xf32, #tpu.memory_space<vmem>>, vector<1x1x32xf32>
    %520 = vector.shape_cast %519 : vector<1x1x32xf32> to vector<1x32xf32>
    %521 = vector.extract_strided_slice %507 {offsets = [0, 0], sizes = [16, 8], strides = [1, 1]} : vector<16x32xf32> to vector<16x8xf32>
    %522 = vector.shape_cast %521 : vector<16x8xf32> to vector<2x8x8xf32>
    %523 = arith.truncf %522 : vector<2x8x8xf32> to vector<2x8x8xbf16>
    %524 = vector.extract_strided_slice %515 {offsets = [0, 0], sizes = [32, 8], strides = [1, 1]} : vector<32x32xf32> to vector<32x8xf32>
    %525 = vector.shape_cast %524 : vector<32x8xf32> to vector<2x16x8xf32>
    %526 = arith.truncf %525 : vector<2x16x8xf32> to vector<2x16x8xbf16>
    %527 = vector.extract_strided_slice %516 {offsets = [0, 0], sizes = [32, 8], strides = [1, 1]} : vector<32x32xf32> to vector<32x8xf32>
    %528 = vector.shape_cast %527 : vector<32x8xf32> to vector<2x16x8xf32>
    %529 = arith.truncf %528 : vector<2x16x8xf32> to vector<2x16x8xbf16>
    "tpu.trace_start"() <{level = 10 : i32, message = "bqd,bkd->bqk"}> : () -> ()
    %cst_175 = arith.constant dense<0.000000e+00> : vector<2x8x16xf32>
    %530 = tpu.matmul %523, %526, %cst_175 {dimension_numbers = #tpu.dot_dimension_numbers<[2], [2], [1], [1], [0, 0, 0, 1, 1, 1], [0], [0]>} : vector<2x8x8xbf16>, vector<2x16x8xbf16>, vector<2x8x16xf32> -> vector<2x8x16xf32>
    "tpu.trace_stop"() : () -> ()
    %cst_176 = arith.constant dense<0xFF800000> : vector<2x8xf32>
    %531 = vector.multi_reduction <maximumf>, %530, %cst_176 [2] : vector<2x8x16xf32> to vector<2x8xf32>
    %532 = vector.shape_cast %531 : vector<2x8xf32> to vector<2x8x1xf32>
    %533 = vector.broadcast %532 : vector<2x8x1xf32> to vector<2x8x16xf32>
    %534 = arith.subf %530, %533 : vector<2x8x16xf32>
    %535 = math.exp %534 : vector<2x8x16xf32>
    %cst_177 = arith.constant dense<0.000000e+00> : vector<2x8xf32>
    %536 = vector.multi_reduction <add>, %535, %cst_177 [2] : vector<2x8x16xf32> to vector<2x8xf32>
    %537 = vector.shape_cast %536 : vector<2x8xf32> to vector<2x8x1xf32>
    %538 = tpu.reciprocal %537 {approx = true} : vector<2x8x1xf32> -> vector<2x8x1xf32>
    %539 = vector.broadcast %538 : vector<2x8x1xf32> to vector<2x8x16xf32>
    %540 = arith.mulf %535, %539 : vector<2x8x16xf32>
    %541 = arith.truncf %540 : vector<2x8x16xf32> to vector<2x8x16xbf16>
    "tpu.trace_start"() <{level = 10 : i32, message = "bqk,bkd->bqd"}> : () -> ()
    %cst_178 = arith.constant dense<0.000000e+00> : vector<2x8x8xf32>
    %542 = tpu.matmul %541, %529, %cst_178 {dimension_numbers = #tpu.dot_dimension_numbers<[2], [1], [1], [2], [0, 0, 0, 1, 1, 2], [0], [0]>} : vector<2x8x16xbf16>, vector<2x16x8xbf16>, vector<2x8x8xf32> -> vector<2x8x8xf32>
    "tpu.trace_stop"() : () -> ()
    %543 = vector.shape_cast %542 : vector<2x8x8xf32> to vector<16x8xf32>
    %544 = vector.extract_strided_slice %507 {offsets = [0, 8], sizes = [16, 8], strides = [1, 1]} : vector<16x32xf32> to vector<16x8xf32>
    %545 = vector.shape_cast %544 : vector<16x8xf32> to vector<2x8x8xf32>
    %546 = arith.truncf %545 : vector<2x8x8xf32> to vector<2x8x8xbf16>
    %547 = vector.extract_strided_slice %515 {offsets = [0, 8], sizes = [32, 8], strides = [1, 1]} : vector<32x32xf32> to vector<32x8xf32>
    %548 = vector.shape_cast %547 : vector<32x8xf32> to vector<2x16x8xf32>
    %549 = arith.truncf %548 : vector<2x16x8xf32> to vector<2x16x8xbf16>
    %550 = vector.extract_strided_slice %516 {offsets = [0, 8], sizes = [32, 8], strides = [1, 1]} : vector<32x32xf32> to vector<32x8xf32>
    %551 = vector.shape_cast %550 : vector<32x8xf32> to vector<2x16x8xf32>
    %552 = arith.truncf %551 : vector<2x16x8xf32> to vector<2x16x8xbf16>
    "tpu.trace_start"() <{level = 10 : i32, message = "bqd,bkd->bqk"}> : () -> ()
    %cst_179 = arith.constant dense<0.000000e+00> : vector<2x8x16xf32>
    %553 = tpu.matmul %546, %549, %cst_179 {dimension_numbers = #tpu.dot_dimension_numbers<[2], [2], [1], [1], [0, 0, 0, 1, 1, 1], [0], [0]>} : vector<2x8x8xbf16>, vector<2x16x8xbf16>, vector<2x8x16xf32> -> vector<2x8x16xf32>
    "tpu.trace_stop"() : () -> ()
    %cst_180 = arith.constant dense<0xFF800000> : vector<2x8xf32>
    %554 = vector.multi_reduction <maximumf>, %553, %cst_180 [2] : vector<2x8x16xf32> to vector<2x8xf32>
    %555 = vector.shape_cast %554 : vector<2x8xf32> to vector<2x8x1xf32>
    %556 = vector.broadcast %555 : vector<2x8x1xf32> to vector<2x8x16xf32>
    %557 = arith.subf %553, %556 : vector<2x8x16xf32>
    %558 = math.exp %557 : vector<2x8x16xf32>
    %cst_181 = arith.constant dense<0.000000e+00> : vector<2x8xf32>
    %559 = vector.multi_reduction <add>, %558, %cst_181 [2] : vector<2x8x16xf32> to vector<2x8xf32>
    %560 = vector.shape_cast %559 : vector<2x8xf32> to vector<2x8x1xf32>
    %561 = tpu.reciprocal %560 {approx = true} : vector<2x8x1xf32> -> vector<2x8x1xf32>
    %562 = vector.broadcast %561 : vector<2x8x1xf32> to vector<2x8x16xf32>
    %563 = arith.mulf %558, %562 : vector<2x8x16xf32>
    %564 = arith.truncf %563 : vector<2x8x16xf32> to vector<2x8x16xbf16>
    "tpu.trace_start"() <{level = 10 : i32, message = "bqk,bkd->bqd"}> : () -> ()
    %cst_182 = arith.constant dense<0.000000e+00> : vector<2x8x8xf32>
    %565 = tpu.matmul %564, %552, %cst_182 {dimension_numbers = #tpu.dot_dimension_numbers<[2], [1], [1], [2], [0, 0, 0, 1, 1, 2], [0], [0]>} : vector<2x8x16xbf16>, vector<2x16x8xbf16>, vector<2x8x8xf32> -> vector<2x8x8xf32>
    "tpu.trace_stop"() : () -> ()
    %566 = vector.shape_cast %565 : vector<2x8x8xf32> to vector<16x8xf32>
    %567 = vector.extract_strided_slice %507 {offsets = [0, 16], sizes = [16, 8], strides = [1, 1]} : vector<16x32xf32> to vector<16x8xf32>
    %568 = vector.shape_cast %567 : vector<16x8xf32> to vector<2x8x8xf32>
    %569 = arith.truncf %568 : vector<2x8x8xf32> to vector<2x8x8xbf16>
    %570 = vector.extract_strided_slice %515 {offsets = [0, 16], sizes = [32, 8], strides = [1, 1]} : vector<32x32xf32> to vector<32x8xf32>
    %571 = vector.shape_cast %570 : vector<32x8xf32> to vector<2x16x8xf32>
    %572 = arith.truncf %571 : vector<2x16x8xf32> to vector<2x16x8xbf16>
    %573 = vector.extract_strided_slice %516 {offsets = [0, 16], sizes = [32, 8], strides = [1, 1]} : vector<32x32xf32> to vector<32x8xf32>
    %574 = vector.shape_cast %573 : vector<32x8xf32> to vector<2x16x8xf32>
    %575 = arith.truncf %574 : vector<2x16x8xf32> to vector<2x16x8xbf16>
    "tpu.trace_start"() <{level = 10 : i32, message = "bqd,bkd->bqk"}> : () -> ()
    %cst_183 = arith.constant dense<0.000000e+00> : vector<2x8x16xf32>
    %576 = tpu.matmul %569, %572, %cst_183 {dimension_numbers = #tpu.dot_dimension_numbers<[2], [2], [1], [1], [0, 0, 0, 1, 1, 1], [0], [0]>} : vector<2x8x8xbf16>, vector<2x16x8xbf16>, vector<2x8x16xf32> -> vector<2x8x16xf32>
    "tpu.trace_stop"() : () -> ()
    %cst_184 = arith.constant dense<0xFF800000> : vector<2x8xf32>
    %577 = vector.multi_reduction <maximumf>, %576, %cst_184 [2] : vector<2x8x16xf32> to vector<2x8xf32>
    %578 = vector.shape_cast %577 : vector<2x8xf32> to vector<2x8x1xf32>
    %579 = vector.broadcast %578 : vector<2x8x1xf32> to vector<2x8x16xf32>
    %580 = arith.subf %576, %579 : vector<2x8x16xf32>
    %581 = math.exp %580 : vector<2x8x16xf32>
    %cst_185 = arith.constant dense<0.000000e+00> : vector<2x8xf32>
    %582 = vector.multi_reduction <add>, %581, %cst_185 [2] : vector<2x8x16xf32> to vector<2x8xf32>
    %583 = vector.shape_cast %582 : vector<2x8xf32> to vector<2x8x1xf32>
    %584 = tpu.reciprocal %583 {approx = true} : vector<2x8x1xf32> -> vector<2x8x1xf32>
    %585 = vector.broadcast %584 : vector<2x8x1xf32> to vector<2x8x16xf32>
    %586 = arith.mulf %581, %585 : vector<2x8x16xf32>
    %587 = arith.truncf %586 : vector<2x8x16xf32> to vector<2x8x16xbf16>
    "tpu.trace_start"() <{level = 10 : i32, message = "bqk,bkd->bqd"}> : () -> ()
    %cst_186 = arith.constant dense<0.000000e+00> : vector<2x8x8xf32>
    %588 = tpu.matmul %587, %575, %cst_186 {dimension_numbers = #tpu.dot_dimension_numbers<[2], [1], [1], [2], [0, 0, 0, 1, 1, 2], [0], [0]>} : vector<2x8x16xbf16>, vector<2x16x8xbf16>, vector<2x8x8xf32> -> vector<2x8x8xf32>
    "tpu.trace_stop"() : () -> ()
    %589 = vector.shape_cast %588 : vector<2x8x8xf32> to vector<16x8xf32>
    %590 = vector.extract_strided_slice %507 {offsets = [0, 24], sizes = [16, 8], strides = [1, 1]} : vector<16x32xf32> to vector<16x8xf32>
    %591 = vector.shape_cast %590 : vector<16x8xf32> to vector<2x8x8xf32>
    %592 = arith.truncf %591 : vector<2x8x8xf32> to vector<2x8x8xbf16>
    %593 = vector.extract_strided_slice %515 {offsets = [0, 24], sizes = [32, 8], strides = [1, 1]} : vector<32x32xf32> to vector<32x8xf32>
    %594 = vector.shape_cast %593 : vector<32x8xf32> to vector<2x16x8xf32>
    %595 = arith.truncf %594 : vector<2x16x8xf32> to vector<2x16x8xbf16>
    %596 = vector.extract_strided_slice %516 {offsets = [0, 24], sizes = [32, 8], strides = [1, 1]} : vector<32x32xf32> to vector<32x8xf32>
    %597 = vector.shape_cast %596 : vector<32x8xf32> to vector<2x16x8xf32>
    %598 = arith.truncf %597 : vector<2x16x8xf32> to vector<2x16x8xbf16>
    "tpu.trace_start"() <{level = 10 : i32, message = "bqd,bkd->bqk"}> : () -> ()
    %cst_187 = arith.constant dense<0.000000e+00> : vector<2x8x16xf32>
    %599 = tpu.matmul %592, %595, %cst_187 {dimension_numbers = #tpu.dot_dimension_numbers<[2], [2], [1], [1], [0, 0, 0, 1, 1, 1], [0], [0]>} : vector<2x8x8xbf16>, vector<2x16x8xbf16>, vector<2x8x16xf32> -> vector<2x8x16xf32>
    "tpu.trace_stop"() : () -> ()
    %cst_188 = arith.constant dense<0xFF800000> : vector<2x8xf32>
    %600 = vector.multi_reduction <maximumf>, %599, %cst_188 [2] : vector<2x8x16xf32> to vector<2x8xf32>
    %601 = vector.shape_cast %600 : vector<2x8xf32> to vector<2x8x1xf32>
    %602 = vector.broadcast %601 : vector<2x8x1xf32> to vector<2x8x16xf32>
    %603 = arith.subf %599, %602 : vector<2x8x16xf32>
    %604 = math.exp %603 : vector<2x8x16xf32>
    %cst_189 = arith.constant dense<0.000000e+00> : vector<2x8xf32>
    %605 = vector.multi_reduction <add>, %604, %cst_189 [2] : vector<2x8x16xf32> to vector<2x8xf32>
    %606 = vector.shape_cast %605 : vector<2x8xf32> to vector<2x8x1xf32>
    %607 = tpu.reciprocal %606 {approx = true} : vector<2x8x1xf32> -> vector<2x8x1xf32>
    %608 = vector.broadcast %607 : vector<2x8x1xf32> to vector<2x8x16xf32>
    %609 = arith.mulf %604, %608 : vector<2x8x16xf32>
    %610 = arith.truncf %609 : vector<2x8x16xf32> to vector<2x8x16xbf16>
    "tpu.trace_start"() <{level = 10 : i32, message = "bqk,bkd->bqd"}> : () -> ()
    %cst_190 = arith.constant dense<0.000000e+00> : vector<2x8x8xf32>
    %611 = tpu.matmul %610, %598, %cst_190 {dimension_numbers = #tpu.dot_dimension_numbers<[2], [1], [1], [2], [0, 0, 0, 1, 1, 2], [0], [0]>} : vector<2x8x16xbf16>, vector<2x16x8xbf16>, vector<2x8x8xf32> -> vector<2x8x8xf32>
    "tpu.trace_stop"() : () -> ()
    %612 = vector.shape_cast %611 : vector<2x8x8xf32> to vector<16x8xf32>
    %613 = tpu.concatenate %543, %566, %589, %612 in 1 : vector<16x8xf32>, vector<16x8xf32>, vector<16x8xf32>, vector<16x8xf32> -> vector<16x32xf32>
    %614 = arith.truncf %613 : vector<16x32xf32> to vector<16x32xbf16>
    %cst_191 = arith.constant dense<0.000000e+00> : vector<16x32xf32>
    %615 = tpu.matmul %614, %518, %cst_191 {dimension_numbers = #tpu.dot_dimension_numbers<[1], [0], [0], [1], [0, 0, 1, 1], [], []>} : vector<16x32xbf16>, vector<32x32xbf16>, vector<16x32xf32> -> vector<16x32xf32>
    %616 = vector.broadcast %520 : vector<1x32xf32> to vector<16x32xf32>
    %617 = arith.addf %615, %616 : vector<16x32xf32>
    %618 = arith.addf %481, %617 : vector<16x32xf32>
    %cst_192 = arith.constant dense<0.000000e+00> : vector<16xf32>
    %619 = vector.multi_reduction <add>, %618, %cst_192 [1] : vector<16x32xf32> to vector<16xf32>
    %620 = vector.shape_cast %619 : vector<16xf32> to vector<16x1xf32>
    %cst_193 = arith.constant 3.200000e+01 : f32
    %621 = vector.broadcast %cst_193 : f32 to vector<16x1xf32>
    %622 = arith.divf %620, %621 : vector<16x1xf32>
    %623 = arith.mulf %618, %618 : vector<16x32xf32>
    %cst_194 = arith.constant dense<0.000000e+00> : vector<16xf32>
    %624 = vector.multi_reduction <add>, %623, %cst_194 [1] : vector<16x32xf32> to vector<16xf32>
    %625 = vector.shape_cast %624 : vector<16xf32> to vector<16x1xf32>
    %cst_195 = arith.constant 3.200000e+01 : f32
    %626 = vector.broadcast %cst_195 : f32 to vector<16x1xf32>
    %627 = arith.divf %625, %626 : vector<16x1xf32>
    %628 = arith.mulf %622, %622 : vector<16x1xf32>
    %629 = arith.subf %627, %628 : vector<16x1xf32>
    %630 = vector.broadcast %622 : vector<16x1xf32> to vector<16x32xf32>
    %631 = arith.subf %618, %630 : vector<16x32xf32>
    %cst_196 = arith.constant 9.99999974E-6 : f32
    %632 = vector.broadcast %cst_196 : f32 to vector<16x1xf32>
    %633 = arith.addf %629, %632 : vector<16x1xf32>
    %634 = math.rsqrt %633 : vector<16x1xf32>
    %635 = vector.broadcast %634 : vector<16x1xf32> to vector<16x32xf32>
    %636 = arith.mulf %631, %635 : vector<16x32xf32>
    %637 = arith.truncf %636 : vector<16x32xf32> to vector<16x32xbf16>
    %c0_197 = arith.constant 0 : index
    %c0_198 = arith.constant 0 : index
    %c0_199 = arith.constant 0 : index
    %638 = vector.load %arg21[%c0_197, %c0_198, %c0_199] : memref<2x32x128xbf16, #tpu.memory_space<vmem>>, vector<1x32x128xbf16>
    %639 = vector.shape_cast %638 : vector<1x32x128xbf16> to vector<32x128xbf16>
    %cst_200 = arith.constant dense<0.000000e+00> : vector<16x128xf32>
    %640 = tpu.matmul %637, %639, %cst_200 {dimension_numbers = #tpu.dot_dimension_numbers<[1], [0], [0], [1], [0, 0, 1, 1], [], []>} : vector<16x32xbf16>, vector<32x128xbf16>, vector<16x128xf32> -> vector<16x128xf32>
    %c0_201 = arith.constant 0 : index
    %c0_202 = arith.constant 0 : index
    %c0_203 = arith.constant 0 : index
    %641 = vector.load %arg22[%c0_201, %c0_202, %c0_203] : memref<2x1x128xf32, #tpu.memory_space<vmem>>, vector<1x1x128xf32>
    %642 = vector.shape_cast %641 : vector<1x1x128xf32> to vector<1x128xf32>
    %643 = vector.broadcast %642 : vector<1x128xf32> to vector<16x128xf32>
    %644 = arith.addf %640, %643 : vector<16x128xf32>
    %cst_204 = arith.constant 0.000000e+00 : f32
    %645 = vector.broadcast %cst_204 : f32 to vector<16x128xf32>
    %646 = arith.maximumf %644, %645 : vector<16x128xf32>
    %647 = arith.truncf %646 : vector<16x128xf32> to vector<16x128xbf16>
    %c0_205 = arith.constant 0 : index
    %c0_206 = arith.constant 0 : index
    %c0_207 = arith.constant 0 : index
    %648 = vector.load %arg23[%c0_205, %c0_206, %c0_207] : memref<2x128x32xbf16, #tpu.memory_space<vmem>>, vector<1x128x32xbf16>
    %649 = vector.shape_cast %648 : vector<1x128x32xbf16> to vector<128x32xbf16>
    %cst_208 = arith.constant dense<0.000000e+00> : vector<16x32xf32>
    %650 = tpu.matmul %647, %649, %cst_208 {dimension_numbers = #tpu.dot_dimension_numbers<[1], [0], [0], [1], [0, 0, 1, 1], [], []>} : vector<16x128xbf16>, vector<128x32xbf16>, vector<16x32xf32> -> vector<16x32xf32>
    %651 = arith.addf %618, %650 : vector<16x32xf32>
    %c0_209 = arith.constant 0 : index
    %c0_210 = arith.constant 0 : index
    %c0_211 = arith.constant 0 : index
    %652 = vector.load %arg24[%c0_209, %c0_210, %c0_211] : memref<2x1x32xf32, #tpu.memory_space<vmem>>, vector<1x1x32xf32>
    %653 = vector.shape_cast %652 : vector<1x1x32xf32> to vector<1x32xf32>
    %654 = vector.broadcast %653 : vector<1x32xf32> to vector<16x32xf32>
    %655 = arith.addf %651, %654 : vector<16x32xf32>
    %cst_212 = arith.constant dense<0.000000e+00> : vector<16xf32>
    %656 = vector.multi_reduction <add>, %655, %cst_212 [1] : vector<16x32xf32> to vector<16xf32>
    %657 = vector.shape_cast %656 : vector<16xf32> to vector<16x1xf32>
    %cst_213 = arith.constant 3.200000e+01 : f32
    %658 = vector.broadcast %cst_213 : f32 to vector<16x1xf32>
    %659 = arith.divf %657, %658 : vector<16x1xf32>
    %660 = arith.mulf %655, %655 : vector<16x32xf32>
    %cst_214 = arith.constant dense<0.000000e+00> : vector<16xf32>
    %661 = vector.multi_reduction <add>, %660, %cst_214 [1] : vector<16x32xf32> to vector<16xf32>
    %662 = vector.shape_cast %661 : vector<16xf32> to vector<16x1xf32>
    %cst_215 = arith.constant 3.200000e+01 : f32
    %663 = vector.broadcast %cst_215 : f32 to vector<16x1xf32>
    %664 = arith.divf %662, %663 : vector<16x1xf32>
    %665 = arith.mulf %659, %659 : vector<16x1xf32>
    %666 = arith.subf %664, %665 : vector<16x1xf32>
    %667 = vector.broadcast %659 : vector<16x1xf32> to vector<16x32xf32>
    %668 = arith.subf %655, %667 : vector<16x32xf32>
    %cst_216 = arith.constant 9.99999974E-6 : f32
    %669 = vector.broadcast %cst_216 : f32 to vector<16x1xf32>
    %670 = arith.addf %666, %669 : vector<16x1xf32>
    %671 = math.rsqrt %670 : vector<16x1xf32>
    %672 = vector.broadcast %671 : vector<16x1xf32> to vector<16x32xf32>
    %673 = arith.mulf %668, %672 : vector<16x32xf32>
    %674 = arith.truncf %673 : vector<16x32xf32> to vector<16x32xbf16>
    %c1_217 = arith.constant 1 : index
    %c0_218 = arith.constant 0 : index
    %c0_219 = arith.constant 0 : index
    %675 = vector.load %arg11[%c1_217, %c0_218, %c0_219] : memref<2x32x96xbf16, #tpu.memory_space<vmem>>, vector<1x32x96xbf16>
    %676 = vector.shape_cast %675 : vector<1x32x96xbf16> to vector<32x96xbf16>
    %cst_220 = arith.constant dense<0.000000e+00> : vector<16x96xf32>
    %677 = tpu.matmul %674, %676, %cst_220 {dimension_numbers = #tpu.dot_dimension_numbers<[1], [0], [0], [1], [0, 0, 1, 1], [], []>} : vector<16x32xbf16>, vector<32x96xbf16>, vector<16x96xf32> -> vector<16x96xf32>
    %c1_221 = arith.constant 1 : index
    %c0_222 = arith.constant 0 : index
    %c0_223 = arith.constant 0 : index
    %678 = vector.load %arg12[%c1_221, %c0_222, %c0_223] : memref<2x1x96xf32, #tpu.memory_space<vmem>>, vector<1x1x96xf32>
    %679 = vector.shape_cast %678 : vector<1x1x96xf32> to vector<1x96xf32>
    %680 = vector.broadcast %679 : vector<1x96xf32> to vector<16x96xf32>
    %681 = arith.addf %677, %680 : vector<16x96xf32>
    %682 = vector.extract_strided_slice %681 {offsets = [0, 0], sizes = [16, 32], strides = [1, 1]} : vector<16x96xf32> to vector<16x32xf32>
    %683 = vector.extract_strided_slice %681 {offsets = [0, 32], sizes = [16, 32], strides = [1, 1]} : vector<16x96xf32> to vector<16x32xf32>
    %684 = vector.extract_strided_slice %681 {offsets = [0, 64], sizes = [16, 32], strides = [1, 1]} : vector<16x96xf32> to vector<16x32xf32>
    %c1_224 = arith.constant 1 : index
    %c0_225 = arith.constant 0 : index
    %c0_226 = arith.constant 0 : index
    %685 = vector.load %arg13[%c1_224, %c0_225, %c0_226] : memref<2x32x32xbf16, #tpu.memory_space<vmem>>, vector<1x32x32xbf16>
    %686 = vector.shape_cast %685 : vector<1x32x32xbf16> to vector<32x32xbf16>
    %c1_227 = arith.constant 1 : index
    %c0_228 = arith.constant 0 : index
    %c0_229 = arith.constant 0 : index
    %687 = vector.load %arg14[%c1_227, %c0_228, %c0_229] : memref<2x1x32xf32, #tpu.memory_space<vmem>>, vector<1x1x32xf32>
    %688 = vector.shape_cast %687 : vector<1x1x32xf32> to vector<1x32xf32>
    %689 = tpu.iota {dimensions = array<i32: 1>} : vector<2x8x8xi32>
    %690 = tpu.iota {dimensions = array<i32: 2>} : vector<2x8x8xi32>
    %691 = arith.cmpi sgt, %690, %689 : vector<2x8x8xi32>
    %cst_230 = arith.constant -1.000000e+06 : f32
    %cst_231 = arith.constant 0.000000e+00 : f32
    %692 = vector.broadcast %cst_230 : f32 to vector<2x8x8xf32>
    %693 = vector.broadcast %cst_231 : f32 to vector<2x8x8xf32>
    %694 = arith.select %691, %692, %693 : vector<2x8x8xi1>, vector<2x8x8xf32>
    %695 = vector.extract_strided_slice %682 {offsets = [0, 0], sizes = [16, 8], strides = [1, 1]} : vector<16x32xf32> to vector<16x8xf32>
    %696 = vector.shape_cast %695 : vector<16x8xf32> to vector<2x8x8xf32>
    %697 = arith.truncf %696 : vector<2x8x8xf32> to vector<2x8x8xbf16>
    %698 = vector.extract_strided_slice %683 {offsets = [0, 0], sizes = [16, 8], strides = [1, 1]} : vector<16x32xf32> to vector<16x8xf32>
    %699 = vector.shape_cast %698 : vector<16x8xf32> to vector<2x8x8xf32>
    %700 = arith.truncf %699 : vector<2x8x8xf32> to vector<2x8x8xbf16>
    %701 = vector.extract_strided_slice %684 {offsets = [0, 0], sizes = [16, 8], strides = [1, 1]} : vector<16x32xf32> to vector<16x8xf32>
    %702 = vector.shape_cast %701 : vector<16x8xf32> to vector<2x8x8xf32>
    %703 = arith.truncf %702 : vector<2x8x8xf32> to vector<2x8x8xbf16>
    "tpu.trace_start"() <{level = 10 : i32, message = "bqd,bkd->bqk"}> : () -> ()
    %cst_232 = arith.constant dense<0.000000e+00> : vector<2x8x8xf32>
    %704 = tpu.matmul %697, %700, %cst_232 {dimension_numbers = #tpu.dot_dimension_numbers<[2], [2], [1], [1], [0, 0, 0, 1, 1, 1], [0], [0]>} : vector<2x8x8xbf16>, vector<2x8x8xbf16>, vector<2x8x8xf32> -> vector<2x8x8xf32>
    "tpu.trace_stop"() : () -> ()
    %705 = arith.addf %704, %694 : vector<2x8x8xf32>
    %cst_233 = arith.constant dense<0xFF800000> : vector<2x8xf32>
    %706 = vector.multi_reduction <maximumf>, %705, %cst_233 [2] : vector<2x8x8xf32> to vector<2x8xf32>
    %707 = vector.shape_cast %706 : vector<2x8xf32> to vector<2x8x1xf32>
    %708 = vector.broadcast %707 : vector<2x8x1xf32> to vector<2x8x8xf32>
    %709 = arith.subf %705, %708 : vector<2x8x8xf32>
    %710 = math.exp %709 : vector<2x8x8xf32>
    %cst_234 = arith.constant dense<0.000000e+00> : vector<2x8xf32>
    %711 = vector.multi_reduction <add>, %710, %cst_234 [2] : vector<2x8x8xf32> to vector<2x8xf32>
    %712 = vector.shape_cast %711 : vector<2x8xf32> to vector<2x8x1xf32>
    %713 = tpu.reciprocal %712 {approx = true} : vector<2x8x1xf32> -> vector<2x8x1xf32>
    %714 = vector.broadcast %713 : vector<2x8x1xf32> to vector<2x8x8xf32>
    %715 = arith.mulf %710, %714 : vector<2x8x8xf32>
    %716 = arith.truncf %715 : vector<2x8x8xf32> to vector<2x8x8xbf16>
    "tpu.trace_start"() <{level = 10 : i32, message = "bqk,bkd->bqd"}> : () -> ()
    %cst_235 = arith.constant dense<0.000000e+00> : vector<2x8x8xf32>
    %717 = tpu.matmul %716, %703, %cst_235 {dimension_numbers = #tpu.dot_dimension_numbers<[2], [1], [1], [2], [0, 0, 0, 1, 1, 2], [0], [0]>} : vector<2x8x8xbf16>, vector<2x8x8xbf16>, vector<2x8x8xf32> -> vector<2x8x8xf32>
    "tpu.trace_stop"() : () -> ()
    %718 = vector.shape_cast %717 : vector<2x8x8xf32> to vector<16x8xf32>
    %719 = vector.extract_strided_slice %682 {offsets = [0, 8], sizes = [16, 8], strides = [1, 1]} : vector<16x32xf32> to vector<16x8xf32>
    %720 = vector.shape_cast %719 : vector<16x8xf32> to vector<2x8x8xf32>
    %721 = arith.truncf %720 : vector<2x8x8xf32> to vector<2x8x8xbf16>
    %722 = vector.extract_strided_slice %683 {offsets = [0, 8], sizes = [16, 8], strides = [1, 1]} : vector<16x32xf32> to vector<16x8xf32>
    %723 = vector.shape_cast %722 : vector<16x8xf32> to vector<2x8x8xf32>
    %724 = arith.truncf %723 : vector<2x8x8xf32> to vector<2x8x8xbf16>
    %725 = vector.extract_strided_slice %684 {offsets = [0, 8], sizes = [16, 8], strides = [1, 1]} : vector<16x32xf32> to vector<16x8xf32>
    %726 = vector.shape_cast %725 : vector<16x8xf32> to vector<2x8x8xf32>
    %727 = arith.truncf %726 : vector<2x8x8xf32> to vector<2x8x8xbf16>
    "tpu.trace_start"() <{level = 10 : i32, message = "bqd,bkd->bqk"}> : () -> ()
    %cst_236 = arith.constant dense<0.000000e+00> : vector<2x8x8xf32>
    %728 = tpu.matmul %721, %724, %cst_236 {dimension_numbers = #tpu.dot_dimension_numbers<[2], [2], [1], [1], [0, 0, 0, 1, 1, 1], [0], [0]>} : vector<2x8x8xbf16>, vector<2x8x8xbf16>, vector<2x8x8xf32> -> vector<2x8x8xf32>
    "tpu.trace_stop"() : () -> ()
    %729 = arith.addf %728, %694 : vector<2x8x8xf32>
    %cst_237 = arith.constant dense<0xFF800000> : vector<2x8xf32>
    %730 = vector.multi_reduction <maximumf>, %729, %cst_237 [2] : vector<2x8x8xf32> to vector<2x8xf32>
    %731 = vector.shape_cast %730 : vector<2x8xf32> to vector<2x8x1xf32>
    %732 = vector.broadcast %731 : vector<2x8x1xf32> to vector<2x8x8xf32>
    %733 = arith.subf %729, %732 : vector<2x8x8xf32>
    %734 = math.exp %733 : vector<2x8x8xf32>
    %cst_238 = arith.constant dense<0.000000e+00> : vector<2x8xf32>
    %735 = vector.multi_reduction <add>, %734, %cst_238 [2] : vector<2x8x8xf32> to vector<2x8xf32>
    %736 = vector.shape_cast %735 : vector<2x8xf32> to vector<2x8x1xf32>
    %737 = tpu.reciprocal %736 {approx = true} : vector<2x8x1xf32> -> vector<2x8x1xf32>
    %738 = vector.broadcast %737 : vector<2x8x1xf32> to vector<2x8x8xf32>
    %739 = arith.mulf %734, %738 : vector<2x8x8xf32>
    %740 = arith.truncf %739 : vector<2x8x8xf32> to vector<2x8x8xbf16>
    "tpu.trace_start"() <{level = 10 : i32, message = "bqk,bkd->bqd"}> : () -> ()
    %cst_239 = arith.constant dense<0.000000e+00> : vector<2x8x8xf32>
    %741 = tpu.matmul %740, %727, %cst_239 {dimension_numbers = #tpu.dot_dimension_numbers<[2], [1], [1], [2], [0, 0, 0, 1, 1, 2], [0], [0]>} : vector<2x8x8xbf16>, vector<2x8x8xbf16>, vector<2x8x8xf32> -> vector<2x8x8xf32>
    "tpu.trace_stop"() : () -> ()
    %742 = vector.shape_cast %741 : vector<2x8x8xf32> to vector<16x8xf32>
    %743 = vector.extract_strided_slice %682 {offsets = [0, 16], sizes = [16, 8], strides = [1, 1]} : vector<16x32xf32> to vector<16x8xf32>
    %744 = vector.shape_cast %743 : vector<16x8xf32> to vector<2x8x8xf32>
    %745 = arith.truncf %744 : vector<2x8x8xf32> to vector<2x8x8xbf16>
    %746 = vector.extract_strided_slice %683 {offsets = [0, 16], sizes = [16, 8], strides = [1, 1]} : vector<16x32xf32> to vector<16x8xf32>
    %747 = vector.shape_cast %746 : vector<16x8xf32> to vector<2x8x8xf32>
    %748 = arith.truncf %747 : vector<2x8x8xf32> to vector<2x8x8xbf16>
    %749 = vector.extract_strided_slice %684 {offsets = [0, 16], sizes = [16, 8], strides = [1, 1]} : vector<16x32xf32> to vector<16x8xf32>
    %750 = vector.shape_cast %749 : vector<16x8xf32> to vector<2x8x8xf32>
    %751 = arith.truncf %750 : vector<2x8x8xf32> to vector<2x8x8xbf16>
    "tpu.trace_start"() <{level = 10 : i32, message = "bqd,bkd->bqk"}> : () -> ()
    %cst_240 = arith.constant dense<0.000000e+00> : vector<2x8x8xf32>
    %752 = tpu.matmul %745, %748, %cst_240 {dimension_numbers = #tpu.dot_dimension_numbers<[2], [2], [1], [1], [0, 0, 0, 1, 1, 1], [0], [0]>} : vector<2x8x8xbf16>, vector<2x8x8xbf16>, vector<2x8x8xf32> -> vector<2x8x8xf32>
    "tpu.trace_stop"() : () -> ()
    %753 = arith.addf %752, %694 : vector<2x8x8xf32>
    %cst_241 = arith.constant dense<0xFF800000> : vector<2x8xf32>
    %754 = vector.multi_reduction <maximumf>, %753, %cst_241 [2] : vector<2x8x8xf32> to vector<2x8xf32>
    %755 = vector.shape_cast %754 : vector<2x8xf32> to vector<2x8x1xf32>
    %756 = vector.broadcast %755 : vector<2x8x1xf32> to vector<2x8x8xf32>
    %757 = arith.subf %753, %756 : vector<2x8x8xf32>
    %758 = math.exp %757 : vector<2x8x8xf32>
    %cst_242 = arith.constant dense<0.000000e+00> : vector<2x8xf32>
    %759 = vector.multi_reduction <add>, %758, %cst_242 [2] : vector<2x8x8xf32> to vector<2x8xf32>
    %760 = vector.shape_cast %759 : vector<2x8xf32> to vector<2x8x1xf32>
    %761 = tpu.reciprocal %760 {approx = true} : vector<2x8x1xf32> -> vector<2x8x1xf32>
    %762 = vector.broadcast %761 : vector<2x8x1xf32> to vector<2x8x8xf32>
    %763 = arith.mulf %758, %762 : vector<2x8x8xf32>
    %764 = arith.truncf %763 : vector<2x8x8xf32> to vector<2x8x8xbf16>
    "tpu.trace_start"() <{level = 10 : i32, message = "bqk,bkd->bqd"}> : () -> ()
    %cst_243 = arith.constant dense<0.000000e+00> : vector<2x8x8xf32>
    %765 = tpu.matmul %764, %751, %cst_243 {dimension_numbers = #tpu.dot_dimension_numbers<[2], [1], [1], [2], [0, 0, 0, 1, 1, 2], [0], [0]>} : vector<2x8x8xbf16>, vector<2x8x8xbf16>, vector<2x8x8xf32> -> vector<2x8x8xf32>
    "tpu.trace_stop"() : () -> ()
    %766 = vector.shape_cast %765 : vector<2x8x8xf32> to vector<16x8xf32>
    %767 = vector.extract_strided_slice %682 {offsets = [0, 24], sizes = [16, 8], strides = [1, 1]} : vector<16x32xf32> to vector<16x8xf32>
    %768 = vector.shape_cast %767 : vector<16x8xf32> to vector<2x8x8xf32>
    %769 = arith.truncf %768 : vector<2x8x8xf32> to vector<2x8x8xbf16>
    %770 = vector.extract_strided_slice %683 {offsets = [0, 24], sizes = [16, 8], strides = [1, 1]} : vector<16x32xf32> to vector<16x8xf32>
    %771 = vector.shape_cast %770 : vector<16x8xf32> to vector<2x8x8xf32>
    %772 = arith.truncf %771 : vector<2x8x8xf32> to vector<2x8x8xbf16>
    %773 = vector.extract_strided_slice %684 {offsets = [0, 24], sizes = [16, 8], strides = [1, 1]} : vector<16x32xf32> to vector<16x8xf32>
    %774 = vector.shape_cast %773 : vector<16x8xf32> to vector<2x8x8xf32>
    %775 = arith.truncf %774 : vector<2x8x8xf32> to vector<2x8x8xbf16>
    "tpu.trace_start"() <{level = 10 : i32, message = "bqd,bkd->bqk"}> : () -> ()
    %cst_244 = arith.constant dense<0.000000e+00> : vector<2x8x8xf32>
    %776 = tpu.matmul %769, %772, %cst_244 {dimension_numbers = #tpu.dot_dimension_numbers<[2], [2], [1], [1], [0, 0, 0, 1, 1, 1], [0], [0]>} : vector<2x8x8xbf16>, vector<2x8x8xbf16>, vector<2x8x8xf32> -> vector<2x8x8xf32>
    "tpu.trace_stop"() : () -> ()
    %777 = arith.addf %776, %694 : vector<2x8x8xf32>
    %cst_245 = arith.constant dense<0xFF800000> : vector<2x8xf32>
    %778 = vector.multi_reduction <maximumf>, %777, %cst_245 [2] : vector<2x8x8xf32> to vector<2x8xf32>
    %779 = vector.shape_cast %778 : vector<2x8xf32> to vector<2x8x1xf32>
    %780 = vector.broadcast %779 : vector<2x8x1xf32> to vector<2x8x8xf32>
    %781 = arith.subf %777, %780 : vector<2x8x8xf32>
    %782 = math.exp %781 : vector<2x8x8xf32>
    %cst_246 = arith.constant dense<0.000000e+00> : vector<2x8xf32>
    %783 = vector.multi_reduction <add>, %782, %cst_246 [2] : vector<2x8x8xf32> to vector<2x8xf32>
    %784 = vector.shape_cast %783 : vector<2x8xf32> to vector<2x8x1xf32>
    %785 = tpu.reciprocal %784 {approx = true} : vector<2x8x1xf32> -> vector<2x8x1xf32>
    %786 = vector.broadcast %785 : vector<2x8x1xf32> to vector<2x8x8xf32>
    %787 = arith.mulf %782, %786 : vector<2x8x8xf32>
    %788 = arith.truncf %787 : vector<2x8x8xf32> to vector<2x8x8xbf16>
    "tpu.trace_start"() <{level = 10 : i32, message = "bqk,bkd->bqd"}> : () -> ()
    %cst_247 = arith.constant dense<0.000000e+00> : vector<2x8x8xf32>
    %789 = tpu.matmul %788, %775, %cst_247 {dimension_numbers = #tpu.dot_dimension_numbers<[2], [1], [1], [2], [0, 0, 0, 1, 1, 2], [0], [0]>} : vector<2x8x8xbf16>, vector<2x8x8xbf16>, vector<2x8x8xf32> -> vector<2x8x8xf32>
    "tpu.trace_stop"() : () -> ()
    %790 = vector.shape_cast %789 : vector<2x8x8xf32> to vector<16x8xf32>
    %791 = tpu.concatenate %718, %742, %766, %790 in 1 : vector<16x8xf32>, vector<16x8xf32>, vector<16x8xf32>, vector<16x8xf32> -> vector<16x32xf32>
    %792 = arith.truncf %791 : vector<16x32xf32> to vector<16x32xbf16>
    %cst_248 = arith.constant dense<0.000000e+00> : vector<16x32xf32>
    %793 = tpu.matmul %792, %686, %cst_248 {dimension_numbers = #tpu.dot_dimension_numbers<[1], [0], [0], [1], [0, 0, 1, 1], [], []>} : vector<16x32xbf16>, vector<32x32xbf16>, vector<16x32xf32> -> vector<16x32xf32>
    %794 = vector.broadcast %688 : vector<1x32xf32> to vector<16x32xf32>
    %795 = arith.addf %793, %794 : vector<16x32xf32>
    %796 = arith.addf %655, %795 : vector<16x32xf32>
    %cst_249 = arith.constant dense<0.000000e+00> : vector<16xf32>
    %797 = vector.multi_reduction <add>, %796, %cst_249 [1] : vector<16x32xf32> to vector<16xf32>
    %798 = vector.shape_cast %797 : vector<16xf32> to vector<16x1xf32>
    %cst_250 = arith.constant 3.200000e+01 : f32
    %799 = vector.broadcast %cst_250 : f32 to vector<16x1xf32>
    %800 = arith.divf %798, %799 : vector<16x1xf32>
    %801 = arith.mulf %796, %796 : vector<16x32xf32>
    %cst_251 = arith.constant dense<0.000000e+00> : vector<16xf32>
    %802 = vector.multi_reduction <add>, %801, %cst_251 [1] : vector<16x32xf32> to vector<16xf32>
    %803 = vector.shape_cast %802 : vector<16xf32> to vector<16x1xf32>
    %cst_252 = arith.constant 3.200000e+01 : f32
    %804 = vector.broadcast %cst_252 : f32 to vector<16x1xf32>
    %805 = arith.divf %803, %804 : vector<16x1xf32>
    %806 = arith.mulf %800, %800 : vector<16x1xf32>
    %807 = arith.subf %805, %806 : vector<16x1xf32>
    %808 = vector.broadcast %800 : vector<16x1xf32> to vector<16x32xf32>
    %809 = arith.subf %796, %808 : vector<16x32xf32>
    %cst_253 = arith.constant 9.99999974E-6 : f32
    %810 = vector.broadcast %cst_253 : f32 to vector<16x1xf32>
    %811 = arith.addf %807, %810 : vector<16x1xf32>
    %812 = math.rsqrt %811 : vector<16x1xf32>
    %813 = vector.broadcast %812 : vector<16x1xf32> to vector<16x32xf32>
    %814 = arith.mulf %809, %813 : vector<16x32xf32>
    %815 = arith.truncf %814 : vector<16x32xf32> to vector<16x32xbf16>
    %c1_254 = arith.constant 1 : index
    %c0_255 = arith.constant 0 : index
    %c0_256 = arith.constant 0 : index
    %816 = vector.load %arg15[%c1_254, %c0_255, %c0_256] : memref<2x32x32xbf16, #tpu.memory_space<vmem>>, vector<1x32x32xbf16>
    %817 = vector.shape_cast %816 : vector<1x32x32xbf16> to vector<32x32xbf16>
    %cst_257 = arith.constant dense<0.000000e+00> : vector<16x32xf32>
    %818 = tpu.matmul %815, %817, %cst_257 {dimension_numbers = #tpu.dot_dimension_numbers<[1], [0], [0], [1], [0, 0, 1, 1], [], []>} : vector<16x32xbf16>, vector<32x32xbf16>, vector<16x32xf32> -> vector<16x32xf32>
    %c1_258 = arith.constant 1 : index
    %c0_259 = arith.constant 0 : index
    %c0_260 = arith.constant 0 : index
    %819 = vector.load %arg16[%c1_258, %c0_259, %c0_260] : memref<2x1x32xf32, #tpu.memory_space<vmem>>, vector<1x1x32xf32>
    %820 = vector.shape_cast %819 : vector<1x1x32xf32> to vector<1x32xf32>
    %821 = vector.broadcast %820 : vector<1x32xf32> to vector<16x32xf32>
    %822 = arith.addf %818, %821 : vector<16x32xf32>
    %c1_261 = arith.constant 1 : index
    %c0_262 = arith.constant 0 : index
    %c0_263 = arith.constant 0 : index
    %823 = vector.load %arg17[%c1_261, %c0_262, %c0_263] : memref<2x32x64xbf16, #tpu.memory_space<vmem>>, vector<1x32x64xbf16>
    %824 = vector.shape_cast %823 : vector<1x32x64xbf16> to vector<32x64xbf16>
    %cst_264 = arith.constant dense<0.000000e+00> : vector<32x64xf32>
    %825 = tpu.matmul %338, %824, %cst_264 {dimension_numbers = #tpu.dot_dimension_numbers<[1], [0], [0], [1], [0, 0, 1, 1], [], []>} : vector<32x32xbf16>, vector<32x64xbf16>, vector<32x64xf32> -> vector<32x64xf32>
    %c1_265 = arith.constant 1 : index
    %c0_266 = arith.constant 0 : index
    %c0_267 = arith.constant 0 : index
    %826 = vector.load %arg18[%c1_265, %c0_266, %c0_267] : memref<2x1x64xf32, #tpu.memory_space<vmem>>, vector<1x1x64xf32>
    %827 = vector.shape_cast %826 : vector<1x1x64xf32> to vector<1x64xf32>
    %828 = vector.broadcast %827 : vector<1x64xf32> to vector<32x64xf32>
    %829 = arith.addf %825, %828 : vector<32x64xf32>
    %830 = vector.extract_strided_slice %829 {offsets = [0, 0], sizes = [32, 32], strides = [1, 1]} : vector<32x64xf32> to vector<32x32xf32>
    %831 = vector.extract_strided_slice %829 {offsets = [0, 32], sizes = [32, 32], strides = [1, 1]} : vector<32x64xf32> to vector<32x32xf32>
    %c1_268 = arith.constant 1 : index
    %c0_269 = arith.constant 0 : index
    %c0_270 = arith.constant 0 : index
    %832 = vector.load %arg19[%c1_268, %c0_269, %c0_270] : memref<2x32x32xbf16, #tpu.memory_space<vmem>>, vector<1x32x32xbf16>
    %833 = vector.shape_cast %832 : vector<1x32x32xbf16> to vector<32x32xbf16>
    %c1_271 = arith.constant 1 : index
    %c0_272 = arith.constant 0 : index
    %c0_273 = arith.constant 0 : index
    %834 = vector.load %arg20[%c1_271, %c0_272, %c0_273] : memref<2x1x32xf32, #tpu.memory_space<vmem>>, vector<1x1x32xf32>
    %835 = vector.shape_cast %834 : vector<1x1x32xf32> to vector<1x32xf32>
    %836 = vector.extract_strided_slice %822 {offsets = [0, 0], sizes = [16, 8], strides = [1, 1]} : vector<16x32xf32> to vector<16x8xf32>
    %837 = vector.shape_cast %836 : vector<16x8xf32> to vector<2x8x8xf32>
    %838 = arith.truncf %837 : vector<2x8x8xf32> to vector<2x8x8xbf16>
    %839 = vector.extract_strided_slice %830 {offsets = [0, 0], sizes = [32, 8], strides = [1, 1]} : vector<32x32xf32> to vector<32x8xf32>
    %840 = vector.shape_cast %839 : vector<32x8xf32> to vector<2x16x8xf32>
    %841 = arith.truncf %840 : vector<2x16x8xf32> to vector<2x16x8xbf16>
    %842 = vector.extract_strided_slice %831 {offsets = [0, 0], sizes = [32, 8], strides = [1, 1]} : vector<32x32xf32> to vector<32x8xf32>
    %843 = vector.shape_cast %842 : vector<32x8xf32> to vector<2x16x8xf32>
    %844 = arith.truncf %843 : vector<2x16x8xf32> to vector<2x16x8xbf16>
    "tpu.trace_start"() <{level = 10 : i32, message = "bqd,bkd->bqk"}> : () -> ()
    %cst_274 = arith.constant dense<0.000000e+00> : vector<2x8x16xf32>
    %845 = tpu.matmul %838, %841, %cst_274 {dimension_numbers = #tpu.dot_dimension_numbers<[2], [2], [1], [1], [0, 0, 0, 1, 1, 1], [0], [0]>} : vector<2x8x8xbf16>, vector<2x16x8xbf16>, vector<2x8x16xf32> -> vector<2x8x16xf32>
    "tpu.trace_stop"() : () -> ()
    %cst_275 = arith.constant dense<0xFF800000> : vector<2x8xf32>
    %846 = vector.multi_reduction <maximumf>, %845, %cst_275 [2] : vector<2x8x16xf32> to vector<2x8xf32>
    %847 = vector.shape_cast %846 : vector<2x8xf32> to vector<2x8x1xf32>
    %848 = vector.broadcast %847 : vector<2x8x1xf32> to vector<2x8x16xf32>
    %849 = arith.subf %845, %848 : vector<2x8x16xf32>
    %850 = math.exp %849 : vector<2x8x16xf32>
    %cst_276 = arith.constant dense<0.000000e+00> : vector<2x8xf32>
    %851 = vector.multi_reduction <add>, %850, %cst_276 [2] : vector<2x8x16xf32> to vector<2x8xf32>
    %852 = vector.shape_cast %851 : vector<2x8xf32> to vector<2x8x1xf32>
    %853 = tpu.reciprocal %852 {approx = true} : vector<2x8x1xf32> -> vector<2x8x1xf32>
    %854 = vector.broadcast %853 : vector<2x8x1xf32> to vector<2x8x16xf32>
    %855 = arith.mulf %850, %854 : vector<2x8x16xf32>
    %856 = arith.truncf %855 : vector<2x8x16xf32> to vector<2x8x16xbf16>
    "tpu.trace_start"() <{level = 10 : i32, message = "bqk,bkd->bqd"}> : () -> ()
    %cst_277 = arith.constant dense<0.000000e+00> : vector<2x8x8xf32>
    %857 = tpu.matmul %856, %844, %cst_277 {dimension_numbers = #tpu.dot_dimension_numbers<[2], [1], [1], [2], [0, 0, 0, 1, 1, 2], [0], [0]>} : vector<2x8x16xbf16>, vector<2x16x8xbf16>, vector<2x8x8xf32> -> vector<2x8x8xf32>
    "tpu.trace_stop"() : () -> ()
    %858 = vector.shape_cast %857 : vector<2x8x8xf32> to vector<16x8xf32>
    %859 = vector.extract_strided_slice %822 {offsets = [0, 8], sizes = [16, 8], strides = [1, 1]} : vector<16x32xf32> to vector<16x8xf32>
    %860 = vector.shape_cast %859 : vector<16x8xf32> to vector<2x8x8xf32>
    %861 = arith.truncf %860 : vector<2x8x8xf32> to vector<2x8x8xbf16>
    %862 = vector.extract_strided_slice %830 {offsets = [0, 8], sizes = [32, 8], strides = [1, 1]} : vector<32x32xf32> to vector<32x8xf32>
    %863 = vector.shape_cast %862 : vector<32x8xf32> to vector<2x16x8xf32>
    %864 = arith.truncf %863 : vector<2x16x8xf32> to vector<2x16x8xbf16>
    %865 = vector.extract_strided_slice %831 {offsets = [0, 8], sizes = [32, 8], strides = [1, 1]} : vector<32x32xf32> to vector<32x8xf32>
    %866 = vector.shape_cast %865 : vector<32x8xf32> to vector<2x16x8xf32>
    %867 = arith.truncf %866 : vector<2x16x8xf32> to vector<2x16x8xbf16>
    "tpu.trace_start"() <{level = 10 : i32, message = "bqd,bkd->bqk"}> : () -> ()
    %cst_278 = arith.constant dense<0.000000e+00> : vector<2x8x16xf32>
    %868 = tpu.matmul %861, %864, %cst_278 {dimension_numbers = #tpu.dot_dimension_numbers<[2], [2], [1], [1], [0, 0, 0, 1, 1, 1], [0], [0]>} : vector<2x8x8xbf16>, vector<2x16x8xbf16>, vector<2x8x16xf32> -> vector<2x8x16xf32>
    "tpu.trace_stop"() : () -> ()
    %cst_279 = arith.constant dense<0xFF800000> : vector<2x8xf32>
    %869 = vector.multi_reduction <maximumf>, %868, %cst_279 [2] : vector<2x8x16xf32> to vector<2x8xf32>
    %870 = vector.shape_cast %869 : vector<2x8xf32> to vector<2x8x1xf32>
    %871 = vector.broadcast %870 : vector<2x8x1xf32> to vector<2x8x16xf32>
    %872 = arith.subf %868, %871 : vector<2x8x16xf32>
    %873 = math.exp %872 : vector<2x8x16xf32>
    %cst_280 = arith.constant dense<0.000000e+00> : vector<2x8xf32>
    %874 = vector.multi_reduction <add>, %873, %cst_280 [2] : vector<2x8x16xf32> to vector<2x8xf32>
    %875 = vector.shape_cast %874 : vector<2x8xf32> to vector<2x8x1xf32>
    %876 = tpu.reciprocal %875 {approx = true} : vector<2x8x1xf32> -> vector<2x8x1xf32>
    %877 = vector.broadcast %876 : vector<2x8x1xf32> to vector<2x8x16xf32>
    %878 = arith.mulf %873, %877 : vector<2x8x16xf32>
    %879 = arith.truncf %878 : vector<2x8x16xf32> to vector<2x8x16xbf16>
    "tpu.trace_start"() <{level = 10 : i32, message = "bqk,bkd->bqd"}> : () -> ()
    %cst_281 = arith.constant dense<0.000000e+00> : vector<2x8x8xf32>
    %880 = tpu.matmul %879, %867, %cst_281 {dimension_numbers = #tpu.dot_dimension_numbers<[2], [1], [1], [2], [0, 0, 0, 1, 1, 2], [0], [0]>} : vector<2x8x16xbf16>, vector<2x16x8xbf16>, vector<2x8x8xf32> -> vector<2x8x8xf32>
    "tpu.trace_stop"() : () -> ()
    %881 = vector.shape_cast %880 : vector<2x8x8xf32> to vector<16x8xf32>
    %882 = vector.extract_strided_slice %822 {offsets = [0, 16], sizes = [16, 8], strides = [1, 1]} : vector<16x32xf32> to vector<16x8xf32>
    %883 = vector.shape_cast %882 : vector<16x8xf32> to vector<2x8x8xf32>
    %884 = arith.truncf %883 : vector<2x8x8xf32> to vector<2x8x8xbf16>
    %885 = vector.extract_strided_slice %830 {offsets = [0, 16], sizes = [32, 8], strides = [1, 1]} : vector<32x32xf32> to vector<32x8xf32>
    %886 = vector.shape_cast %885 : vector<32x8xf32> to vector<2x16x8xf32>
    %887 = arith.truncf %886 : vector<2x16x8xf32> to vector<2x16x8xbf16>
    %888 = vector.extract_strided_slice %831 {offsets = [0, 16], sizes = [32, 8], strides = [1, 1]} : vector<32x32xf32> to vector<32x8xf32>
    %889 = vector.shape_cast %888 : vector<32x8xf32> to vector<2x16x8xf32>
    %890 = arith.truncf %889 : vector<2x16x8xf32> to vector<2x16x8xbf16>
    "tpu.trace_start"() <{level = 10 : i32, message = "bqd,bkd->bqk"}> : () -> ()
    %cst_282 = arith.constant dense<0.000000e+00> : vector<2x8x16xf32>
    %891 = tpu.matmul %884, %887, %cst_282 {dimension_numbers = #tpu.dot_dimension_numbers<[2], [2], [1], [1], [0, 0, 0, 1, 1, 1], [0], [0]>} : vector<2x8x8xbf16>, vector<2x16x8xbf16>, vector<2x8x16xf32> -> vector<2x8x16xf32>
    "tpu.trace_stop"() : () -> ()
    %cst_283 = arith.constant dense<0xFF800000> : vector<2x8xf32>
    %892 = vector.multi_reduction <maximumf>, %891, %cst_283 [2] : vector<2x8x16xf32> to vector<2x8xf32>
    %893 = vector.shape_cast %892 : vector<2x8xf32> to vector<2x8x1xf32>
    %894 = vector.broadcast %893 : vector<2x8x1xf32> to vector<2x8x16xf32>
    %895 = arith.subf %891, %894 : vector<2x8x16xf32>
    %896 = math.exp %895 : vector<2x8x16xf32>
    %cst_284 = arith.constant dense<0.000000e+00> : vector<2x8xf32>
    %897 = vector.multi_reduction <add>, %896, %cst_284 [2] : vector<2x8x16xf32> to vector<2x8xf32>
    %898 = vector.shape_cast %897 : vector<2x8xf32> to vector<2x8x1xf32>
    %899 = tpu.reciprocal %898 {approx = true} : vector<2x8x1xf32> -> vector<2x8x1xf32>
    %900 = vector.broadcast %899 : vector<2x8x1xf32> to vector<2x8x16xf32>
    %901 = arith.mulf %896, %900 : vector<2x8x16xf32>
    %902 = arith.truncf %901 : vector<2x8x16xf32> to vector<2x8x16xbf16>
    "tpu.trace_start"() <{level = 10 : i32, message = "bqk,bkd->bqd"}> : () -> ()
    %cst_285 = arith.constant dense<0.000000e+00> : vector<2x8x8xf32>
    %903 = tpu.matmul %902, %890, %cst_285 {dimension_numbers = #tpu.dot_dimension_numbers<[2], [1], [1], [2], [0, 0, 0, 1, 1, 2], [0], [0]>} : vector<2x8x16xbf16>, vector<2x16x8xbf16>, vector<2x8x8xf32> -> vector<2x8x8xf32>
    "tpu.trace_stop"() : () -> ()
    %904 = vector.shape_cast %903 : vector<2x8x8xf32> to vector<16x8xf32>
    %905 = vector.extract_strided_slice %822 {offsets = [0, 24], sizes = [16, 8], strides = [1, 1]} : vector<16x32xf32> to vector<16x8xf32>
    %906 = vector.shape_cast %905 : vector<16x8xf32> to vector<2x8x8xf32>
    %907 = arith.truncf %906 : vector<2x8x8xf32> to vector<2x8x8xbf16>
    %908 = vector.extract_strided_slice %830 {offsets = [0, 24], sizes = [32, 8], strides = [1, 1]} : vector<32x32xf32> to vector<32x8xf32>
    %909 = vector.shape_cast %908 : vector<32x8xf32> to vector<2x16x8xf32>
    %910 = arith.truncf %909 : vector<2x16x8xf32> to vector<2x16x8xbf16>
    %911 = vector.extract_strided_slice %831 {offsets = [0, 24], sizes = [32, 8], strides = [1, 1]} : vector<32x32xf32> to vector<32x8xf32>
    %912 = vector.shape_cast %911 : vector<32x8xf32> to vector<2x16x8xf32>
    %913 = arith.truncf %912 : vector<2x16x8xf32> to vector<2x16x8xbf16>
    "tpu.trace_start"() <{level = 10 : i32, message = "bqd,bkd->bqk"}> : () -> ()
    %cst_286 = arith.constant dense<0.000000e+00> : vector<2x8x16xf32>
    %914 = tpu.matmul %907, %910, %cst_286 {dimension_numbers = #tpu.dot_dimension_numbers<[2], [2], [1], [1], [0, 0, 0, 1, 1, 1], [0], [0]>} : vector<2x8x8xbf16>, vector<2x16x8xbf16>, vector<2x8x16xf32> -> vector<2x8x16xf32>
    "tpu.trace_stop"() : () -> ()
    %cst_287 = arith.constant dense<0xFF800000> : vector<2x8xf32>
    %915 = vector.multi_reduction <maximumf>, %914, %cst_287 [2] : vector<2x8x16xf32> to vector<2x8xf32>
    %916 = vector.shape_cast %915 : vector<2x8xf32> to vector<2x8x1xf32>
    %917 = vector.broadcast %916 : vector<2x8x1xf32> to vector<2x8x16xf32>
    %918 = arith.subf %914, %917 : vector<2x8x16xf32>
    %919 = math.exp %918 : vector<2x8x16xf32>
    %cst_288 = arith.constant dense<0.000000e+00> : vector<2x8xf32>
    %920 = vector.multi_reduction <add>, %919, %cst_288 [2] : vector<2x8x16xf32> to vector<2x8xf32>
    %921 = vector.shape_cast %920 : vector<2x8xf32> to vector<2x8x1xf32>
    %922 = tpu.reciprocal %921 {approx = true} : vector<2x8x1xf32> -> vector<2x8x1xf32>
    %923 = vector.broadcast %922 : vector<2x8x1xf32> to vector<2x8x16xf32>
    %924 = arith.mulf %919, %923 : vector<2x8x16xf32>
    %925 = arith.truncf %924 : vector<2x8x16xf32> to vector<2x8x16xbf16>
    "tpu.trace_start"() <{level = 10 : i32, message = "bqk,bkd->bqd"}> : () -> ()
    %cst_289 = arith.constant dense<0.000000e+00> : vector<2x8x8xf32>
    %926 = tpu.matmul %925, %913, %cst_289 {dimension_numbers = #tpu.dot_dimension_numbers<[2], [1], [1], [2], [0, 0, 0, 1, 1, 2], [0], [0]>} : vector<2x8x16xbf16>, vector<2x16x8xbf16>, vector<2x8x8xf32> -> vector<2x8x8xf32>
    "tpu.trace_stop"() : () -> ()
    %927 = vector.shape_cast %926 : vector<2x8x8xf32> to vector<16x8xf32>
    %928 = tpu.concatenate %858, %881, %904, %927 in 1 : vector<16x8xf32>, vector<16x8xf32>, vector<16x8xf32>, vector<16x8xf32> -> vector<16x32xf32>
    %929 = arith.truncf %928 : vector<16x32xf32> to vector<16x32xbf16>
    %cst_290 = arith.constant dense<0.000000e+00> : vector<16x32xf32>
    %930 = tpu.matmul %929, %833, %cst_290 {dimension_numbers = #tpu.dot_dimension_numbers<[1], [0], [0], [1], [0, 0, 1, 1], [], []>} : vector<16x32xbf16>, vector<32x32xbf16>, vector<16x32xf32> -> vector<16x32xf32>
    %931 = vector.broadcast %835 : vector<1x32xf32> to vector<16x32xf32>
    %932 = arith.addf %930, %931 : vector<16x32xf32>
    %933 = arith.addf %796, %932 : vector<16x32xf32>
    %cst_291 = arith.constant dense<0.000000e+00> : vector<16xf32>
    %934 = vector.multi_reduction <add>, %933, %cst_291 [1] : vector<16x32xf32> to vector<16xf32>
    %935 = vector.shape_cast %934 : vector<16xf32> to vector<16x1xf32>
    %cst_292 = arith.constant 3.200000e+01 : f32
    %936 = vector.broadcast %cst_292 : f32 to vector<16x1xf32>
    %937 = arith.divf %935, %936 : vector<16x1xf32>
    %938 = arith.mulf %933, %933 : vector<16x32xf32>
    %cst_293 = arith.constant dense<0.000000e+00> : vector<16xf32>
    %939 = vector.multi_reduction <add>, %938, %cst_293 [1] : vector<16x32xf32> to vector<16xf32>
    %940 = vector.shape_cast %939 : vector<16xf32> to vector<16x1xf32>
    %cst_294 = arith.constant 3.200000e+01 : f32
    %941 = vector.broadcast %cst_294 : f32 to vector<16x1xf32>
    %942 = arith.divf %940, %941 : vector<16x1xf32>
    %943 = arith.mulf %937, %937 : vector<16x1xf32>
    %944 = arith.subf %942, %943 : vector<16x1xf32>
    %945 = vector.broadcast %937 : vector<16x1xf32> to vector<16x32xf32>
    %946 = arith.subf %933, %945 : vector<16x32xf32>
    %cst_295 = arith.constant 9.99999974E-6 : f32
    %947 = vector.broadcast %cst_295 : f32 to vector<16x1xf32>
    %948 = arith.addf %944, %947 : vector<16x1xf32>
    %949 = math.rsqrt %948 : vector<16x1xf32>
    %950 = vector.broadcast %949 : vector<16x1xf32> to vector<16x32xf32>
    %951 = arith.mulf %946, %950 : vector<16x32xf32>
    %952 = arith.truncf %951 : vector<16x32xf32> to vector<16x32xbf16>
    %c1_296 = arith.constant 1 : index
    %c0_297 = arith.constant 0 : index
    %c0_298 = arith.constant 0 : index
    %953 = vector.load %arg21[%c1_296, %c0_297, %c0_298] : memref<2x32x128xbf16, #tpu.memory_space<vmem>>, vector<1x32x128xbf16>
    %954 = vector.shape_cast %953 : vector<1x32x128xbf16> to vector<32x128xbf16>
    %cst_299 = arith.constant dense<0.000000e+00> : vector<16x128xf32>
    %955 = tpu.matmul %952, %954, %cst_299 {dimension_numbers = #tpu.dot_dimension_numbers<[1], [0], [0], [1], [0, 0, 1, 1], [], []>} : vector<16x32xbf16>, vector<32x128xbf16>, vector<16x128xf32> -> vector<16x128xf32>
    %c1_300 = arith.constant 1 : index
    %c0_301 = arith.constant 0 : index
    %c0_302 = arith.constant 0 : index
    %956 = vector.load %arg22[%c1_300, %c0_301, %c0_302] : memref<2x1x128xf32, #tpu.memory_space<vmem>>, vector<1x1x128xf32>
    %957 = vector.shape_cast %956 : vector<1x1x128xf32> to vector<1x128xf32>
    %958 = vector.broadcast %957 : vector<1x128xf32> to vector<16x128xf32>
    %959 = arith.addf %955, %958 : vector<16x128xf32>
    %cst_303 = arith.constant 0.000000e+00 : f32
    %960 = vector.broadcast %cst_303 : f32 to vector<16x128xf32>
    %961 = arith.maximumf %959, %960 : vector<16x128xf32>
    %962 = arith.truncf %961 : vector<16x128xf32> to vector<16x128xbf16>
    %c1_304 = arith.constant 1 : index
    %c0_305 = arith.constant 0 : index
    %c0_306 = arith.constant 0 : index
    %963 = vector.load %arg23[%c1_304, %c0_305, %c0_306] : memref<2x128x32xbf16, #tpu.memory_space<vmem>>, vector<1x128x32xbf16>
    %964 = vector.shape_cast %963 : vector<1x128x32xbf16> to vector<128x32xbf16>
    %cst_307 = arith.constant dense<0.000000e+00> : vector<16x32xf32>
    %965 = tpu.matmul %962, %964, %cst_307 {dimension_numbers = #tpu.dot_dimension_numbers<[1], [0], [0], [1], [0, 0, 1, 1], [], []>} : vector<16x128xbf16>, vector<128x32xbf16>, vector<16x32xf32> -> vector<16x32xf32>
    %966 = arith.addf %933, %965 : vector<16x32xf32>
    %c1_308 = arith.constant 1 : index
    %c0_309 = arith.constant 0 : index
    %c0_310 = arith.constant 0 : index
    %967 = vector.load %arg24[%c1_308, %c0_309, %c0_310] : memref<2x1x32xf32, #tpu.memory_space<vmem>>, vector<1x1x32xf32>
    %968 = vector.shape_cast %967 : vector<1x1x32xf32> to vector<1x32xf32>
    %969 = vector.broadcast %968 : vector<1x32xf32> to vector<16x32xf32>
    %970 = arith.addf %966, %969 : vector<16x32xf32>
    %971 = arith.truncf %970 : vector<16x32xf32> to vector<16x32xbf16>
    %c0_311 = arith.constant 0 : index
    %c0_312 = arith.constant 0 : index
    %972 = vector.load %arg25[%c0_311, %c0_312] : memref<32x128xbf16, #tpu.memory_space<vmem>>, vector<32x128xbf16>
    %cst_313 = arith.constant dense<0.000000e+00> : vector<16x128xf32>
    %973 = tpu.matmul %971, %972, %cst_313 {dimension_numbers = #tpu.dot_dimension_numbers<[1], [0], [0], [1], [0, 0, 1, 1], [], []>} : vector<16x32xbf16>, vector<32x128xbf16>, vector<16x128xf32> -> vector<16x128xf32>
    %c0_314 = arith.constant 0 : index
    %c0_315 = arith.constant 0 : index
    %974 = vector.load %arg26[%c0_314, %c0_315] : memref<1x128xf32, #tpu.memory_space<vmem>>, vector<1x128xf32>
    %975 = vector.broadcast %974 : vector<1x128xf32> to vector<16x128xf32>
    %976 = arith.addf %973, %975 : vector<16x128xf32>
    %977 = vector.shape_cast %976 : vector<16x128xf32> to vector<2x8x128xf32>
    %c0_316 = arith.constant 0 : index
    %c0_317 = arith.constant 0 : index
    %c0_318 = arith.constant 0 : index
    %978 = vector.load %arg27[%c0_316, %c0_317, %c0_318] : memref<2x8x128xf32, #tpu.memory_space<vmem>>, vector<2x8x128xf32>
    tpu.vector_store %arg27[%c0_316, %c0_317, %c0_318], %977 {strides = array<i32>} : memref<2x8x128xf32, #tpu.memory_space<vmem>>, vector<2x8x128xf32>,
    return
  }
  func.func @transform_0(%arg0: i32) -> (i32, i32, i32) {
    %c0_i32 = arith.constant 0 : i32
    %c0_i32_0 = arith.constant 0 : i32
    %c0_i32_1 = arith.constant 0 : i32
    %c0_i32_2 = arith.constant 0 : i32
    return %c0_i32, %c0_i32_0, %c0_i32_1 : i32, i32, i32
  }
  func.func @transform_1(%arg0: i32) -> (i32, i32, i32) {
    %c0_i32 = arith.constant 0 : i32
    %c0_i32_0 = arith.constant 0 : i32
    %c0_i32_1 = arith.constant 0 : i32
    %c0_i32_2 = arith.constant 0 : i32
    return %c0_i32, %c0_i32_0, %c0_i32_1 : i32, i32, i32
  }
  func.func @transform_2(%arg0: i32) -> (i32, i32, i32) {
    %c0_i32 = arith.constant 0 : i32
    %c0_i32_0 = arith.constant 0 : i32
    %c0_i32_1 = arith.constant 0 : i32
    %c0_i32_2 = arith.constant 0 : i32
    return %c0_i32, %c0_i32_0, %c0_i32_1 : i32, i32, i32
  }
  func.func @transform_3(%arg0: i32) -> (i32, i32, i32) {
    %c0_i32 = arith.constant 0 : i32
    %c0_i32_0 = arith.constant 0 : i32
    %c0_i32_1 = arith.constant 0 : i32
    %c0_i32_2 = arith.constant 0 : i32
    return %c0_i32, %c0_i32_0, %c0_i32_1 : i32, i32, i32
  }
  func.func @transform_4(%arg0: i32) -> (i32, i32, i32) {
    %c0_i32 = arith.constant 0 : i32
    %c0_i32_0 = arith.constant 0 : i32
    %c0_i32_1 = arith.constant 0 : i32
    %c0_i32_2 = arith.constant 0 : i32
    return %c0_i32, %c0_i32_0, %c0_i32_1 : i32, i32, i32
  }
  func.func @transform_5(%arg0: i32) -> (i32, i32, i32) {
    %c0_i32 = arith.constant 0 : i32
    %c0_i32_0 = arith.constant 0 : i32
    %c0_i32_1 = arith.constant 0 : i32
    %c0_i32_2 = arith.constant 0 : i32
    return %c0_i32, %c0_i32_0, %c0_i32_1 : i32, i32, i32
  }
  func.func @transform_6(%arg0: i32) -> (i32, i32, i32) {
    %c0_i32 = arith.constant 0 : i32
    %c0_i32_0 = arith.constant 0 : i32
    %c0_i32_1 = arith.constant 0 : i32
    %c0_i32_2 = arith.constant 0 : i32
    return %c0_i32, %c0_i32_0, %c0_i32_1 : i32, i32, i32
  }
  func.func @transform_7(%arg0: i32) -> (i32, i32, i32) {
    %c0_i32 = arith.constant 0 : i32
    %c0_i32_0 = arith.constant 0 : i32
    %c0_i32_1 = arith.constant 0 : i32
    %c0_i32_2 = arith.constant 0 : i32
    return %c0_i32, %c0_i32_0, %c0_i32_1 : i32, i32, i32
  }
  func.func @transform_8(%arg0: i32) -> (i32, i32, i32) {
    %c0_i32 = arith.constant 0 : i32
    %c0_i32_0 = arith.constant 0 : i32
    %c0_i32_1 = arith.constant 0 : i32
    %c0_i32_2 = arith.constant 0 : i32
    return %c0_i32, %c0_i32_0, %c0_i32_1 : i32, i32, i32
  }
  func.func @transform_9(%arg0: i32) -> (i32, i32, i32) {
    %c0_i32 = arith.constant 0 : i32
    %c0_i32_0 = arith.constant 0 : i32
    %c0_i32_1 = arith.constant 0 : i32
    %c0_i32_2 = arith.constant 0 : i32
    return %c0_i32, %c0_i32_0, %c0_i32_1 : i32, i32, i32
  }
  func.func @transform_10(%arg0: i32) -> (i32, i32, i32) {
    %c0_i32 = arith.constant 0 : i32
    %c0_i32_0 = arith.constant 0 : i32
    %c0_i32_1 = arith.constant 0 : i32
    %c0_i32_2 = arith.constant 0 : i32
    return %c0_i32, %c0_i32_0, %c0_i32_1 : i32, i32, i32
  }
  func.func @transform_11(%arg0: i32) -> (i32, i32, i32) {
    %c0_i32 = arith.constant 0 : i32
    %c0_i32_0 = arith.constant 0 : i32
    %c0_i32_1 = arith.constant 0 : i32
    %c0_i32_2 = arith.constant 0 : i32
    return %c0_i32, %c0_i32_0, %c0_i32_1 : i32, i32, i32
  }
  func.func @transform_12(%arg0: i32) -> (i32, i32, i32) {
    %c0_i32 = arith.constant 0 : i32
    %c0_i32_0 = arith.constant 0 : i32
    %c0_i32_1 = arith.constant 0 : i32
    %c0_i32_2 = arith.constant 0 : i32
    return %c0_i32, %c0_i32_0, %c0_i32_1 : i32, i32, i32
  }
  func.func @transform_13(%arg0: i32) -> (i32, i32, i32) {
    %c0_i32 = arith.constant 0 : i32
    %c0_i32_0 = arith.constant 0 : i32
    %c0_i32_1 = arith.constant 0 : i32
    %c0_i32_2 = arith.constant 0 : i32
    return %c0_i32, %c0_i32_0, %c0_i32_1 : i32, i32, i32
  }
  func.func @transform_14(%arg0: i32) -> (i32, i32, i32) {
    %c0_i32 = arith.constant 0 : i32
    %c0_i32_0 = arith.constant 0 : i32
    %c0_i32_1 = arith.constant 0 : i32
    %c0_i32_2 = arith.constant 0 : i32
    return %c0_i32, %c0_i32_0, %c0_i32_1 : i32, i32, i32
  }
  func.func @transform_15(%arg0: i32) -> (i32, i32, i32) {
    %c0_i32 = arith.constant 0 : i32
    %c0_i32_0 = arith.constant 0 : i32
    %c0_i32_1 = arith.constant 0 : i32
    %c0_i32_2 = arith.constant 0 : i32
    return %c0_i32, %c0_i32_0, %c0_i32_1 : i32, i32, i32
  }
  func.func @transform_16(%arg0: i32) -> (i32, i32, i32) {
    %c0_i32 = arith.constant 0 : i32
    %c0_i32_0 = arith.constant 0 : i32
    %c0_i32_1 = arith.constant 0 : i32
    %c0_i32_2 = arith.constant 0 : i32
    return %c0_i32, %c0_i32_0, %c0_i32_1 : i32, i32, i32
  }
  func.func @transform_17(%arg0: i32) -> (i32, i32, i32) {
    %c0_i32 = arith.constant 0 : i32
    %c0_i32_0 = arith.constant 0 : i32
    %c0_i32_1 = arith.constant 0 : i32
    %c0_i32_2 = arith.constant 0 : i32
    return %c0_i32, %c0_i32_0, %c0_i32_1 : i32, i32, i32
  }
  func.func @transform_18(%arg0: i32) -> (i32, i32, i32) {
    %c0_i32 = arith.constant 0 : i32
    %c0_i32_0 = arith.constant 0 : i32
    %c0_i32_1 = arith.constant 0 : i32
    %c0_i32_2 = arith.constant 0 : i32
    return %c0_i32, %c0_i32_0, %c0_i32_1 : i32, i32, i32
  }
  func.func @transform_19(%arg0: i32) -> (i32, i32, i32) {
    %c0_i32 = arith.constant 0 : i32
    %c0_i32_0 = arith.constant 0 : i32
    %c0_i32_1 = arith.constant 0 : i32
    %c0_i32_2 = arith.constant 0 : i32
    return %c0_i32, %c0_i32_0, %c0_i32_1 : i32, i32, i32
  }
  func.func @transform_20(%arg0: i32) -> (i32, i32, i32) {
    %c0_i32 = arith.constant 0 : i32
    %c0_i32_0 = arith.constant 0 : i32
    %c0_i32_1 = arith.constant 0 : i32
    %c0_i32_2 = arith.constant 0 : i32
    return %c0_i32, %c0_i32_0, %c0_i32_1 : i32, i32, i32
  }
  func.func @transform_21(%arg0: i32) -> (i32, i32, i32) {
    %c0_i32 = arith.constant 0 : i32
    %c0_i32_0 = arith.constant 0 : i32
    %c0_i32_1 = arith.constant 0 : i32
    %c0_i32_2 = arith.constant 0 : i32
    return %c0_i32, %c0_i32_0, %c0_i32_1 : i32, i32, i32
  }
  func.func @transform_22(%arg0: i32) -> (i32, i32, i32) {
    %c0_i32 = arith.constant 0 : i32
    %c0_i32_0 = arith.constant 0 : i32
    %c0_i32_1 = arith.constant 0 : i32
    %c0_i32_2 = arith.constant 0 : i32
    return %c0_i32, %c0_i32_0, %c0_i32_1 : i32, i32, i32
  }
  func.func @transform_23(%arg0: i32) -> (i32, i32, i32) {
    %c0_i32 = arith.constant 0 : i32
    %c0_i32_0 = arith.constant 0 : i32
    %c0_i32_1 = arith.constant 0 : i32
    %c0_i32_2 = arith.constant 0 : i32
    return %c0_i32, %c0_i32_0, %c0_i32_1 : i32, i32, i32
  }
  func.func @transform_24(%arg0: i32) -> (i32, i32) {
    %c0_i32 = arith.constant 0 : i32
    %c0_i32_0 = arith.constant 0 : i32
    %c0_i32_1 = arith.constant 0 : i32
    return %c0_i32, %c0_i32_0 : i32, i32
  }
  func.func @transform_25(%arg0: i32) -> (i32, i32) {
    %c0_i32 = arith.constant 0 : i32
    %c0_i32_0 = arith.constant 0 : i32
    %c0_i32_1 = arith.constant 0 : i32
    return %c0_i32, %c0_i32_0 : i32, i32
  }
  func.func @transform_26(%arg0: i32) -> (i32, i32, i32) {
    %c0_i32 = arith.constant 0 : i32
    %c0_i32_0 = arith.constant 0 : i32
    %c0_i32_1 = arith.constant 0 : i32
    %c0_i32_2 = arith.constant 0 : i32
    return %c0_i32, %c0_i32_0, %c0_i32_1 : i32, i32, i32
  }
}

</mosaic_0001>

<llo_original>
// kernel: transformer_forward.1
$region0: #{transformer_forward.1}
  #allocation0 [shape = 'u32[]', space=smem, size = 0x4, offset = 0x4, fixed_abs, tag = 'smem constant byte address 0x4 - core index']
  #allocation1 [shape = 'u32[72,128]{1,0:T(1,128)}', space=vmem, size = 0x9000, scoped, tag = 'internal scratch']
  %s0 = inlined_call_operand.vmem [shape: f32[2,16,32], index: 0, kind: input, shape index: {}]
  %s1 = inlined_call_operand.vmem [shape: f32[2,8,32], index: 1, kind: input, shape index: {}]
  %s2 = inlined_call_operand.vmem [shape: bf16[2,32,96], index: 2, kind: input, shape index: {}]
  %s3 = inlined_call_operand.vmem [shape: f32[2,1,96], index: 3, kind: input, shape index: {}]
  %s4 = inlined_call_operand.vmem [shape: bf16[2,32,32], index: 4, kind: input, shape index: {}]
  %s5 = inlined_call_operand.vmem [shape: f32[2,1,32], index: 5, kind: input, shape index: {}]
  %s6 = inlined_call_operand.vmem [shape: bf16[2,32,128], index: 6, kind: input, shape index: {}]
  %s7 = inlined_call_operand.vmem [shape: f32[2,1,128], index: 7, kind: input, shape index: {}]
  %s8 = inlined_call_operand.vmem [shape: bf16[2,128,32], index: 8, kind: input, shape index: {}]
  %s9 = inlined_call_operand.vmem [shape: f32[2,1,32], index: 9, kind: input, shape index: {}]
  %s10 = inlined_call_operand.vmem [shape: bf16[2,32,96], index: 10, kind: input, shape index: {}]
  %s11 = inlined_call_operand.vmem [shape: f32[2,1,96], index: 11, kind: input, shape index: {}]
  %s12 = inlined_call_operand.vmem [shape: bf16[2,32,32], index: 12, kind: input, shape index: {}]
  %s13 = inlined_call_operand.vmem [shape: f32[2,1,32], index: 13, kind: input, shape index: {}]
  %s14 = inlined_call_operand.vmem [shape: bf16[2,32,32], index: 14, kind: input, shape index: {}]
  %s15 = inlined_call_operand.vmem [shape: f32[2,1,32], index: 15, kind: input, shape index: {}]
  %s16 = inlined_call_operand.vmem [shape: bf16[2,32,64], index: 16, kind: input, shape index: {}]
  %s17 = inlined_call_operand.vmem [shape: f32[2,1,64], index: 17, kind: input, shape index: {}]
  %s18 = inlined_call_operand.vmem [shape: bf16[2,32,32], index: 18, kind: input, shape index: {}]
  %s19 = inlined_call_operand.vmem [shape: f32[2,1,32], index: 19, kind: input, shape index: {}]
  %s20 = inlined_call_operand.vmem [shape: bf16[2,32,128], index: 20, kind: input, shape index: {}]
  %s21 = inlined_call_operand.vmem [shape: f32[2,1,128], index: 21, kind: input, shape index: {}]
  %s22 = inlined_call_operand.vmem [shape: bf16[2,128,32], index: 22, kind: input, shape index: {}]
  %s23 = inlined_call_operand.vmem [shape: f32[2,1,32], index: 23, kind: input, shape index: {}]
  %s24 = inlined_call_operand.vmem [shape: bf16[32,128], index: 24, kind: input, shape index: {}]
  %s25 = inlined_call_operand.vmem [shape: f32[1,128], index: 25, kind: input, shape index: {}]
  %s26 = inlined_call_operand.hbm [shape: f32[2,8,128], index: 26, kind: output, shape index: {}]
  %s27 = sld [smem:[#allocation0]]
  $region114: #{transformer_forward.1} parent=0
    _
  %s29 = ssub.s32 1, %s27
  %s30 = scalar_select 0, %s29, %s27
  $region1: #{transformer_forward.1} parent=0
    #allocation2 [shape = 'u8[8192]{0}', space=vmem, size = 0x2000, scoped, tag = 'output window, operand 0, single buffered']
    #allocation3 [shape = 's32[1]{0}', space=sflag, size = 0x4, scoped, tag = 'scoped memory for transformer_forward.1']
    %31 = vsyncpa [#allocation3], 0
    // Predicated region
    $region2: #{transformer_forward.1} parent=1 // pred_check
      _
    $region3: #{transformer_forward.1} parent=1 // pred_check_branch
      %33 = sbr.rel (0) target = $region5
    $region4: #{transformer_forward.1} parent=1 // pred_region
      _
    $region5: #{transformer_forward.1} parent=1 // pred_fallthru
      _
    // Predicated region
    $region6: #{transformer_forward.1} parent=1 // pred_check
      _
    $region7: #{transformer_forward.1} parent=1 // pred_check_branch
      %35 = sbr.rel (0) target = $region9
    $region8: #{transformer_forward.1} parent=1 // pred_region
      _
    $region9: #{transformer_forward.1} parent=1 // pred_fallthru
      _
    // Predicated region
    $region10: #{transformer_forward.1} parent=1 // pred_check
      _
    $region11: #{transformer_forward.1} parent=1 // pred_check_branch
      %37 = sbr.rel (0) target = $region13
    $region12: #{transformer_forward.1} parent=1 // pred_region
      _
    $region13: #{transformer_forward.1} parent=1 // pred_fallthru
      _
    // Predicated region
    $region14: #{transformer_forward.1} parent=1 // pred_check
      _
    $region15: #{transformer_forward.1} parent=1 // pred_check_branch
      %39 = sbr.rel (0) target = $region17
    $region16: #{transformer_forward.1} parent=1 // pred_region
      _
    $region17: #{transformer_forward.1} parent=1 // pred_fallthru
      _
    // Predicated region
    $region18: #{transformer_forward.1} parent=1 // pred_check
      _
    $region19: #{transformer_forward.1} parent=1 // pred_check_branch
      %41 = sbr.rel (0) target = $region21
    $region20: #{transformer_forward.1} parent=1 // pred_region
      _
    $region21: #{transformer_forward.1} parent=1 // pred_fallthru
      _
    // Predicated region
    $region22: #{transformer_forward.1} parent=1 // pred_check
      _
    $region23: #{transformer_forward.1} parent=1 // pred_check_branch
      %43 = sbr.rel (0) target = $region25
    $region24: #{transformer_forward.1} parent=1 // pred_region
      _
    $region25: #{transformer_forward.1} parent=1 // pred_fallthru
      _
    // Predicated region
    $region26: #{transformer_forward.1} parent=1 // pred_check
      _
    $region27: #{transformer_forward.1} parent=1 // pred_check_branch
      %45 = sbr.rel (0) target = $region29
    $region28: #{transformer_forward.1} parent=1 // pred_region
      _
    $region29: #{transformer_forward.1} parent=1 // pred_fallthru
      _
    // Predicated region
    $region30: #{transformer_forward.1} parent=1 // pred_check
      _
    $region31: #{transformer_forward.1} parent=1 // pred_check_branch
      %47 = sbr.rel (0) target = $region33
    $region32: #{transformer_forward.1} parent=1 // pred_region
      _
    $region33: #{transformer_forward.1} parent=1 // pred_fallthru
      _
    // Predicated region
    $region34: #{transformer_forward.1} parent=1 // pred_check
      _
    $region35: #{transformer_forward.1} parent=1 // pred_check_branch
      %49 = sbr.rel (0) target = $region37
    $region36: #{transformer_forward.1} parent=1 // pred_region
      _
    $region37: #{transformer_forward.1} parent=1 // pred_fallthru
      _
    // Predicated region
    $region38: #{transformer_forward.1} parent=1 // pred_check
      _
    $region39: #{transformer_forward.1} parent=1 // pred_check_branch
      %51 = sbr.rel (0) target = $region41
    $region40: #{transformer_forward.1} parent=1 // pred_region
      _
    $region41: #{transformer_forward.1} parent=1 // pred_fallthru
      _
    // Predicated region
    $region42: #{transformer_forward.1} parent=1 // pred_check
      _
    $region43: #{transformer_forward.1} parent=1 // pred_check_branch
      %53 = sbr.rel (0) target = $region45
    $region44: #{transformer_forward.1} parent=1 // pred_region
      _
    $region45: #{transformer_forward.1} parent=1 // pred_fallthru
      _
    // Predicated region
    $region46: #{transformer_forward.1} parent=1 // pred_check
      _
    $region47: #{transformer_forward.1} parent=1 // pred_check_branch
      %55 = sbr.rel (0) target = $region49
    $region48: #{transformer_forward.1} parent=1 // pred_region
      _
    $region49: #{transformer_forward.1} parent=1 // pred_fallthru
      _
    // Predicated region
    $region50: #{transformer_forward.1} parent=1 // pred_check
      _
    $region51: #{transformer_forward.1} parent=1 // pred_check_branch
      %57 = sbr.rel (0) target = $region53
    $region52: #{transformer_forward.1} parent=1 // pred_region
      _
    $region53: #{transformer_forward.1} parent=1 // pred_fallthru
      _
    // Predicated region
    $region54: #{transformer_forward.1} parent=1 // pred_check
      _
    $region55: #{transformer_forward.1} parent=1 // pred_check_branch
      %59 = sbr.rel (0) target = $region57
    $region56: #{transformer_forward.1} parent=1 // pred_region
      _
    $region57: #{transformer_forward.1} parent=1 // pred_fallthru
      _
    // Predicated region
    $region58: #{transformer_forward.1} parent=1 // pred_check
      _
    $region59: #{transformer_forward.1} parent=1 // pred_check_branch
      %61 = sbr.rel (0) target = $region61
    $region60: #{transformer_forward.1} parent=1 // pred_region
      _
    $region61: #{transformer_forward.1} parent=1 // pred_fallthru
      _
    // Predicated region
    $region62: #{transformer_forward.1} parent=1 // pred_check
      _
    $region63: #{transformer_forward.1} parent=1 // pred_check_branch
      %63 = sbr.rel (0) target = $region65
    $region64: #{transformer_forward.1} parent=1 // pred_region
      _
    $region65: #{transformer_forward.1} parent=1 // pred_fallthru
      _
    // Predicated region
    $region66: #{transformer_forward.1} parent=1 // pred_check
      _
    $region67: #{transformer_forward.1} parent=1 // pred_check_branch
      %65 = sbr.rel (0) target = $region69
    $region68: #{transformer_forward.1} parent=1 // pred_region
      _
    $region69: #{transformer_forward.1} parent=1 // pred_fallthru
      _
    // Predicated region
    $region70: #{transformer_forward.1} parent=1 // pred_check
      _
    $region71: #{transformer_forward.1} parent=1 // pred_check_branch
      %67 = sbr.rel (0) target = $region73
    $region72: #{transformer_forward.1} parent=1 // pred_region
      _
    $region73: #{transformer_forward.1} parent=1 // pred_fallthru
      _
    // Predicated region
    $region74: #{transformer_forward.1} parent=1 // pred_check
      _
    $region75: #{transformer_forward.1} parent=1 // pred_check_branch
      %69 = sbr.rel (0) target = $region77
    $region76: #{transformer_forward.1} parent=1 // pred_region
      _
    $region77: #{transformer_forward.1} parent=1 // pred_fallthru
      _
    // Predicated region
    $region78: #{transformer_forward.1} parent=1 // pred_check
      _
    $region79: #{transformer_forward.1} parent=1 // pred_check_branch
      %71 = sbr.rel (0) target = $region81
    $region80: #{transformer_forward.1} parent=1 // pred_region
      _
    $region81: #{transformer_forward.1} parent=1 // pred_fallthru
      _
    // Predicated region
    $region82: #{transformer_forward.1} parent=1 // pred_check
      _
    $region83: #{transformer_forward.1} parent=1 // pred_check_branch
      %73 = sbr.rel (0) target = $region85
    $region84: #{transformer_forward.1} parent=1 // pred_region
      _
    $region85: #{transformer_forward.1} parent=1 // pred_fallthru
      _
    // Predicated region
    $region86: #{transformer_forward.1} parent=1 // pred_check
      _
    $region87: #{transformer_forward.1} parent=1 // pred_check_branch
      %75 = sbr.rel (0) target = $region89
    $region88: #{transformer_forward.1} parent=1 // pred_region
      _
    $region89: #{transformer_forward.1} parent=1 // pred_fallthru
      _
    // Predicated region
    $region90: #{transformer_forward.1} parent=1 // pred_check
      _
    $region91: #{transformer_forward.1} parent=1 // pred_check_branch
      %77 = sbr.rel (0) target = $region93
    $region92: #{transformer_forward.1} parent=1 // pred_region
      _
    $region93: #{transformer_forward.1} parent=1 // pred_fallthru
      _
    // Predicated region
    $region94: #{transformer_forward.1} parent=1 // pred_check
      _
    $region95: #{transformer_forward.1} parent=1 // pred_check_branch
      %79 = sbr.rel (0) target = $region97
    $region96: #{transformer_forward.1} parent=1 // pred_region
      _
    $region97: #{transformer_forward.1} parent=1 // pred_fallthru
      _
    // Predicated region
    $region98: #{transformer_forward.1} parent=1 // pred_check
      _
    $region99: #{transformer_forward.1} parent=1 // pred_check_branch
      %81 = sbr.rel (0) target = $region101
    $region100: #{transformer_forward.1} parent=1 // pred_region
      _
    $region101: #{transformer_forward.1} parent=1 // pred_fallthru
      _
    // Predicated region
    $region102: #{transformer_forward.1} parent=1 // pred_check
      _
    $region103: #{transformer_forward.1} parent=1 // pred_check_branch
      %83 = sbr.rel (0) target = $region105
    $region104: #{transformer_forward.1} parent=1 // pred_region
      _
    $region105: #{transformer_forward.1} parent=1 // pred_fallthru
      _
    %v85 = vld [vmem:[%s0] sm:$0xff]
    %v86 = vld [vmem:[%s0 + $0x8] sm:$0xff]
    %v87 = vld [vmem:[%s0 + $0x10] sm:$0xff]
    %v88 = vld [vmem:[%s0 + $0x18] sm:$0xff]
    %vm89 = vcmask 261120
    %v90 = vsel %vm89, %v85, 0.0
    %91 = vadd.xlane.f32.xlu0 %v90
    %v92 = vpop.xlane.xlu0 %91
    %v93 = vsel %vm89, %v86, 0.0
    %94 = vadd.xlane.f32.xlu0 %v93
    %v95 = vpop.xlane.xlu0 %94
    %v96 = vsel %vm89, %v87, 0.0
    %97 = vadd.xlane.f32.xlu0 %v96
    %v98 = vpop.xlane.xlu0 %97
    %v99 = vsel %vm89, %v88, 0.0
    %100 = vadd.xlane.f32.xlu0 %v99
    %v101 = vpop.xlane.xlu0 %100
    %v102 = vrcp.pop 32.0
    %v103 = vmul.f32 32.0, %v102
    %v104 = vsub.f32 1.0, %v103
    %v105 = vmul.f32 %v102, %v104
    %v106 = vadd.f32 %v102, %v105
    %vm107 = vweird.f32 %v102
    %v108 = vsel %vm107, %v102, %v106
    %v109 = vmul.f32 %v92, %v108
    %v110 = vmul.f32 %v95, %v108
    %v111 = vmul.f32 %v98, %v108
    %v112 = vmul.f32 %v101, %v108
    %v113 = vmul.f32 %v85, %v85
    %v114 = vmul.f32 %v86, %v86
    %v115 = vmul.f32 %v87, %v87
    %v116 = vmul.f32 %v88, %v88
    %v117 = vsel %vm89, %v113, 0.0
    %118 = vadd.xlane.f32.xlu0 %v117
    %v119 = vpop.xlane.xlu0 %118
    %v120 = vsel %vm89, %v114, 0.0
    %121 = vadd.xlane.f32.xlu0 %v120
    %v122 = vpop.xlane.xlu0 %121
    %v123 = vsel %vm89, %v115, 0.0
    %124 = vadd.xlane.f32.xlu0 %v123
    %v125 = vpop.xlane.xlu0 %124
    %v126 = vsel %vm89, %v116, 0.0
    %127 = vadd.xlane.f32.xlu0 %v126
    %v128 = vpop.xlane.xlu0 %127
    %v129 = vmul.f32 %v119, %v108
    %v130 = vmul.f32 %v122, %v108
    %v131 = vmul.f32 %v125, %v108
    %v132 = vmul.f32 %v128, %v108
    %v133 = vmul.f32 %v109, %v109
    %v134 = vmul.f32 %v110, %v110
    %v135 = vmul.f32 %v111, %v111
    %v136 = vmul.f32 %v112, %v112
    %v137 = vsub.f32 %v129, %v133
    %v138 = vsub.f32 %v130, %v134
    %v139 = vsub.f32 %v131, %v135
    %v140 = vsub.f32 %v132, %v136
    %v141 = vsub.f32 %v85, %v109
    %v142 = vsub.f32 %v86, %v110
    %v143 = vsub.f32 %v87, %v111
    %v144 = vsub.f32 %v88, %v112
    %v145 = vadd.f32 %v137, 1e-05
    %v146 = vadd.f32 %v138, 1e-05
    %v147 = vadd.f32 %v139, 1e-05
    %v148 = vadd.f32 %v140, 1e-05
    %v149 = vrsqrt.pop %v145
    %v150 = vmul.f32 %v149, %v145
    %v151 = vmul.f32 %v150, %v149
    %v152 = vmul.f32 0.5, %v151
    %v153 = vsub.f32 1.5, %v152
    %v154 = vmul.f32 %v149, %v153
    %vm155 = vweird.f32 %v145
    %vm156 = vweird.f32 %v149
    %vm157 = vmor %vm155, %vm156
    %v158 = vsel %vm157, %v149, %v154
    %v159 = vrsqrt.pop %v146
    %v160 = vmul.f32 %v159, %v146
    %v161 = vmul.f32 %v160, %v159
    %v162 = vmul.f32 0.5, %v161
    %v163 = vsub.f32 1.5, %v162
    %v164 = vmul.f32 %v159, %v163
    %vm165 = vweird.f32 %v146
    %vm166 = vweird.f32 %v159
    %vm167 = vmor %vm165, %vm166
    %v168 = vsel %vm167, %v159, %v164
    %v169 = vrsqrt.pop %v147
    %v170 = vmul.f32 %v169, %v147
    %v171 = vmul.f32 %v170, %v169
    %v172 = vmul.f32 0.5, %v171
    %v173 = vsub.f32 1.5, %v172
    %v174 = vmul.f32 %v169, %v173
    %vm175 = vweird.f32 %v147
    %vm176 = vweird.f32 %v169
    %vm177 = vmor %vm175, %vm176
    %v178 = vsel %vm177, %v169, %v174
    %v179 = vrsqrt.pop %v148
    %v180 = vmul.f32 %v179, %v148
    %v181 = vmul.f32 %v180, %v179
    %v182 = vmul.f32 0.5, %v181
    %v183 = vsub.f32 1.5, %v182
    %v184 = vmul.f32 %v179, %v183
    %vm185 = vweird.f32 %v148
    %vm186 = vweird.f32 %v179
    %vm187 = vmor %vm185, %vm186
    %v188 = vsel %vm187, %v179, %v184
    %v189 = vmul.f32 %v141, %v158
    %v190 = vmul.f32 %v142, %v168
    %v191 = vmul.f32 %v143, %v178
    %v192 = vmul.f32 %v144, %v188
    %v193 = vpack.c.bf16 %v190, %v189
    %v194 = vpack.c.bf16 %v192, %v191
    %v195 = vld [vmem:[%s2] sm:$0xf]
    %v196 = vld [vmem:[%s2 + $0x4] sm:$0xf]
    %v197 = vld [vmem:[%s2 + $0x8] sm:$0xf]
    %v198 = vld [vmem:[%s2 + $0xc] sm:$0xf]
    %v199 = vld [vmem:[%s3] sm:$0x1]
    %v201 = vperm.slane %v199, 0
    %v207 = vunpack.c.l.b16 %v195
    %v208 = vunpack.c.l.b16 %v196
    %v209 = vunpack.c.l.b16 %v197
    %v210 = vunpack.c.l.b16 %v198
    %v211 = vpack.c.b16 %v208, %v207
    %v212 = vpack.c.b16 %v210, %v209
    %v216 = vsel %vm89, %v193, 0
    %v219 = vsel %vm89, %v194, 0
    %221 = vmatpush.bf16.msra.mxu0 0
    %222 = vmatpush.bf16.msra.mxu0 0
    %223 = vmatpush.bf16.msra.mxu0 0
    %224 = vmatpush.bf16.msra.mxu0 0
    %225 = vmatpush.bf16.msra.mxu0 0
    %226 = vmatpush.bf16.msra.mxu0 0
    %227 = vmatpush.bf16.msra.mxu0 %v212
    %228 = vmatpush.bf16.msra.mxu0 %v211
    %229 = vmatmul.bf16.gmra.mxu0 %v216
    %v230 = vpop.f32.mrf.mxu0
    %v231 = vadd.f32 %v201, %v230
    %v232 = vpop.f32.mrf.mxu0
    %v233 = vadd.f32 %v201, %v232
    %234 = vmatmul.bf16.gmra.mxu0 %v219
    %v235 = vpop.f32.mrf.mxu0
    %v236 = vadd.f32 %v201, %v235
    %v237 = vpop.f32.mrf.mxu0
    %v238 = vadd.f32 %v201, %v237
    %239 = vdwg.mxu0
    %v240 = vld [vmem:[%s4] sm:$0xf]
    %v241 = vld [vmem:[%s4 + $0x4] sm:$0xf]
    %v242 = vld [vmem:[%s4 + $0x8] sm:$0xf]
    %v243 = vld [vmem:[%s4 + $0xc] sm:$0xf]
    %v244 = vld [vmem:[%s5] sm:$0x1]
    %v245 = vpack.c.bf16 %v231, %v231
    %v246 = vpack.c.bf16 %v233, %v233
    %v247 = vpack.c.bf16 %v236, %v236
    %v248 = vpack.c.bf16 %v238, %v238
    %v251 = vunpack.c.l.b16 %v245
    %v252 = vunpack.c.l.b16 %v246
    %v253 = vpack.c.b16 %v252, %v251
    %254 = vrot.lane.b32.xlu0 %v253, 96
    %v255 = vpop.permute.xlu0 %254
    %vm256 = vcmask 64512
    %v258 = vsel %vm256, %v253, 0
    %v261 = vsel %vm256, %v255, 0
    %263 = vmatpush.bf16.xpose.msra.mxu0 0
    %264 = vmatpush.bf16.xpose.msra.mxu0 0
    %265 = vmatpush.bf16.xpose.msra.mxu0 0
    %266 = vmatpush.bf16.xpose.msra.mxu0 0
    %267 = vmatpush.bf16.xpose.msra.mxu0 0
    %268 = vmatpush.bf16.xpose.msra.mxu0 0
    %269 = vmatpush.bf16.xpose.msra.mxu0 0
    %270 = vmatpush.bf16.xpose.msra.mxu0 %v261
    %271 = vmatmul.bf16.gmra.mxu0 %v258
    %v272 = vpop.f32.mrf.mxu0
    %v273 = vadd.f32 0.0, %v272
    %v274 = vpop.f32.mrf.mxu0
    %v275 = vadd.f32 0.0, %v274
    %276 = vdwg.mxu0
    %v279 = vunpack.c.l.b16 %v247
    %v280 = vunpack.c.l.b16 %v248
    %v281 = vpack.c.b16 %v280, %v279
    %282 = vrot.lane.b32.xlu0 %v281, 96
    %v283 = vpop.permute.xlu0 %282
    %v285 = vsel %vm256, %v281, 0
    %v288 = vsel %vm256, %v283, 0
    %290 = vmatpush.bf16.xpose.msra.mxu0 0
    %291 = vmatpush.bf16.xpose.msra.mxu0 0
    %292 = vmatpush.bf16.xpose.msra.mxu0 0
    %293 = vmatpush.bf16.xpose.msra.mxu0 0
    %294 = vmatpush.bf16.xpose.msra.mxu0 0
    %295 = vmatpush.bf16.xpose.msra.mxu0 0
    %296 = vmatpush.bf16.xpose.msra.mxu0 0
    %297 = vmatpush.bf16.xpose.msra.mxu0 %v288
    %298 = vmatmul.bf16.gmra.mxu0 %v285
    %v299 = vpop.f32.mrf.mxu0
    %v300 = vadd.f32 0.0, %v299
    %v301 = vpop.f32.mrf.mxu0
    %v302 = vadd.f32 0.0, %v301
    %303 = vdwg.mxu0
    %vm304 = vcmask 130048
    %v305 = vsel %vm304, %v273, -inf
    %306 = vmax.xlane.f32.xlu0 %v305
    %v307 = vpop.xlane.xlu0 %306
    %v308 = vsel %vm304, %v275, -inf
    %309 = vmax.xlane.f32.xlu0 %v308
    %v310 = vpop.xlane.xlu0 %309
    %v311 = vsel %vm304, %v300, -inf
    %312 = vmax.xlane.f32.xlu0 %v311
    %v313 = vpop.xlane.xlu0 %312
    %v314 = vsel %vm304, %v302, -inf
    %315 = vmax.xlane.f32.xlu0 %v314
    %v316 = vpop.xlane.xlu0 %315
    %v317 = vsub.f32 %v273, %v307
    %v318 = vsub.f32 %v275, %v310
    %v319 = vsub.f32 %v300, %v313
    %v320 = vsub.f32 %v302, %v316
    %v321 = vmul.f32 %v317, 1.442695
    %v322 = vpow.pop %v321
    %v323 = vmul.f32 %v318, 1.442695
    %v324 = vpow.pop %v323
    %v325 = vmul.f32 %v319, 1.442695
    %v326 = vpow.pop %v325
    %v327 = vmul.f32 %v320, 1.442695
    %v328 = vpow.pop %v327
    %v329 = vsel %vm304, %v322, 0.0
    %330 = vadd.xlane.f32.xlu0 %v329
    %v331 = vpop.xlane.xlu0 %330
    %v332 = vsel %vm304, %v324, 0.0
    %333 = vadd.xlane.f32.xlu0 %v332
    %v334 = vpop.xlane.xlu0 %333
    %v335 = vsel %vm304, %v326, 0.0
    %336 = vadd.xlane.f32.xlu0 %v335
    %v337 = vpop.xlane.xlu0 %336
    %v338 = vsel %vm304, %v328, 0.0
    %339 = vadd.xlane.f32.xlu0 %v338
    %v340 = vpop.xlane.xlu0 %339
    %v341 = vrcp.pop %v331
    %v342 = vrcp.pop %v334
    %v343 = vrcp.pop %v337
    %v344 = vrcp.pop %v340
    %v345 = vmul.f32 %v322, %v341
    %v346 = vmul.f32 %v324, %v342
    %v347 = vmul.f32 %v326, %v343
    %v348 = vmul.f32 %v328, %v344
    %v349 = vpack.c.bf16 %v345, %v345
    %v350 = vpack.c.bf16 %v346, %v346
    %v351 = vpack.c.bf16 %v347, %v347
    %v352 = vpack.c.bf16 %v348, %v348
    %v355 = vunpack.c.l.b16 %v349
    %v356 = vunpack.c.l.b16 %v350
    %v357 = vpack.c.b16 %v356, %v355
    %358 = vrot.lane.b32.xlu0 %v253, 64
    %v359 = vpop.permute.xlu0 %358
    %v362 = vsel %vm304, %v357, 0
    %364 = vmatpush.bf16.msra.mxu0 0
    %365 = vmatpush.bf16.msra.mxu0 0
    %366 = vmatpush.bf16.msra.mxu0 0
    %367 = vmatpush.bf16.msra.mxu0 0
    %368 = vmatpush.bf16.msra.mxu0 0
    %369 = vmatpush.bf16.msra.mxu0 0
    %370 = vmatpush.bf16.msra.mxu0 0
    %371 = vmatpush.bf16.msra.mxu0 %v359
    %372 = vmatmul.bf16.gmra.mxu0 %v362
    %v373 = vpop.f32.mrf.mxu0
    %v374 = vadd.f32 0.0, %v373
    %v375 = vpop.f32.mrf.mxu0
    %v376 = vadd.f32 0.0, %v375
    %377 = vdwg.mxu0
    %v380 = vunpack.c.l.b16 %v351
    %v381 = vunpack.c.l.b16 %v352
    %v382 = vpack.c.b16 %v381, %v380
    %383 = vrot.lane.b32.xlu0 %v281, 64
    %v384 = vpop.permute.xlu0 %383
    %v387 = vsel %vm304, %v382, 0
    %389 = vmatpush.bf16.msra.mxu0 0
    %390 = vmatpush.bf16.msra.mxu0 0
    %391 = vmatpush.bf16.msra.mxu0 0
    %392 = vmatpush.bf16.msra.mxu0 0
    %393 = vmatpush.bf16.msra.mxu0 0
    %394 = vmatpush.bf16.msra.mxu0 0
    %395 = vmatpush.bf16.msra.mxu0 0
    %396 = vmatpush.bf16.msra.mxu0 %v384
    %397 = vmatmul.bf16.gmra.mxu0 %v387
    %v398 = vpop.f32.mrf.mxu0
    %v399 = vadd.f32 0.0, %v398
    %v400 = vpop.f32.mrf.mxu0
    %v401 = vadd.f32 0.0, %v400
    %402 = vdwg.mxu0
    %403 = vrot.lane.b32.xlu0 %v253, 120
    %v404 = vpop.permute.xlu0 %403
    %405 = vrot.lane.b32.xlu0 %v253, 88
    %v406 = vpop.permute.xlu0 %405
    %v408 = vsel %vm256, %v404, 0
    %v411 = vsel %vm256, %v406, 0
    %413 = vmatpush.bf16.xpose.msra.mxu0 0
    %414 = vmatpush.bf16.xpose.msra.mxu0 0
    %415 = vmatpush.bf16.xpose.msra.mxu0 0
    %416 = vmatpush.bf16.xpose.msra.mxu0 0
    %417 = vmatpush.bf16.xpose.msra.mxu0 0
    %418 = vmatpush.bf16.xpose.msra.mxu0 0
    %419 = vmatpush.bf16.xpose.msra.mxu0 0
    %420 = vmatpush.bf16.xpose.msra.mxu0 %v411
    %421 = vmatmul.bf16.gmra.mxu0 %v408
    %v422 = vpop.f32.mrf.mxu0
    %v423 = vadd.f32 0.0, %v422
    %v424 = vpop.f32.mrf.mxu0
    %v425 = vadd.f32 0.0, %v424
    %426 = vdwg.mxu0
    %427 = vrot.lane.b32.xlu0 %v281, 120
    %v428 = vpop.permute.xlu0 %427
    %429 = vrot.lane.b32.xlu0 %v281, 88
    %v430 = vpop.permute.xlu0 %429
    %v432 = vsel %vm256, %v428, 0
    %v435 = vsel %vm256, %v430, 0
    %437 = vmatpush.bf16.xpose.msra.mxu0 0
    %438 = vmatpush.bf16.xpose.msra.mxu0 0
    %439 = vmatpush.bf16.xpose.msra.mxu0 0
    %440 = vmatpush.bf16.xpose.msra.mxu0 0
    %441 = vmatpush.bf16.xpose.msra.mxu0 0
    %442 = vmatpush.bf16.xpose.msra.mxu0 0
    %443 = vmatpush.bf16.xpose.msra.mxu0 0
    %444 = vmatpush.bf16.xpose.msra.mxu0 %v435
    %445 = vmatmul.bf16.gmra.mxu0 %v432
    %v446 = vpop.f32.mrf.mxu0
    %v447 = vadd.f32 0.0, %v446
    %v448 = vpop.f32.mrf.mxu0
    %v449 = vadd.f32 0.0, %v448
    %450 = vdwg.mxu0
    %v451 = vsel %vm304, %v423, -inf
    %452 = vmax.xlane.f32.xlu0 %v451
    %v453 = vpop.xlane.xlu0 %452
    %v454 = vsel %vm304, %v425, -inf
    %455 = vmax.xlane.f32.xlu0 %v454
    %v456 = vpop.xlane.xlu0 %455
    %v457 = vsel %vm304, %v447, -inf
    %458 = vmax.xlane.f32.xlu0 %v457
    %v459 = vpop.xlane.xlu0 %458
    %v460 = vsel %vm304, %v449, -inf
    %461 = vmax.xlane.f32.xlu0 %v460
    %v462 = vpop.xlane.xlu0 %461
    %v463 = vsub.f32 %v423, %v453
    %v464 = vsub.f32 %v425, %v456
    %v465 = vsub.f32 %v447, %v459
    %v466 = vsub.f32 %v449, %v462
    %v467 = vmul.f32 %v463, 1.442695
    %v468 = vpow.pop %v467
    %v469 = vmul.f32 %v464, 1.442695
    %v470 = vpow.pop %v469
    %v471 = vmul.f32 %v465, 1.442695
    %v472 = vpow.pop %v471
    %v473 = vmul.f32 %v466, 1.442695
    %v474 = vpow.pop %v473
    %v475 = vsel %vm304, %v468, 0.0
    %476 = vadd.xlane.f32.xlu0 %v475
    %v477 = vpop.xlane.xlu0 %476
    %v478 = vsel %vm304, %v470, 0.0
    %479 = vadd.xlane.f32.xlu0 %v478
    %v480 = vpop.xlane.xlu0 %479
    %v481 = vsel %vm304, %v472, 0.0
    %482 = vadd.xlane.f32.xlu0 %v481
    %v483 = vpop.xlane.xlu0 %482
    %v484 = vsel %vm304, %v474, 0.0
    %485 = vadd.xlane.f32.xlu0 %v484
    %v486 = vpop.xlane.xlu0 %485
    %v487 = vrcp.pop %v477
    %v488 = vrcp.pop %v480
    %v489 = vrcp.pop %v483
    %v490 = vrcp.pop %v486
    %v491 = vmul.f32 %v468, %v487
    %v492 = vmul.f32 %v470, %v488
    %v493 = vmul.f32 %v472, %v489
    %v494 = vmul.f32 %v474, %v490
    %v495 = vpack.c.bf16 %v491, %v491
    %v496 = vpack.c.bf16 %v492, %v492
    %v497 = vpack.c.bf16 %v493, %v493
    %v498 = vpack.c.bf16 %v494, %v494
    %v501 = vunpack.c.l.b16 %v495
    %v502 = vunpack.c.l.b16 %v496
    %v503 = vpack.c.b16 %v502, %v501
    %504 = vrot.lane.b32.xlu0 %v253, 56
    %v505 = vpop.permute.xlu0 %504
    %v508 = vsel %vm304, %v503, 0
    %510 = vmatpush.bf16.msra.mxu0 0
    %511 = vmatpush.bf16.msra.mxu0 0
    %512 = vmatpush.bf16.msra.mxu0 0
    %513 = vmatpush.bf16.msra.mxu0 0
    %514 = vmatpush.bf16.msra.mxu0 0
    %515 = vmatpush.bf16.msra.mxu0 0
    %516 = vmatpush.bf16.msra.mxu0 0
    %517 = vmatpush.bf16.msra.mxu0 %v505
    %518 = vmatmul.bf16.gmra.mxu0 %v508
    %v519 = vpop.f32.mrf.mxu0
    %v520 = vadd.f32 0.0, %v519
    %v521 = vpop.f32.mrf.mxu0
    %v522 = vadd.f32 0.0, %v521
    %523 = vdwg.mxu0
    %v526 = vunpack.c.l.b16 %v497
    %v527 = vunpack.c.l.b16 %v498
    %v528 = vpack.c.b16 %v527, %v526
    %529 = vrot.lane.b32.xlu0 %v281, 56
    %v530 = vpop.permute.xlu0 %529
    %v533 = vsel %vm304, %v528, 0
    %535 = vmatpush.bf16.msra.mxu0 0
    %536 = vmatpush.bf16.msra.mxu0 0
    %537 = vmatpush.bf16.msra.mxu0 0
    %538 = vmatpush.bf16.msra.mxu0 0
    %539 = vmatpush.bf16.msra.mxu0 0
    %540 = vmatpush.bf16.msra.mxu0 0
    %541 = vmatpush.bf16.msra.mxu0 0
    %542 = vmatpush.bf16.msra.mxu0 %v530
    %543 = vmatmul.bf16.gmra.mxu0 %v533
    %v544 = vpop.f32.mrf.mxu0
    %v545 = vadd.f32 0.0, %v544
    %v546 = vpop.f32.mrf.mxu0
    %v547 = vadd.f32 0.0, %v546
    %548 = vdwg.mxu0
    %549 = vrot.lane.b32.xlu0 %v253, 112
    %v550 = vpop.permute.xlu0 %549
    %551 = vrot.lane.b32.xlu0 %v253, 80
    %v552 = vpop.permute.xlu0 %551
    %v554 = vsel %vm256, %v550, 0
    %v557 = vsel %vm256, %v552, 0
    %559 = vmatpush.bf16.xpose.msra.mxu0 0
    %560 = vmatpush.bf16.xpose.msra.mxu0 0
    %561 = vmatpush.bf16.xpose.msra.mxu0 0
    %562 = vmatpush.bf16.xpose.msra.mxu0 0
    %563 = vmatpush.bf16.xpose.msra.mxu0 0
    %564 = vmatpush.bf16.xpose.msra.mxu0 0
    %565 = vmatpush.bf16.xpose.msra.mxu0 0
    %566 = vmatpush.bf16.xpose.msra.mxu0 %v557
    %567 = vmatmul.bf16.gmra.mxu0 %v554
    %v568 = vpop.f32.mrf.mxu0
    %v569 = vadd.f32 0.0, %v568
    %v570 = vpop.f32.mrf.mxu0
    %v571 = vadd.f32 0.0, %v570
    %572 = vdwg.mxu0
    %573 = vrot.lane.b32.xlu0 %v281, 112
    %v574 = vpop.permute.xlu0 %573
    %575 = vrot.lane.b32.xlu0 %v281, 80
    %v576 = vpop.permute.xlu0 %575
    %v578 = vsel %vm256, %v574, 0
    %v581 = vsel %vm256, %v576, 0
    %583 = vmatpush.bf16.xpose.msra.mxu0 0
    %584 = vmatpush.bf16.xpose.msra.mxu0 0
    %585 = vmatpush.bf16.xpose.msra.mxu0 0
    %586 = vmatpush.bf16.xpose.msra.mxu0 0
    %587 = vmatpush.bf16.xpose.msra.mxu0 0
    %588 = vmatpush.bf16.xpose.msra.mxu0 0
    %589 = vmatpush.bf16.xpose.msra.mxu0 0
    %590 = vmatpush.bf16.xpose.msra.mxu0 %v581
    %591 = vmatmul.bf16.gmra.mxu0 %v578
    %v592 = vpop.f32.mrf.mxu0
    %v593 = vadd.f32 0.0, %v592
    %v594 = vpop.f32.mrf.mxu0
    %v595 = vadd.f32 0.0, %v594
    %596 = vdwg.mxu0
    %v597 = vsel %vm304, %v569, -inf
    %598 = vmax.xlane.f32.xlu0 %v597
    %v599 = vpop.xlane.xlu0 %598
    %v600 = vsel %vm304, %v571, -inf
    %601 = vmax.xlane.f32.xlu0 %v600
    %v602 = vpop.xlane.xlu0 %601
    %v603 = vsel %vm304, %v593, -inf
    %604 = vmax.xlane.f32.xlu0 %v603
    %v605 = vpop.xlane.xlu0 %604
    %v606 = vsel %vm304, %v595, -inf
    %607 = vmax.xlane.f32.xlu0 %v606
    %v608 = vpop.xlane.xlu0 %607
    %v609 = vsub.f32 %v569, %v599
    %v610 = vsub.f32 %v571, %v602
    %v611 = vsub.f32 %v593, %v605
    %v612 = vsub.f32 %v595, %v608
    %v613 = vmul.f32 %v609, 1.442695
    %v614 = vpow.pop %v613
    %v615 = vmul.f32 %v610, 1.442695
    %v616 = vpow.pop %v615
    %v617 = vmul.f32 %v611, 1.442695
    %v618 = vpow.pop %v617
    %v619 = vmul.f32 %v612, 1.442695
    %v620 = vpow.pop %v619
    %v621 = vsel %vm304, %v614, 0.0
    %622 = vadd.xlane.f32.xlu0 %v621
    %v623 = vpop.xlane.xlu0 %622
    %v624 = vsel %vm304, %v616, 0.0
    %625 = vadd.xlane.f32.xlu0 %v624
    %v626 = vpop.xlane.xlu0 %625
    %v627 = vsel %vm304, %v618, 0.0
    %628 = vadd.xlane.f32.xlu0 %v627
    %v629 = vpop.xlane.xlu0 %628
    %v630 = vsel %vm304, %v620, 0.0
    %631 = vadd.xlane.f32.xlu0 %v630
    %v632 = vpop.xlane.xlu0 %631
    %v633 = vrcp.pop %v623
    %v634 = vrcp.pop %v626
    %v635 = vrcp.pop %v629
    %v636 = vrcp.pop %v632
    %v637 = vmul.f32 %v614, %v633
    %v638 = vmul.f32 %v616, %v634
    %v639 = vmul.f32 %v618, %v635
    %v640 = vmul.f32 %v620, %v636
    %v641 = vpack.c.bf16 %v637, %v637
    %v642 = vpack.c.bf16 %v638, %v638
    %v643 = vpack.c.bf16 %v639, %v639
    %v644 = vpack.c.bf16 %v640, %v640
    %v647 = vunpack.c.l.b16 %v641
    %v648 = vunpack.c.l.b16 %v642
    %v649 = vpack.c.b16 %v648, %v647
    %650 = vrot.lane.b32.xlu0 %v253, 48
    %v651 = vpop.permute.xlu0 %650
    %v654 = vsel %vm304, %v649, 0
    %656 = vmatpush.bf16.msra.mxu0 0
    %657 = vmatpush.bf16.msra.mxu0 0
    %658 = vmatpush.bf16.msra.mxu0 0
    %659 = vmatpush.bf16.msra.mxu0 0
    %660 = vmatpush.bf16.msra.mxu0 0
    %661 = vmatpush.bf16.msra.mxu0 0
    %662 = vmatpush.bf16.msra.mxu0 0
    %663 = vmatpush.bf16.msra.mxu0 %v651
    %664 = vmatmul.bf16.gmra.mxu0 %v654
    %v665 = vpop.f32.mrf.mxu0
    %v666 = vadd.f32 0.0, %v665
    %v667 = vpop.f32.mrf.mxu0
    %v668 = vadd.f32 0.0, %v667
    %669 = vdwg.mxu0
    %v672 = vunpack.c.l.b16 %v643
    %v673 = vunpack.c.l.b16 %v644
    %v674 = vpack.c.b16 %v673, %v672
    %675 = vrot.lane.b32.xlu0 %v281, 48
    %v676 = vpop.permute.xlu0 %675
    %v679 = vsel %vm304, %v674, 0
    %681 = vmatpush.bf16.msra.mxu0 0
    %682 = vmatpush.bf16.msra.mxu0 0
    %683 = vmatpush.bf16.msra.mxu0 0
    %684 = vmatpush.bf16.msra.mxu0 0
    %685 = vmatpush.bf16.msra.mxu0 0
    %686 = vmatpush.bf16.msra.mxu0 0
    %687 = vmatpush.bf16.msra.mxu0 0
    %688 = vmatpush.bf16.msra.mxu0 %v676
    %689 = vmatmul.bf16.gmra.mxu0 %v679
    %v690 = vpop.f32.mrf.mxu0
    %v691 = vadd.f32 0.0, %v690
    %v692 = vpop.f32.mrf.mxu0
    %v693 = vadd.f32 0.0, %v692
    %694 = vdwg.mxu0
    %695 = vrot.lane.b32.xlu0 %v253, 104
    %v696 = vpop.permute.xlu0 %695
    %697 = vrot.lane.b32.xlu0 %v253, 72
    %v698 = vpop.permute.xlu0 %697
    %v700 = vsel %vm256, %v696, 0
    %v703 = vsel %vm256, %v698, 0
    %705 = vmatpush.bf16.xpose.msra.mxu0 0
    %706 = vmatpush.bf16.xpose.msra.mxu0 0
    %707 = vmatpush.bf16.xpose.msra.mxu0 0
    %708 = vmatpush.bf16.xpose.msra.mxu0 0
    %709 = vmatpush.bf16.xpose.msra.mxu0 0
    %710 = vmatpush.bf16.xpose.msra.mxu0 0
    %711 = vmatpush.bf16.xpose.msra.mxu0 0
    %712 = vmatpush.bf16.xpose.msra.mxu0 %v703
    %713 = vmatmul.bf16.gmra.mxu0 %v700
    %v714 = vpop.f32.mrf.mxu0
    %v715 = vadd.f32 0.0, %v714
    %v716 = vpop.f32.mrf.mxu0
    %v717 = vadd.f32 0.0, %v716
    %718 = vdwg.mxu0
    %719 = vrot.lane.b32.xlu0 %v281, 104
    %v720 = vpop.permute.xlu0 %719
    %721 = vrot.lane.b32.xlu0 %v281, 72
    %v722 = vpop.permute.xlu0 %721
    %v724 = vsel %vm256, %v720, 0
    %v727 = vsel %vm256, %v722, 0
    %729 = vmatpush.bf16.xpose.msra.mxu0 0
    %730 = vmatpush.bf16.xpose.msra.mxu0 0
    %731 = vmatpush.bf16.xpose.msra.mxu0 0
    %732 = vmatpush.bf16.xpose.msra.mxu0 0
    %733 = vmatpush.bf16.xpose.msra.mxu0 0
    %734 = vmatpush.bf16.xpose.msra.mxu0 0
    %735 = vmatpush.bf16.xpose.msra.mxu0 0
    %736 = vmatpush.bf16.xpose.msra.mxu0 %v727
    %737 = vmatmul.bf16.gmra.mxu0 %v724
    %v738 = vpop.f32.mrf.mxu0
    %v739 = vadd.f32 0.0, %v738
    %v740 = vpop.f32.mrf.mxu0
    %v741 = vadd.f32 0.0, %v740
    %742 = vdwg.mxu0
    %v743 = vsel %vm304, %v715, -inf
    %744 = vmax.xlane.f32.xlu0 %v743
    %v745 = vpop.xlane.xlu0 %744
    %v746 = vsel %vm304, %v717, -inf
    %747 = vmax.xlane.f32.xlu0 %v746
    %v748 = vpop.xlane.xlu0 %747
    %v749 = vsel %vm304, %v739, -inf
    %750 = vmax.xlane.f32.xlu0 %v749
    %v751 = vpop.xlane.xlu0 %750
    %v752 = vsel %vm304, %v741, -inf
    %753 = vmax.xlane.f32.xlu0 %v752
    %v754 = vpop.xlane.xlu0 %753
    %v755 = vsub.f32 %v715, %v745
    %v756 = vsub.f32 %v717, %v748
    %v757 = vsub.f32 %v739, %v751
    %v758 = vsub.f32 %v741, %v754
    %v759 = vmul.f32 %v755, 1.442695
    %v760 = vpow.pop %v759
    %v761 = vmul.f32 %v756, 1.442695
    %v762 = vpow.pop %v761
    %v763 = vmul.f32 %v757, 1.442695
    %v764 = vpow.pop %v763
    %v765 = vmul.f32 %v758, 1.442695
    %v766 = vpow.pop %v765
    %v767 = vsel %vm304, %v760, 0.0
    %768 = vadd.xlane.f32.xlu0 %v767
    %v769 = vpop.xlane.xlu0 %768
    %v770 = vsel %vm304, %v762, 0.0
    %771 = vadd.xlane.f32.xlu0 %v770
    %v772 = vpop.xlane.xlu0 %771
    %v773 = vsel %vm304, %v764, 0.0
    %774 = vadd.xlane.f32.xlu0 %v773
    %v775 = vpop.xlane.xlu0 %774
    %v776 = vsel %vm304, %v766, 0.0
    %777 = vadd.xlane.f32.xlu0 %v776
    %v778 = vpop.xlane.xlu0 %777
    %v779 = vrcp.pop %v769
    %v780 = vrcp.pop %v772
    %v781 = vrcp.pop %v775
    %v782 = vrcp.pop %v778
    %v783 = vmul.f32 %v760, %v779
    %v784 = vmul.f32 %v762, %v780
    %v785 = vmul.f32 %v764, %v781
    %v786 = vmul.f32 %v766, %v782
    %v787 = vpack.c.bf16 %v783, %v783
    %v788 = vpack.c.bf16 %v784, %v784
    %v789 = vpack.c.bf16 %v785, %v785
    %v790 = vpack.c.bf16 %v786, %v786
    %v793 = vunpack.c.l.b16 %v787
    %v794 = vunpack.c.l.b16 %v788
    %v795 = vpack.c.b16 %v794, %v793
    %796 = vrot.lane.b32.xlu0 %v253, 40
    %v797 = vpop.permute.xlu0 %796
    %v800 = vsel %vm304, %v795, 0
    %802 = vmatpush.bf16.msra.mxu0 0
    %803 = vmatpush.bf16.msra.mxu0 0
    %804 = vmatpush.bf16.msra.mxu0 0
    %805 = vmatpush.bf16.msra.mxu0 0
    %806 = vmatpush.bf16.msra.mxu0 0
    %807 = vmatpush.bf16.msra.mxu0 0
    %808 = vmatpush.bf16.msra.mxu0 0
    %809 = vmatpush.bf16.msra.mxu0 %v797
    %810 = vmatmul.bf16.gmra.mxu0 %v800
    %v811 = vpop.f32.mrf.mxu0
    %v812 = vadd.f32 0.0, %v811
    %v813 = vpop.f32.mrf.mxu0
    %v814 = vadd.f32 0.0, %v813
    %815 = vdwg.mxu0
    %v818 = vunpack.c.l.b16 %v789
    %v819 = vunpack.c.l.b16 %v790
    %v820 = vpack.c.b16 %v819, %v818
    %821 = vrot.lane.b32.xlu0 %v281, 40
    %v822 = vpop.permute.xlu0 %821
    %v825 = vsel %vm304, %v820, 0
    %827 = vmatpush.bf16.msra.mxu0 0
    %828 = vmatpush.bf16.msra.mxu0 0
    %829 = vmatpush.bf16.msra.mxu0 0
    %830 = vmatpush.bf16.msra.mxu0 0
    %831 = vmatpush.bf16.msra.mxu0 0
    %832 = vmatpush.bf16.msra.mxu0 0
    %833 = vmatpush.bf16.msra.mxu0 0
    %834 = vmatpush.bf16.msra.mxu0 %v822
    %835 = vmatmul.bf16.gmra.mxu0 %v825
    %v836 = vpop.f32.mrf.mxu0
    %v837 = vadd.f32 0.0, %v836
    %v838 = vpop.f32.mrf.mxu0
    %v839 = vadd.f32 0.0, %v838
    %840 = vdwg.mxu0
    %845 = vrot.lane.b32.xlu0 %v520, 8
    %v846 = vpop.permute.xlu0 %845
    %847 = vrot.lane.b32.xlu0 %v522, 8
    %v848 = vpop.permute.xlu0 %847
    %849 = vrot.lane.b32.xlu0 %v545, 8
    %v850 = vpop.permute.xlu0 %849
    %851 = vrot.lane.b32.xlu0 %v547, 8
    %v852 = vpop.permute.xlu0 %851
    %861 = vrot.lane.b32.xlu0 %v666, 16
    %v862 = vpop.permute.xlu0 %861
    %863 = vrot.lane.b32.xlu0 %v668, 16
    %v864 = vpop.permute.xlu0 %863
    %865 = vrot.lane.b32.xlu0 %v691, 16
    %v866 = vpop.permute.xlu0 %865
    %867 = vrot.lane.b32.xlu0 %v693, 16
    %v868 = vpop.permute.xlu0 %867
    %877 = vrot.lane.b32.xlu0 %v812, 24
    %v878 = vpop.permute.xlu0 %877
    %879 = vrot.lane.b32.xlu0 %v814, 24
    %v880 = vpop.permute.xlu0 %879
    %881 = vrot.lane.b32.xlu0 %v837, 24
    %v882 = vpop.permute.xlu0 %881
    %883 = vrot.lane.b32.xlu0 %v839, 24
    %v884 = vpop.permute.xlu0 %883
    %v889 = vsel %vm256, %v374, %v846
    %v890 = vsel %vm256, %v376, %v848
    %v891 = vsel %vm256, %v399, %v850
    %v892 = vsel %vm256, %v401, %v852
    %v893 = vsel %vm304, %v889, %v862
    %v894 = vsel %vm304, %v890, %v864
    %v895 = vsel %vm304, %v891, %v866
    %v896 = vsel %vm304, %v892, %v868
    %vm897 = vcmask 195584
    %v898 = vsel %vm897, %v893, %v878
    %v899 = vsel %vm897, %v894, %v880
    %v900 = vsel %vm897, %v895, %v882
    %v901 = vsel %vm897, %v896, %v884
    %v902 = vpack.c.bf16 %v899, %v898
    %v903 = vpack.c.bf16 %v901, %v900
    %v905 = vperm.slane %v244, 0
    %v911 = vunpack.c.l.b16 %v240
    %v912 = vunpack.c.l.b16 %v241
    %v913 = vunpack.c.l.b16 %v242
    %v914 = vunpack.c.l.b16 %v243
    %v915 = vpack.c.b16 %v912, %v911
    %v916 = vpack.c.b16 %v914, %v913
    %v920 = vsel %vm89, %v902, 0
    %v923 = vsel %vm89, %v903, 0
    %925 = vmatpush.bf16.msra.mxu0 0
    %926 = vmatpush.bf16.msra.mxu0 0
    %927 = vmatpush.bf16.msra.mxu0 0
    %928 = vmatpush.bf16.msra.mxu0 0
    %929 = vmatpush.bf16.msra.mxu0 0
    %930 = vmatpush.bf16.msra.mxu0 0
    %931 = vmatpush.bf16.msra.mxu0 %v916
    %932 = vmatpush.bf16.msra.mxu0 %v915
    %933 = vmatmul.bf16.gmra.mxu0 %v920
    %v934 = vpop.f32.mrf.mxu0
    %v935 = vadd.f32 %v905, %v934
    %v936 = vpop.f32.mrf.mxu0
    %v937 = vadd.f32 %v905, %v936
    %938 = vmatmul.bf16.gmra.mxu0 %v923
    %v939 = vpop.f32.mrf.mxu0
    %v940 = vadd.f32 %v905, %v939
    %v941 = vpop.f32.mrf.mxu0
    %v942 = vadd.f32 %v905, %v941
    %943 = vdwg.mxu0
    %v944 = vadd.f32 %v85, %v935
    %v945 = vadd.f32 %v86, %v937
    %v946 = vadd.f32 %v87, %v940
    %v947 = vadd.f32 %v88, %v942
    %v948 = vsel %vm89, %v944, 0.0
    %949 = vadd.xlane.f32.xlu0 %v948
    %v950 = vpop.xlane.xlu0 %949
    %v951 = vsel %vm89, %v945, 0.0
    %952 = vadd.xlane.f32.xlu0 %v951
    %v953 = vpop.xlane.xlu0 %952
    %v954 = vsel %vm89, %v946, 0.0
    %955 = vadd.xlane.f32.xlu0 %v954
    %v956 = vpop.xlane.xlu0 %955
    %v957 = vsel %vm89, %v947, 0.0
    %958 = vadd.xlane.f32.xlu0 %v957
    %v959 = vpop.xlane.xlu0 %958
    %v960 = vmul.f32 %v950, %v108
    %v961 = vmul.f32 %v953, %v108
    %v962 = vmul.f32 %v956, %v108
    %v963 = vmul.f32 %v959, %v108
    %v964 = vmul.f32 %v944, %v944
    %v965 = vmul.f32 %v945, %v945
    %v966 = vmul.f32 %v946, %v946
    %v967 = vmul.f32 %v947, %v947
    %v968 = vsel %vm89, %v964, 0.0
    %969 = vadd.xlane.f32.xlu0 %v968
    %v970 = vpop.xlane.xlu0 %969
    %v971 = vsel %vm89, %v965, 0.0
    %972 = vadd.xlane.f32.xlu0 %v971
    %v973 = vpop.xlane.xlu0 %972
    %v974 = vsel %vm89, %v966, 0.0
    %975 = vadd.xlane.f32.xlu0 %v974
    %v976 = vpop.xlane.xlu0 %975
    %v977 = vsel %vm89, %v967, 0.0
    %978 = vadd.xlane.f32.xlu0 %v977
    %v979 = vpop.xlane.xlu0 %978
    %v980 = vmul.f32 %v970, %v108
    %v981 = vmul.f32 %v973, %v108
    %v982 = vmul.f32 %v976, %v108
    %v983 = vmul.f32 %v979, %v108
    %v984 = vmul.f32 %v960, %v960
    %v985 = vmul.f32 %v961, %v961
    %v986 = vmul.f32 %v962, %v962
    %v987 = vmul.f32 %v963, %v963
    %v988 = vsub.f32 %v980, %v984
    %v989 = vsub.f32 %v981, %v985
    %v990 = vsub.f32 %v982, %v986
    %v991 = vsub.f32 %v983, %v987
    %v992 = vsub.f32 %v944, %v960
    %v993 = vsub.f32 %v945, %v961
    %v994 = vsub.f32 %v946, %v962
    %v995 = vsub.f32 %v947, %v963
    %v996 = vadd.f32 %v988, 1e-05
    %v997 = vadd.f32 %v989, 1e-05
    %v998 = vadd.f32 %v990, 1e-05
    %v999 = vadd.f32 %v991, 1e-05
    %v1000 = vrsqrt.pop %v996
    %v1001 = vmul.f32 %v1000, %v996
    %v1002 = vmul.f32 %v1001, %v1000
    %v1003 = vmul.f32 0.5, %v1002
    %v1004 = vsub.f32 1.5, %v1003
    %v1005 = vmul.f32 %v1000, %v1004
    %vm1006 = vweird.f32 %v996
    %vm1007 = vweird.f32 %v1000
    %vm1008 = vmor %vm1006, %vm1007
    %v1009 = vsel %vm1008, %v1000, %v1005
    %v1010 = vrsqrt.pop %v997
    %v1011 = vmul.f32 %v1010, %v997
    %v1012 = vmul.f32 %v1011, %v1010
    %v1013 = vmul.f32 0.5, %v1012
    %v1014 = vsub.f32 1.5, %v1013
    %v1015 = vmul.f32 %v1010, %v1014
    %vm1016 = vweird.f32 %v997
    %vm1017 = vweird.f32 %v1010
    %vm1018 = vmor %vm1016, %vm1017
    %v1019 = vsel %vm1018, %v1010, %v1015
    %v1020 = vrsqrt.pop %v998
    %v1021 = vmul.f32 %v1020, %v998
    %v1022 = vmul.f32 %v1021, %v1020
    %v1023 = vmul.f32 0.5, %v1022
    %v1024 = vsub.f32 1.5, %v1023
    %v1025 = vmul.f32 %v1020, %v1024
    %vm1026 = vweird.f32 %v998
    %vm1027 = vweird.f32 %v1020
    %vm1028 = vmor %vm1026, %vm1027
    %v1029 = vsel %vm1028, %v1020, %v1025
    %v1030 = vrsqrt.pop %v999
    %v1031 = vmul.f32 %v1030, %v999
    %v1032 = vmul.f32 %v1031, %v1030
    %v1033 = vmul.f32 0.5, %v1032
    %v1034 = vsub.f32 1.5, %v1033
    %v1035 = vmul.f32 %v1030, %v1034
    %vm1036 = vweird.f32 %v999
    %vm1037 = vweird.f32 %v1030
    %vm1038 = vmor %vm1036, %vm1037
    %v1039 = vsel %vm1038, %v1030, %v1035
    %v1040 = vmul.f32 %v992, %v1009
    %v1041 = vmul.f32 %v993, %v1019
    %v1042 = vmul.f32 %v994, %v1029
    %v1043 = vmul.f32 %v995, %v1039
    %v1044 = vpack.c.bf16 %v1041, %v1040
    %v1045 = vpack.c.bf16 %v1043, %v1042
    %v1046 = vld [vmem:[%s6] sm:$0xf]
    %v1047 = vld [vmem:[%s6 + $0x4] sm:$0xf]
    %v1048 = vld [vmem:[%s6 + $0x8] sm:$0xf]
    %v1049 = vld [vmem:[%s6 + $0xc] sm:$0xf]
    %v1050 = vld [vmem:[%s7] sm:$0x1]
    %v1052 = vperm.slane %v1050, 0
    %v1058 = vunpack.c.l.b16 %v1046
    %v1059 = vunpack.c.l.b16 %v1047
    %v1060 = vunpack.c.l.b16 %v1048
    %v1061 = vunpack.c.l.b16 %v1049
    %v1062 = vpack.c.b16 %v1059, %v1058
    %v1063 = vpack.c.b16 %v1061, %v1060
    %v1067 = vsel %vm89, %v1044, 0
    %v1070 = vsel %vm89, %v1045, 0
    %1072 = vmatpush.bf16.msra.mxu0 0
    %1073 = vmatpush.bf16.msra.mxu0 0
    %1074 = vmatpush.bf16.msra.mxu0 0
    %1075 = vmatpush.bf16.msra.mxu0 0
    %1076 = vmatpush.bf16.msra.mxu0 0
    %1077 = vmatpush.bf16.msra.mxu0 0
    %1078 = vmatpush.bf16.msra.mxu0 %v1063
    %1079 = vmatpush.bf16.msra.mxu0 %v1062
    %1080 = vmatmul.bf16.gmra.mxu0 %v1067
    %v1081 = vpop.f32.mrf.mxu0
    %v1082 = vadd.f32 %v1052, %v1081
    %v1083 = vpop.f32.mrf.mxu0
    %v1084 = vadd.f32 %v1052, %v1083
    %1085 = vmatmul.bf16.gmra.mxu0 %v1070
    %v1086 = vpop.f32.mrf.mxu0
    %v1087 = vadd.f32 %v1052, %v1086
    %v1088 = vpop.f32.mrf.mxu0
    %v1089 = vadd.f32 %v1052, %v1088
    %1090 = vdwg.mxu0
    %v1091 = vmax.f32 %v1082, 0.0
    %v1092 = vmax.f32 %v1084, 0.0
    %v1093 = vmax.f32 %v1087, 0.0
    %v1094 = vmax.f32 %v1089, 0.0
    %v1095 = vpack.c.bf16 %v1092, %v1091
    %v1096 = vpack.c.bf16 %v1094, %v1093
    %v1097 = vld [vmem:[%s8] sm:$0xf]
    %v1098 = vld [vmem:[%s8 + $0x4] sm:$0xf]
    %v1099 = vld [vmem:[%s8 + $0x8] sm:$0xf]
    %v1100 = vld [vmem:[%s8 + $0xc] sm:$0xf]
    %v1101 = vld [vmem:[%s8 + $0x10] sm:$0xf]
    %v1102 = vld [vmem:[%s8 + $0x14] sm:$0xf]
    %v1103 = vld [vmem:[%s8 + $0x18] sm:$0xf]
    %v1104 = vld [vmem:[%s8 + $0x1c] sm:$0xf]
    %v1105 = vld [vmem:[%s8 + $0x20] sm:$0xf]
    %v1106 = vld [vmem:[%s8 + $0x24] sm:$0xf]
    %v1107 = vld [vmem:[%s8 + $0x28] sm:$0xf]
    %v1108 = vld [vmem:[%s8 + $0x2c] sm:$0xf]
    %v1109 = vld [vmem:[%s8 + $0x30] sm:$0xf]
    %v1110 = vld [vmem:[%s8 + $0x34] sm:$0xf]
    %v1111 = vld [vmem:[%s8 + $0x38] sm:$0xf]
    %v1112 = vld [vmem:[%s8 + $0x3c] sm:$0xf]
    %v1129 = vunpack.c.l.b16 %v1097
    %v1130 = vunpack.c.l.b16 %v1098
    %v1131 = vunpack.c.l.b16 %v1099
    %v1132 = vunpack.c.l.b16 %v1100
    %v1133 = vunpack.c.l.b16 %v1101
    %v1134 = vunpack.c.l.b16 %v1102
    %v1135 = vunpack.c.l.b16 %v1103
    %v1136 = vunpack.c.l.b16 %v1104
    %v1137 = vunpack.c.l.b16 %v1105
    %v1138 = vunpack.c.l.b16 %v1106
    %v1139 = vunpack.c.l.b16 %v1107
    %v1140 = vunpack.c.l.b16 %v1108
    %v1141 = vunpack.c.l.b16 %v1109
    %v1142 = vunpack.c.l.b16 %v1110
    %v1143 = vunpack.c.l.b16 %v1111
    %v1144 = vunpack.c.l.b16 %v1112
    %v1145 = vpack.c.b16 %v1130, %v1129
    %v1146 = vpack.c.b16 %v1132, %v1131
    %v1147 = vpack.c.b16 %v1134, %v1133
    %v1148 = vpack.c.b16 %v1136, %v1135
    %v1149 = vpack.c.b16 %v1138, %v1137
    %v1150 = vpack.c.b16 %v1140, %v1139
    %v1151 = vpack.c.b16 %v1142, %v1141
    %v1152 = vpack.c.b16 %v1144, %v1143
    %1161 = vmatpush.bf16.msra.mxu0 %v1152
    %1162 = vmatpush.bf16.msra.mxu0 %v1151
    %1163 = vmatpush.bf16.msra.mxu0 %v1150
    %1164 = vmatpush.bf16.msra.mxu0 %v1149
    %1165 = vmatpush.bf16.msra.mxu0 %v1148
    %1166 = vmatpush.bf16.msra.mxu0 %v1147
    %1167 = vmatpush.bf16.msra.mxu0 %v1146
    %1168 = vmatpush.bf16.msra.mxu0 %v1145
    %1169 = vmatmul.bf16.gmra.mxu0 %v1095
    %v1170 = vpop.f32.mrf.mxu0
    %v1171 = vadd.f32 0.0, %v1170
    %v1172 = vpop.f32.mrf.mxu0
    %v1173 = vadd.f32 0.0, %v1172
    %1174 = vmatmul.bf16.gmra.mxu0 %v1096
    %v1175 = vpop.f32.mrf.mxu0
    %v1176 = vadd.f32 0.0, %v1175
    %v1177 = vpop.f32.mrf.mxu0
    %v1178 = vadd.f32 0.0, %v1177
    %1179 = vdwg.mxu0
    %v1180 = vadd.f32 %v944, %v1171
    %v1181 = vadd.f32 %v945, %v1173
    %v1182 = vadd.f32 %v946, %v1176
    %v1183 = vadd.f32 %v947, %v1178
    %v1184 = vld [vmem:[%s9] sm:$0x1]
    %v1186 = vperm.slane %v1184, 0
    %v1188 = vadd.f32 %v1180, %v1186
    %v1189 = vadd.f32 %v1181, %v1186
    %v1190 = vadd.f32 %v1182, %v1186
    %v1191 = vadd.f32 %v1183, %v1186
    %v1192 = vsel %vm89, %v1188, 0.0
    %1193 = vadd.xlane.f32.xlu0 %v1192
    %v1194 = vpop.xlane.xlu0 %1193
    %v1195 = vsel %vm89, %v1189, 0.0
    %1196 = vadd.xlane.f32.xlu0 %v1195
    %v1197 = vpop.xlane.xlu0 %1196
    %v1198 = vsel %vm89, %v1190, 0.0
    %1199 = vadd.xlane.f32.xlu0 %v1198
    %v1200 = vpop.xlane.xlu0 %1199
    %v1201 = vsel %vm89, %v1191, 0.0
    %1202 = vadd.xlane.f32.xlu0 %v1201
    %v1203 = vpop.xlane.xlu0 %1202
    %v1204 = vmul.f32 %v1194, %v108
    %v1205 = vmul.f32 %v1197, %v108
    %v1206 = vmul.f32 %v1200, %v108
    %v1207 = vmul.f32 %v1203, %v108
    %v1208 = vmul.f32 %v1188, %v1188
    %v1209 = vmul.f32 %v1189, %v1189
    %v1210 = vmul.f32 %v1190, %v1190
    %v1211 = vmul.f32 %v1191, %v1191
    %v1212 = vsel %vm89, %v1208, 0.0
    %1213 = vadd.xlane.f32.xlu0 %v1212
    %v1214 = vpop.xlane.xlu0 %1213
    %v1215 = vsel %vm89, %v1209, 0.0
    %1216 = vadd.xlane.f32.xlu0 %v1215
    %v1217 = vpop.xlane.xlu0 %1216
    %v1218 = vsel %vm89, %v1210, 0.0
    %1219 = vadd.xlane.f32.xlu0 %v1218
    %v1220 = vpop.xlane.xlu0 %1219
    %v1221 = vsel %vm89, %v1211, 0.0
    %1222 = vadd.xlane.f32.xlu0 %v1221
    %v1223 = vpop.xlane.xlu0 %1222
    %v1224 = vmul.f32 %v1214, %v108
    %v1225 = vmul.f32 %v1217, %v108
    %v1226 = vmul.f32 %v1220, %v108
    %v1227 = vmul.f32 %v1223, %v108
    %v1228 = vmul.f32 %v1204, %v1204
    %v1229 = vmul.f32 %v1205, %v1205
    %v1230 = vmul.f32 %v1206, %v1206
    %v1231 = vmul.f32 %v1207, %v1207
    %v1232 = vsub.f32 %v1224, %v1228
    %v1233 = vsub.f32 %v1225, %v1229
    %v1234 = vsub.f32 %v1226, %v1230
    %v1235 = vsub.f32 %v1227, %v1231
    %v1236 = vsub.f32 %v1188, %v1204
    %v1237 = vsub.f32 %v1189, %v1205
    %v1238 = vsub.f32 %v1190, %v1206
    %v1239 = vsub.f32 %v1191, %v1207
    %v1240 = vadd.f32 %v1232, 1e-05
    %v1241 = vadd.f32 %v1233, 1e-05
    %v1242 = vadd.f32 %v1234, 1e-05
    %v1243 = vadd.f32 %v1235, 1e-05
    %v1244 = vrsqrt.pop %v1240
    %v1245 = vmul.f32 %v1244, %v1240
    %v1246 = vmul.f32 %v1245, %v1244
    %v1247 = vmul.f32 0.5, %v1246
    %v1248 = vsub.f32 1.5, %v1247
    %v1249 = vmul.f32 %v1244, %v1248
    %vm1250 = vweird.f32 %v1240
    %vm1251 = vweird.f32 %v1244
    %vm1252 = vmor %vm1250, %vm1251
    %v1253 = vsel %vm1252, %v1244, %v1249
    %v1254 = vrsqrt.pop %v1241
    %v1255 = vmul.f32 %v1254, %v1241
    %v1256 = vmul.f32 %v1255, %v1254
    %v1257 = vmul.f32 0.5, %v1256
    %v1258 = vsub.f32 1.5, %v1257
    %v1259 = vmul.f32 %v1254, %v1258
    %vm1260 = vweird.f32 %v1241
    %vm1261 = vweird.f32 %v1254
    %vm1262 = vmor %vm1260, %vm1261
    %v1263 = vsel %vm1262, %v1254, %v1259
    %v1264 = vrsqrt.pop %v1242
    %v1265 = vmul.f32 %v1264, %v1242
    %v1266 = vmul.f32 %v1265, %v1264
    %v1267 = vmul.f32 0.5, %v1266
    %v1268 = vsub.f32 1.5, %v1267
    %v1269 = vmul.f32 %v1264, %v1268
    %vm1270 = vweird.f32 %v1242
    %vm1271 = vweird.f32 %v1264
    %vm1272 = vmor %vm1270, %vm1271
    %v1273 = vsel %vm1272, %v1264, %v1269
    %v1274 = vrsqrt.pop %v1243
    %v1275 = vmul.f32 %v1274, %v1243
    %v1276 = vmul.f32 %v1275, %v1274
    %v1277 = vmul.f32 0.5, %v1276
    %v1278 = vsub.f32 1.5, %v1277
    %v1279 = vmul.f32 %v1274, %v1278
    %vm1280 = vweird.f32 %v1243
    %vm1281 = vweird.f32 %v1274
    %vm1282 = vmor %vm1280, %vm1281
    %v1283 = vsel %vm1282, %v1274, %v1279
    %v1284 = vmul.f32 %v1236, %v1253
    %v1285 = vmul.f32 %v1237, %v1263
    %v1286 = vmul.f32 %v1238, %v1273
    %v1287 = vmul.f32 %v1239, %v1283
    %v1288 = vpack.c.bf16 %v1285, %v1284
    %v1289 = vpack.c.bf16 %v1287, %v1286
    %s1290 = scalar_lea.vmem %s2, 16
    %v1291 = vld [vmem:[%s1290] sm:$0xf]
    %v1292 = vld [vmem:[%s1290 + $0x4] sm:$0xf]
    %v1293 = vld [vmem:[%s1290 + $0x8] sm:$0xf]
    %v1294 = vld [vmem:[%s1290 + $0xc] sm:$0xf]
    %s1295 = scalar_lea.vmem %s3, 1
    %v1296 = vld [vmem:[%s1295] sm:$0x1]
    %v1298 = vperm.slane %v1296, 0
    %v1304 = vunpack.c.l.b16 %v1291
    %v1305 = vunpack.c.l.b16 %v1292
    %v1306 = vunpack.c.l.b16 %v1293
    %v1307 = vunpack.c.l.b16 %v1294
    %v1308 = vpack.c.b16 %v1305, %v1304
    %v1309 = vpack.c.b16 %v1307, %v1306
    %v1313 = vsel %vm89, %v1288, 0
    %v1316 = vsel %vm89, %v1289, 0
    %1318 = vmatpush.bf16.msra.mxu0 0
    %1319 = vmatpush.bf16.msra.mxu0 0
    %1320 = vmatpush.bf16.msra.mxu0 0
    %1321 = vmatpush.bf16.msra.mxu0 0
    %1322 = vmatpush.bf16.msra.mxu0 0
    %1323 = vmatpush.bf16.msra.mxu0 0
    %1324 = vmatpush.bf16.msra.mxu0 %v1309
    %1325 = vmatpush.bf16.msra.mxu0 %v1308
    %1326 = vmatmul.bf16.gmra.mxu0 %v1313
    %v1327 = vpop.f32.mrf.mxu0
    %v1328 = vadd.f32 %v1298, %v1327
    %v1329 = vpop.f32.mrf.mxu0
    %v1330 = vadd.f32 %v1298, %v1329
    %1331 = vmatmul.bf16.gmra.mxu0 %v1316
    %v1332 = vpop.f32.mrf.mxu0
    %v1333 = vadd.f32 %v1298, %v1332
    %v1334 = vpop.f32.mrf.mxu0
    %v1335 = vadd.f32 %v1298, %v1334
    %1336 = vdwg.mxu0
    %s1337 = scalar_lea.vmem %s4, 16
    %v1338 = vld [vmem:[%s1337] sm:$0xf]
    %v1339 = vld [vmem:[%s1337 + $0x4] sm:$0xf]
    %v1340 = vld [vmem:[%s1337 + $0x8] sm:$0xf]
    %v1341 = vld [vmem:[%s1337 + $0xc] sm:$0xf]
    %s1342 = scalar_lea.vmem %s5, 1
    %v1343 = vld [vmem:[%s1342] sm:$0x1]
    %v1344 = vpack.c.bf16 %v1328, %v1328
    %v1345 = vpack.c.bf16 %v1330, %v1330
    %v1346 = vpack.c.bf16 %v1333, %v1333
    %v1347 = vpack.c.bf16 %v1335, %v1335
    %v1350 = vunpack.c.l.b16 %v1344
    %v1351 = vunpack.c.l.b16 %v1345
    %v1352 = vpack.c.b16 %v1351, %v1350
    %1353 = vrot.lane.b32.xlu0 %v1352, 96
    %v1354 = vpop.permute.xlu0 %1353
    %v1356 = vsel %vm256, %v1352, 0
    %v1359 = vsel %vm256, %v1354, 0
    %1361 = vmatpush.bf16.xpose.msra.mxu0 0
    %1362 = vmatpush.bf16.xpose.msra.mxu0 0
    %1363 = vmatpush.bf16.xpose.msra.mxu0 0
    %1364 = vmatpush.bf16.xpose.msra.mxu0 0
    %1365 = vmatpush.bf16.xpose.msra.mxu0 0
    %1366 = vmatpush.bf16.xpose.msra.mxu0 0
    %1367 = vmatpush.bf16.xpose.msra.mxu0 0
    %1368 = vmatpush.bf16.xpose.msra.mxu0 %v1359
    %1369 = vmatmul.bf16.gmra.mxu0 %v1356
    %v1370 = vpop.f32.mrf.mxu0
    %v1371 = vadd.f32 0.0, %v1370
    %v1372 = vpop.f32.mrf.mxu0
    %v1373 = vadd.f32 0.0, %v1372
    %1374 = vdwg.mxu0
    %v1377 = vunpack.c.l.b16 %v1346
    %v1378 = vunpack.c.l.b16 %v1347
    %v1379 = vpack.c.b16 %v1378, %v1377
    %1380 = vrot.lane.b32.xlu0 %v1379, 96
    %v1381 = vpop.permute.xlu0 %1380
    %v1383 = vsel %vm256, %v1379, 0
    %v1386 = vsel %vm256, %v1381, 0
    %1388 = vmatpush.bf16.xpose.msra.mxu0 0
    %1389 = vmatpush.bf16.xpose.msra.mxu0 0
    %1390 = vmatpush.bf16.xpose.msra.mxu0 0
    %1391 = vmatpush.bf16.xpose.msra.mxu0 0
    %1392 = vmatpush.bf16.xpose.msra.mxu0 0
    %1393 = vmatpush.bf16.xpose.msra.mxu0 0
    %1394 = vmatpush.bf16.xpose.msra.mxu0 0
    %1395 = vmatpush.bf16.xpose.msra.mxu0 %v1386
    %1396 = vmatmul.bf16.gmra.mxu0 %v1383
    %v1397 = vpop.f32.mrf.mxu0
    %v1398 = vadd.f32 0.0, %v1397
    %v1399 = vpop.f32.mrf.mxu0
    %v1400 = vadd.f32 0.0, %v1399
    %1401 = vdwg.mxu0
    %v1402 = vsel %vm304, %v1371, -inf
    %1403 = vmax.xlane.f32.xlu0 %v1402
    %v1404 = vpop.xlane.xlu0 %1403
    %v1405 = vsel %vm304, %v1373, -inf
    %1406 = vmax.xlane.f32.xlu0 %v1405
    %v1407 = vpop.xlane.xlu0 %1406
    %v1408 = vsel %vm304, %v1398, -inf
    %1409 = vmax.xlane.f32.xlu0 %v1408
    %v1410 = vpop.xlane.xlu0 %1409
    %v1411 = vsel %vm304, %v1400, -inf
    %1412 = vmax.xlane.f32.xlu0 %v1411
    %v1413 = vpop.xlane.xlu0 %1412
    %v1414 = vsub.f32 %v1371, %v1404
    %v1415 = vsub.f32 %v1373, %v1407
    %v1416 = vsub.f32 %v1398, %v1410
    %v1417 = vsub.f32 %v1400, %v1413
    %v1418 = vmul.f32 %v1414, 1.442695
    %v1419 = vpow.pop %v1418
    %v1420 = vmul.f32 %v1415, 1.442695
    %v1421 = vpow.pop %v1420
    %v1422 = vmul.f32 %v1416, 1.442695
    %v1423 = vpow.pop %v1422
    %v1424 = vmul.f32 %v1417, 1.442695
    %v1425 = vpow.pop %v1424
    %v1426 = vsel %vm304, %v1419, 0.0
    %1427 = vadd.xlane.f32.xlu0 %v1426
    %v1428 = vpop.xlane.xlu0 %1427
    %v1429 = vsel %vm304, %v1421, 0.0
    %1430 = vadd.xlane.f32.xlu0 %v1429
    %v1431 = vpop.xlane.xlu0 %1430
    %v1432 = vsel %vm304, %v1423, 0.0
    %1433 = vadd.xlane.f32.xlu0 %v1432
    %v1434 = vpop.xlane.xlu0 %1433
    %v1435 = vsel %vm304, %v1425, 0.0
    %1436 = vadd.xlane.f32.xlu0 %v1435
    %v1437 = vpop.xlane.xlu0 %1436
    %v1438 = vrcp.pop %v1428
    %v1439 = vrcp.pop %v1431
    %v1440 = vrcp.pop %v1434
    %v1441 = vrcp.pop %v1437
    %v1442 = vmul.f32 %v1419, %v1438
    %v1443 = vmul.f32 %v1421, %v1439
    %v1444 = vmul.f32 %v1423, %v1440
    %v1445 = vmul.f32 %v1425, %v1441
    %v1446 = vpack.c.bf16 %v1442, %v1442
    %v1447 = vpack.c.bf16 %v1443, %v1443
    %v1448 = vpack.c.bf16 %v1444, %v1444
    %v1449 = vpack.c.bf16 %v1445, %v1445
    %v1452 = vunpack.c.l.b16 %v1446
    %v1453 = vunpack.c.l.b16 %v1447
    %v1454 = vpack.c.b16 %v1453, %v1452
    %1455 = vrot.lane.b32.xlu0 %v1352, 64
    %v1456 = vpop.permute.xlu0 %1455
    %v1459 = vsel %vm304, %v1454, 0
    %1461 = vmatpush.bf16.msra.mxu0 0
    %1462 = vmatpush.bf16.msra.mxu0 0
    %1463 = vmatpush.bf16.msra.mxu0 0
    %1464 = vmatpush.bf16.msra.mxu0 0
    %1465 = vmatpush.bf16.msra.mxu0 0
    %1466 = vmatpush.bf16.msra.mxu0 0
    %1467 = vmatpush.bf16.msra.mxu0 0
    %1468 = vmatpush.bf16.msra.mxu0 %v1456
    %1469 = vmatmul.bf16.gmra.mxu0 %v1459
    %v1470 = vpop.f32.mrf.mxu0
    %v1471 = vadd.f32 0.0, %v1470
    %v1472 = vpop.f32.mrf.mxu0
    %v1473 = vadd.f32 0.0, %v1472
    %1474 = vdwg.mxu0
    %v1477 = vunpack.c.l.b16 %v1448
    %v1478 = vunpack.c.l.b16 %v1449
    %v1479 = vpack.c.b16 %v1478, %v1477
    %1480 = vrot.lane.b32.xlu0 %v1379, 64
    %v1481 = vpop.permute.xlu0 %1480
    %v1484 = vsel %vm304, %v1479, 0
    %1486 = vmatpush.bf16.msra.mxu0 0
    %1487 = vmatpush.bf16.msra.mxu0 0
    %1488 = vmatpush.bf16.msra.mxu0 0
    %1489 = vmatpush.bf16.msra.mxu0 0
    %1490 = vmatpush.bf16.msra.mxu0 0
    %1491 = vmatpush.bf16.msra.mxu0 0
    %1492 = vmatpush.bf16.msra.mxu0 0
    %1493 = vmatpush.bf16.msra.mxu0 %v1481
    %1494 = vmatmul.bf16.gmra.mxu0 %v1484
    %v1495 = vpop.f32.mrf.mxu0
    %v1496 = vadd.f32 0.0, %v1495
    %v1497 = vpop.f32.mrf.mxu0
    %v1498 = vadd.f32 0.0, %v1497
    %1499 = vdwg.mxu0
    %1500 = vrot.lane.b32.xlu0 %v1352, 120
    %v1501 = vpop.permute.xlu0 %1500
    %1502 = vrot.lane.b32.xlu0 %v1352, 88
    %v1503 = vpop.permute.xlu0 %1502
    %v1505 = vsel %vm256, %v1501, 0
    %v1508 = vsel %vm256, %v1503, 0
    %1510 = vmatpush.bf16.xpose.msra.mxu0 0
    %1511 = vmatpush.bf16.xpose.msra.mxu0 0
    %1512 = vmatpush.bf16.xpose.msra.mxu0 0
    %1513 = vmatpush.bf16.xpose.msra.mxu0 0
    %1514 = vmatpush.bf16.xpose.msra.mxu0 0
    %1515 = vmatpush.bf16.xpose.msra.mxu0 0
    %1516 = vmatpush.bf16.xpose.msra.mxu0 0
    %1517 = vmatpush.bf16.xpose.msra.mxu0 %v1508
    %1518 = vmatmul.bf16.gmra.mxu0 %v1505
    %v1519 = vpop.f32.mrf.mxu0
    %v1520 = vadd.f32 0.0, %v1519
    %v1521 = vpop.f32.mrf.mxu0
    %v1522 = vadd.f32 0.0, %v1521
    %1523 = vdwg.mxu0
    %1524 = vrot.lane.b32.xlu0 %v1379, 120
    %v1525 = vpop.permute.xlu0 %1524
    %1526 = vrot.lane.b32.xlu0 %v1379, 88
    %v1527 = vpop.permute.xlu0 %1526
    %v1529 = vsel %vm256, %v1525, 0
    %v1532 = vsel %vm256, %v1527, 0
    %1534 = vmatpush.bf16.xpose.msra.mxu0 0
    %1535 = vmatpush.bf16.xpose.msra.mxu0 0
    %1536 = vmatpush.bf16.xpose.msra.mxu0 0
    %1537 = vmatpush.bf16.xpose.msra.mxu0 0
    %1538 = vmatpush.bf16.xpose.msra.mxu0 0
    %1539 = vmatpush.bf16.xpose.msra.mxu0 0
    %1540 = vmatpush.bf16.xpose.msra.mxu0 0
    %1541 = vmatpush.bf16.xpose.msra.mxu0 %v1532
    %1542 = vmatmul.bf16.gmra.mxu0 %v1529
    %v1543 = vpop.f32.mrf.mxu0
    %v1544 = vadd.f32 0.0, %v1543
    %v1545 = vpop.f32.mrf.mxu0
    %v1546 = vadd.f32 0.0, %v1545
    %1547 = vdwg.mxu0
    %v1548 = vsel %vm304, %v1520, -inf
    %1549 = vmax.xlane.f32.xlu0 %v1548
    %v1550 = vpop.xlane.xlu0 %1549
    %v1551 = vsel %vm304, %v1522, -inf
    %1552 = vmax.xlane.f32.xlu0 %v1551
    %v1553 = vpop.xlane.xlu0 %1552
    %v1554 = vsel %vm304, %v1544, -inf
    %1555 = vmax.xlane.f32.xlu0 %v1554
    %v1556 = vpop.xlane.xlu0 %1555
    %v1557 = vsel %vm304, %v1546, -inf
    %1558 = vmax.xlane.f32.xlu0 %v1557
    %v1559 = vpop.xlane.xlu0 %1558
    %v1560 = vsub.f32 %v1520, %v1550
    %v1561 = vsub.f32 %v1522, %v1553
    %v1562 = vsub.f32 %v1544, %v1556
    %v1563 = vsub.f32 %v1546, %v1559
    %v1564 = vmul.f32 %v1560, 1.442695
    %v1565 = vpow.pop %v1564
    %v1566 = vmul.f32 %v1561, 1.442695
    %v1567 = vpow.pop %v1566
    %v1568 = vmul.f32 %v1562, 1.442695
    %v1569 = vpow.pop %v1568
    %v1570 = vmul.f32 %v1563, 1.442695
    %v1571 = vpow.pop %v1570
    %v1572 = vsel %vm304, %v1565, 0.0
    %1573 = vadd.xlane.f32.xlu0 %v1572
    %v1574 = vpop.xlane.xlu0 %1573
    %v1575 = vsel %vm304, %v1567, 0.0
    %1576 = vadd.xlane.f32.xlu0 %v1575
    %v1577 = vpop.xlane.xlu0 %1576
    %v1578 = vsel %vm304, %v1569, 0.0
    %1579 = vadd.xlane.f32.xlu0 %v1578
    %v1580 = vpop.xlane.xlu0 %1579
    %v1581 = vsel %vm304, %v1571, 0.0
    %1582 = vadd.xlane.f32.xlu0 %v1581
    %v1583 = vpop.xlane.xlu0 %1582
    %v1584 = vrcp.pop %v1574
    %v1585 = vrcp.pop %v1577
    %v1586 = vrcp.pop %v1580
    %v1587 = vrcp.pop %v1583
    %v1588 = vmul.f32 %v1565, %v1584
    %v1589 = vmul.f32 %v1567, %v1585
    %v1590 = vmul.f32 %v1569, %v1586
    %v1591 = vmul.f32 %v1571, %v1587
    %v1592 = vpack.c.bf16 %v1588, %v1588
    %v1593 = vpack.c.bf16 %v1589, %v1589
    %v1594 = vpack.c.bf16 %v1590, %v1590
    %v1595 = vpack.c.bf16 %v1591, %v1591
    %v1598 = vunpack.c.l.b16 %v1592
    %v1599 = vunpack.c.l.b16 %v1593
    %v1600 = vpack.c.b16 %v1599, %v1598
    %1601 = vrot.lane.b32.xlu0 %v1352, 56
    %v1602 = vpop.permute.xlu0 %1601
    %v1605 = vsel %vm304, %v1600, 0
    %1607 = vmatpush.bf16.msra.mxu0 0
    %1608 = vmatpush.bf16.msra.mxu0 0
    %1609 = vmatpush.bf16.msra.mxu0 0
    %1610 = vmatpush.bf16.msra.mxu0 0
    %1611 = vmatpush.bf16.msra.mxu0 0
    %1612 = vmatpush.bf16.msra.mxu0 0
    %1613 = vmatpush.bf16.msra.mxu0 0
    %1614 = vmatpush.bf16.msra.mxu0 %v1602
    %1615 = vmatmul.bf16.gmra.mxu0 %v1605
    %v1616 = vpop.f32.mrf.mxu0
    %v1617 = vadd.f32 0.0, %v1616
    %v1618 = vpop.f32.mrf.mxu0
    %v1619 = vadd.f32 0.0, %v1618
    %1620 = vdwg.mxu0
    %v1623 = vunpack.c.l.b16 %v1594
    %v1624 = vunpack.c.l.b16 %v1595
    %v1625 = vpack.c.b16 %v1624, %v1623
    %1626 = vrot.lane.b32.xlu0 %v1379, 56
    %v1627 = vpop.permute.xlu0 %1626
    %v1630 = vsel %vm304, %v1625, 0
    %1632 = vmatpush.bf16.msra.mxu0 0
    %1633 = vmatpush.bf16.msra.mxu0 0
    %1634 = vmatpush.bf16.msra.mxu0 0
    %1635 = vmatpush.bf16.msra.mxu0 0
    %1636 = vmatpush.bf16.msra.mxu0 0
    %1637 = vmatpush.bf16.msra.mxu0 0
    %1638 = vmatpush.bf16.msra.mxu0 0
    %1639 = vmatpush.bf16.msra.mxu0 %v1627
    %1640 = vmatmul.bf16.gmra.mxu0 %v1630
    %v1641 = vpop.f32.mrf.mxu0
    %v1642 = vadd.f32 0.0, %v1641
    %v1643 = vpop.f32.mrf.mxu0
    %v1644 = vadd.f32 0.0, %v1643
    %1645 = vdwg.mxu0
    %1646 = vrot.lane.b32.xlu0 %v1352, 112
    %v1647 = vpop.permute.xlu0 %1646
    %1648 = vrot.lane.b32.xlu0 %v1352, 80
    %v1649 = vpop.permute.xlu0 %1648
    %v1651 = vsel %vm256, %v1647, 0
    %v1654 = vsel %vm256, %v1649, 0
    %1656 = vmatpush.bf16.xpose.msra.mxu0 0
    %1657 = vmatpush.bf16.xpose.msra.mxu0 0
    %1658 = vmatpush.bf16.xpose.msra.mxu0 0
    %1659 = vmatpush.bf16.xpose.msra.mxu0 0
    %1660 = vmatpush.bf16.xpose.msra.mxu0 0
    %1661 = vmatpush.bf16.xpose.msra.mxu0 0
    %1662 = vmatpush.bf16.xpose.msra.mxu0 0
    %1663 = vmatpush.bf16.xpose.msra.mxu0 %v1654
    %1664 = vmatmul.bf16.gmra.mxu0 %v1651
    %v1665 = vpop.f32.mrf.mxu0
    %v1666 = vadd.f32 0.0, %v1665
    %v1667 = vpop.f32.mrf.mxu0
    %v1668 = vadd.f32 0.0, %v1667
    %1669 = vdwg.mxu0
    %1670 = vrot.lane.b32.xlu0 %v1379, 112
    %v1671 = vpop.permute.xlu0 %1670
    %1672 = vrot.lane.b32.xlu0 %v1379, 80
    %v1673 = vpop.permute.xlu0 %1672
    %v1675 = vsel %vm256, %v1671, 0
    %v1678 = vsel %vm256, %v1673, 0
    %1680 = vmatpush.bf16.xpose.msra.mxu0 0
    %1681 = vmatpush.bf16.xpose.msra.mxu0 0
    %1682 = vmatpush.bf16.xpose.msra.mxu0 0
    %1683 = vmatpush.bf16.xpose.msra.mxu0 0
    %1684 = vmatpush.bf16.xpose.msra.mxu0 0
    %1685 = vmatpush.bf16.xpose.msra.mxu0 0
    %1686 = vmatpush.bf16.xpose.msra.mxu0 0
    %1687 = vmatpush.bf16.xpose.msra.mxu0 %v1678
    %1688 = vmatmul.bf16.gmra.mxu0 %v1675
    %v1689 = vpop.f32.mrf.mxu0
    %v1690 = vadd.f32 0.0, %v1689
    %v1691 = vpop.f32.mrf.mxu0
    %v1692 = vadd.f32 0.0, %v1691
    %1693 = vdwg.mxu0
    %v1694 = vsel %vm304, %v1666, -inf
    %1695 = vmax.xlane.f32.xlu0 %v1694
    %v1696 = vpop.xlane.xlu0 %1695
    %v1697 = vsel %vm304, %v1668, -inf
    %1698 = vmax.xlane.f32.xlu0 %v1697
    %v1699 = vpop.xlane.xlu0 %1698
    %v1700 = vsel %vm304, %v1690, -inf
    %1701 = vmax.xlane.f32.xlu0 %v1700
    %v1702 = vpop.xlane.xlu0 %1701
    %v1703 = vsel %vm304, %v1692, -inf
    %1704 = vmax.xlane.f32.xlu0 %v1703
    %v1705 = vpop.xlane.xlu0 %1704
    %v1706 = vsub.f32 %v1666, %v1696
    %v1707 = vsub.f32 %v1668, %v1699
    %v1708 = vsub.f32 %v1690, %v1702
    %v1709 = vsub.f32 %v1692, %v1705
    %v1710 = vmul.f32 %v1706, 1.442695
    %v1711 = vpow.pop %v1710
    %v1712 = vmul.f32 %v1707, 1.442695
    %v1713 = vpow.pop %v1712
    %v1714 = vmul.f32 %v1708, 1.442695
    %v1715 = vpow.pop %v1714
    %v1716 = vmul.f32 %v1709, 1.442695
    %v1717 = vpow.pop %v1716
    %v1718 = vsel %vm304, %v1711, 0.0
    %1719 = vadd.xlane.f32.xlu0 %v1718
    %v1720 = vpop.xlane.xlu0 %1719
    %v1721 = vsel %vm304, %v1713, 0.0
    %1722 = vadd.xlane.f32.xlu0 %v1721
    %v1723 = vpop.xlane.xlu0 %1722
    %v1724 = vsel %vm304, %v1715, 0.0
    %1725 = vadd.xlane.f32.xlu0 %v1724
    %v1726 = vpop.xlane.xlu0 %1725
    %v1727 = vsel %vm304, %v1717, 0.0
    %1728 = vadd.xlane.f32.xlu0 %v1727
    %v1729 = vpop.xlane.xlu0 %1728
    %v1730 = vrcp.pop %v1720
    %v1731 = vrcp.pop %v1723
    %v1732 = vrcp.pop %v1726
    %v1733 = vrcp.pop %v1729
    %v1734 = vmul.f32 %v1711, %v1730
    %v1735 = vmul.f32 %v1713, %v1731
    %v1736 = vmul.f32 %v1715, %v1732
    %v1737 = vmul.f32 %v1717, %v1733
    %v1738 = vpack.c.bf16 %v1734, %v1734
    %v1739 = vpack.c.bf16 %v1735, %v1735
    %v1740 = vpack.c.bf16 %v1736, %v1736
    %v1741 = vpack.c.bf16 %v1737, %v1737
    %v1744 = vunpack.c.l.b16 %v1738
    %v1745 = vunpack.c.l.b16 %v1739
    %v1746 = vpack.c.b16 %v1745, %v1744
    %1747 = vrot.lane.b32.xlu0 %v1352, 48
    %v1748 = vpop.permute.xlu0 %1747
    %v1751 = vsel %vm304, %v1746, 0
    %1753 = vmatpush.bf16.msra.mxu0 0
    %1754 = vmatpush.bf16.msra.mxu0 0
    %1755 = vmatpush.bf16.msra.mxu0 0
    %1756 = vmatpush.bf16.msra.mxu0 0
    %1757 = vmatpush.bf16.msra.mxu0 0
    %1758 = vmatpush.bf16.msra.mxu0 0
    %1759 = vmatpush.bf16.msra.mxu0 0
    %1760 = vmatpush.bf16.msra.mxu0 %v1748
    %1761 = vmatmul.bf16.gmra.mxu0 %v1751
    %v1762 = vpop.f32.mrf.mxu0
    %v1763 = vadd.f32 0.0, %v1762
    %v1764 = vpop.f32.mrf.mxu0
    %v1765 = vadd.f32 0.0, %v1764
    %1766 = vdwg.mxu0
    %v1769 = vunpack.c.l.b16 %v1740
    %v1770 = vunpack.c.l.b16 %v1741
    %v1771 = vpack.c.b16 %v1770, %v1769
    %1772 = vrot.lane.b32.xlu0 %v1379, 48
    %v1773 = vpop.permute.xlu0 %1772
    %v1776 = vsel %vm304, %v1771, 0
    %1778 = vmatpush.bf16.msra.mxu0 0
    %1779 = vmatpush.bf16.msra.mxu0 0
    %1780 = vmatpush.bf16.msra.mxu0 0
    %1781 = vmatpush.bf16.msra.mxu0 0
    %1782 = vmatpush.bf16.msra.mxu0 0
    %1783 = vmatpush.bf16.msra.mxu0 0
    %1784 = vmatpush.bf16.msra.mxu0 0
    %1785 = vmatpush.bf16.msra.mxu0 %v1773
    %1786 = vmatmul.bf16.gmra.mxu0 %v1776
    %v1787 = vpop.f32.mrf.mxu0
    %v1788 = vadd.f32 0.0, %v1787
    %v1789 = vpop.f32.mrf.mxu0
    %v1790 = vadd.f32 0.0, %v1789
    %1791 = vdwg.mxu0
    %1792 = vrot.lane.b32.xlu0 %v1352, 104
    %v1793 = vpop.permute.xlu0 %1792
    %1794 = vrot.lane.b32.xlu0 %v1352, 72
    %v1795 = vpop.permute.xlu0 %1794
    %v1797 = vsel %vm256, %v1793, 0
    %v1800 = vsel %vm256, %v1795, 0
    %1802 = vmatpush.bf16.xpose.msra.mxu0 0
    %1803 = vmatpush.bf16.xpose.msra.mxu0 0
    %1804 = vmatpush.bf16.xpose.msra.mxu0 0
    %1805 = vmatpush.bf16.xpose.msra.mxu0 0
    %1806 = vmatpush.bf16.xpose.msra.mxu0 0
    %1807 = vmatpush.bf16.xpose.msra.mxu0 0
    %1808 = vmatpush.bf16.xpose.msra.mxu0 0
    %1809 = vmatpush.bf16.xpose.msra.mxu0 %v1800
    %1810 = vmatmul.bf16.gmra.mxu0 %v1797
    %v1811 = vpop.f32.mrf.mxu0
    %v1812 = vadd.f32 0.0, %v1811
    %v1813 = vpop.f32.mrf.mxu0
    %v1814 = vadd.f32 0.0, %v1813
    %1815 = vdwg.mxu0
    %1816 = vrot.lane.b32.xlu0 %v1379, 104
    %v1817 = vpop.permute.xlu0 %1816
    %1818 = vrot.lane.b32.xlu0 %v1379, 72
    %v1819 = vpop.permute.xlu0 %1818
    %v1821 = vsel %vm256, %v1817, 0
    %v1824 = vsel %vm256, %v1819, 0
    %1826 = vmatpush.bf16.xpose.msra.mxu0 0
    %1827 = vmatpush.bf16.xpose.msra.mxu0 0
    %1828 = vmatpush.bf16.xpose.msra.mxu0 0
    %1829 = vmatpush.bf16.xpose.msra.mxu0 0
    %1830 = vmatpush.bf16.xpose.msra.mxu0 0
    %1831 = vmatpush.bf16.xpose.msra.mxu0 0
    %1832 = vmatpush.bf16.xpose.msra.mxu0 0
    %1833 = vmatpush.bf16.xpose.msra.mxu0 %v1824
    %1834 = vmatmul.bf16.gmra.mxu0 %v1821
    %v1835 = vpop.f32.mrf.mxu0
    %v1836 = vadd.f32 0.0, %v1835
    %v1837 = vpop.f32.mrf.mxu0
    %v1838 = vadd.f32 0.0, %v1837
    %1839 = vdwg.mxu0
    %v1840 = vsel %vm304, %v1812, -inf
    %1841 = vmax.xlane.f32.xlu0 %v1840
    %v1842 = vpop.xlane.xlu0 %1841
    %v1843 = vsel %vm304, %v1814, -inf
    %1844 = vmax.xlane.f32.xlu0 %v1843
    %v1845 = vpop.xlane.xlu0 %1844
    %v1846 = vsel %vm304, %v1836, -inf
    %1847 = vmax.xlane.f32.xlu0 %v1846
    %v1848 = vpop.xlane.xlu0 %1847
    %v1849 = vsel %vm304, %v1838, -inf
    %1850 = vmax.xlane.f32.xlu0 %v1849
    %v1851 = vpop.xlane.xlu0 %1850
    %v1852 = vsub.f32 %v1812, %v1842
    %v1853 = vsub.f32 %v1814, %v1845
    %v1854 = vsub.f32 %v1836, %v1848
    %v1855 = vsub.f32 %v1838, %v1851
    %v1856 = vmul.f32 %v1852, 1.442695
    %v1857 = vpow.pop %v1856
    %v1858 = vmul.f32 %v1853, 1.442695
    %v1859 = vpow.pop %v1858
    %v1860 = vmul.f32 %v1854, 1.442695
    %v1861 = vpow.pop %v1860
    %v1862 = vmul.f32 %v1855, 1.442695
    %v1863 = vpow.pop %v1862
    %v1864 = vsel %vm304, %v1857, 0.0
    %1865 = vadd.xlane.f32.xlu0 %v1864
    %v1866 = vpop.xlane.xlu0 %1865
    %v1867 = vsel %vm304, %v1859, 0.0
    %1868 = vadd.xlane.f32.xlu0 %v1867
    %v1869 = vpop.xlane.xlu0 %1868
    %v1870 = vsel %vm304, %v1861, 0.0
    %1871 = vadd.xlane.f32.xlu0 %v1870
    %v1872 = vpop.xlane.xlu0 %1871
    %v1873 = vsel %vm304, %v1863, 0.0
    %1874 = vadd.xlane.f32.xlu0 %v1873
    %v1875 = vpop.xlane.xlu0 %1874
    %v1876 = vrcp.pop %v1866
    %v1877 = vrcp.pop %v1869
    %v1878 = vrcp.pop %v1872
    %v1879 = vrcp.pop %v1875
    %v1880 = vmul.f32 %v1857, %v1876
    %v1881 = vmul.f32 %v1859, %v1877
    %v1882 = vmul.f32 %v1861, %v1878
    %v1883 = vmul.f32 %v1863, %v1879
    %v1884 = vpack.c.bf16 %v1880, %v1880
    %v1885 = vpack.c.bf16 %v1881, %v1881
    %v1886 = vpack.c.bf16 %v1882, %v1882
    %v1887 = vpack.c.bf16 %v1883, %v1883
    %v1890 = vunpack.c.l.b16 %v1884
    %v1891 = vunpack.c.l.b16 %v1885
    %v1892 = vpack.c.b16 %v1891, %v1890
    %1893 = vrot.lane.b32.xlu0 %v1352, 40
    %v1894 = vpop.permute.xlu0 %1893
    %v1897 = vsel %vm304, %v1892, 0
    %1899 = vmatpush.bf16.msra.mxu0 0
    %1900 = vmatpush.bf16.msra.mxu0 0
    %1901 = vmatpush.bf16.msra.mxu0 0
    %1902 = vmatpush.bf16.msra.mxu0 0
    %1903 = vmatpush.bf16.msra.mxu0 0
    %1904 = vmatpush.bf16.msra.mxu0 0
    %1905 = vmatpush.bf16.msra.mxu0 0
    %1906 = vmatpush.bf16.msra.mxu0 %v1894
    %1907 = vmatmul.bf16.gmra.mxu0 %v1897
    %v1908 = vpop.f32.mrf.mxu0
    %v1909 = vadd.f32 0.0, %v1908
    %v1910 = vpop.f32.mrf.mxu0
    %v1911 = vadd.f32 0.0, %v1910
    %1912 = vdwg.mxu0
    %v1915 = vunpack.c.l.b16 %v1886
    %v1916 = vunpack.c.l.b16 %v1887
    %v1917 = vpack.c.b16 %v1916, %v1915
    %1918 = vrot.lane.b32.xlu0 %v1379, 40
    %v1919 = vpop.permute.xlu0 %1918
    %v1922 = vsel %vm304, %v1917, 0
    %1924 = vmatpush.bf16.msra.mxu0 0
    %1925 = vmatpush.bf16.msra.mxu0 0
    %1926 = vmatpush.bf16.msra.mxu0 0
    %1927 = vmatpush.bf16.msra.mxu0 0
    %1928 = vmatpush.bf16.msra.mxu0 0
    %1929 = vmatpush.bf16.msra.mxu0 0
    %1930 = vmatpush.bf16.msra.mxu0 0
    %1931 = vmatpush.bf16.msra.mxu0 %v1919
    %1932 = vmatmul.bf16.gmra.mxu0 %v1922
    %v1933 = vpop.f32.mrf.mxu0
    %v1934 = vadd.f32 0.0, %v1933
    %v1935 = vpop.f32.mrf.mxu0
    %v1936 = vadd.f32 0.0, %v1935
    %1937 = vdwg.mxu0
    %1942 = vrot.lane.b32.xlu0 %v1617, 8
    %v1943 = vpop.permute.xlu0 %1942
    %1944 = vrot.lane.b32.xlu0 %v1619, 8
    %v1945 = vpop.permute.xlu0 %1944
    %1946 = vrot.lane.b32.xlu0 %v1642, 8
    %v1947 = vpop.permute.xlu0 %1946
    %1948 = vrot.lane.b32.xlu0 %v1644, 8
    %v1949 = vpop.permute.xlu0 %1948
    %1958 = vrot.lane.b32.xlu0 %v1763, 16
    %v1959 = vpop.permute.xlu0 %1958
    %1960 = vrot.lane.b32.xlu0 %v1765, 16
    %v1961 = vpop.permute.xlu0 %1960
    %1962 = vrot.lane.b32.xlu0 %v1788, 16
    %v1963 = vpop.permute.xlu0 %1962
    %1964 = vrot.lane.b32.xlu0 %v1790, 16
    %v1965 = vpop.permute.xlu0 %1964
    %1974 = vrot.lane.b32.xlu0 %v1909, 24
    %v1975 = vpop.permute.xlu0 %1974
    %1976 = vrot.lane.b32.xlu0 %v1911, 24
    %v1977 = vpop.permute.xlu0 %1976
    %1978 = vrot.lane.b32.xlu0 %v1934, 24
    %v1979 = vpop.permute.xlu0 %1978
    %1980 = vrot.lane.b32.xlu0 %v1936, 24
    %v1981 = vpop.permute.xlu0 %1980
    %v1986 = vsel %vm256, %v1471, %v1943
    %v1987 = vsel %vm256, %v1473, %v1945
    %v1988 = vsel %vm256, %v1496, %v1947
    %v1989 = vsel %vm256, %v1498, %v1949
    %v1990 = vsel %vm304, %v1986, %v1959
    %v1991 = vsel %vm304, %v1987, %v1961
    %v1992 = vsel %vm304, %v1988, %v1963
    %v1993 = vsel %vm304, %v1989, %v1965
    %v1994 = vsel %vm897, %v1990, %v1975
    %v1995 = vsel %vm897, %v1991, %v1977
    %v1996 = vsel %vm897, %v1992, %v1979
    %v1997 = vsel %vm897, %v1993, %v1981
    %v1998 = vpack.c.bf16 %v1995, %v1994
    %v1999 = vpack.c.bf16 %v1997, %v1996
    %v2001 = vperm.slane %v1343, 0
    %v2007 = vunpack.c.l.b16 %v1338
    %v2008 = vunpack.c.l.b16 %v1339
    %v2009 = vunpack.c.l.b16 %v1340
    %v2010 = vunpack.c.l.b16 %v1341
    %v2011 = vpack.c.b16 %v2008, %v2007
    %v2012 = vpack.c.b16 %v2010, %v2009
    %v2016 = vsel %vm89, %v1998, 0
    %v2019 = vsel %vm89, %v1999, 0
    %2021 = vmatpush.bf16.msra.mxu0 0
    %2022 = vmatpush.bf16.msra.mxu0 0
    %2023 = vmatpush.bf16.msra.mxu0 0
    %2024 = vmatpush.bf16.msra.mxu0 0
    %2025 = vmatpush.bf16.msra.mxu0 0
    %2026 = vmatpush.bf16.msra.mxu0 0
    %2027 = vmatpush.bf16.msra.mxu0 %v2012
    %2028 = vmatpush.bf16.msra.mxu0 %v2011
    %2029 = vmatmul.bf16.gmra.mxu0 %v2016
    %v2030 = vpop.f32.mrf.mxu0
    %v2031 = vadd.f32 %v2001, %v2030
    %v2032 = vpop.f32.mrf.mxu0
    %v2033 = vadd.f32 %v2001, %v2032
    %2034 = vmatmul.bf16.gmra.mxu0 %v2019
    %v2035 = vpop.f32.mrf.mxu0
    %v2036 = vadd.f32 %v2001, %v2035
    %v2037 = vpop.f32.mrf.mxu0
    %v2038 = vadd.f32 %v2001, %v2037
    %2039 = vdwg.mxu0
    %v2040 = vadd.f32 %v1188, %v2031
    %v2041 = vadd.f32 %v1189, %v2033
    %v2042 = vadd.f32 %v1190, %v2036
    %v2043 = vadd.f32 %v1191, %v2038
    %v2044 = vsel %vm89, %v2040, 0.0
    %2045 = vadd.xlane.f32.xlu0 %v2044
    %v2046 = vpop.xlane.xlu0 %2045
    %v2047 = vsel %vm89, %v2041, 0.0
    %2048 = vadd.xlane.f32.xlu0 %v2047
    %v2049 = vpop.xlane.xlu0 %2048
    %v2050 = vsel %vm89, %v2042, 0.0
    %2051 = vadd.xlane.f32.xlu0 %v2050
    %v2052 = vpop.xlane.xlu0 %2051
    %v2053 = vsel %vm89, %v2043, 0.0
    %2054 = vadd.xlane.f32.xlu0 %v2053
    %v2055 = vpop.xlane.xlu0 %2054
    %v2056 = vmul.f32 %v2046, %v108
    %v2057 = vmul.f32 %v2049, %v108
    %v2058 = vmul.f32 %v2052, %v108
    %v2059 = vmul.f32 %v2055, %v108
    %v2060 = vmul.f32 %v2040, %v2040
    %v2061 = vmul.f32 %v2041, %v2041
    %v2062 = vmul.f32 %v2042, %v2042
    %v2063 = vmul.f32 %v2043, %v2043
    %v2064 = vsel %vm89, %v2060, 0.0
    %2065 = vadd.xlane.f32.xlu0 %v2064
    %v2066 = vpop.xlane.xlu0 %2065
    %v2067 = vsel %vm89, %v2061, 0.0
    %2068 = vadd.xlane.f32.xlu0 %v2067
    %v2069 = vpop.xlane.xlu0 %2068
    %v2070 = vsel %vm89, %v2062, 0.0
    %2071 = vadd.xlane.f32.xlu0 %v2070
    %v2072 = vpop.xlane.xlu0 %2071
    %v2073 = vsel %vm89, %v2063, 0.0
    %2074 = vadd.xlane.f32.xlu0 %v2073
    %v2075 = vpop.xlane.xlu0 %2074
    %v2076 = vmul.f32 %v2066, %v108
    %v2077 = vmul.f32 %v2069, %v108
    %v2078 = vmul.f32 %v2072, %v108
    %v2079 = vmul.f32 %v2075, %v108
    %v2080 = vmul.f32 %v2056, %v2056
    %v2081 = vmul.f32 %v2057, %v2057
    %v2082 = vmul.f32 %v2058, %v2058
    %v2083 = vmul.f32 %v2059, %v2059
    %v2084 = vsub.f32 %v2076, %v2080
    %v2085 = vsub.f32 %v2077, %v2081
    %v2086 = vsub.f32 %v2078, %v2082
    %v2087 = vsub.f32 %v2079, %v2083
    %v2088 = vsub.f32 %v2040, %v2056
    %v2089 = vsub.f32 %v2041, %v2057
    %v2090 = vsub.f32 %v2042, %v2058
    %v2091 = vsub.f32 %v2043, %v2059
    %v2092 = vadd.f32 %v2084, 1e-05
    %v2093 = vadd.f32 %v2085, 1e-05
    %v2094 = vadd.f32 %v2086, 1e-05
    %v2095 = vadd.f32 %v2087, 1e-05
    %v2096 = vrsqrt.pop %v2092
    %v2097 = vmul.f32 %v2096, %v2092
    %v2098 = vmul.f32 %v2097, %v2096
    %v2099 = vmul.f32 0.5, %v2098
    %v2100 = vsub.f32 1.5, %v2099
    %v2101 = vmul.f32 %v2096, %v2100
    %vm2102 = vweird.f32 %v2092
    %vm2103 = vweird.f32 %v2096
    %vm2104 = vmor %vm2102, %vm2103
    %v2105 = vsel %vm2104, %v2096, %v2101
    %v2106 = vrsqrt.pop %v2093
    %v2107 = vmul.f32 %v2106, %v2093
    %v2108 = vmul.f32 %v2107, %v2106
    %v2109 = vmul.f32 0.5, %v2108
    %v2110 = vsub.f32 1.5, %v2109
    %v2111 = vmul.f32 %v2106, %v2110
    %vm2112 = vweird.f32 %v2093
    %vm2113 = vweird.f32 %v2106
    %vm2114 = vmor %vm2112, %vm2113
    %v2115 = vsel %vm2114, %v2106, %v2111
    %v2116 = vrsqrt.pop %v2094
    %v2117 = vmul.f32 %v2116, %v2094
    %v2118 = vmul.f32 %v2117, %v2116
    %v2119 = vmul.f32 0.5, %v2118
    %v2120 = vsub.f32 1.5, %v2119
    %v2121 = vmul.f32 %v2116, %v2120
    %vm2122 = vweird.f32 %v2094
    %vm2123 = vweird.f32 %v2116
    %vm2124 = vmor %vm2122, %vm2123
    %v2125 = vsel %vm2124, %v2116, %v2121
    %v2126 = vrsqrt.pop %v2095
    %v2127 = vmul.f32 %v2126, %v2095
    %v2128 = vmul.f32 %v2127, %v2126
    %v2129 = vmul.f32 0.5, %v2128
    %v2130 = vsub.f32 1.5, %v2129
    %v2131 = vmul.f32 %v2126, %v2130
    %vm2132 = vweird.f32 %v2095
    %vm2133 = vweird.f32 %v2126
    %vm2134 = vmor %vm2132, %vm2133
    %v2135 = vsel %vm2134, %v2126, %v2131
    %v2136 = vmul.f32 %v2088, %v2105
    %v2137 = vmul.f32 %v2089, %v2115
    %v2138 = vmul.f32 %v2090, %v2125
    %v2139 = vmul.f32 %v2091, %v2135
    %v2140 = vpack.c.bf16 %v2137, %v2136
    %v2141 = vpack.c.bf16 %v2139, %v2138
    %s2142 = scalar_lea.vmem %s6, 16
    %v2143 = vld [vmem:[%s2142] sm:$0xf]
    %v2144 = vld [vmem:[%s2142 + $0x4] sm:$0xf]
    %v2145 = vld [vmem:[%s2142 + $0x8] sm:$0xf]
    %v2146 = vld [vmem:[%s2142 + $0xc] sm:$0xf]
    %s2147 = scalar_lea.vmem %s7, 1
    %v2148 = vld [vmem:[%s2147] sm:$0x1]
    %v2150 = vperm.slane %v2148, 0
    %v2156 = vunpack.c.l.b16 %v2143
    %v2157 = vunpack.c.l.b16 %v2144
    %v2158 = vunpack.c.l.b16 %v2145
    %v2159 = vunpack.c.l.b16 %v2146
    %v2160 = vpack.c.b16 %v2157, %v2156
    %v2161 = vpack.c.b16 %v2159, %v2158
    %v2165 = vsel %vm89, %v2140, 0
    %v2168 = vsel %vm89, %v2141, 0
    %2170 = vmatpush.bf16.msra.mxu0 0
    %2171 = vmatpush.bf16.msra.mxu0 0
    %2172 = vmatpush.bf16.msra.mxu0 0
    %2173 = vmatpush.bf16.msra.mxu0 0
    %2174 = vmatpush.bf16.msra.mxu0 0
    %2175 = vmatpush.bf16.msra.mxu0 0
    %2176 = vmatpush.bf16.msra.mxu0 %v2161
    %2177 = vmatpush.bf16.msra.mxu0 %v2160
    %2178 = vmatmul.bf16.gmra.mxu0 %v2165
    %v2179 = vpop.f32.mrf.mxu0
    %v2180 = vadd.f32 %v2150, %v2179
    %v2181 = vpop.f32.mrf.mxu0
    %v2182 = vadd.f32 %v2150, %v2181
    %2183 = vmatmul.bf16.gmra.mxu0 %v2168
    %v2184 = vpop.f32.mrf.mxu0
    %v2185 = vadd.f32 %v2150, %v2184
    %v2186 = vpop.f32.mrf.mxu0
    %v2187 = vadd.f32 %v2150, %v2186
    %2188 = vdwg.mxu0
    %v2189 = vmax.f32 %v2180, 0.0
    %v2190 = vmax.f32 %v2182, 0.0
    %v2191 = vmax.f32 %v2185, 0.0
    %v2192 = vmax.f32 %v2187, 0.0
    %v2193 = vpack.c.bf16 %v2190, %v2189
    %v2194 = vpack.c.bf16 %v2192, %v2191
    %s2195 = scalar_lea.vmem %s8, 64
    %v2196 = vld [vmem:[%s2195] sm:$0xf]
    %v2197 = vld [vmem:[%s2195 + $0x4] sm:$0xf]
    %v2198 = vld [vmem:[%s2195 + $0x8] sm:$0xf]
    %v2199 = vld [vmem:[%s2195 + $0xc] sm:$0xf]
    %v2200 = vld [vmem:[%s2195 + $0x10] sm:$0xf]
    %v2201 = vld [vmem:[%s2195 + $0x14] sm:$0xf]
    %v2202 = vld [vmem:[%s2195 + $0x18] sm:$0xf]
    %v2203 = vld [vmem:[%s2195 + $0x1c] sm:$0xf]
    %v2204 = vld [vmem:[%s2195 + $0x20] sm:$0xf]
    %v2205 = vld [vmem:[%s2195 + $0x24] sm:$0xf]
    %v2206 = vld [vmem:[%s2195 + $0x28] sm:$0xf]
    %v2207 = vld [vmem:[%s2195 + $0x2c] sm:$0xf]
    %v2208 = vld [vmem:[%s2195 + $0x30] sm:$0xf]
    %v2209 = vld [vmem:[%s2195 + $0x34] sm:$0xf]
    %v2210 = vld [vmem:[%s2195 + $0x38] sm:$0xf]
    %v2211 = vld [vmem:[%s2195 + $0x3c] sm:$0xf]
    %v2228 = vunpack.c.l.b16 %v2196
    %v2229 = vunpack.c.l.b16 %v2197
    %v2230 = vunpack.c.l.b16 %v2198
    %v2231 = vunpack.c.l.b16 %v2199
    %v2232 = vunpack.c.l.b16 %v2200
    %v2233 = vunpack.c.l.b16 %v2201
    %v2234 = vunpack.c.l.b16 %v2202
    %v2235 = vunpack.c.l.b16 %v2203
    %v2236 = vunpack.c.l.b16 %v2204
    %v2237 = vunpack.c.l.b16 %v2205
    %v2238 = vunpack.c.l.b16 %v2206
    %v2239 = vunpack.c.l.b16 %v2207
    %v2240 = vunpack.c.l.b16 %v2208
    %v2241 = vunpack.c.l.b16 %v2209
    %v2242 = vunpack.c.l.b16 %v2210
    %v2243 = vunpack.c.l.b16 %v2211
    %v2244 = vpack.c.b16 %v2229, %v2228
    %v2245 = vpack.c.b16 %v2231, %v2230
    %v2246 = vpack.c.b16 %v2233, %v2232
    %v2247 = vpack.c.b16 %v2235, %v2234
    %v2248 = vpack.c.b16 %v2237, %v2236
    %v2249 = vpack.c.b16 %v2239, %v2238
    %v2250 = vpack.c.b16 %v2241, %v2240
    %v2251 = vpack.c.b16 %v2243, %v2242
    %2260 = vmatpush.bf16.msra.mxu0 %v2251
    %2261 = vmatpush.bf16.msra.mxu0 %v2250
    %2262 = vmatpush.bf16.msra.mxu0 %v2249
    %2263 = vmatpush.bf16.msra.mxu0 %v2248
    %2264 = vmatpush.bf16.msra.mxu0 %v2247
    %2265 = vmatpush.bf16.msra.mxu0 %v2246
    %2266 = vmatpush.bf16.msra.mxu0 %v2245
    %2267 = vmatpush.bf16.msra.mxu0 %v2244
    %2268 = vmatmul.bf16.gmra.mxu0 %v2193
    %v2269 = vpop.f32.mrf.mxu0
    %v2270 = vadd.f32 0.0, %v2269
    %v2271 = vpop.f32.mrf.mxu0
    %v2272 = vadd.f32 0.0, %v2271
    %2273 = vmatmul.bf16.gmra.mxu0 %v2194
    %v2274 = vpop.f32.mrf.mxu0
    %v2275 = vadd.f32 0.0, %v2274
    %v2276 = vpop.f32.mrf.mxu0
    %v2277 = vadd.f32 0.0, %v2276
    %2278 = vdwg.mxu0
    %v2279 = vadd.f32 %v2040, %v2270
    %v2280 = vadd.f32 %v2041, %v2272
    %v2281 = vadd.f32 %v2042, %v2275
    %v2282 = vadd.f32 %v2043, %v2277
    %s2283 = scalar_lea.vmem %s9, 1
    %v2284 = vld [vmem:[%s2283] sm:$0x1]
    %v2286 = vperm.slane %v2284, 0
    %v2288 = vadd.f32 %v2279, %v2286
    %v2289 = vadd.f32 %v2280, %v2286
    %v2290 = vadd.f32 %v2281, %v2286
    %v2291 = vadd.f32 %v2282, %v2286
    %v2292 = vpack.c.bf16 %v2289, %v2288
    %v2293 = vpack.c.bf16 %v2291, %v2290
    %v2294 = vld [vmem:[%s1] sm:$0xff]
    %v2295 = vld [vmem:[%s1 + $0x8] sm:$0xff]
    %v2296 = vsel %vm89, %v2294, 0.0
    %2297 = vadd.xlane.f32.xlu0 %v2296
    %v2298 = vpop.xlane.xlu0 %2297
    %v2299 = vsel %vm89, %v2295, 0.0
    %2300 = vadd.xlane.f32.xlu0 %v2299
    %v2301 = vpop.xlane.xlu0 %2300
    %v2302 = vmul.f32 %v2298, %v108
    %v2303 = vmul.f32 %v2301, %v108
    %v2304 = vmul.f32 %v2294, %v2294
    %v2305 = vmul.f32 %v2295, %v2295
    %v2306 = vsel %vm89, %v2304, 0.0
    %2307 = vadd.xlane.f32.xlu0 %v2306
    %v2308 = vpop.xlane.xlu0 %2307
    %v2309 = vsel %vm89, %v2305, 0.0
    %2310 = vadd.xlane.f32.xlu0 %v2309
    %v2311 = vpop.xlane.xlu0 %2310
    %v2312 = vmul.f32 %v2308, %v108
    %v2313 = vmul.f32 %v2311, %v108
    %v2314 = vmul.f32 %v2302, %v2302
    %v2315 = vmul.f32 %v2303, %v2303
    %v2316 = vsub.f32 %v2312, %v2314
    %v2317 = vsub.f32 %v2313, %v2315
    %v2318 = vsub.f32 %v2294, %v2302
    %v2319 = vsub.f32 %v2295, %v2303
    %v2320 = vadd.f32 %v2316, 1e-05
    %v2321 = vadd.f32 %v2317, 1e-05
    %v2322 = vrsqrt.pop %v2320
    %v2323 = vmul.f32 %v2322, %v2320
    %v2324 = vmul.f32 %v2323, %v2322
    %v2325 = vmul.f32 0.5, %v2324
    %v2326 = vsub.f32 1.5, %v2325
    %v2327 = vmul.f32 %v2322, %v2326
    %vm2328 = vweird.f32 %v2320
    %vm2329 = vweird.f32 %v2322
    %vm2330 = vmor %vm2328, %vm2329
    %v2331 = vsel %vm2330, %v2322, %v2327
    %v2332 = vrsqrt.pop %v2321
    %v2333 = vmul.f32 %v2332, %v2321
    %v2334 = vmul.f32 %v2333, %v2332
    %v2335 = vmul.f32 0.5, %v2334
    %v2336 = vsub.f32 1.5, %v2335
    %v2337 = vmul.f32 %v2332, %v2336
    %vm2338 = vweird.f32 %v2321
    %vm2339 = vweird.f32 %v2332
    %vm2340 = vmor %vm2338, %vm2339
    %v2341 = vsel %vm2340, %v2332, %v2337
    %v2342 = vmul.f32 %v2318, %v2331
    %v2343 = vmul.f32 %v2319, %v2341
    %v2344 = vpack.c.bf16 %v2343, %v2342
    %v2345 = vld [vmem:[%s10] sm:$0xf]
    %v2346 = vld [vmem:[%s10 + $0x4] sm:$0xf]
    %v2347 = vld [vmem:[%s10 + $0x8] sm:$0xf]
    %v2348 = vld [vmem:[%s10 + $0xc] sm:$0xf]
    %v2349 = vld [vmem:[%s11] sm:$0x1]
    %v2351 = vperm.slane %v2349, 0
    %v2357 = vunpack.c.l.b16 %v2345
    %v2358 = vunpack.c.l.b16 %v2346
    %v2359 = vunpack.c.l.b16 %v2347
    %v2360 = vunpack.c.l.b16 %v2348
    %v2361 = vpack.c.b16 %v2358, %v2357
    %v2362 = vpack.c.b16 %v2360, %v2359
    %v2366 = vsel %vm89, %v2344, 0
    %2368 = vmatpush.bf16.msra.mxu0 0
    %2369 = vmatpush.bf16.msra.mxu0 0
    %2370 = vmatpush.bf16.msra.mxu0 0
    %2371 = vmatpush.bf16.msra.mxu0 0
    %2372 = vmatpush.bf16.msra.mxu0 0
    %2373 = vmatpush.bf16.msra.mxu0 0
    %2374 = vmatpush.bf16.msra.mxu0 %v2362
    %2375 = vmatpush.bf16.msra.mxu0 %v2361
    %2376 = vmatmul.bf16.gmra.mxu0 %v2366
    %v2377 = vpop.f32.mrf.mxu0
    %v2378 = vadd.f32 %v2351, %v2377
    %v2379 = vpop.f32.mrf.mxu0
    %v2380 = vadd.f32 %v2351, %v2379
    %2381 = vdwg.mxu0
    %v2382 = vld [vmem:[%s12] sm:$0xf]
    %v2383 = vld [vmem:[%s12 + $0x4] sm:$0xf]
    %v2384 = vld [vmem:[%s12 + $0x8] sm:$0xf]
    %v2385 = vld [vmem:[%s12 + $0xc] sm:$0xf]
    %v2386 = vld [vmem:[%s13] sm:$0x1]
    %v2387 = vlaneseq
    %v2388 = vshrl.u32 %v2387, 7
    %v2389 = vlaneseq
    %v2390 = vand.u32 %v2389, 127
    %vm2391 = vcmp.gt.s32.totalorder %v2390, %v2388
    %v2392 = vsel %vm2391, -1000000.0, 0.0
    %v2393 = vpack.c.bf16 %v2378, %v2378
    %v2394 = vpack.c.bf16 %v2380, %v2380
    %v2396 = vunpack.c.l.b16 %v2393
    %v2397 = vpack.c.b16 %v2396, %v2396
    %2398 = vrot.lane.b32.xlu0 %v2397, 96
    %v2399 = vpop.permute.xlu0 %2398
    %v2401 = vsel %vm256, %v2393, 0
    %v2404 = vsel %vm256, %v2399, 0
    %2406 = vmatpush.bf16.xpose.msra.mxu0 0
    %2407 = vmatpush.bf16.xpose.msra.mxu0 0
    %2408 = vmatpush.bf16.xpose.msra.mxu0 0
    %2409 = vmatpush.bf16.xpose.msra.mxu0 0
    %2410 = vmatpush.bf16.xpose.msra.mxu0 0
    %2411 = vmatpush.bf16.xpose.msra.mxu0 0
    %2412 = vmatpush.bf16.xpose.msra.mxu0 0
    %2413 = vmatpush.bf16.xpose.msra.mxu0 %v2404
    %2414 = vmatmul.bf16.gmra.mxu0 %v2401
    %v2415 = vpop.f32.mrf.mxu0
    %v2416 = vadd.f32 %v2392, %v2415
    %v2417 = vpop.f32.mrf.mxu0
    %2418 = vdwg.mxu0
    %v2420 = vunpack.c.l.b16 %v2394
    %v2421 = vpack.c.b16 %v2420, %v2420
    %2422 = vrot.lane.b32.xlu0 %v2421, 96
    %v2423 = vpop.permute.xlu0 %2422
    %v2425 = vsel %vm256, %v2394, 0
    %v2428 = vsel %vm256, %v2423, 0
    %2430 = vmatpush.bf16.xpose.msra.mxu0 0
    %2431 = vmatpush.bf16.xpose.msra.mxu0 0
    %2432 = vmatpush.bf16.xpose.msra.mxu0 0
    %2433 = vmatpush.bf16.xpose.msra.mxu0 0
    %2434 = vmatpush.bf16.xpose.msra.mxu0 0
    %2435 = vmatpush.bf16.xpose.msra.mxu0 0
    %2436 = vmatpush.bf16.xpose.msra.mxu0 0
    %2437 = vmatpush.bf16.xpose.msra.mxu0 %v2428
    %2438 = vmatmul.bf16.gmra.mxu0 %v2425
    %v2439 = vpop.f32.mrf.mxu0
    %v2440 = vadd.f32 %v2392, %v2439
    %v2441 = vpop.f32.mrf.mxu0
    %2442 = vdwg.mxu0
    %v2443 = vsel %vm256, %v2416, -inf
    %2444 = vmax.xlane.f32.xlu0 %v2443
    %v2445 = vpop.xlane.xlu0 %2444
    %v2446 = vsel %vm256, %v2440, -inf
    %2447 = vmax.xlane.f32.xlu0 %v2446
    %v2448 = vpop.xlane.xlu0 %2447
    %v2449 = vsub.f32 %v2416, %v2445
    %v2450 = vsub.f32 %v2440, %v2448
    %v2451 = vmul.f32 %v2449, 1.442695
    %v2452 = vpow.pop %v2451
    %v2453 = vmul.f32 %v2450, 1.442695
    %v2454 = vpow.pop %v2453
    %v2455 = vsel %vm256, %v2452, 0.0
    %2456 = vadd.xlane.f32.xlu0 %v2455
    %v2457 = vpop.xlane.xlu0 %2456
    %v2458 = vsel %vm256, %v2454, 0.0
    %2459 = vadd.xlane.f32.xlu0 %v2458
    %v2460 = vpop.xlane.xlu0 %2459
    %v2461 = vrcp.pop %v2457
    %v2462 = vrcp.pop %v2460
    %v2463 = vmul.f32 %v2452, %v2461
    %v2464 = vmul.f32 %v2454, %v2462
    %v2465 = vpack.c.bf16 %v2463, %v2463
    %v2466 = vpack.c.bf16 %v2464, %v2464
    %2467 = vrot.lane.b32.xlu0 %v2397, 64
    %v2468 = vpop.permute.xlu0 %2467
    %v2470 = vsel %vm256, %v2465, 0
    %vm2472 = vcmask 1043456
    %v2474 = vsel %vm2472, %v2468, 0
    %2476 = vmatpush.bf16.msra.mxu0 0
    %2477 = vmatpush.bf16.msra.mxu0 0
    %2478 = vmatpush.bf16.msra.mxu0 0
    %2479 = vmatpush.bf16.msra.mxu0 0
    %2480 = vmatpush.bf16.msra.mxu0 0
    %2481 = vmatpush.bf16.msra.mxu0 0
    %2482 = vmatpush.bf16.msra.mxu0 0
    %2483 = vmatpush.bf16.msra.mxu0 %v2474
    %2484 = vmatmul.bf16.gmra.mxu0 %v2470
    %v2485 = vpop.f32.mrf.mxu0
    %v2486 = vadd.f32 0.0, %v2485
    %v2487 = vpop.f32.mrf.mxu0
    %2488 = vdwg.mxu0
    %2489 = vrot.lane.b32.xlu0 %v2421, 64
    %v2490 = vpop.permute.xlu0 %2489
    %v2492 = vsel %vm256, %v2466, 0
    %v2495 = vsel %vm2472, %v2490, 0
    %2497 = vmatpush.bf16.msra.mxu0 0
    %2498 = vmatpush.bf16.msra.mxu0 0
    %2499 = vmatpush.bf16.msra.mxu0 0
    %2500 = vmatpush.bf16.msra.mxu0 0
    %2501 = vmatpush.bf16.msra.mxu0 0
    %2502 = vmatpush.bf16.msra.mxu0 0
    %2503 = vmatpush.bf16.msra.mxu0 0
    %2504 = vmatpush.bf16.msra.mxu0 %v2495
    %2505 = vmatmul.bf16.gmra.mxu0 %v2492
    %v2506 = vpop.f32.mrf.mxu0
    %v2507 = vadd.f32 0.0, %v2506
    %v2508 = vpop.f32.mrf.mxu0
    %2509 = vdwg.mxu0
    %2510 = vrot.lane.b32.xlu0 %v2397, 120
    %v2511 = vpop.permute.xlu0 %2510
    %2512 = vrot.lane.b32.xlu0 %v2397, 88
    %v2513 = vpop.permute.xlu0 %2512
    %v2515 = vsel %vm256, %v2511, 0
    %v2518 = vsel %vm256, %v2513, 0
    %2520 = vmatpush.bf16.xpose.msra.mxu0 0
    %2521 = vmatpush.bf16.xpose.msra.mxu0 0
    %2522 = vmatpush.bf16.xpose.msra.mxu0 0
    %2523 = vmatpush.bf16.xpose.msra.mxu0 0
    %2524 = vmatpush.bf16.xpose.msra.mxu0 0
    %2525 = vmatpush.bf16.xpose.msra.mxu0 0
    %2526 = vmatpush.bf16.xpose.msra.mxu0 0
    %2527 = vmatpush.bf16.xpose.msra.mxu0 %v2518
    %2528 = vmatmul.bf16.gmra.mxu0 %v2515
    %v2529 = vpop.f32.mrf.mxu0
    %v2530 = vadd.f32 %v2392, %v2529
    %v2531 = vpop.f32.mrf.mxu0
    %2532 = vdwg.mxu0
    %2533 = vrot.lane.b32.xlu0 %v2421, 120
    %v2534 = vpop.permute.xlu0 %2533
    %2535 = vrot.lane.b32.xlu0 %v2421, 88
    %v2536 = vpop.permute.xlu0 %2535
    %v2538 = vsel %vm256, %v2534, 0
    %v2541 = vsel %vm256, %v2536, 0
    %2543 = vmatpush.bf16.xpose.msra.mxu0 0
    %2544 = vmatpush.bf16.xpose.msra.mxu0 0
    %2545 = vmatpush.bf16.xpose.msra.mxu0 0
    %2546 = vmatpush.bf16.xpose.msra.mxu0 0
    %2547 = vmatpush.bf16.xpose.msra.mxu0 0
    %2548 = vmatpush.bf16.xpose.msra.mxu0 0
    %2549 = vmatpush.bf16.xpose.msra.mxu0 0
    %2550 = vmatpush.bf16.xpose.msra.mxu0 %v2541
    %2551 = vmatmul.bf16.gmra.mxu0 %v2538
    %v2552 = vpop.f32.mrf.mxu0
    %v2553 = vadd.f32 %v2392, %v2552
    %v2554 = vpop.f32.mrf.mxu0
    %2555 = vdwg.mxu0
    %v2556 = vsel %vm256, %v2530, -inf
    %2557 = vmax.xlane.f32.xlu0 %v2556
    %v2558 = vpop.xlane.xlu0 %2557
    %v2559 = vsel %vm256, %v2553, -inf
    %2560 = vmax.xlane.f32.xlu0 %v2559
    %v2561 = vpop.xlane.xlu0 %2560
    %v2562 = vsub.f32 %v2530, %v2558
    %v2563 = vsub.f32 %v2553, %v2561
    %v2564 = vmul.f32 %v2562, 1.442695
    %v2565 = vpow.pop %v2564
    %v2566 = vmul.f32 %v2563, 1.442695
    %v2567 = vpow.pop %v2566
    %v2568 = vsel %vm256, %v2565, 0.0
    %2569 = vadd.xlane.f32.xlu0 %v2568
    %v2570 = vpop.xlane.xlu0 %2569
    %v2571 = vsel %vm256, %v2567, 0.0
    %2572 = vadd.xlane.f32.xlu0 %v2571
    %v2573 = vpop.xlane.xlu0 %2572
    %v2574 = vrcp.pop %v2570
    %v2575 = vrcp.pop %v2573
    %v2576 = vmul.f32 %v2565, %v2574
    %v2577 = vmul.f32 %v2567, %v2575
    %v2578 = vpack.c.bf16 %v2576, %v2576
    %v2579 = vpack.c.bf16 %v2577, %v2577
    %2580 = vrot.lane.b32.xlu0 %v2397, 56
    %v2581 = vpop.permute.xlu0 %2580
    %v2583 = vsel %vm256, %v2578, 0
    %v2586 = vsel %vm2472, %v2581, 0
    %2588 = vmatpush.bf16.msra.mxu0 0
    %2589 = vmatpush.bf16.msra.mxu0 0
    %2590 = vmatpush.bf16.msra.mxu0 0
    %2591 = vmatpush.bf16.msra.mxu0 0
    %2592 = vmatpush.bf16.msra.mxu0 0
    %2593 = vmatpush.bf16.msra.mxu0 0
    %2594 = vmatpush.bf16.msra.mxu0 0
    %2595 = vmatpush.bf16.msra.mxu0 %v2586
    %2596 = vmatmul.bf16.gmra.mxu0 %v2583
    %v2597 = vpop.f32.mrf.mxu0
    %v2598 = vadd.f32 0.0, %v2597
    %v2599 = vpop.f32.mrf.mxu0
    %2600 = vdwg.mxu0
    %2601 = vrot.lane.b32.xlu0 %v2421, 56
    %v2602 = vpop.permute.xlu0 %2601
    %v2604 = vsel %vm256, %v2579, 0
    %v2607 = vsel %vm2472, %v2602, 0
    %2609 = vmatpush.bf16.msra.mxu0 0
    %2610 = vmatpush.bf16.msra.mxu0 0
    %2611 = vmatpush.bf16.msra.mxu0 0
    %2612 = vmatpush.bf16.msra.mxu0 0
    %2613 = vmatpush.bf16.msra.mxu0 0
    %2614 = vmatpush.bf16.msra.mxu0 0
    %2615 = vmatpush.bf16.msra.mxu0 0
    %2616 = vmatpush.bf16.msra.mxu0 %v2607
    %2617 = vmatmul.bf16.gmra.mxu0 %v2604
    %v2618 = vpop.f32.mrf.mxu0
    %v2619 = vadd.f32 0.0, %v2618
    %v2620 = vpop.f32.mrf.mxu0
    %2621 = vdwg.mxu0
    %2622 = vrot.lane.b32.xlu0 %v2397, 112
    %v2623 = vpop.permute.xlu0 %2622
    %2624 = vrot.lane.b32.xlu0 %v2397, 80
    %v2625 = vpop.permute.xlu0 %2624
    %v2627 = vsel %vm256, %v2623, 0
    %v2630 = vsel %vm256, %v2625, 0
    %2632 = vmatpush.bf16.xpose.msra.mxu0 0
    %2633 = vmatpush.bf16.xpose.msra.mxu0 0
    %2634 = vmatpush.bf16.xpose.msra.mxu0 0
    %2635 = vmatpush.bf16.xpose.msra.mxu0 0
    %2636 = vmatpush.bf16.xpose.msra.mxu0 0
    %2637 = vmatpush.bf16.xpose.msra.mxu0 0
    %2638 = vmatpush.bf16.xpose.msra.mxu0 0
    %2639 = vmatpush.bf16.xpose.msra.mxu0 %v2630
    %2640 = vmatmul.bf16.gmra.mxu0 %v2627
    %v2641 = vpop.f32.mrf.mxu0
    %v2642 = vadd.f32 %v2392, %v2641
    %v2643 = vpop.f32.mrf.mxu0
    %2644 = vdwg.mxu0
    %2645 = vrot.lane.b32.xlu0 %v2421, 112
    %v2646 = vpop.permute.xlu0 %2645
    %2647 = vrot.lane.b32.xlu0 %v2421, 80
    %v2648 = vpop.permute.xlu0 %2647
    %v2650 = vsel %vm256, %v2646, 0
    %v2653 = vsel %vm256, %v2648, 0
    %2655 = vmatpush.bf16.xpose.msra.mxu0 0
    %2656 = vmatpush.bf16.xpose.msra.mxu0 0
    %2657 = vmatpush.bf16.xpose.msra.mxu0 0
    %2658 = vmatpush.bf16.xpose.msra.mxu0 0
    %2659 = vmatpush.bf16.xpose.msra.mxu0 0
    %2660 = vmatpush.bf16.xpose.msra.mxu0 0
    %2661 = vmatpush.bf16.xpose.msra.mxu0 0
    %2662 = vmatpush.bf16.xpose.msra.mxu0 %v2653
    %2663 = vmatmul.bf16.gmra.mxu0 %v2650
    %v2664 = vpop.f32.mrf.mxu0
    %v2665 = vadd.f32 %v2392, %v2664
    %v2666 = vpop.f32.mrf.mxu0
    %2667 = vdwg.mxu0
    %v2668 = vsel %vm256, %v2642, -inf
    %2669 = vmax.xlane.f32.xlu0 %v2668
    %v2670 = vpop.xlane.xlu0 %2669
    %v2671 = vsel %vm256, %v2665, -inf
    %2672 = vmax.xlane.f32.xlu0 %v2671
    %v2673 = vpop.xlane.xlu0 %2672
    %v2674 = vsub.f32 %v2642, %v2670
    %v2675 = vsub.f32 %v2665, %v2673
    %v2676 = vmul.f32 %v2674, 1.442695
    %v2677 = vpow.pop %v2676
    %v2678 = vmul.f32 %v2675, 1.442695
    %v2679 = vpow.pop %v2678
    %v2680 = vsel %vm256, %v2677, 0.0
    %2681 = vadd.xlane.f32.xlu0 %v2680
    %v2682 = vpop.xlane.xlu0 %2681
    %v2683 = vsel %vm256, %v2679, 0.0
    %2684 = vadd.xlane.f32.xlu0 %v2683
    %v2685 = vpop.xlane.xlu0 %2684
    %v2686 = vrcp.pop %v2682
    %v2687 = vrcp.pop %v2685
    %v2688 = vmul.f32 %v2677, %v2686
    %v2689 = vmul.f32 %v2679, %v2687
    %v2690 = vpack.c.bf16 %v2688, %v2688
    %v2691 = vpack.c.bf16 %v2689, %v2689
    %2692 = vrot.lane.b32.xlu0 %v2397, 48
    %v2693 = vpop.permute.xlu0 %2692
    %v2695 = vsel %vm256, %v2690, 0
    %v2698 = vsel %vm2472, %v2693, 0
    %2700 = vmatpush.bf16.msra.mxu0 0
    %2701 = vmatpush.bf16.msra.mxu0 0
    %2702 = vmatpush.bf16.msra.mxu0 0
    %2703 = vmatpush.bf16.msra.mxu0 0
    %2704 = vmatpush.bf16.msra.mxu0 0
    %2705 = vmatpush.bf16.msra.mxu0 0
    %2706 = vmatpush.bf16.msra.mxu0 0
    %2707 = vmatpush.bf16.msra.mxu0 %v2698
    %2708 = vmatmul.bf16.gmra.mxu0 %v2695
    %v2709 = vpop.f32.mrf.mxu0
    %v2710 = vadd.f32 0.0, %v2709
    %v2711 = vpop.f32.mrf.mxu0
    %2712 = vdwg.mxu0
    %2713 = vrot.lane.b32.xlu0 %v2421, 48
    %v2714 = vpop.permute.xlu0 %2713
    %v2716 = vsel %vm256, %v2691, 0
    %v2719 = vsel %vm2472, %v2714, 0
    %2721 = vmatpush.bf16.msra.mxu0 0
    %2722 = vmatpush.bf16.msra.mxu0 0
    %2723 = vmatpush.bf16.msra.mxu0 0
    %2724 = vmatpush.bf16.msra.mxu0 0
    %2725 = vmatpush.bf16.msra.mxu0 0
    %2726 = vmatpush.bf16.msra.mxu0 0
    %2727 = vmatpush.bf16.msra.mxu0 0
    %2728 = vmatpush.bf16.msra.mxu0 %v2719
    %2729 = vmatmul.bf16.gmra.mxu0 %v2716
    %v2730 = vpop.f32.mrf.mxu0
    %v2731 = vadd.f32 0.0, %v2730
    %v2732 = vpop.f32.mrf.mxu0
    %2733 = vdwg.mxu0
    %2734 = vrot.lane.b32.xlu0 %v2397, 104
    %v2735 = vpop.permute.xlu0 %2734
    %2736 = vrot.lane.b32.xlu0 %v2397, 72
    %v2737 = vpop.permute.xlu0 %2736
    %v2739 = vsel %vm256, %v2735, 0
    %v2742 = vsel %vm256, %v2737, 0
    %2744 = vmatpush.bf16.xpose.msra.mxu0 0
    %2745 = vmatpush.bf16.xpose.msra.mxu0 0
    %2746 = vmatpush.bf16.xpose.msra.mxu0 0
    %2747 = vmatpush.bf16.xpose.msra.mxu0 0
    %2748 = vmatpush.bf16.xpose.msra.mxu0 0
    %2749 = vmatpush.bf16.xpose.msra.mxu0 0
    %2750 = vmatpush.bf16.xpose.msra.mxu0 0
    %2751 = vmatpush.bf16.xpose.msra.mxu0 %v2742
    %2752 = vmatmul.bf16.gmra.mxu0 %v2739
    %v2753 = vpop.f32.mrf.mxu0
    %v2754 = vadd.f32 %v2392, %v2753
    %v2755 = vpop.f32.mrf.mxu0
    %2756 = vdwg.mxu0
    %2757 = vrot.lane.b32.xlu0 %v2421, 104
    %v2758 = vpop.permute.xlu0 %2757
    %2759 = vrot.lane.b32.xlu0 %v2421, 72
    %v2760 = vpop.permute.xlu0 %2759
    %v2762 = vsel %vm256, %v2758, 0
    %v2765 = vsel %vm256, %v2760, 0
    %2767 = vmatpush.bf16.xpose.msra.mxu0 0
    %2768 = vmatpush.bf16.xpose.msra.mxu0 0
    %2769 = vmatpush.bf16.xpose.msra.mxu0 0
    %2770 = vmatpush.bf16.xpose.msra.mxu0 0
    %2771 = vmatpush.bf16.xpose.msra.mxu0 0
    %2772 = vmatpush.bf16.xpose.msra.mxu0 0
    %2773 = vmatpush.bf16.xpose.msra.mxu0 0
    %2774 = vmatpush.bf16.xpose.msra.mxu0 %v2765
    %2775 = vmatmul.bf16.gmra.mxu0 %v2762
    %v2776 = vpop.f32.mrf.mxu0
    %v2777 = vadd.f32 %v2392, %v2776
    %v2778 = vpop.f32.mrf.mxu0
    %2779 = vdwg.mxu0
    %v2780 = vsel %vm256, %v2754, -inf
    %2781 = vmax.xlane.f32.xlu0 %v2780
    %v2782 = vpop.xlane.xlu0 %2781
    %v2783 = vsel %vm256, %v2777, -inf
    %2784 = vmax.xlane.f32.xlu0 %v2783
    %v2785 = vpop.xlane.xlu0 %2784
    %v2786 = vsub.f32 %v2754, %v2782
    %v2787 = vsub.f32 %v2777, %v2785
    %v2788 = vmul.f32 %v2786, 1.442695
    %v2789 = vpow.pop %v2788
    %v2790 = vmul.f32 %v2787, 1.442695
    %v2791 = vpow.pop %v2790
    %v2792 = vsel %vm256, %v2789, 0.0
    %2793 = vadd.xlane.f32.xlu0 %v2792
    %v2794 = vpop.xlane.xlu0 %2793
    %v2795 = vsel %vm256, %v2791, 0.0
    %2796 = vadd.xlane.f32.xlu0 %v2795
    %v2797 = vpop.xlane.xlu0 %2796
    %v2798 = vrcp.pop %v2794
    %v2799 = vrcp.pop %v2797
    %v2800 = vmul.f32 %v2789, %v2798
    %v2801 = vmul.f32 %v2791, %v2799
    %v2802 = vpack.c.bf16 %v2800, %v2800
    %v2803 = vpack.c.bf16 %v2801, %v2801
    %2804 = vrot.lane.b32.xlu0 %v2397, 40
    %v2805 = vpop.permute.xlu0 %2804
    %v2807 = vsel %vm256, %v2802, 0
    %v2810 = vsel %vm2472, %v2805, 0
    %2812 = vmatpush.bf16.msra.mxu0 0
    %2813 = vmatpush.bf16.msra.mxu0 0
    %2814 = vmatpush.bf16.msra.mxu0 0
    %2815 = vmatpush.bf16.msra.mxu0 0
    %2816 = vmatpush.bf16.msra.mxu0 0
    %2817 = vmatpush.bf16.msra.mxu0 0
    %2818 = vmatpush.bf16.msra.mxu0 0
    %2819 = vmatpush.bf16.msra.mxu0 %v2810
    %2820 = vmatmul.bf16.gmra.mxu0 %v2807
    %v2821 = vpop.f32.mrf.mxu0
    %v2822 = vadd.f32 0.0, %v2821
    %v2823 = vpop.f32.mrf.mxu0
    %2824 = vdwg.mxu0
    %2825 = vrot.lane.b32.xlu0 %v2421, 40
    %v2826 = vpop.permute.xlu0 %2825
    %v2828 = vsel %vm256, %v2803, 0
    %v2831 = vsel %vm2472, %v2826, 0
    %2833 = vmatpush.bf16.msra.mxu0 0
    %2834 = vmatpush.bf16.msra.mxu0 0
    %2835 = vmatpush.bf16.msra.mxu0 0
    %2836 = vmatpush.bf16.msra.mxu0 0
    %2837 = vmatpush.bf16.msra.mxu0 0
    %2838 = vmatpush.bf16.msra.mxu0 0
    %2839 = vmatpush.bf16.msra.mxu0 0
    %2840 = vmatpush.bf16.msra.mxu0 %v2831
    %2841 = vmatmul.bf16.gmra.mxu0 %v2828
    %v2842 = vpop.f32.mrf.mxu0
    %v2843 = vadd.f32 0.0, %v2842
    %v2844 = vpop.f32.mrf.mxu0
    %2845 = vdwg.mxu0
    %2848 = vrot.lane.b32.xlu0 %v2598, 8
    %v2849 = vpop.permute.xlu0 %2848
    %2850 = vrot.lane.b32.xlu0 %v2619, 8
    %v2851 = vpop.permute.xlu0 %2850
    %2856 = vrot.lane.b32.xlu0 %v2710, 16
    %v2857 = vpop.permute.xlu0 %2856
    %2858 = vrot.lane.b32.xlu0 %v2731, 16
    %v2859 = vpop.permute.xlu0 %2858
    %2864 = vrot.lane.b32.xlu0 %v2822, 24
    %v2865 = vpop.permute.xlu0 %2864
    %2866 = vrot.lane.b32.xlu0 %v2843, 24
    %v2867 = vpop.permute.xlu0 %2866
    %v2870 = vsel %vm256, %v2486, %v2849
    %v2871 = vsel %vm256, %v2507, %v2851
    %v2872 = vsel %vm304, %v2870, %v2857
    %v2873 = vsel %vm304, %v2871, %v2859
    %v2874 = vsel %vm897, %v2872, %v2865
    %v2875 = vsel %vm897, %v2873, %v2867
    %v2876 = vpack.c.bf16 %v2875, %v2874
    %v2878 = vperm.slane %v2386, 0
    %v2884 = vunpack.c.l.b16 %v2382
    %v2885 = vunpack.c.l.b16 %v2383
    %v2886 = vunpack.c.l.b16 %v2384
    %v2887 = vunpack.c.l.b16 %v2385
    %v2888 = vpack.c.b16 %v2885, %v2884
    %v2889 = vpack.c.b16 %v2887, %v2886
    %v2893 = vsel %vm89, %v2876, 0
    %2895 = vmatpush.bf16.msra.mxu0 0
    %2896 = vmatpush.bf16.msra.mxu0 0
    %2897 = vmatpush.bf16.msra.mxu0 0
    %2898 = vmatpush.bf16.msra.mxu0 0
    %2899 = vmatpush.bf16.msra.mxu0 0
    %2900 = vmatpush.bf16.msra.mxu0 0
    %2901 = vmatpush.bf16.msra.mxu0 %v2889
    %2902 = vmatpush.bf16.msra.mxu0 %v2888
    %2903 = vmatmul.bf16.gmra.mxu0 %v2893
    %v2904 = vpop.f32.mrf.mxu0
    %v2905 = vadd.f32 %v2878, %v2904
    %v2906 = vpop.f32.mrf.mxu0
    %v2907 = vadd.f32 %v2878, %v2906
    %2908 = vdwg.mxu0
    %v2909 = vadd.f32 %v2294, %v2905
    %v2910 = vadd.f32 %v2295, %v2907
    %v2911 = vsel %vm89, %v2909, 0.0
    %2912 = vadd.xlane.f32.xlu0 %v2911
    %v2913 = vpop.xlane.xlu0 %2912
    %v2914 = vsel %vm89, %v2910, 0.0
    %2915 = vadd.xlane.f32.xlu0 %v2914
    %v2916 = vpop.xlane.xlu0 %2915
    %v2917 = vmul.f32 %v2913, %v108
    %v2918 = vmul.f32 %v2916, %v108
    %v2919 = vmul.f32 %v2909, %v2909
    %v2920 = vmul.f32 %v2910, %v2910
    %v2921 = vsel %vm89, %v2919, 0.0
    %2922 = vadd.xlane.f32.xlu0 %v2921
    %v2923 = vpop.xlane.xlu0 %2922
    %v2924 = vsel %vm89, %v2920, 0.0
    %2925 = vadd.xlane.f32.xlu0 %v2924
    %v2926 = vpop.xlane.xlu0 %2925
    %v2927 = vmul.f32 %v2923, %v108
    %v2928 = vmul.f32 %v2926, %v108
    %v2929 = vmul.f32 %v2917, %v2917
    %v2930 = vmul.f32 %v2918, %v2918
    %v2931 = vsub.f32 %v2927, %v2929
    %v2932 = vsub.f32 %v2928, %v2930
    %v2933 = vsub.f32 %v2909, %v2917
    %v2934 = vsub.f32 %v2910, %v2918
    %v2935 = vadd.f32 %v2931, 1e-05
    %v2936 = vadd.f32 %v2932, 1e-05
    %v2937 = vrsqrt.pop %v2935
    %v2938 = vmul.f32 %v2937, %v2935
    %v2939 = vmul.f32 %v2938, %v2937
    %v2940 = vmul.f32 0.5, %v2939
    %v2941 = vsub.f32 1.5, %v2940
    %v2942 = vmul.f32 %v2937, %v2941
    %vm2943 = vweird.f32 %v2935
    %vm2944 = vweird.f32 %v2937
    %vm2945 = vmor %vm2943, %vm2944
    %v2946 = vsel %vm2945, %v2937, %v2942
    %v2947 = vrsqrt.pop %v2936
    %v2948 = vmul.f32 %v2947, %v2936
    %v2949 = vmul.f32 %v2948, %v2947
    %v2950 = vmul.f32 0.5, %v2949
    %v2951 = vsub.f32 1.5, %v2950
    %v2952 = vmul.f32 %v2947, %v2951
    %vm2953 = vweird.f32 %v2936
    %vm2954 = vweird.f32 %v2947
    %vm2955 = vmor %vm2953, %vm2954
    %v2956 = vsel %vm2955, %v2947, %v2952
    %v2957 = vmul.f32 %v2933, %v2946
    %v2958 = vmul.f32 %v2934, %v2956
    %v2959 = vpack.c.bf16 %v2958, %v2957
    %v2960 = vld [vmem:[%s14] sm:$0xf]
    %v2961 = vld [vmem:[%s14 + $0x4] sm:$0xf]
    %v2962 = vld [vmem:[%s14 + $0x8] sm:$0xf]
    %v2963 = vld [vmem:[%s14 + $0xc] sm:$0xf]
    %v2964 = vld [vmem:[%s15] sm:$0x1]
    %v2966 = vperm.slane %v2964, 0
    %v2972 = vunpack.c.l.b16 %v2960
    %v2973 = vunpack.c.l.b16 %v2961
    %v2974 = vunpack.c.l.b16 %v2962
    %v2975 = vunpack.c.l.b16 %v2963
    %v2976 = vpack.c.b16 %v2973, %v2972
    %v2977 = vpack.c.b16 %v2975, %v2974
    %v2981 = vsel %vm89, %v2959, 0
    %2983 = vmatpush.bf16.msra.mxu0 0
    %2984 = vmatpush.bf16.msra.mxu0 0
    %2985 = vmatpush.bf16.msra.mxu0 0
    %2986 = vmatpush.bf16.msra.mxu0 0
    %2987 = vmatpush.bf16.msra.mxu0 0
    %2988 = vmatpush.bf16.msra.mxu0 0
    %2989 = vmatpush.bf16.msra.mxu0 %v2977
    %2990 = vmatpush.bf16.msra.mxu0 %v2976
    %2991 = vmatmul.bf16.gmra.mxu0 %v2981
    %v2992 = vpop.f32.mrf.mxu0
    %v2993 = vadd.f32 %v2966, %v2992
    %v2994 = vpop.f32.mrf.mxu0
    %v2995 = vadd.f32 %v2966, %v2994
    %2996 = vdwg.mxu0
    %v2997 = vld [vmem:[%s16] sm:$0xf]
    %v2998 = vld [vmem:[%s16 + $0x4] sm:$0xf]
    %v2999 = vld [vmem:[%s16 + $0x8] sm:$0xf]
    %v3000 = vld [vmem:[%s16 + $0xc] sm:$0xf]
    %v3001 = vld [vmem:[%s17] sm:$0x1]
    %v3003 = vperm.slane %v3001, 0
    %v3009 = vunpack.c.l.b16 %v2997
    %v3010 = vunpack.c.l.b16 %v2998
    %v3011 = vunpack.c.l.b16 %v2999
    %v3012 = vunpack.c.l.b16 %v3000
    %v3013 = vpack.c.b16 %v3010, %v3009
    %v3014 = vpack.c.b16 %v3012, %v3011
    %v3018 = vsel %vm89, %v2292, 0
    %v3021 = vsel %vm89, %v2293, 0
    %3023 = vmatpush.bf16.msra.mxu0 0
    %3024 = vmatpush.bf16.msra.mxu0 0
    %3025 = vmatpush.bf16.msra.mxu0 0
    %3026 = vmatpush.bf16.msra.mxu0 0
    %3027 = vmatpush.bf16.msra.mxu0 0
    %3028 = vmatpush.bf16.msra.mxu0 0
    %3029 = vmatpush.bf16.msra.mxu0 %v3014
    %3030 = vmatpush.bf16.msra.mxu0 %v3013
    %3031 = vmatmul.bf16.gmra.mxu0 %v3018
    %v3032 = vpop.f32.mrf.mxu0
    %v3033 = vadd.f32 %v3003, %v3032
    %v3034 = vpop.f32.mrf.mxu0
    %v3035 = vadd.f32 %v3003, %v3034
    %3036 = vmatmul.bf16.gmra.mxu0 %v3021
    %v3037 = vpop.f32.mrf.mxu0
    %v3038 = vadd.f32 %v3003, %v3037
    %v3039 = vpop.f32.mrf.mxu0
    %v3040 = vadd.f32 %v3003, %v3039
    %3041 = vdwg.mxu0
    %v3042 = vld [vmem:[%s18] sm:$0xf]
    %v3043 = vld [vmem:[%s18 + $0x4] sm:$0xf]
    %v3044 = vld [vmem:[%s18 + $0x8] sm:$0xf]
    %v3045 = vld [vmem:[%s18 + $0xc] sm:$0xf]
    %v3046 = vld [vmem:[%s19] sm:$0x1]
    %v3047 = vpack.c.bf16 %v2993, %v2993
    %v3048 = vpack.c.bf16 %v2995, %v2995
    %v3049 = vpack.c.bf16 %v3033, %v3033
    %v3050 = vpack.c.bf16 %v3035, %v3035
    %v3051 = vpack.c.bf16 %v3038, %v3038
    %v3052 = vpack.c.bf16 %v3040, %v3040
    %v3055 = vunpack.c.l.b16 %v3049
    %v3056 = vunpack.c.l.b16 %v3050
    %v3057 = vpack.c.b16 %v3056, %v3055
    %v3059 = vsel %vm256, %v3047, 0
    %v3062 = vsel %vm256, %v3057, 0
    %3064 = vmatpush.bf16.xpose.msra.mxu0 0
    %3065 = vmatpush.bf16.xpose.msra.mxu0 0
    %3066 = vmatpush.bf16.xpose.msra.mxu0 0
    %3067 = vmatpush.bf16.xpose.msra.mxu0 0
    %3068 = vmatpush.bf16.xpose.msra.mxu0 0
    %3069 = vmatpush.bf16.xpose.msra.mxu0 0
    %3070 = vmatpush.bf16.xpose.msra.mxu0 0
    %3071 = vmatpush.bf16.xpose.msra.mxu0 %v3062
    %3072 = vmatmul.bf16.gmra.mxu0 %v3059
    %v3073 = vpop.f32.mrf.mxu0
    %v3074 = vadd.f32 0.0, %v3073
    %v3075 = vpop.f32.mrf.mxu0
    %3076 = vdwg.mxu0
    %v3079 = vunpack.c.l.b16 %v3051
    %v3080 = vunpack.c.l.b16 %v3052
    %v3081 = vpack.c.b16 %v3080, %v3079
    %v3083 = vsel %vm256, %v3048, 0
    %v3086 = vsel %vm256, %v3081, 0
    %3088 = vmatpush.bf16.xpose.msra.mxu0 0
    %3089 = vmatpush.bf16.xpose.msra.mxu0 0
    %3090 = vmatpush.bf16.xpose.msra.mxu0 0
    %3091 = vmatpush.bf16.xpose.msra.mxu0 0
    %3092 = vmatpush.bf16.xpose.msra.mxu0 0
    %3093 = vmatpush.bf16.xpose.msra.mxu0 0
    %3094 = vmatpush.bf16.xpose.msra.mxu0 0
    %3095 = vmatpush.bf16.xpose.msra.mxu0 %v3086
    %3096 = vmatmul.bf16.gmra.mxu0 %v3083
    %v3097 = vpop.f32.mrf.mxu0
    %v3098 = vadd.f32 0.0, %v3097
    %v3099 = vpop.f32.mrf.mxu0
    %3100 = vdwg.mxu0
    %v3101 = vsel %vm304, %v3074, -inf
    %3102 = vmax.xlane.f32.xlu0 %v3101
    %v3103 = vpop.xlane.xlu0 %3102
    %v3104 = vsel %vm304, %v3098, -inf
    %3105 = vmax.xlane.f32.xlu0 %v3104
    %v3106 = vpop.xlane.xlu0 %3105
    %v3107 = vsub.f32 %v3074, %v3103
    %v3108 = vsub.f32 %v3098, %v3106
    %v3109 = vmul.f32 %v3107, 1.442695
    %v3110 = vpow.pop %v3109
    %v3111 = vmul.f32 %v3108, 1.442695
    %v3112 = vpow.pop %v3111
    %v3113 = vsel %vm304, %v3110, 0.0
    %3114 = vadd.xlane.f32.xlu0 %v3113
    %v3115 = vpop.xlane.xlu0 %3114
    %v3116 = vsel %vm304, %v3112, 0.0
    %3117 = vadd.xlane.f32.xlu0 %v3116
    %v3118 = vpop.xlane.xlu0 %3117
    %v3119 = vrcp.pop %v3115
    %v3120 = vrcp.pop %v3118
    %v3121 = vmul.f32 %v3110, %v3119
    %v3122 = vmul.f32 %v3112, %v3120
    %v3123 = vpack.c.bf16 %v3121, %v3121
    %v3124 = vpack.c.bf16 %v3122, %v3122
    %3125 = vrot.lane.b32.xlu0 %v3057, 96
    %v3126 = vpop.permute.xlu0 %3125
    %v3129 = vsel %vm304, %v3123, 0
    %3131 = vmatpush.bf16.msra.mxu0 0
    %3132 = vmatpush.bf16.msra.mxu0 0
    %3133 = vmatpush.bf16.msra.mxu0 0
    %3134 = vmatpush.bf16.msra.mxu0 0
    %3135 = vmatpush.bf16.msra.mxu0 0
    %3136 = vmatpush.bf16.msra.mxu0 0
    %3137 = vmatpush.bf16.msra.mxu0 0
    %3138 = vmatpush.bf16.msra.mxu0 %v3126
    %3139 = vmatmul.bf16.gmra.mxu0 %v3129
    %v3140 = vpop.f32.mrf.mxu0
    %v3141 = vadd.f32 0.0, %v3140
    %v3142 = vpop.f32.mrf.mxu0
    %3143 = vdwg.mxu0
    %3144 = vrot.lane.b32.xlu0 %v3081, 96
    %v3145 = vpop.permute.xlu0 %3144
    %v3148 = vsel %vm304, %v3124, 0
    %3150 = vmatpush.bf16.msra.mxu0 0
    %3151 = vmatpush.bf16.msra.mxu0 0
    %3152 = vmatpush.bf16.msra.mxu0 0
    %3153 = vmatpush.bf16.msra.mxu0 0
    %3154 = vmatpush.bf16.msra.mxu0 0
    %3155 = vmatpush.bf16.msra.mxu0 0
    %3156 = vmatpush.bf16.msra.mxu0 0
    %3157 = vmatpush.bf16.msra.mxu0 %v3145
    %3158 = vmatmul.bf16.gmra.mxu0 %v3148
    %v3159 = vpop.f32.mrf.mxu0
    %v3160 = vadd.f32 0.0, %v3159
    %v3161 = vpop.f32.mrf.mxu0
    %3162 = vdwg.mxu0
    %v3164 = vunpack.c.l.b16 %v3047
    %v3165 = vpack.c.b16 %v3164, %v3164
    %3166 = vrot.lane.b32.xlu0 %v3165, 120
    %v3167 = vpop.permute.xlu0 %3166
    %3168 = vrot.lane.b32.xlu0 %v3057, 120
    %v3169 = vpop.permute.xlu0 %3168
    %v3171 = vsel %vm256, %v3167, 0
    %v3174 = vsel %vm256, %v3169, 0
    %3176 = vmatpush.bf16.xpose.msra.mxu0 0
    %3177 = vmatpush.bf16.xpose.msra.mxu0 0
    %3178 = vmatpush.bf16.xpose.msra.mxu0 0
    %3179 = vmatpush.bf16.xpose.msra.mxu0 0
    %3180 = vmatpush.bf16.xpose.msra.mxu0 0
    %3181 = vmatpush.bf16.xpose.msra.mxu0 0
    %3182 = vmatpush.bf16.xpose.msra.mxu0 0
    %3183 = vmatpush.bf16.xpose.msra.mxu0 %v3174
    %3184 = vmatmul.bf16.gmra.mxu0 %v3171
    %v3185 = vpop.f32.mrf.mxu0
    %v3186 = vadd.f32 0.0, %v3185
    %v3187 = vpop.f32.mrf.mxu0
    %3188 = vdwg.mxu0
    %v3190 = vunpack.c.l.b16 %v3048
    %v3191 = vpack.c.b16 %v3190, %v3190
    %3192 = vrot.lane.b32.xlu0 %v3191, 120
    %v3193 = vpop.permute.xlu0 %3192
    %3194 = vrot.lane.b32.xlu0 %v3081, 120
    %v3195 = vpop.permute.xlu0 %3194
    %v3197 = vsel %vm256, %v3193, 0
    %v3200 = vsel %vm256, %v3195, 0
    %3202 = vmatpush.bf16.xpose.msra.mxu0 0
    %3203 = vmatpush.bf16.xpose.msra.mxu0 0
    %3204 = vmatpush.bf16.xpose.msra.mxu0 0
    %3205 = vmatpush.bf16.xpose.msra.mxu0 0
    %3206 = vmatpush.bf16.xpose.msra.mxu0 0
    %3207 = vmatpush.bf16.xpose.msra.mxu0 0
    %3208 = vmatpush.bf16.xpose.msra.mxu0 0
    %3209 = vmatpush.bf16.xpose.msra.mxu0 %v3200
    %3210 = vmatmul.bf16.gmra.mxu0 %v3197
    %v3211 = vpop.f32.mrf.mxu0
    %v3212 = vadd.f32 0.0, %v3211
    %v3213 = vpop.f32.mrf.mxu0
    %3214 = vdwg.mxu0
    %v3215 = vsel %vm304, %v3186, -inf
    %3216 = vmax.xlane.f32.xlu0 %v3215
    %v3217 = vpop.xlane.xlu0 %3216
    %v3218 = vsel %vm304, %v3212, -inf
    %3219 = vmax.xlane.f32.xlu0 %v3218
    %v3220 = vpop.xlane.xlu0 %3219
    %v3221 = vsub.f32 %v3186, %v3217
    %v3222 = vsub.f32 %v3212, %v3220
    %v3223 = vmul.f32 %v3221, 1.442695
    %v3224 = vpow.pop %v3223
    %v3225 = vmul.f32 %v3222, 1.442695
    %v3226 = vpow.pop %v3225
    %v3227 = vsel %vm304, %v3224, 0.0
    %3228 = vadd.xlane.f32.xlu0 %v3227
    %v3229 = vpop.xlane.xlu0 %3228
    %v3230 = vsel %vm304, %v3226, 0.0
    %3231 = vadd.xlane.f32.xlu0 %v3230
    %v3232 = vpop.xlane.xlu0 %3231
    %v3233 = vrcp.pop %v3229
    %v3234 = vrcp.pop %v3232
    %v3235 = vmul.f32 %v3224, %v3233
    %v3236 = vmul.f32 %v3226, %v3234
    %v3237 = vpack.c.bf16 %v3235, %v3235
    %v3238 = vpack.c.bf16 %v3236, %v3236
    %3239 = vrot.lane.b32.xlu0 %v3057, 88
    %v3240 = vpop.permute.xlu0 %3239
    %v3243 = vsel %vm304, %v3237, 0
    %3245 = vmatpush.bf16.msra.mxu0 0
    %3246 = vmatpush.bf16.msra.mxu0 0
    %3247 = vmatpush.bf16.msra.mxu0 0
    %3248 = vmatpush.bf16.msra.mxu0 0
    %3249 = vmatpush.bf16.msra.mxu0 0
    %3250 = vmatpush.bf16.msra.mxu0 0
    %3251 = vmatpush.bf16.msra.mxu0 0
    %3252 = vmatpush.bf16.msra.mxu0 %v3240
    %3253 = vmatmul.bf16.gmra.mxu0 %v3243
    %v3254 = vpop.f32.mrf.mxu0
    %v3255 = vadd.f32 0.0, %v3254
    %v3256 = vpop.f32.mrf.mxu0
    %3257 = vdwg.mxu0
    %3258 = vrot.lane.b32.xlu0 %v3081, 88
    %v3259 = vpop.permute.xlu0 %3258
    %v3262 = vsel %vm304, %v3238, 0
    %3264 = vmatpush.bf16.msra.mxu0 0
    %3265 = vmatpush.bf16.msra.mxu0 0
    %3266 = vmatpush.bf16.msra.mxu0 0
    %3267 = vmatpush.bf16.msra.mxu0 0
    %3268 = vmatpush.bf16.msra.mxu0 0
    %3269 = vmatpush.bf16.msra.mxu0 0
    %3270 = vmatpush.bf16.msra.mxu0 0
    %3271 = vmatpush.bf16.msra.mxu0 %v3259
    %3272 = vmatmul.bf16.gmra.mxu0 %v3262
    %v3273 = vpop.f32.mrf.mxu0
    %v3274 = vadd.f32 0.0, %v3273
    %v3275 = vpop.f32.mrf.mxu0
    %3276 = vdwg.mxu0
    %3277 = vrot.lane.b32.xlu0 %v3165, 112
    %v3278 = vpop.permute.xlu0 %3277
    %3279 = vrot.lane.b32.xlu0 %v3057, 112
    %v3280 = vpop.permute.xlu0 %3279
    %v3282 = vsel %vm256, %v3278, 0
    %v3285 = vsel %vm256, %v3280, 0
    %3287 = vmatpush.bf16.xpose.msra.mxu0 0
    %3288 = vmatpush.bf16.xpose.msra.mxu0 0
    %3289 = vmatpush.bf16.xpose.msra.mxu0 0
    %3290 = vmatpush.bf16.xpose.msra.mxu0 0
    %3291 = vmatpush.bf16.xpose.msra.mxu0 0
    %3292 = vmatpush.bf16.xpose.msra.mxu0 0
    %3293 = vmatpush.bf16.xpose.msra.mxu0 0
    %3294 = vmatpush.bf16.xpose.msra.mxu0 %v3285
    %3295 = vmatmul.bf16.gmra.mxu0 %v3282
    %v3296 = vpop.f32.mrf.mxu0
    %v3297 = vadd.f32 0.0, %v3296
    %v3298 = vpop.f32.mrf.mxu0
    %3299 = vdwg.mxu0
    %3300 = vrot.lane.b32.xlu0 %v3191, 112
    %v3301 = vpop.permute.xlu0 %3300
    %3302 = vrot.lane.b32.xlu0 %v3081, 112
    %v3303 = vpop.permute.xlu0 %3302
    %v3305 = vsel %vm256, %v3301, 0
    %v3308 = vsel %vm256, %v3303, 0
    %3310 = vmatpush.bf16.xpose.msra.mxu0 0
    %3311 = vmatpush.bf16.xpose.msra.mxu0 0
    %3312 = vmatpush.bf16.xpose.msra.mxu0 0
    %3313 = vmatpush.bf16.xpose.msra.mxu0 0
    %3314 = vmatpush.bf16.xpose.msra.mxu0 0
    %3315 = vmatpush.bf16.xpose.msra.mxu0 0
    %3316 = vmatpush.bf16.xpose.msra.mxu0 0
    %3317 = vmatpush.bf16.xpose.msra.mxu0 %v3308
    %3318 = vmatmul.bf16.gmra.mxu0 %v3305
    %v3319 = vpop.f32.mrf.mxu0
    %v3320 = vadd.f32 0.0, %v3319
    %v3321 = vpop.f32.mrf.mxu0
    %3322 = vdwg.mxu0
    %v3323 = vsel %vm304, %v3297, -inf
    %3324 = vmax.xlane.f32.xlu0 %v3323
    %v3325 = vpop.xlane.xlu0 %3324
    %v3326 = vsel %vm304, %v3320, -inf
    %3327 = vmax.xlane.f32.xlu0 %v3326
    %v3328 = vpop.xlane.xlu0 %3327
    %v3329 = vsub.f32 %v3297, %v3325
    %v3330 = vsub.f32 %v3320, %v3328
    %v3331 = vmul.f32 %v3329, 1.442695
    %v3332 = vpow.pop %v3331
    %v3333 = vmul.f32 %v3330, 1.442695
    %v3334 = vpow.pop %v3333
    %v3335 = vsel %vm304, %v3332, 0.0
    %3336 = vadd.xlane.f32.xlu0 %v3335
    %v3337 = vpop.xlane.xlu0 %3336
    %v3338 = vsel %vm304, %v3334, 0.0
    %3339 = vadd.xlane.f32.xlu0 %v3338
    %v3340 = vpop.xlane.xlu0 %3339
    %v3341 = vrcp.pop %v3337
    %v3342 = vrcp.pop %v3340
    %v3343 = vmul.f32 %v3332, %v3341
    %v3344 = vmul.f32 %v3334, %v3342
    %v3345 = vpack.c.bf16 %v3343, %v3343
    %v3346 = vpack.c.bf16 %v3344, %v3344
    %3347 = vrot.lane.b32.xlu0 %v3057, 80
    %v3348 = vpop.permute.xlu0 %3347
    %v3351 = vsel %vm304, %v3345, 0
    %3353 = vmatpush.bf16.msra.mxu0 0
    %3354 = vmatpush.bf16.msra.mxu0 0
    %3355 = vmatpush.bf16.msra.mxu0 0
    %3356 = vmatpush.bf16.msra.mxu0 0
    %3357 = vmatpush.bf16.msra.mxu0 0
    %3358 = vmatpush.bf16.msra.mxu0 0
    %3359 = vmatpush.bf16.msra.mxu0 0
    %3360 = vmatpush.bf16.msra.mxu0 %v3348
    %3361 = vmatmul.bf16.gmra.mxu0 %v3351
    %v3362 = vpop.f32.mrf.mxu0
    %v3363 = vadd.f32 0.0, %v3362
    %v3364 = vpop.f32.mrf.mxu0
    %3365 = vdwg.mxu0
    %3366 = vrot.lane.b32.xlu0 %v3081, 80
    %v3367 = vpop.permute.xlu0 %3366
    %v3370 = vsel %vm304, %v3346, 0
    %3372 = vmatpush.bf16.msra.mxu0 0
    %3373 = vmatpush.bf16.msra.mxu0 0
    %3374 = vmatpush.bf16.msra.mxu0 0
    %3375 = vmatpush.bf16.msra.mxu0 0
    %3376 = vmatpush.bf16.msra.mxu0 0
    %3377 = vmatpush.bf16.msra.mxu0 0
    %3378 = vmatpush.bf16.msra.mxu0 0
    %3379 = vmatpush.bf16.msra.mxu0 %v3367
    %3380 = vmatmul.bf16.gmra.mxu0 %v3370
    %v3381 = vpop.f32.mrf.mxu0
    %v3382 = vadd.f32 0.0, %v3381
    %v3383 = vpop.f32.mrf.mxu0
    %3384 = vdwg.mxu0
    %3385 = vrot.lane.b32.xlu0 %v3165, 104
    %v3386 = vpop.permute.xlu0 %3385
    %3387 = vrot.lane.b32.xlu0 %v3057, 104
    %v3388 = vpop.permute.xlu0 %3387
    %v3390 = vsel %vm256, %v3386, 0
    %v3393 = vsel %vm256, %v3388, 0
    %3395 = vmatpush.bf16.xpose.msra.mxu0 0
    %3396 = vmatpush.bf16.xpose.msra.mxu0 0
    %3397 = vmatpush.bf16.xpose.msra.mxu0 0
    %3398 = vmatpush.bf16.xpose.msra.mxu0 0
    %3399 = vmatpush.bf16.xpose.msra.mxu0 0
    %3400 = vmatpush.bf16.xpose.msra.mxu0 0
    %3401 = vmatpush.bf16.xpose.msra.mxu0 0
    %3402 = vmatpush.bf16.xpose.msra.mxu0 %v3393
    %3403 = vmatmul.bf16.gmra.mxu0 %v3390
    %v3404 = vpop.f32.mrf.mxu0
    %v3405 = vadd.f32 0.0, %v3404
    %v3406 = vpop.f32.mrf.mxu0
    %3407 = vdwg.mxu0
    %3408 = vrot.lane.b32.xlu0 %v3191, 104
    %v3409 = vpop.permute.xlu0 %3408
    %3410 = vrot.lane.b32.xlu0 %v3081, 104
    %v3411 = vpop.permute.xlu0 %3410
    %v3413 = vsel %vm256, %v3409, 0
    %v3416 = vsel %vm256, %v3411, 0
    %3418 = vmatpush.bf16.xpose.msra.mxu0 0
    %3419 = vmatpush.bf16.xpose.msra.mxu0 0
    %3420 = vmatpush.bf16.xpose.msra.mxu0 0
    %3421 = vmatpush.bf16.xpose.msra.mxu0 0
    %3422 = vmatpush.bf16.xpose.msra.mxu0 0
    %3423 = vmatpush.bf16.xpose.msra.mxu0 0
    %3424 = vmatpush.bf16.xpose.msra.mxu0 0
    %3425 = vmatpush.bf16.xpose.msra.mxu0 %v3416
    %3426 = vmatmul.bf16.gmra.mxu0 %v3413
    %v3427 = vpop.f32.mrf.mxu0
    %v3428 = vadd.f32 0.0, %v3427
    %v3429 = vpop.f32.mrf.mxu0
    %3430 = vdwg.mxu0
    %v3431 = vsel %vm304, %v3405, -inf
    %3432 = vmax.xlane.f32.xlu0 %v3431
    %v3433 = vpop.xlane.xlu0 %3432
    %v3434 = vsel %vm304, %v3428, -inf
    %3435 = vmax.xlane.f32.xlu0 %v3434
    %v3436 = vpop.xlane.xlu0 %3435
    %v3437 = vsub.f32 %v3405, %v3433
    %v3438 = vsub.f32 %v3428, %v3436
    %v3439 = vmul.f32 %v3437, 1.442695
    %v3440 = vpow.pop %v3439
    %v3441 = vmul.f32 %v3438, 1.442695
    %v3442 = vpow.pop %v3441
    %v3443 = vsel %vm304, %v3440, 0.0
    %3444 = vadd.xlane.f32.xlu0 %v3443
    %v3445 = vpop.xlane.xlu0 %3444
    %v3446 = vsel %vm304, %v3442, 0.0
    %3447 = vadd.xlane.f32.xlu0 %v3446
    %v3448 = vpop.xlane.xlu0 %3447
    %v3449 = vrcp.pop %v3445
    %v3450 = vrcp.pop %v3448
    %v3451 = vmul.f32 %v3440, %v3449
    %v3452 = vmul.f32 %v3442, %v3450
    %v3453 = vpack.c.bf16 %v3451, %v3451
    %v3454 = vpack.c.bf16 %v3452, %v3452
    %3455 = vrot.lane.b32.xlu0 %v3057, 72
    %v3456 = vpop.permute.xlu0 %3455
    %v3459 = vsel %vm304, %v3453, 0
    %3461 = vmatpush.bf16.msra.mxu0 0
    %3462 = vmatpush.bf16.msra.mxu0 0
    %3463 = vmatpush.bf16.msra.mxu0 0
    %3464 = vmatpush.bf16.msra.mxu0 0
    %3465 = vmatpush.bf16.msra.mxu0 0
    %3466 = vmatpush.bf16.msra.mxu0 0
    %3467 = vmatpush.bf16.msra.mxu0 0
    %3468 = vmatpush.bf16.msra.mxu0 %v3456
    %3469 = vmatmul.bf16.gmra.mxu0 %v3459
    %v3470 = vpop.f32.mrf.mxu0
    %v3471 = vadd.f32 0.0, %v3470
    %v3472 = vpop.f32.mrf.mxu0
    %3473 = vdwg.mxu0
    %3474 = vrot.lane.b32.xlu0 %v3081, 72
    %v3475 = vpop.permute.xlu0 %3474
    %v3478 = vsel %vm304, %v3454, 0
    %3480 = vmatpush.bf16.msra.mxu0 0
    %3481 = vmatpush.bf16.msra.mxu0 0
    %3482 = vmatpush.bf16.msra.mxu0 0
    %3483 = vmatpush.bf16.msra.mxu0 0
    %3484 = vmatpush.bf16.msra.mxu0 0
    %3485 = vmatpush.bf16.msra.mxu0 0
    %3486 = vmatpush.bf16.msra.mxu0 0
    %3487 = vmatpush.bf16.msra.mxu0 %v3475
    %3488 = vmatmul.bf16.gmra.mxu0 %v3478
    %v3489 = vpop.f32.mrf.mxu0
    %v3490 = vadd.f32 0.0, %v3489
    %v3491 = vpop.f32.mrf.mxu0
    %3492 = vdwg.mxu0
    %3495 = vrot.lane.b32.xlu0 %v3255, 8
    %v3496 = vpop.permute.xlu0 %3495
    %3497 = vrot.lane.b32.xlu0 %v3274, 8
    %v3498 = vpop.permute.xlu0 %3497
    %3503 = vrot.lane.b32.xlu0 %v3363, 16
    %v3504 = vpop.permute.xlu0 %3503
    %3505 = vrot.lane.b32.xlu0 %v3382, 16
    %v3506 = vpop.permute.xlu0 %3505
    %3511 = vrot.lane.b32.xlu0 %v3471, 24
    %v3512 = vpop.permute.xlu0 %3511
    %3513 = vrot.lane.b32.xlu0 %v3490, 24
    %v3514 = vpop.permute.xlu0 %3513
    %v3517 = vsel %vm256, %v3141, %v3496
    %v3518 = vsel %vm256, %v3160, %v3498
    %v3519 = vsel %vm304, %v3517, %v3504
    %v3520 = vsel %vm304, %v3518, %v3506
    %v3521 = vsel %vm897, %v3519, %v3512
    %v3522 = vsel %vm897, %v3520, %v3514
    %v3523 = vpack.c.bf16 %v3522, %v3521
    %v3525 = vperm.slane %v3046, 0
    %v3531 = vunpack.c.l.b16 %v3042
    %v3532 = vunpack.c.l.b16 %v3043
    %v3533 = vunpack.c.l.b16 %v3044
    %v3534 = vunpack.c.l.b16 %v3045
    %v3535 = vpack.c.b16 %v3532, %v3531
    %v3536 = vpack.c.b16 %v3534, %v3533
    %v3540 = vsel %vm89, %v3523, 0
    %3542 = vmatpush.bf16.msra.mxu0 0
    %3543 = vmatpush.bf16.msra.mxu0 0
    %3544 = vmatpush.bf16.msra.mxu0 0
    %3545 = vmatpush.bf16.msra.mxu0 0
    %3546 = vmatpush.bf16.msra.mxu0 0
    %3547 = vmatpush.bf16.msra.mxu0 0
    %3548 = vmatpush.bf16.msra.mxu0 %v3536
    %3549 = vmatpush.bf16.msra.mxu0 %v3535
    %3550 = vmatmul.bf16.gmra.mxu0 %v3540
    %v3551 = vpop.f32.mrf.mxu0
    %v3552 = vadd.f32 %v3525, %v3551
    %v3553 = vpop.f32.mrf.mxu0
    %v3554 = vadd.f32 %v3525, %v3553
    %3555 = vdwg.mxu0
    %v3556 = vadd.f32 %v2909, %v3552
    %v3557 = vadd.f32 %v2910, %v3554
    %v3558 = vsel %vm89, %v3556, 0.0
    %3559 = vadd.xlane.f32.xlu0 %v3558
    %v3560 = vpop.xlane.xlu0 %3559
    %v3561 = vsel %vm89, %v3557, 0.0
    %3562 = vadd.xlane.f32.xlu0 %v3561
    %v3563 = vpop.xlane.xlu0 %3562
    %v3564 = vmul.f32 %v3560, %v108
    %v3565 = vmul.f32 %v3563, %v108
    %v3566 = vmul.f32 %v3556, %v3556
    %v3567 = vmul.f32 %v3557, %v3557
    %v3568 = vsel %vm89, %v3566, 0.0
    %3569 = vadd.xlane.f32.xlu0 %v3568
    %v3570 = vpop.xlane.xlu0 %3569
    %v3571 = vsel %vm89, %v3567, 0.0
    %3572 = vadd.xlane.f32.xlu0 %v3571
    %v3573 = vpop.xlane.xlu0 %3572
    %v3574 = vmul.f32 %v3570, %v108
    %v3575 = vmul.f32 %v3573, %v108
    %v3576 = vmul.f32 %v3564, %v3564
    %v3577 = vmul.f32 %v3565, %v3565
    %v3578 = vsub.f32 %v3574, %v3576
    %v3579 = vsub.f32 %v3575, %v3577
    %v3580 = vsub.f32 %v3556, %v3564
    %v3581 = vsub.f32 %v3557, %v3565
    %v3582 = vadd.f32 %v3578, 1e-05
    %v3583 = vadd.f32 %v3579, 1e-05
    %v3584 = vrsqrt.pop %v3582
    %v3585 = vmul.f32 %v3584, %v3582
    %v3586 = vmul.f32 %v3585, %v3584
    %v3587 = vmul.f32 0.5, %v3586
    %v3588 = vsub.f32 1.5, %v3587
    %v3589 = vmul.f32 %v3584, %v3588
    %vm3590 = vweird.f32 %v3582
    %vm3591 = vweird.f32 %v3584
    %vm3592 = vmor %vm3590, %vm3591
    %v3593 = vsel %vm3592, %v3584, %v3589
    %v3594 = vrsqrt.pop %v3583
    %v3595 = vmul.f32 %v3594, %v3583
    %v3596 = vmul.f32 %v3595, %v3594
    %v3597 = vmul.f32 0.5, %v3596
    %v3598 = vsub.f32 1.5, %v3597
    %v3599 = vmul.f32 %v3594, %v3598
    %vm3600 = vweird.f32 %v3583
    %vm3601 = vweird.f32 %v3594
    %vm3602 = vmor %vm3600, %vm3601
    %v3603 = vsel %vm3602, %v3594, %v3599
    %v3604 = vmul.f32 %v3580, %v3593
    %v3605 = vmul.f32 %v3581, %v3603
    %v3606 = vpack.c.bf16 %v3605, %v3604
    %v3607 = vld [vmem:[%s20] sm:$0xf]
    %v3608 = vld [vmem:[%s20 + $0x4] sm:$0xf]
    %v3609 = vld [vmem:[%s20 + $0x8] sm:$0xf]
    %v3610 = vld [vmem:[%s20 + $0xc] sm:$0xf]
    %v3611 = vld [vmem:[%s21] sm:$0x1]
    %v3613 = vperm.slane %v3611, 0
    %v3619 = vunpack.c.l.b16 %v3607
    %v3620 = vunpack.c.l.b16 %v3608
    %v3621 = vunpack.c.l.b16 %v3609
    %v3622 = vunpack.c.l.b16 %v3610
    %v3623 = vpack.c.b16 %v3620, %v3619
    %v3624 = vpack.c.b16 %v3622, %v3621
    %v3628 = vsel %vm89, %v3606, 0
    %3630 = vmatpush.bf16.msra.mxu0 0
    %3631 = vmatpush.bf16.msra.mxu0 0
    %3632 = vmatpush.bf16.msra.mxu0 0
    %3633 = vmatpush.bf16.msra.mxu0 0
    %3634 = vmatpush.bf16.msra.mxu0 0
    %3635 = vmatpush.bf16.msra.mxu0 0
    %3636 = vmatpush.bf16.msra.mxu0 %v3624
    %3637 = vmatpush.bf16.msra.mxu0 %v3623
    %3638 = vmatmul.bf16.gmra.mxu0 %v3628
    %v3639 = vpop.f32.mrf.mxu0
    %v3640 = vadd.f32 %v3613, %v3639
    %v3641 = vpop.f32.mrf.mxu0
    %v3642 = vadd.f32 %v3613, %v3641
    %3643 = vdwg.mxu0
    %v3644 = vmax.f32 %v3640, 0.0
    %v3645 = vmax.f32 %v3642, 0.0
    %v3646 = vpack.c.bf16 %v3645, %v3644
    %v3647 = vld [vmem:[%s22] sm:$0xf]
    %v3648 = vld [vmem:[%s22 + $0x4] sm:$0xf]
    %v3649 = vld [vmem:[%s22 + $0x8] sm:$0xf]
    %v3650 = vld [vmem:[%s22 + $0xc] sm:$0xf]
    %v3651 = vld [vmem:[%s22 + $0x10] sm:$0xf]
    %v3652 = vld [vmem:[%s22 + $0x14] sm:$0xf]
    %v3653 = vld [vmem:[%s22 + $0x18] sm:$0xf]
    %v3654 = vld [vmem:[%s22 + $0x1c] sm:$0xf]
    %v3655 = vld [vmem:[%s22 + $0x20] sm:$0xf]
    %v3656 = vld [vmem:[%s22 + $0x24] sm:$0xf]
    %v3657 = vld [vmem:[%s22 + $0x28] sm:$0xf]
    %v3658 = vld [vmem:[%s22 + $0x2c] sm:$0xf]
    %v3659 = vld [vmem:[%s22 + $0x30] sm:$0xf]
    %v3660 = vld [vmem:[%s22 + $0x34] sm:$0xf]
    %v3661 = vld [vmem:[%s22 + $0x38] sm:$0xf]
    %v3662 = vld [vmem:[%s22 + $0x3c] sm:$0xf]
    %v3679 = vunpack.c.l.b16 %v3647
    %v3680 = vunpack.c.l.b16 %v3648
    %v3681 = vunpack.c.l.b16 %v3649
    %v3682 = vunpack.c.l.b16 %v3650
    %v3683 = vunpack.c.l.b16 %v3651
    %v3684 = vunpack.c.l.b16 %v3652
    %v3685 = vunpack.c.l.b16 %v3653
    %v3686 = vunpack.c.l.b16 %v3654
    %v3687 = vunpack.c.l.b16 %v3655
    %v3688 = vunpack.c.l.b16 %v3656
    %v3689 = vunpack.c.l.b16 %v3657
    %v3690 = vunpack.c.l.b16 %v3658
    %v3691 = vunpack.c.l.b16 %v3659
    %v3692 = vunpack.c.l.b16 %v3660
    %v3693 = vunpack.c.l.b16 %v3661
    %v3694 = vunpack.c.l.b16 %v3662
    %v3695 = vpack.c.b16 %v3680, %v3679
    %v3696 = vpack.c.b16 %v3682, %v3681
    %v3697 = vpack.c.b16 %v3684, %v3683
    %v3698 = vpack.c.b16 %v3686, %v3685
    %v3699 = vpack.c.b16 %v3688, %v3687
    %v3700 = vpack.c.b16 %v3690, %v3689
    %v3701 = vpack.c.b16 %v3692, %v3691
    %v3702 = vpack.c.b16 %v3694, %v3693
    %3711 = vmatpush.bf16.msra.mxu0 %v3702
    %3712 = vmatpush.bf16.msra.mxu0 %v3701
    %3713 = vmatpush.bf16.msra.mxu0 %v3700
    %3714 = vmatpush.bf16.msra.mxu0 %v3699
    %3715 = vmatpush.bf16.msra.mxu0 %v3698
    %3716 = vmatpush.bf16.msra.mxu0 %v3697
    %3717 = vmatpush.bf16.msra.mxu0 %v3696
    %3718 = vmatpush.bf16.msra.mxu0 %v3695
    %3719 = vmatmul.bf16.gmra.mxu0 %v3646
    %v3720 = vpop.f32.mrf.mxu0
    %v3721 = vadd.f32 0.0, %v3720
    %v3722 = vpop.f32.mrf.mxu0
    %v3723 = vadd.f32 0.0, %v3722
    %3724 = vdwg.mxu0
    %v3725 = vadd.f32 %v3556, %v3721
    %v3726 = vadd.f32 %v3557, %v3723
    %v3727 = vld [vmem:[%s23] sm:$0x1]
    %v3729 = vperm.slane %v3727, 0
    %v3731 = vadd.f32 %v3725, %v3729
    %v3732 = vadd.f32 %v3726, %v3729
    %v3733 = vsel %vm89, %v3731, 0.0
    %3734 = vadd.xlane.f32.xlu0 %v3733
    %v3735 = vpop.xlane.xlu0 %3734
    %v3736 = vsel %vm89, %v3732, 0.0
    %3737 = vadd.xlane.f32.xlu0 %v3736
    %v3738 = vpop.xlane.xlu0 %3737
    %v3739 = vmul.f32 %v3735, %v108
    %v3740 = vmul.f32 %v3738, %v108
    %v3741 = vmul.f32 %v3731, %v3731
    %v3742 = vmul.f32 %v3732, %v3732
    %v3743 = vsel %vm89, %v3741, 0.0
    %3744 = vadd.xlane.f32.xlu0 %v3743
    %v3745 = vpop.xlane.xlu0 %3744
    %v3746 = vsel %vm89, %v3742, 0.0
    %3747 = vadd.xlane.f32.xlu0 %v3746
    %v3748 = vpop.xlane.xlu0 %3747
    %v3749 = vmul.f32 %v3745, %v108
    %v3750 = vmul.f32 %v3748, %v108
    %v3751 = vmul.f32 %v3739, %v3739
    %v3752 = vmul.f32 %v3740, %v3740
    %v3753 = vsub.f32 %v3749, %v3751
    %v3754 = vsub.f32 %v3750, %v3752
    %v3755 = vsub.f32 %v3731, %v3739
    %v3756 = vsub.f32 %v3732, %v3740
    %v3757 = vadd.f32 %v3753, 1e-05
    %v3758 = vadd.f32 %v3754, 1e-05
    %v3759 = vrsqrt.pop %v3757
    %v3760 = vmul.f32 %v3759, %v3757
    %v3761 = vmul.f32 %v3760, %v3759
    %v3762 = vmul.f32 0.5, %v3761
    %v3763 = vsub.f32 1.5, %v3762
    %v3764 = vmul.f32 %v3759, %v3763
    %vm3765 = vweird.f32 %v3757
    %vm3766 = vweird.f32 %v3759
    %vm3767 = vmor %vm3765, %vm3766
    %v3768 = vsel %vm3767, %v3759, %v3764
    %v3769 = vrsqrt.pop %v3758
    %v3770 = vmul.f32 %v3769, %v3758
    %v3771 = vmul.f32 %v3770, %v3769
    %v3772 = vmul.f32 0.5, %v3771
    %v3773 = vsub.f32 1.5, %v3772
    %v3774 = vmul.f32 %v3769, %v3773
    %vm3775 = vweird.f32 %v3758
    %vm3776 = vweird.f32 %v3769
    %vm3777 = vmor %vm3775, %vm3776
    %v3778 = vsel %vm3777, %v3769, %v3774
    %v3779 = vmul.f32 %v3755, %v3768
    %v3780 = vmul.f32 %v3756, %v3778
    %v3781 = vpack.c.bf16 %v3780, %v3779
    %s3782 = scalar_lea.vmem %s10, 16
    %v3783 = vld [vmem:[%s3782] sm:$0xf]
    %v3784 = vld [vmem:[%s3782 + $0x4] sm:$0xf]
    %v3785 = vld [vmem:[%s3782 + $0x8] sm:$0xf]
    %v3786 = vld [vmem:[%s3782 + $0xc] sm:$0xf]
    %s3787 = scalar_lea.vmem %s11, 1
    %v3788 = vld [vmem:[%s3787] sm:$0x1]
    %v3790 = vperm.slane %v3788, 0
    %v3796 = vunpack.c.l.b16 %v3783
    %v3797 = vunpack.c.l.b16 %v3784
    %v3798 = vunpack.c.l.b16 %v3785
    %v3799 = vunpack.c.l.b16 %v3786
    %v3800 = vpack.c.b16 %v3797, %v3796
    %v3801 = vpack.c.b16 %v3799, %v3798
    %v3805 = vsel %vm89, %v3781, 0
    %3807 = vmatpush.bf16.msra.mxu0 0
    %3808 = vmatpush.bf16.msra.mxu0 0
    %3809 = vmatpush.bf16.msra.mxu0 0
    %3810 = vmatpush.bf16.msra.mxu0 0
    %3811 = vmatpush.bf16.msra.mxu0 0
    %3812 = vmatpush.bf16.msra.mxu0 0
    %3813 = vmatpush.bf16.msra.mxu0 %v3801
    %3814 = vmatpush.bf16.msra.mxu0 %v3800
    %3815 = vmatmul.bf16.gmra.mxu0 %v3805
    %v3816 = vpop.f32.mrf.mxu0
    %v3817 = vadd.f32 %v3790, %v3816
    %v3818 = vpop.f32.mrf.mxu0
    %v3819 = vadd.f32 %v3790, %v3818
    %3820 = vdwg.mxu0
    %s3821 = scalar_lea.vmem %s12, 16
    %v3822 = vld [vmem:[%s3821] sm:$0xf]
    %v3823 = vld [vmem:[%s3821 + $0x4] sm:$0xf]
    %v3824 = vld [vmem:[%s3821 + $0x8] sm:$0xf]
    %v3825 = vld [vmem:[%s3821 + $0xc] sm:$0xf]
    %s3826 = scalar_lea.vmem %s13, 1
    %v3827 = vld [vmem:[%s3826] sm:$0x1]
    %v3828 = vpack.c.bf16 %v3817, %v3817
    %v3829 = vpack.c.bf16 %v3819, %v3819
    %v3831 = vunpack.c.l.b16 %v3828
    %v3832 = vpack.c.b16 %v3831, %v3831
    %3833 = vrot.lane.b32.xlu0 %v3832, 96
    %v3834 = vpop.permute.xlu0 %3833
    %v3836 = vsel %vm256, %v3828, 0
    %v3839 = vsel %vm256, %v3834, 0
    %3841 = vmatpush.bf16.xpose.msra.mxu0 0
    %3842 = vmatpush.bf16.xpose.msra.mxu0 0
    %3843 = vmatpush.bf16.xpose.msra.mxu0 0
    %3844 = vmatpush.bf16.xpose.msra.mxu0 0
    %3845 = vmatpush.bf16.xpose.msra.mxu0 0
    %3846 = vmatpush.bf16.xpose.msra.mxu0 0
    %3847 = vmatpush.bf16.xpose.msra.mxu0 0
    %3848 = vmatpush.bf16.xpose.msra.mxu0 %v3839
    %3849 = vmatmul.bf16.gmra.mxu0 %v3836
    %v3850 = vpop.f32.mrf.mxu0
    %v3851 = vadd.f32 %v2392, %v3850
    %v3852 = vpop.f32.mrf.mxu0
    %3853 = vdwg.mxu0
    %v3855 = vunpack.c.l.b16 %v3829
    %v3856 = vpack.c.b16 %v3855, %v3855
    %3857 = vrot.lane.b32.xlu0 %v3856, 96
    %v3858 = vpop.permute.xlu0 %3857
    %v3860 = vsel %vm256, %v3829, 0
    %v3863 = vsel %vm256, %v3858, 0
    %3865 = vmatpush.bf16.xpose.msra.mxu0 0
    %3866 = vmatpush.bf16.xpose.msra.mxu0 0
    %3867 = vmatpush.bf16.xpose.msra.mxu0 0
    %3868 = vmatpush.bf16.xpose.msra.mxu0 0
    %3869 = vmatpush.bf16.xpose.msra.mxu0 0
    %3870 = vmatpush.bf16.xpose.msra.mxu0 0
    %3871 = vmatpush.bf16.xpose.msra.mxu0 0
    %3872 = vmatpush.bf16.xpose.msra.mxu0 %v3863
    %3873 = vmatmul.bf16.gmra.mxu0 %v3860
    %v3874 = vpop.f32.mrf.mxu0
    %v3875 = vadd.f32 %v2392, %v3874
    %v3876 = vpop.f32.mrf.mxu0
    %3877 = vdwg.mxu0
    %v3878 = vsel %vm256, %v3851, -inf
    %3879 = vmax.xlane.f32.xlu0 %v3878
    %v3880 = vpop.xlane.xlu0 %3879
    %v3881 = vsel %vm256, %v3875, -inf
    %3882 = vmax.xlane.f32.xlu0 %v3881
    %v3883 = vpop.xlane.xlu0 %3882
    %v3884 = vsub.f32 %v3851, %v3880
    %v3885 = vsub.f32 %v3875, %v3883
    %v3886 = vmul.f32 %v3884, 1.442695
    %v3887 = vpow.pop %v3886
    %v3888 = vmul.f32 %v3885, 1.442695
    %v3889 = vpow.pop %v3888
    %v3890 = vsel %vm256, %v3887, 0.0
    %3891 = vadd.xlane.f32.xlu0 %v3890
    %v3892 = vpop.xlane.xlu0 %3891
    %v3893 = vsel %vm256, %v3889, 0.0
    %3894 = vadd.xlane.f32.xlu0 %v3893
    %v3895 = vpop.xlane.xlu0 %3894
    %v3896 = vrcp.pop %v3892
    %v3897 = vrcp.pop %v3895
    %v3898 = vmul.f32 %v3887, %v3896
    %v3899 = vmul.f32 %v3889, %v3897
    %v3900 = vpack.c.bf16 %v3898, %v3898
    %v3901 = vpack.c.bf16 %v3899, %v3899
    %3902 = vrot.lane.b32.xlu0 %v3832, 64
    %v3903 = vpop.permute.xlu0 %3902
    %v3905 = vsel %vm256, %v3900, 0
    %v3908 = vsel %vm2472, %v3903, 0
    %3910 = vmatpush.bf16.msra.mxu0 0
    %3911 = vmatpush.bf16.msra.mxu0 0
    %3912 = vmatpush.bf16.msra.mxu0 0
    %3913 = vmatpush.bf16.msra.mxu0 0
    %3914 = vmatpush.bf16.msra.mxu0 0
    %3915 = vmatpush.bf16.msra.mxu0 0
    %3916 = vmatpush.bf16.msra.mxu0 0
    %3917 = vmatpush.bf16.msra.mxu0 %v3908
    %3918 = vmatmul.bf16.gmra.mxu0 %v3905
    %v3919 = vpop.f32.mrf.mxu0
    %v3920 = vadd.f32 0.0, %v3919
    %v3921 = vpop.f32.mrf.mxu0
    %3922 = vdwg.mxu0
    %3923 = vrot.lane.b32.xlu0 %v3856, 64
    %v3924 = vpop.permute.xlu0 %3923
    %v3926 = vsel %vm256, %v3901, 0
    %v3929 = vsel %vm2472, %v3924, 0
    %3931 = vmatpush.bf16.msra.mxu0 0
    %3932 = vmatpush.bf16.msra.mxu0 0
    %3933 = vmatpush.bf16.msra.mxu0 0
    %3934 = vmatpush.bf16.msra.mxu0 0
    %3935 = vmatpush.bf16.msra.mxu0 0
    %3936 = vmatpush.bf16.msra.mxu0 0
    %3937 = vmatpush.bf16.msra.mxu0 0
    %3938 = vmatpush.bf16.msra.mxu0 %v3929
    %3939 = vmatmul.bf16.gmra.mxu0 %v3926
    %v3940 = vpop.f32.mrf.mxu0
    %v3941 = vadd.f32 0.0, %v3940
    %v3942 = vpop.f32.mrf.mxu0
    %3943 = vdwg.mxu0
    %3944 = vrot.lane.b32.xlu0 %v3832, 120
    %v3945 = vpop.permute.xlu0 %3944
    %3946 = vrot.lane.b32.xlu0 %v3832, 88
    %v3947 = vpop.permute.xlu0 %3946
    %v3949 = vsel %vm256, %v3945, 0
    %v3952 = vsel %vm256, %v3947, 0
    %3954 = vmatpush.bf16.xpose.msra.mxu0 0
    %3955 = vmatpush.bf16.xpose.msra.mxu0 0
    %3956 = vmatpush.bf16.xpose.msra.mxu0 0
    %3957 = vmatpush.bf16.xpose.msra.mxu0 0
    %3958 = vmatpush.bf16.xpose.msra.mxu0 0
    %3959 = vmatpush.bf16.xpose.msra.mxu0 0
    %3960 = vmatpush.bf16.xpose.msra.mxu0 0
    %3961 = vmatpush.bf16.xpose.msra.mxu0 %v3952
    %3962 = vmatmul.bf16.gmra.mxu0 %v3949
    %v3963 = vpop.f32.mrf.mxu0
    %v3964 = vadd.f32 %v2392, %v3963
    %v3965 = vpop.f32.mrf.mxu0
    %3966 = vdwg.mxu0
    %3967 = vrot.lane.b32.xlu0 %v3856, 120
    %v3968 = vpop.permute.xlu0 %3967
    %3969 = vrot.lane.b32.xlu0 %v3856, 88
    %v3970 = vpop.permute.xlu0 %3969
    %v3972 = vsel %vm256, %v3968, 0
    %v3975 = vsel %vm256, %v3970, 0
    %3977 = vmatpush.bf16.xpose.msra.mxu0 0
    %3978 = vmatpush.bf16.xpose.msra.mxu0 0
    %3979 = vmatpush.bf16.xpose.msra.mxu0 0
    %3980 = vmatpush.bf16.xpose.msra.mxu0 0
    %3981 = vmatpush.bf16.xpose.msra.mxu0 0
    %3982 = vmatpush.bf16.xpose.msra.mxu0 0
    %3983 = vmatpush.bf16.xpose.msra.mxu0 0
    %3984 = vmatpush.bf16.xpose.msra.mxu0 %v3975
    %3985 = vmatmul.bf16.gmra.mxu0 %v3972
    %v3986 = vpop.f32.mrf.mxu0
    %v3987 = vadd.f32 %v2392, %v3986
    %v3988 = vpop.f32.mrf.mxu0
    %3989 = vdwg.mxu0
    %v3990 = vsel %vm256, %v3964, -inf
    %3991 = vmax.xlane.f32.xlu0 %v3990
    %v3992 = vpop.xlane.xlu0 %3991
    %v3993 = vsel %vm256, %v3987, -inf
    %3994 = vmax.xlane.f32.xlu0 %v3993
    %v3995 = vpop.xlane.xlu0 %3994
    %v3996 = vsub.f32 %v3964, %v3992
    %v3997 = vsub.f32 %v3987, %v3995
    %v3998 = vmul.f32 %v3996, 1.442695
    %v3999 = vpow.pop %v3998
    %v4000 = vmul.f32 %v3997, 1.442695
    %v4001 = vpow.pop %v4000
    %v4002 = vsel %vm256, %v3999, 0.0
    %4003 = vadd.xlane.f32.xlu0 %v4002
    %v4004 = vpop.xlane.xlu0 %4003
    %v4005 = vsel %vm256, %v4001, 0.0
    %4006 = vadd.xlane.f32.xlu0 %v4005
    %v4007 = vpop.xlane.xlu0 %4006
    %v4008 = vrcp.pop %v4004
    %v4009 = vrcp.pop %v4007
    %v4010 = vmul.f32 %v3999, %v4008
    %v4011 = vmul.f32 %v4001, %v4009
    %v4012 = vpack.c.bf16 %v4010, %v4010
    %v4013 = vpack.c.bf16 %v4011, %v4011
    %4014 = vrot.lane.b32.xlu0 %v3832, 56
    %v4015 = vpop.permute.xlu0 %4014
    %v4017 = vsel %vm256, %v4012, 0
    %v4020 = vsel %vm2472, %v4015, 0
    %4022 = vmatpush.bf16.msra.mxu0 0
    %4023 = vmatpush.bf16.msra.mxu0 0
    %4024 = vmatpush.bf16.msra.mxu0 0
    %4025 = vmatpush.bf16.msra.mxu0 0
    %4026 = vmatpush.bf16.msra.mxu0 0
    %4027 = vmatpush.bf16.msra.mxu0 0
    %4028 = vmatpush.bf16.msra.mxu0 0
    %4029 = vmatpush.bf16.msra.mxu0 %v4020
    %4030 = vmatmul.bf16.gmra.mxu0 %v4017
    %v4031 = vpop.f32.mrf.mxu0
    %v4032 = vadd.f32 0.0, %v4031
    %v4033 = vpop.f32.mrf.mxu0
    %4034 = vdwg.mxu0
    %4035 = vrot.lane.b32.xlu0 %v3856, 56
    %v4036 = vpop.permute.xlu0 %4035
    %v4038 = vsel %vm256, %v4013, 0
    %v4041 = vsel %vm2472, %v4036, 0
    %4043 = vmatpush.bf16.msra.mxu0 0
    %4044 = vmatpush.bf16.msra.mxu0 0
    %4045 = vmatpush.bf16.msra.mxu0 0
    %4046 = vmatpush.bf16.msra.mxu0 0
    %4047 = vmatpush.bf16.msra.mxu0 0
    %4048 = vmatpush.bf16.msra.mxu0 0
    %4049 = vmatpush.bf16.msra.mxu0 0
    %4050 = vmatpush.bf16.msra.mxu0 %v4041
    %4051 = vmatmul.bf16.gmra.mxu0 %v4038
    %v4052 = vpop.f32.mrf.mxu0
    %v4053 = vadd.f32 0.0, %v4052
    %v4054 = vpop.f32.mrf.mxu0
    %4055 = vdwg.mxu0
    %4056 = vrot.lane.b32.xlu0 %v3832, 112
    %v4057 = vpop.permute.xlu0 %4056
    %4058 = vrot.lane.b32.xlu0 %v3832, 80
    %v4059 = vpop.permute.xlu0 %4058
    %v4061 = vsel %vm256, %v4057, 0
    %v4064 = vsel %vm256, %v4059, 0
    %4066 = vmatpush.bf16.xpose.msra.mxu0 0
    %4067 = vmatpush.bf16.xpose.msra.mxu0 0
    %4068 = vmatpush.bf16.xpose.msra.mxu0 0
    %4069 = vmatpush.bf16.xpose.msra.mxu0 0
    %4070 = vmatpush.bf16.xpose.msra.mxu0 0
    %4071 = vmatpush.bf16.xpose.msra.mxu0 0
    %4072 = vmatpush.bf16.xpose.msra.mxu0 0
    %4073 = vmatpush.bf16.xpose.msra.mxu0 %v4064
    %4074 = vmatmul.bf16.gmra.mxu0 %v4061
    %v4075 = vpop.f32.mrf.mxu0
    %v4076 = vadd.f32 %v2392, %v4075
    %v4077 = vpop.f32.mrf.mxu0
    %4078 = vdwg.mxu0
    %4079 = vrot.lane.b32.xlu0 %v3856, 112
    %v4080 = vpop.permute.xlu0 %4079
    %4081 = vrot.lane.b32.xlu0 %v3856, 80
    %v4082 = vpop.permute.xlu0 %4081
    %v4084 = vsel %vm256, %v4080, 0
    %v4087 = vsel %vm256, %v4082, 0
    %4089 = vmatpush.bf16.xpose.msra.mxu0 0
    %4090 = vmatpush.bf16.xpose.msra.mxu0 0
    %4091 = vmatpush.bf16.xpose.msra.mxu0 0
    %4092 = vmatpush.bf16.xpose.msra.mxu0 0
    %4093 = vmatpush.bf16.xpose.msra.mxu0 0
    %4094 = vmatpush.bf16.xpose.msra.mxu0 0
    %4095 = vmatpush.bf16.xpose.msra.mxu0 0
    %4096 = vmatpush.bf16.xpose.msra.mxu0 %v4087
    %4097 = vmatmul.bf16.gmra.mxu0 %v4084
    %v4098 = vpop.f32.mrf.mxu0
    %v4099 = vadd.f32 %v2392, %v4098
    %v4100 = vpop.f32.mrf.mxu0
    %4101 = vdwg.mxu0
    %v4102 = vsel %vm256, %v4076, -inf
    %4103 = vmax.xlane.f32.xlu0 %v4102
    %v4104 = vpop.xlane.xlu0 %4103
    %v4105 = vsel %vm256, %v4099, -inf
    %4106 = vmax.xlane.f32.xlu0 %v4105
    %v4107 = vpop.xlane.xlu0 %4106
    %v4108 = vsub.f32 %v4076, %v4104
    %v4109 = vsub.f32 %v4099, %v4107
    %v4110 = vmul.f32 %v4108, 1.442695
    %v4111 = vpow.pop %v4110
    %v4112 = vmul.f32 %v4109, 1.442695
    %v4113 = vpow.pop %v4112
    %v4114 = vsel %vm256, %v4111, 0.0
    %4115 = vadd.xlane.f32.xlu0 %v4114
    %v4116 = vpop.xlane.xlu0 %4115
    %v4117 = vsel %vm256, %v4113, 0.0
    %4118 = vadd.xlane.f32.xlu0 %v4117
    %v4119 = vpop.xlane.xlu0 %4118
    %v4120 = vrcp.pop %v4116
    %v4121 = vrcp.pop %v4119
    %v4122 = vmul.f32 %v4111, %v4120
    %v4123 = vmul.f32 %v4113, %v4121
    %v4124 = vpack.c.bf16 %v4122, %v4122
    %v4125 = vpack.c.bf16 %v4123, %v4123
    %4126 = vrot.lane.b32.xlu0 %v3832, 48
    %v4127 = vpop.permute.xlu0 %4126
    %v4129 = vsel %vm256, %v4124, 0
    %v4132 = vsel %vm2472, %v4127, 0
    %4134 = vmatpush.bf16.msra.mxu0 0
    %4135 = vmatpush.bf16.msra.mxu0 0
    %4136 = vmatpush.bf16.msra.mxu0 0
    %4137 = vmatpush.bf16.msra.mxu0 0
    %4138 = vmatpush.bf16.msra.mxu0 0
    %4139 = vmatpush.bf16.msra.mxu0 0
    %4140 = vmatpush.bf16.msra.mxu0 0
    %4141 = vmatpush.bf16.msra.mxu0 %v4132
    %4142 = vmatmul.bf16.gmra.mxu0 %v4129
    %v4143 = vpop.f32.mrf.mxu0
    %v4144 = vadd.f32 0.0, %v4143
    %v4145 = vpop.f32.mrf.mxu0
    %4146 = vdwg.mxu0
    %4147 = vrot.lane.b32.xlu0 %v3856, 48
    %v4148 = vpop.permute.xlu0 %4147
    %v4150 = vsel %vm256, %v4125, 0
    %v4153 = vsel %vm2472, %v4148, 0
    %4155 = vmatpush.bf16.msra.mxu0 0
    %4156 = vmatpush.bf16.msra.mxu0 0
    %4157 = vmatpush.bf16.msra.mxu0 0
    %4158 = vmatpush.bf16.msra.mxu0 0
    %4159 = vmatpush.bf16.msra.mxu0 0
    %4160 = vmatpush.bf16.msra.mxu0 0
    %4161 = vmatpush.bf16.msra.mxu0 0
    %4162 = vmatpush.bf16.msra.mxu0 %v4153
    %4163 = vmatmul.bf16.gmra.mxu0 %v4150
    %v4164 = vpop.f32.mrf.mxu0
    %v4165 = vadd.f32 0.0, %v4164
    %v4166 = vpop.f32.mrf.mxu0
    %4167 = vdwg.mxu0
    %4168 = vrot.lane.b32.xlu0 %v3832, 104
    %v4169 = vpop.permute.xlu0 %4168
    %4170 = vrot.lane.b32.xlu0 %v3832, 72
    %v4171 = vpop.permute.xlu0 %4170
    %v4173 = vsel %vm256, %v4169, 0
    %v4176 = vsel %vm256, %v4171, 0
    %4178 = vmatpush.bf16.xpose.msra.mxu0 0
    %4179 = vmatpush.bf16.xpose.msra.mxu0 0
    %4180 = vmatpush.bf16.xpose.msra.mxu0 0
    %4181 = vmatpush.bf16.xpose.msra.mxu0 0
    %4182 = vmatpush.bf16.xpose.msra.mxu0 0
    %4183 = vmatpush.bf16.xpose.msra.mxu0 0
    %4184 = vmatpush.bf16.xpose.msra.mxu0 0
    %4185 = vmatpush.bf16.xpose.msra.mxu0 %v4176
    %4186 = vmatmul.bf16.gmra.mxu0 %v4173
    %v4187 = vpop.f32.mrf.mxu0
    %v4188 = vadd.f32 %v2392, %v4187
    %v4189 = vpop.f32.mrf.mxu0
    %4190 = vdwg.mxu0
    %4191 = vrot.lane.b32.xlu0 %v3856, 104
    %v4192 = vpop.permute.xlu0 %4191
    %4193 = vrot.lane.b32.xlu0 %v3856, 72
    %v4194 = vpop.permute.xlu0 %4193
    %v4196 = vsel %vm256, %v4192, 0
    %v4199 = vsel %vm256, %v4194, 0
    %4201 = vmatpush.bf16.xpose.msra.mxu0 0
    %4202 = vmatpush.bf16.xpose.msra.mxu0 0
    %4203 = vmatpush.bf16.xpose.msra.mxu0 0
    %4204 = vmatpush.bf16.xpose.msra.mxu0 0
    %4205 = vmatpush.bf16.xpose.msra.mxu0 0
    %4206 = vmatpush.bf16.xpose.msra.mxu0 0
    %4207 = vmatpush.bf16.xpose.msra.mxu0 0
    %4208 = vmatpush.bf16.xpose.msra.mxu0 %v4199
    %4209 = vmatmul.bf16.gmra.mxu0 %v4196
    %v4210 = vpop.f32.mrf.mxu0
    %v4211 = vadd.f32 %v2392, %v4210
    %v4212 = vpop.f32.mrf.mxu0
    %4213 = vdwg.mxu0
    %v4214 = vsel %vm256, %v4188, -inf
    %4215 = vmax.xlane.f32.xlu0 %v4214
    %v4216 = vpop.xlane.xlu0 %4215
    %v4217 = vsel %vm256, %v4211, -inf
    %4218 = vmax.xlane.f32.xlu0 %v4217
    %v4219 = vpop.xlane.xlu0 %4218
    %v4220 = vsub.f32 %v4188, %v4216
    %v4221 = vsub.f32 %v4211, %v4219
    %v4222 = vmul.f32 %v4220, 1.442695
    %v4223 = vpow.pop %v4222
    %v4224 = vmul.f32 %v4221, 1.442695
    %v4225 = vpow.pop %v4224
    %v4226 = vsel %vm256, %v4223, 0.0
    %4227 = vadd.xlane.f32.xlu0 %v4226
    %v4228 = vpop.xlane.xlu0 %4227
    %v4229 = vsel %vm256, %v4225, 0.0
    %4230 = vadd.xlane.f32.xlu0 %v4229
    %v4231 = vpop.xlane.xlu0 %4230
    %v4232 = vrcp.pop %v4228
    %v4233 = vrcp.pop %v4231
    %v4234 = vmul.f32 %v4223, %v4232
    %v4235 = vmul.f32 %v4225, %v4233
    %v4236 = vpack.c.bf16 %v4234, %v4234
    %v4237 = vpack.c.bf16 %v4235, %v4235
    %4238 = vrot.lane.b32.xlu0 %v3832, 40
    %v4239 = vpop.permute.xlu0 %4238
    %v4241 = vsel %vm256, %v4236, 0
    %v4244 = vsel %vm2472, %v4239, 0
    %4246 = vmatpush.bf16.msra.mxu0 0
    %4247 = vmatpush.bf16.msra.mxu0 0
    %4248 = vmatpush.bf16.msra.mxu0 0
    %4249 = vmatpush.bf16.msra.mxu0 0
    %4250 = vmatpush.bf16.msra.mxu0 0
    %4251 = vmatpush.bf16.msra.mxu0 0
    %4252 = vmatpush.bf16.msra.mxu0 0
    %4253 = vmatpush.bf16.msra.mxu0 %v4244
    %4254 = vmatmul.bf16.gmra.mxu0 %v4241
    %v4255 = vpop.f32.mrf.mxu0
    %v4256 = vadd.f32 0.0, %v4255
    %v4257 = vpop.f32.mrf.mxu0
    %4258 = vdwg.mxu0
    %4259 = vrot.lane.b32.xlu0 %v3856, 40
    %v4260 = vpop.permute.xlu0 %4259
    %v4262 = vsel %vm256, %v4237, 0
    %v4265 = vsel %vm2472, %v4260, 0
    %4267 = vmatpush.bf16.msra.mxu0 0
    %4268 = vmatpush.bf16.msra.mxu0 0
    %4269 = vmatpush.bf16.msra.mxu0 0
    %4270 = vmatpush.bf16.msra.mxu0 0
    %4271 = vmatpush.bf16.msra.mxu0 0
    %4272 = vmatpush.bf16.msra.mxu0 0
    %4273 = vmatpush.bf16.msra.mxu0 0
    %4274 = vmatpush.bf16.msra.mxu0 %v4265
    %4275 = vmatmul.bf16.gmra.mxu0 %v4262
    %v4276 = vpop.f32.mrf.mxu0
    %v4277 = vadd.f32 0.0, %v4276
    %v4278 = vpop.f32.mrf.mxu0
    %4279 = vdwg.mxu0
    %4282 = vrot.lane.b32.xlu0 %v4032, 8
    %v4283 = vpop.permute.xlu0 %4282
    %4284 = vrot.lane.b32.xlu0 %v4053, 8
    %v4285 = vpop.permute.xlu0 %4284
    %4290 = vrot.lane.b32.xlu0 %v4144, 16
    %v4291 = vpop.permute.xlu0 %4290
    %4292 = vrot.lane.b32.xlu0 %v4165, 16
    %v4293 = vpop.permute.xlu0 %4292
    %4298 = vrot.lane.b32.xlu0 %v4256, 24
    %v4299 = vpop.permute.xlu0 %4298
    %4300 = vrot.lane.b32.xlu0 %v4277, 24
    %v4301 = vpop.permute.xlu0 %4300
    %v4304 = vsel %vm256, %v3920, %v4283
    %v4305 = vsel %vm256, %v3941, %v4285
    %v4306 = vsel %vm304, %v4304, %v4291
    %v4307 = vsel %vm304, %v4305, %v4293
    %v4308 = vsel %vm897, %v4306, %v4299
    %v4309 = vsel %vm897, %v4307, %v4301
    %v4310 = vpack.c.bf16 %v4309, %v4308
    %v4312 = vperm.slane %v3827, 0
    %v4318 = vunpack.c.l.b16 %v3822
    %v4319 = vunpack.c.l.b16 %v3823
    %v4320 = vunpack.c.l.b16 %v3824
    %v4321 = vunpack.c.l.b16 %v3825
    %v4322 = vpack.c.b16 %v4319, %v4318
    %v4323 = vpack.c.b16 %v4321, %v4320
    %v4327 = vsel %vm89, %v4310, 0
    %4329 = vmatpush.bf16.msra.mxu0 0
    %4330 = vmatpush.bf16.msra.mxu0 0
    %4331 = vmatpush.bf16.msra.mxu0 0
    %4332 = vmatpush.bf16.msra.mxu0 0
    %4333 = vmatpush.bf16.msra.mxu0 0
    %4334 = vmatpush.bf16.msra.mxu0 0
    %4335 = vmatpush.bf16.msra.mxu0 %v4323
    %4336 = vmatpush.bf16.msra.mxu0 %v4322
    %4337 = vmatmul.bf16.gmra.mxu0 %v4327
    %v4338 = vpop.f32.mrf.mxu0
    %v4339 = vadd.f32 %v4312, %v4338
    %v4340 = vpop.f32.mrf.mxu0
    %v4341 = vadd.f32 %v4312, %v4340
    %4342 = vdwg.mxu0
    %v4343 = vadd.f32 %v3731, %v4339
    %v4344 = vadd.f32 %v3732, %v4341
    %v4345 = vsel %vm89, %v4343, 0.0
    %4346 = vadd.xlane.f32.xlu0 %v4345
    %v4347 = vpop.xlane.xlu0 %4346
    %v4348 = vsel %vm89, %v4344, 0.0
    %4349 = vadd.xlane.f32.xlu0 %v4348
    %v4350 = vpop.xlane.xlu0 %4349
    %v4351 = vmul.f32 %v4347, %v108
    %v4352 = vmul.f32 %v4350, %v108
    %v4353 = vmul.f32 %v4343, %v4343
    %v4354 = vmul.f32 %v4344, %v4344
    %v4355 = vsel %vm89, %v4353, 0.0
    %4356 = vadd.xlane.f32.xlu0 %v4355
    %v4357 = vpop.xlane.xlu0 %4356
    %v4358 = vsel %vm89, %v4354, 0.0
    %4359 = vadd.xlane.f32.xlu0 %v4358
    %v4360 = vpop.xlane.xlu0 %4359
    %v4361 = vmul.f32 %v4357, %v108
    %v4362 = vmul.f32 %v4360, %v108
    %v4363 = vmul.f32 %v4351, %v4351
    %v4364 = vmul.f32 %v4352, %v4352
    %v4365 = vsub.f32 %v4361, %v4363
    %v4366 = vsub.f32 %v4362, %v4364
    %v4367 = vsub.f32 %v4343, %v4351
    %v4368 = vsub.f32 %v4344, %v4352
    %v4369 = vadd.f32 %v4365, 1e-05
    %v4370 = vadd.f32 %v4366, 1e-05
    %v4371 = vrsqrt.pop %v4369
    %v4372 = vmul.f32 %v4371, %v4369
    %v4373 = vmul.f32 %v4372, %v4371
    %v4374 = vmul.f32 0.5, %v4373
    %v4375 = vsub.f32 1.5, %v4374
    %v4376 = vmul.f32 %v4371, %v4375
    %vm4377 = vweird.f32 %v4369
    %vm4378 = vweird.f32 %v4371
    %vm4379 = vmor %vm4377, %vm4378
    %v4380 = vsel %vm4379, %v4371, %v4376
    %v4381 = vrsqrt.pop %v4370
    %v4382 = vmul.f32 %v4381, %v4370
    %v4383 = vmul.f32 %v4382, %v4381
    %v4384 = vmul.f32 0.5, %v4383
    %v4385 = vsub.f32 1.5, %v4384
    %v4386 = vmul.f32 %v4381, %v4385
    %vm4387 = vweird.f32 %v4370
    %vm4388 = vweird.f32 %v4381
    %vm4389 = vmor %vm4387, %vm4388
    %v4390 = vsel %vm4389, %v4381, %v4386
    %v4391 = vmul.f32 %v4367, %v4380
    %v4392 = vmul.f32 %v4368, %v4390
    %v4393 = vpack.c.bf16 %v4392, %v4391
    %s4394 = scalar_lea.vmem %s14, 16
    %v4395 = vld [vmem:[%s4394] sm:$0xf]
    %v4396 = vld [vmem:[%s4394 + $0x4] sm:$0xf]
    %v4397 = vld [vmem:[%s4394 + $0x8] sm:$0xf]
    %v4398 = vld [vmem:[%s4394 + $0xc] sm:$0xf]
    %s4399 = scalar_lea.vmem %s15, 1
    %v4400 = vld [vmem:[%s4399] sm:$0x1]
    %v4402 = vperm.slane %v4400, 0
    %v4408 = vunpack.c.l.b16 %v4395
    %v4409 = vunpack.c.l.b16 %v4396
    %v4410 = vunpack.c.l.b16 %v4397
    %v4411 = vunpack.c.l.b16 %v4398
    %v4412 = vpack.c.b16 %v4409, %v4408
    %v4413 = vpack.c.b16 %v4411, %v4410
    %v4417 = vsel %vm89, %v4393, 0
    %4419 = vmatpush.bf16.msra.mxu0 0
    %4420 = vmatpush.bf16.msra.mxu0 0
    %4421 = vmatpush.bf16.msra.mxu0 0
    %4422 = vmatpush.bf16.msra.mxu0 0
    %4423 = vmatpush.bf16.msra.mxu0 0
    %4424 = vmatpush.bf16.msra.mxu0 0
    %4425 = vmatpush.bf16.msra.mxu0 %v4413
    %4426 = vmatpush.bf16.msra.mxu0 %v4412
    %4427 = vmatmul.bf16.gmra.mxu0 %v4417
    %v4428 = vpop.f32.mrf.mxu0
    %v4429 = vadd.f32 %v4402, %v4428
    %v4430 = vpop.f32.mrf.mxu0
    %v4431 = vadd.f32 %v4402, %v4430
    %4432 = vdwg.mxu0
    %s4433 = scalar_lea.vmem %s16, 16
    %v4434 = vld [vmem:[%s4433] sm:$0xf]
    %v4435 = vld [vmem:[%s4433 + $0x4] sm:$0xf]
    %v4436 = vld [vmem:[%s4433 + $0x8] sm:$0xf]
    %v4437 = vld [vmem:[%s4433 + $0xc] sm:$0xf]
    %s4438 = scalar_lea.vmem %s17, 1
    %v4439 = vld [vmem:[%s4438] sm:$0x1]
    %v4441 = vperm.slane %v4439, 0
    %v4447 = vunpack.c.l.b16 %v4434
    %v4448 = vunpack.c.l.b16 %v4435
    %v4449 = vunpack.c.l.b16 %v4436
    %v4450 = vunpack.c.l.b16 %v4437
    %v4451 = vpack.c.b16 %v4448, %v4447
    %v4452 = vpack.c.b16 %v4450, %v4449
    %4455 = vmatpush.bf16.msra.mxu0 0
    %4456 = vmatpush.bf16.msra.mxu0 0
    %4457 = vmatpush.bf16.msra.mxu0 0
    %4458 = vmatpush.bf16.msra.mxu0 0
    %4459 = vmatpush.bf16.msra.mxu0 0
    %4460 = vmatpush.bf16.msra.mxu0 0
    %4461 = vmatpush.bf16.msra.mxu0 %v4452
    %4462 = vmatpush.bf16.msra.mxu0 %v4451
    %4463 = vmatmul.bf16.gmra.mxu0 %v3018
    %v4464 = vpop.f32.mrf.mxu0
    %v4465 = vadd.f32 %v4441, %v4464
    %v4466 = vpop.f32.mrf.mxu0
    %v4467 = vadd.f32 %v4441, %v4466
    %4468 = vmatmul.bf16.gmra.mxu0 %v3021
    %v4469 = vpop.f32.mrf.mxu0
    %v4470 = vadd.f32 %v4441, %v4469
    %v4471 = vpop.f32.mrf.mxu0
    %v4472 = vadd.f32 %v4441, %v4471
    %4473 = vdwg.mxu0
    %s4474 = scalar_lea.vmem %s18, 16
    %v4475 = vld [vmem:[%s4474] sm:$0xf]
    %v4476 = vld [vmem:[%s4474 + $0x4] sm:$0xf]
    %v4477 = vld [vmem:[%s4474 + $0x8] sm:$0xf]
    %v4478 = vld [vmem:[%s4474 + $0xc] sm:$0xf]
    %s4479 = scalar_lea.vmem %s19, 1
    %v4480 = vld [vmem:[%s4479] sm:$0x1]
    %v4481 = vpack.c.bf16 %v4429, %v4429
    %v4482 = vpack.c.bf16 %v4431, %v4431
    %v4483 = vpack.c.bf16 %v4465, %v4465
    %v4484 = vpack.c.bf16 %v4467, %v4467
    %v4485 = vpack.c.bf16 %v4470, %v4470
    %v4486 = vpack.c.bf16 %v4472, %v4472
    %v4489 = vunpack.c.l.b16 %v4483
    %v4490 = vunpack.c.l.b16 %v4484
    %v4491 = vpack.c.b16 %v4490, %v4489
    %v4493 = vsel %vm256, %v4481, 0
    %v4496 = vsel %vm256, %v4491, 0
    %4498 = vmatpush.bf16.xpose.msra.mxu0 0
    %4499 = vmatpush.bf16.xpose.msra.mxu0 0
    %4500 = vmatpush.bf16.xpose.msra.mxu0 0
    %4501 = vmatpush.bf16.xpose.msra.mxu0 0
    %4502 = vmatpush.bf16.xpose.msra.mxu0 0
    %4503 = vmatpush.bf16.xpose.msra.mxu0 0
    %4504 = vmatpush.bf16.xpose.msra.mxu0 0
    %4505 = vmatpush.bf16.xpose.msra.mxu0 %v4496
    %4506 = vmatmul.bf16.gmra.mxu0 %v4493
    %v4507 = vpop.f32.mrf.mxu0
    %v4508 = vadd.f32 0.0, %v4507
    %v4509 = vpop.f32.mrf.mxu0
    %4510 = vdwg.mxu0
    %v4513 = vunpack.c.l.b16 %v4485
    %v4514 = vunpack.c.l.b16 %v4486
    %v4515 = vpack.c.b16 %v4514, %v4513
    %v4517 = vsel %vm256, %v4482, 0
    %v4520 = vsel %vm256, %v4515, 0
    %4522 = vmatpush.bf16.xpose.msra.mxu0 0
    %4523 = vmatpush.bf16.xpose.msra.mxu0 0
    %4524 = vmatpush.bf16.xpose.msra.mxu0 0
    %4525 = vmatpush.bf16.xpose.msra.mxu0 0
    %4526 = vmatpush.bf16.xpose.msra.mxu0 0
    %4527 = vmatpush.bf16.xpose.msra.mxu0 0
    %4528 = vmatpush.bf16.xpose.msra.mxu0 0
    %4529 = vmatpush.bf16.xpose.msra.mxu0 %v4520
    %4530 = vmatmul.bf16.gmra.mxu0 %v4517
    %v4531 = vpop.f32.mrf.mxu0
    %v4532 = vadd.f32 0.0, %v4531
    %v4533 = vpop.f32.mrf.mxu0
    %4534 = vdwg.mxu0
    %v4535 = vsel %vm304, %v4508, -inf
    %4536 = vmax.xlane.f32.xlu0 %v4535
    %v4537 = vpop.xlane.xlu0 %4536
    %v4538 = vsel %vm304, %v4532, -inf
    %4539 = vmax.xlane.f32.xlu0 %v4538
    %v4540 = vpop.xlane.xlu0 %4539
    %v4541 = vsub.f32 %v4508, %v4537
    %v4542 = vsub.f32 %v4532, %v4540
    %v4543 = vmul.f32 %v4541, 1.442695
    %v4544 = vpow.pop %v4543
    %v4545 = vmul.f32 %v4542, 1.442695
    %v4546 = vpow.pop %v4545
    %v4547 = vsel %vm304, %v4544, 0.0
    %4548 = vadd.xlane.f32.xlu0 %v4547
    %v4549 = vpop.xlane.xlu0 %4548
    %v4550 = vsel %vm304, %v4546, 0.0
    %4551 = vadd.xlane.f32.xlu0 %v4550
    %v4552 = vpop.xlane.xlu0 %4551
    %v4553 = vrcp.pop %v4549
    %v4554 = vrcp.pop %v4552
    %v4555 = vmul.f32 %v4544, %v4553
    %v4556 = vmul.f32 %v4546, %v4554
    %v4557 = vpack.c.bf16 %v4555, %v4555
    %v4558 = vpack.c.bf16 %v4556, %v4556
    %4559 = vrot.lane.b32.xlu0 %v4491, 96
    %v4560 = vpop.permute.xlu0 %4559
    %v4563 = vsel %vm304, %v4557, 0
    %4565 = vmatpush.bf16.msra.mxu0 0
    %4566 = vmatpush.bf16.msra.mxu0 0
    %4567 = vmatpush.bf16.msra.mxu0 0
    %4568 = vmatpush.bf16.msra.mxu0 0
    %4569 = vmatpush.bf16.msra.mxu0 0
    %4570 = vmatpush.bf16.msra.mxu0 0
    %4571 = vmatpush.bf16.msra.mxu0 0
    %4572 = vmatpush.bf16.msra.mxu0 %v4560
    %4573 = vmatmul.bf16.gmra.mxu0 %v4563
    %v4574 = vpop.f32.mrf.mxu0
    %v4575 = vadd.f32 0.0, %v4574
    %v4576 = vpop.f32.mrf.mxu0
    %4577 = vdwg.mxu0
    %4578 = vrot.lane.b32.xlu0 %v4515, 96
    %v4579 = vpop.permute.xlu0 %4578
    %v4582 = vsel %vm304, %v4558, 0
    %4584 = vmatpush.bf16.msra.mxu0 0
    %4585 = vmatpush.bf16.msra.mxu0 0
    %4586 = vmatpush.bf16.msra.mxu0 0
    %4587 = vmatpush.bf16.msra.mxu0 0
    %4588 = vmatpush.bf16.msra.mxu0 0
    %4589 = vmatpush.bf16.msra.mxu0 0
    %4590 = vmatpush.bf16.msra.mxu0 0
    %4591 = vmatpush.bf16.msra.mxu0 %v4579
    %4592 = vmatmul.bf16.gmra.mxu0 %v4582
    %v4593 = vpop.f32.mrf.mxu0
    %v4594 = vadd.f32 0.0, %v4593
    %v4595 = vpop.f32.mrf.mxu0
    %4596 = vdwg.mxu0
    %v4598 = vunpack.c.l.b16 %v4481
    %v4599 = vpack.c.b16 %v4598, %v4598
    %4600 = vrot.lane.b32.xlu0 %v4599, 120
    %v4601 = vpop.permute.xlu0 %4600
    %4602 = vrot.lane.b32.xlu0 %v4491, 120
    %v4603 = vpop.permute.xlu0 %4602
    %v4605 = vsel %vm256, %v4601, 0
    %v4608 = vsel %vm256, %v4603, 0
    %4610 = vmatpush.bf16.xpose.msra.mxu0 0
    %4611 = vmatpush.bf16.xpose.msra.mxu0 0
    %4612 = vmatpush.bf16.xpose.msra.mxu0 0
    %4613 = vmatpush.bf16.xpose.msra.mxu0 0
    %4614 = vmatpush.bf16.xpose.msra.mxu0 0
    %4615 = vmatpush.bf16.xpose.msra.mxu0 0
    %4616 = vmatpush.bf16.xpose.msra.mxu0 0
    %4617 = vmatpush.bf16.xpose.msra.mxu0 %v4608
    %4618 = vmatmul.bf16.gmra.mxu0 %v4605
    %v4619 = vpop.f32.mrf.mxu0
    %v4620 = vadd.f32 0.0, %v4619
    %v4621 = vpop.f32.mrf.mxu0
    %4622 = vdwg.mxu0
    %v4624 = vunpack.c.l.b16 %v4482
    %v4625 = vpack.c.b16 %v4624, %v4624
    %4626 = vrot.lane.b32.xlu0 %v4625, 120
    %v4627 = vpop.permute.xlu0 %4626
    %4628 = vrot.lane.b32.xlu0 %v4515, 120
    %v4629 = vpop.permute.xlu0 %4628
    %v4631 = vsel %vm256, %v4627, 0
    %v4634 = vsel %vm256, %v4629, 0
    %4636 = vmatpush.bf16.xpose.msra.mxu0 0
    %4637 = vmatpush.bf16.xpose.msra.mxu0 0
    %4638 = vmatpush.bf16.xpose.msra.mxu0 0
    %4639 = vmatpush.bf16.xpose.msra.mxu0 0
    %4640 = vmatpush.bf16.xpose.msra.mxu0 0
    %4641 = vmatpush.bf16.xpose.msra.mxu0 0
    %4642 = vmatpush.bf16.xpose.msra.mxu0 0
    %4643 = vmatpush.bf16.xpose.msra.mxu0 %v4634
    %4644 = vmatmul.bf16.gmra.mxu0 %v4631
    %v4645 = vpop.f32.mrf.mxu0
    %v4646 = vadd.f32 0.0, %v4645
    %v4647 = vpop.f32.mrf.mxu0
    %4648 = vdwg.mxu0
    %v4649 = vsel %vm304, %v4620, -inf
    %4650 = vmax.xlane.f32.xlu0 %v4649
    %v4651 = vpop.xlane.xlu0 %4650
    %v4652 = vsel %vm304, %v4646, -inf
    %4653 = vmax.xlane.f32.xlu0 %v4652
    %v4654 = vpop.xlane.xlu0 %4653
    %v4655 = vsub.f32 %v4620, %v4651
    %v4656 = vsub.f32 %v4646, %v4654
    %v4657 = vmul.f32 %v4655, 1.442695
    %v4658 = vpow.pop %v4657
    %v4659 = vmul.f32 %v4656, 1.442695
    %v4660 = vpow.pop %v4659
    %v4661 = vsel %vm304, %v4658, 0.0
    %4662 = vadd.xlane.f32.xlu0 %v4661
    %v4663 = vpop.xlane.xlu0 %4662
    %v4664 = vsel %vm304, %v4660, 0.0
    %4665 = vadd.xlane.f32.xlu0 %v4664
    %v4666 = vpop.xlane.xlu0 %4665
    %v4667 = vrcp.pop %v4663
    %v4668 = vrcp.pop %v4666
    %v4669 = vmul.f32 %v4658, %v4667
    %v4670 = vmul.f32 %v4660, %v4668
    %v4671 = vpack.c.bf16 %v4669, %v4669
    %v4672 = vpack.c.bf16 %v4670, %v4670
    %4673 = vrot.lane.b32.xlu0 %v4491, 88
    %v4674 = vpop.permute.xlu0 %4673
    %v4677 = vsel %vm304, %v4671, 0
    %4679 = vmatpush.bf16.msra.mxu0 0
    %4680 = vmatpush.bf16.msra.mxu0 0
    %4681 = vmatpush.bf16.msra.mxu0 0
    %4682 = vmatpush.bf16.msra.mxu0 0
    %4683 = vmatpush.bf16.msra.mxu0 0
    %4684 = vmatpush.bf16.msra.mxu0 0
    %4685 = vmatpush.bf16.msra.mxu0 0
    %4686 = vmatpush.bf16.msra.mxu0 %v4674
    %4687 = vmatmul.bf16.gmra.mxu0 %v4677
    %v4688 = vpop.f32.mrf.mxu0
    %v4689 = vadd.f32 0.0, %v4688
    %v4690 = vpop.f32.mrf.mxu0
    %4691 = vdwg.mxu0
    %4692 = vrot.lane.b32.xlu0 %v4515, 88
    %v4693 = vpop.permute.xlu0 %4692
    %v4696 = vsel %vm304, %v4672, 0
    %4698 = vmatpush.bf16.msra.mxu0 0
    %4699 = vmatpush.bf16.msra.mxu0 0
    %4700 = vmatpush.bf16.msra.mxu0 0
    %4701 = vmatpush.bf16.msra.mxu0 0
    %4702 = vmatpush.bf16.msra.mxu0 0
    %4703 = vmatpush.bf16.msra.mxu0 0
    %4704 = vmatpush.bf16.msra.mxu0 0
    %4705 = vmatpush.bf16.msra.mxu0 %v4693
    %4706 = vmatmul.bf16.gmra.mxu0 %v4696
    %v4707 = vpop.f32.mrf.mxu0
    %v4708 = vadd.f32 0.0, %v4707
    %v4709 = vpop.f32.mrf.mxu0
    %4710 = vdwg.mxu0
    %4711 = vrot.lane.b32.xlu0 %v4599, 112
    %v4712 = vpop.permute.xlu0 %4711
    %4713 = vrot.lane.b32.xlu0 %v4491, 112
    %v4714 = vpop.permute.xlu0 %4713
    %v4716 = vsel %vm256, %v4712, 0
    %v4719 = vsel %vm256, %v4714, 0
    %4721 = vmatpush.bf16.xpose.msra.mxu0 0
    %4722 = vmatpush.bf16.xpose.msra.mxu0 0
    %4723 = vmatpush.bf16.xpose.msra.mxu0 0
    %4724 = vmatpush.bf16.xpose.msra.mxu0 0
    %4725 = vmatpush.bf16.xpose.msra.mxu0 0
    %4726 = vmatpush.bf16.xpose.msra.mxu0 0
    %4727 = vmatpush.bf16.xpose.msra.mxu0 0
    %4728 = vmatpush.bf16.xpose.msra.mxu0 %v4719
    %4729 = vmatmul.bf16.gmra.mxu0 %v4716
    %v4730 = vpop.f32.mrf.mxu0
    %v4731 = vadd.f32 0.0, %v4730
    %v4732 = vpop.f32.mrf.mxu0
    %4733 = vdwg.mxu0
    %4734 = vrot.lane.b32.xlu0 %v4625, 112
    %v4735 = vpop.permute.xlu0 %4734
    %4736 = vrot.lane.b32.xlu0 %v4515, 112
    %v4737 = vpop.permute.xlu0 %4736
    %v4739 = vsel %vm256, %v4735, 0
    %v4742 = vsel %vm256, %v4737, 0
    %4744 = vmatpush.bf16.xpose.msra.mxu0 0
    %4745 = vmatpush.bf16.xpose.msra.mxu0 0
    %4746 = vmatpush.bf16.xpose.msra.mxu0 0
    %4747 = vmatpush.bf16.xpose.msra.mxu0 0
    %4748 = vmatpush.bf16.xpose.msra.mxu0 0
    %4749 = vmatpush.bf16.xpose.msra.mxu0 0
    %4750 = vmatpush.bf16.xpose.msra.mxu0 0
    %4751 = vmatpush.bf16.xpose.msra.mxu0 %v4742
    %4752 = vmatmul.bf16.gmra.mxu0 %v4739
    %v4753 = vpop.f32.mrf.mxu0
    %v4754 = vadd.f32 0.0, %v4753
    %v4755 = vpop.f32.mrf.mxu0
    %4756 = vdwg.mxu0
    %v4757 = vsel %vm304, %v4731, -inf
    %4758 = vmax.xlane.f32.xlu0 %v4757
    %v4759 = vpop.xlane.xlu0 %4758
    %v4760 = vsel %vm304, %v4754, -inf
    %4761 = vmax.xlane.f32.xlu0 %v4760
    %v4762 = vpop.xlane.xlu0 %4761
    %v4763 = vsub.f32 %v4731, %v4759
    %v4764 = vsub.f32 %v4754, %v4762
    %v4765 = vmul.f32 %v4763, 1.442695
    %v4766 = vpow.pop %v4765
    %v4767 = vmul.f32 %v4764, 1.442695
    %v4768 = vpow.pop %v4767
    %v4769 = vsel %vm304, %v4766, 0.0
    %4770 = vadd.xlane.f32.xlu0 %v4769
    %v4771 = vpop.xlane.xlu0 %4770
    %v4772 = vsel %vm304, %v4768, 0.0
    %4773 = vadd.xlane.f32.xlu0 %v4772
    %v4774 = vpop.xlane.xlu0 %4773
    %v4775 = vrcp.pop %v4771
    %v4776 = vrcp.pop %v4774
    %v4777 = vmul.f32 %v4766, %v4775
    %v4778 = vmul.f32 %v4768, %v4776
    %v4779 = vpack.c.bf16 %v4777, %v4777
    %v4780 = vpack.c.bf16 %v4778, %v4778
    %4781 = vrot.lane.b32.xlu0 %v4491, 80
    %v4782 = vpop.permute.xlu0 %4781
    %v4785 = vsel %vm304, %v4779, 0
    %4787 = vmatpush.bf16.msra.mxu0 0
    %4788 = vmatpush.bf16.msra.mxu0 0
    %4789 = vmatpush.bf16.msra.mxu0 0
    %4790 = vmatpush.bf16.msra.mxu0 0
    %4791 = vmatpush.bf16.msra.mxu0 0
    %4792 = vmatpush.bf16.msra.mxu0 0
    %4793 = vmatpush.bf16.msra.mxu0 0
    %4794 = vmatpush.bf16.msra.mxu0 %v4782
    %4795 = vmatmul.bf16.gmra.mxu0 %v4785
    %v4796 = vpop.f32.mrf.mxu0
    %v4797 = vadd.f32 0.0, %v4796
    %v4798 = vpop.f32.mrf.mxu0
    %4799 = vdwg.mxu0
    %4800 = vrot.lane.b32.xlu0 %v4515, 80
    %v4801 = vpop.permute.xlu0 %4800
    %v4804 = vsel %vm304, %v4780, 0
    %4806 = vmatpush.bf16.msra.mxu0 0
    %4807 = vmatpush.bf16.msra.mxu0 0
    %4808 = vmatpush.bf16.msra.mxu0 0
    %4809 = vmatpush.bf16.msra.mxu0 0
    %4810 = vmatpush.bf16.msra.mxu0 0
    %4811 = vmatpush.bf16.msra.mxu0 0
    %4812 = vmatpush.bf16.msra.mxu0 0
    %4813 = vmatpush.bf16.msra.mxu0 %v4801
    %4814 = vmatmul.bf16.gmra.mxu0 %v4804
    %v4815 = vpop.f32.mrf.mxu0
    %v4816 = vadd.f32 0.0, %v4815
    %v4817 = vpop.f32.mrf.mxu0
    %4818 = vdwg.mxu0
    %4819 = vrot.lane.b32.xlu0 %v4599, 104
    %v4820 = vpop.permute.xlu0 %4819
    %4821 = vrot.lane.b32.xlu0 %v4491, 104
    %v4822 = vpop.permute.xlu0 %4821
    %v4824 = vsel %vm256, %v4820, 0
    %v4827 = vsel %vm256, %v4822, 0
    %4829 = vmatpush.bf16.xpose.msra.mxu0 0
    %4830 = vmatpush.bf16.xpose.msra.mxu0 0
    %4831 = vmatpush.bf16.xpose.msra.mxu0 0
    %4832 = vmatpush.bf16.xpose.msra.mxu0 0
    %4833 = vmatpush.bf16.xpose.msra.mxu0 0
    %4834 = vmatpush.bf16.xpose.msra.mxu0 0
    %4835 = vmatpush.bf16.xpose.msra.mxu0 0
    %4836 = vmatpush.bf16.xpose.msra.mxu0 %v4827
    %4837 = vmatmul.bf16.gmra.mxu0 %v4824
    %v4838 = vpop.f32.mrf.mxu0
    %v4839 = vadd.f32 0.0, %v4838
    %v4840 = vpop.f32.mrf.mxu0
    %4841 = vdwg.mxu0
    %4842 = vrot.lane.b32.xlu0 %v4625, 104
    %v4843 = vpop.permute.xlu0 %4842
    %4844 = vrot.lane.b32.xlu0 %v4515, 104
    %v4845 = vpop.permute.xlu0 %4844
    %v4847 = vsel %vm256, %v4843, 0
    %v4850 = vsel %vm256, %v4845, 0
    %4852 = vmatpush.bf16.xpose.msra.mxu0 0
    %4853 = vmatpush.bf16.xpose.msra.mxu0 0
    %4854 = vmatpush.bf16.xpose.msra.mxu0 0
    %4855 = vmatpush.bf16.xpose.msra.mxu0 0
    %4856 = vmatpush.bf16.xpose.msra.mxu0 0
    %4857 = vmatpush.bf16.xpose.msra.mxu0 0
    %4858 = vmatpush.bf16.xpose.msra.mxu0 0
    %4859 = vmatpush.bf16.xpose.msra.mxu0 %v4850
    %4860 = vmatmul.bf16.gmra.mxu0 %v4847
    %v4861 = vpop.f32.mrf.mxu0
    %v4862 = vadd.f32 0.0, %v4861
    %v4863 = vpop.f32.mrf.mxu0
    %4864 = vdwg.mxu0
    %v4865 = vsel %vm304, %v4839, -inf
    %4866 = vmax.xlane.f32.xlu0 %v4865
    %v4867 = vpop.xlane.xlu0 %4866
    %v4868 = vsel %vm304, %v4862, -inf
    %4869 = vmax.xlane.f32.xlu0 %v4868
    %v4870 = vpop.xlane.xlu0 %4869
    %v4871 = vsub.f32 %v4839, %v4867
    %v4872 = vsub.f32 %v4862, %v4870
    %v4873 = vmul.f32 %v4871, 1.442695
    %v4874 = vpow.pop %v4873
    %v4875 = vmul.f32 %v4872, 1.442695
    %v4876 = vpow.pop %v4875
    %v4877 = vsel %vm304, %v4874, 0.0
    %4878 = vadd.xlane.f32.xlu0 %v4877
    %v4879 = vpop.xlane.xlu0 %4878
    %v4880 = vsel %vm304, %v4876, 0.0
    %4881 = vadd.xlane.f32.xlu0 %v4880
    %v4882 = vpop.xlane.xlu0 %4881
    %v4883 = vrcp.pop %v4879
    %v4884 = vrcp.pop %v4882
    %v4885 = vmul.f32 %v4874, %v4883
    %v4886 = vmul.f32 %v4876, %v4884
    %v4887 = vpack.c.bf16 %v4885, %v4885
    %v4888 = vpack.c.bf16 %v4886, %v4886
    %4889 = vrot.lane.b32.xlu0 %v4491, 72
    %v4890 = vpop.permute.xlu0 %4889
    %v4893 = vsel %vm304, %v4887, 0
    %4895 = vmatpush.bf16.msra.mxu0 0
    %4896 = vmatpush.bf16.msra.mxu0 0
    %4897 = vmatpush.bf16.msra.mxu0 0
    %4898 = vmatpush.bf16.msra.mxu0 0
    %4899 = vmatpush.bf16.msra.mxu0 0
    %4900 = vmatpush.bf16.msra.mxu0 0
    %4901 = vmatpush.bf16.msra.mxu0 0
    %4902 = vmatpush.bf16.msra.mxu0 %v4890
    %4903 = vmatmul.bf16.gmra.mxu0 %v4893
    %v4904 = vpop.f32.mrf.mxu0
    %v4905 = vadd.f32 0.0, %v4904
    %v4906 = vpop.f32.mrf.mxu0
    %4907 = vdwg.mxu0
    %4908 = vrot.lane.b32.xlu0 %v4515, 72
    %v4909 = vpop.permute.xlu0 %4908
    %v4912 = vsel %vm304, %v4888, 0
    %4914 = vmatpush.bf16.msra.mxu0 0
    %4915 = vmatpush.bf16.msra.mxu0 0
    %4916 = vmatpush.bf16.msra.mxu0 0
    %4917 = vmatpush.bf16.msra.mxu0 0
    %4918 = vmatpush.bf16.msra.mxu0 0
    %4919 = vmatpush.bf16.msra.mxu0 0
    %4920 = vmatpush.bf16.msra.mxu0 0
    %4921 = vmatpush.bf16.msra.mxu0 %v4909
    %4922 = vmatmul.bf16.gmra.mxu0 %v4912
    %v4923 = vpop.f32.mrf.mxu0
    %v4924 = vadd.f32 0.0, %v4923
    %v4925 = vpop.f32.mrf.mxu0
    %4926 = vdwg.mxu0
    %4929 = vrot.lane.b32.xlu0 %v4689, 8
    %v4930 = vpop.permute.xlu0 %4929
    %4931 = vrot.lane.b32.xlu0 %v4708, 8
    %v4932 = vpop.permute.xlu0 %4931
    %4937 = vrot.lane.b32.xlu0 %v4797, 16
    %v4938 = vpop.permute.xlu0 %4937
    %4939 = vrot.lane.b32.xlu0 %v4816, 16
    %v4940 = vpop.permute.xlu0 %4939
    %4945 = vrot.lane.b32.xlu0 %v4905, 24
    %v4946 = vpop.permute.xlu0 %4945
    %4947 = vrot.lane.b32.xlu0 %v4924, 24
    %v4948 = vpop.permute.xlu0 %4947
    %v4951 = vsel %vm256, %v4575, %v4930
    %v4952 = vsel %vm256, %v4594, %v4932
    %v4953 = vsel %vm304, %v4951, %v4938
    %v4954 = vsel %vm304, %v4952, %v4940
    %v4955 = vsel %vm897, %v4953, %v4946
    %v4956 = vsel %vm897, %v4954, %v4948
    %v4957 = vpack.c.bf16 %v4956, %v4955
    %v4959 = vperm.slane %v4480, 0
    %v4965 = vunpack.c.l.b16 %v4475
    %v4966 = vunpack.c.l.b16 %v4476
    %v4967 = vunpack.c.l.b16 %v4477
    %v4968 = vunpack.c.l.b16 %v4478
    %v4969 = vpack.c.b16 %v4966, %v4965
    %v4970 = vpack.c.b16 %v4968, %v4967
    %v4974 = vsel %vm89, %v4957, 0
    %4976 = vmatpush.bf16.msra.mxu0 0
    %4977 = vmatpush.bf16.msra.mxu0 0
    %4978 = vmatpush.bf16.msra.mxu0 0
    %4979 = vmatpush.bf16.msra.mxu0 0
    %4980 = vmatpush.bf16.msra.mxu0 0
    %4981 = vmatpush.bf16.msra.mxu0 0
    %4982 = vmatpush.bf16.msra.mxu0 %v4970
    %4983 = vmatpush.bf16.msra.mxu0 %v4969
    %4984 = vmatmul.bf16.gmra.mxu0 %v4974
    %v4985 = vpop.f32.mrf.mxu0
    %v4986 = vadd.f32 %v4959, %v4985
    %v4987 = vpop.f32.mrf.mxu0
    %v4988 = vadd.f32 %v4959, %v4987
    %4989 = vdwg.mxu0
    %v4990 = vadd.f32 %v4343, %v4986
    %v4991 = vadd.f32 %v4344, %v4988
    %v4992 = vsel %vm89, %v4990, 0.0
    %4993 = vadd.xlane.f32.xlu0 %v4992
    %v4994 = vpop.xlane.xlu0 %4993
    %v4995 = vsel %vm89, %v4991, 0.0
    %4996 = vadd.xlane.f32.xlu0 %v4995
    %v4997 = vpop.xlane.xlu0 %4996
    %v4998 = vmul.f32 %v4994, %v108
    %v4999 = vmul.f32 %v4997, %v108
    %v5000 = vmul.f32 %v4990, %v4990
    %v5001 = vmul.f32 %v4991, %v4991
    %v5002 = vsel %vm89, %v5000, 0.0
    %5003 = vadd.xlane.f32.xlu0 %v5002
    %v5004 = vpop.xlane.xlu0 %5003
    %v5005 = vsel %vm89, %v5001, 0.0
    %5006 = vadd.xlane.f32.xlu0 %v5005
    %v5007 = vpop.xlane.xlu0 %5006
    %v5008 = vmul.f32 %v5004, %v108
    %v5009 = vmul.f32 %v5007, %v108
    %v5010 = vmul.f32 %v4998, %v4998
    %v5011 = vmul.f32 %v4999, %v4999
    %v5012 = vsub.f32 %v5008, %v5010
    %v5013 = vsub.f32 %v5009, %v5011
    %v5014 = vsub.f32 %v4990, %v4998
    %v5015 = vsub.f32 %v4991, %v4999
    %v5016 = vadd.f32 %v5012, 1e-05
    %v5017 = vadd.f32 %v5013, 1e-05
    %v5018 = vrsqrt.pop %v5016
    %v5019 = vmul.f32 %v5018, %v5016
    %v5020 = vmul.f32 %v5019, %v5018
    %v5021 = vmul.f32 0.5, %v5020
    %v5022 = vsub.f32 1.5, %v5021
    %v5023 = vmul.f32 %v5018, %v5022
    %vm5024 = vweird.f32 %v5016
    %vm5025 = vweird.f32 %v5018
    %vm5026 = vmor %vm5024, %vm5025
    %v5027 = vsel %vm5026, %v5018, %v5023
    %v5028 = vrsqrt.pop %v5017
    %v5029 = vmul.f32 %v5028, %v5017
    %v5030 = vmul.f32 %v5029, %v5028
    %v5031 = vmul.f32 0.5, %v5030
    %v5032 = vsub.f32 1.5, %v5031
    %v5033 = vmul.f32 %v5028, %v5032
    %vm5034 = vweird.f32 %v5017
    %vm5035 = vweird.f32 %v5028
    %vm5036 = vmor %vm5034, %vm5035
    %v5037 = vsel %vm5036, %v5028, %v5033
    %v5038 = vmul.f32 %v5014, %v5027
    %v5039 = vmul.f32 %v5015, %v5037
    %v5040 = vpack.c.bf16 %v5039, %v5038
    %s5041 = scalar_lea.vmem %s20, 16
    %v5042 = vld [vmem:[%s5041] sm:$0xf]
    %v5043 = vld [vmem:[%s5041 + $0x4] sm:$0xf]
    %v5044 = vld [vmem:[%s5041 + $0x8] sm:$0xf]
    %v5045 = vld [vmem:[%s5041 + $0xc] sm:$0xf]
    %s5046 = scalar_lea.vmem %s21, 1
    %v5047 = vld [vmem:[%s5046] sm:$0x1]
    %v5049 = vperm.slane %v5047, 0
    %v5055 = vunpack.c.l.b16 %v5042
    %v5056 = vunpack.c.l.b16 %v5043
    %v5057 = vunpack.c.l.b16 %v5044
    %v5058 = vunpack.c.l.b16 %v5045
    %v5059 = vpack.c.b16 %v5056, %v5055
    %v5060 = vpack.c.b16 %v5058, %v5057
    %v5064 = vsel %vm89, %v5040, 0
    %5066 = vmatpush.bf16.msra.mxu0 0
    %5067 = vmatpush.bf16.msra.mxu0 0
    %5068 = vmatpush.bf16.msra.mxu0 0
    %5069 = vmatpush.bf16.msra.mxu0 0
    %5070 = vmatpush.bf16.msra.mxu0 0
    %5071 = vmatpush.bf16.msra.mxu0 0
    %5072 = vmatpush.bf16.msra.mxu0 %v5060
    %5073 = vmatpush.bf16.msra.mxu0 %v5059
    %5074 = vmatmul.bf16.gmra.mxu0 %v5064
    %v5075 = vpop.f32.mrf.mxu0
    %v5076 = vadd.f32 %v5049, %v5075
    %v5077 = vpop.f32.mrf.mxu0
    %v5078 = vadd.f32 %v5049, %v5077
    %5079 = vdwg.mxu0
    %v5080 = vmax.f32 %v5076, 0.0
    %v5081 = vmax.f32 %v5078, 0.0
    %v5082 = vpack.c.bf16 %v5081, %v5080
    %s5083 = scalar_lea.vmem %s22, 64
    %v5084 = vld [vmem:[%s5083] sm:$0xf]
    %v5085 = vld [vmem:[%s5083 + $0x4] sm:$0xf]
    %v5086 = vld [vmem:[%s5083 + $0x8] sm:$0xf]
    %v5087 = vld [vmem:[%s5083 + $0xc] sm:$0xf]
    %v5088 = vld [vmem:[%s5083 + $0x10] sm:$0xf]
    %v5089 = vld [vmem:[%s5083 + $0x14] sm:$0xf]
    %v5090 = vld [vmem:[%s5083 + $0x18] sm:$0xf]
    %v5091 = vld [vmem:[%s5083 + $0x1c] sm:$0xf]
    %v5092 = vld [vmem:[%s5083 + $0x20] sm:$0xf]
    %v5093 = vld [vmem:[%s5083 + $0x24] sm:$0xf]
    %v5094 = vld [vmem:[%s5083 + $0x28] sm:$0xf]
    %v5095 = vld [vmem:[%s5083 + $0x2c] sm:$0xf]
    %v5096 = vld [vmem:[%s5083 + $0x30] sm:$0xf]
    %v5097 = vld [vmem:[%s5083 + $0x34] sm:$0xf]
    %v5098 = vld [vmem:[%s5083 + $0x38] sm:$0xf]
    %v5099 = vld [vmem:[%s5083 + $0x3c] sm:$0xf]
    %v5116 = vunpack.c.l.b16 %v5084
    %v5117 = vunpack.c.l.b16 %v5085
    %v5118 = vunpack.c.l.b16 %v5086
    %v5119 = vunpack.c.l.b16 %v5087
    %v5120 = vunpack.c.l.b16 %v5088
    %v5121 = vunpack.c.l.b16 %v5089
    %v5122 = vunpack.c.l.b16 %v5090
    %v5123 = vunpack.c.l.b16 %v5091
    %v5124 = vunpack.c.l.b16 %v5092
    %v5125 = vunpack.c.l.b16 %v5093
    %v5126 = vunpack.c.l.b16 %v5094
    %v5127 = vunpack.c.l.b16 %v5095
    %v5128 = vunpack.c.l.b16 %v5096
    %v5129 = vunpack.c.l.b16 %v5097
    %v5130 = vunpack.c.l.b16 %v5098
    %v5131 = vunpack.c.l.b16 %v5099
    %v5132 = vpack.c.b16 %v5117, %v5116
    %v5133 = vpack.c.b16 %v5119, %v5118
    %v5134 = vpack.c.b16 %v5121, %v5120
    %v5135 = vpack.c.b16 %v5123, %v5122
    %v5136 = vpack.c.b16 %v5125, %v5124
    %v5137 = vpack.c.b16 %v5127, %v5126
    %v5138 = vpack.c.b16 %v5129, %v5128
    %v5139 = vpack.c.b16 %v5131, %v5130
    %5148 = vmatpush.bf16.msra.mxu0 %v5139
    %5149 = vmatpush.bf16.msra.mxu0 %v5138
    %5150 = vmatpush.bf16.msra.mxu0 %v5137
    %5151 = vmatpush.bf16.msra.mxu0 %v5136
    %5152 = vmatpush.bf16.msra.mxu0 %v5135
    %5153 = vmatpush.bf16.msra.mxu0 %v5134
    %5154 = vmatpush.bf16.msra.mxu0 %v5133
    %5155 = vmatpush.bf16.msra.mxu0 %v5132
    %5156 = vmatmul.bf16.gmra.mxu0 %v5082
    %v5157 = vpop.f32.mrf.mxu0
    %v5158 = vadd.f32 0.0, %v5157
    %v5159 = vpop.f32.mrf.mxu0
    %v5160 = vadd.f32 0.0, %v5159
    %5161 = vdwg.mxu0
    %v5162 = vadd.f32 %v4990, %v5158
    %v5163 = vadd.f32 %v4991, %v5160
    %s5164 = scalar_lea.vmem %s23, 1
    %v5165 = vld [vmem:[%s5164] sm:$0x1]
    %v5167 = vperm.slane %v5165, 0
    %v5169 = vadd.f32 %v5162, %v5167
    %v5170 = vadd.f32 %v5163, %v5167
    %v5171 = vpack.c.bf16 %v5170, %v5169
    %v5172 = vld [vmem:[%s24] sm:$0xf]
    %v5173 = vld [vmem:[%s24 + $0x4] sm:$0xf]
    %v5174 = vld [vmem:[%s24 + $0x8] sm:$0xf]
    %v5175 = vld [vmem:[%s24 + $0xc] sm:$0xf]
    %v5176 = vld [vmem:[%s25] sm:$0x1]
    %v5178 = vperm.slane %v5176, 0
    %v5184 = vunpack.c.l.b16 %v5172
    %v5185 = vunpack.c.l.b16 %v5173
    %v5186 = vunpack.c.l.b16 %v5174
    %v5187 = vunpack.c.l.b16 %v5175
    %v5188 = vpack.c.b16 %v5185, %v5184
    %v5189 = vpack.c.b16 %v5187, %v5186
    %v5193 = vsel %vm89, %v5171, 0
    %5195 = vmatpush.bf16.msra.mxu0 0
    %5196 = vmatpush.bf16.msra.mxu0 0
    %5197 = vmatpush.bf16.msra.mxu0 0
    %5198 = vmatpush.bf16.msra.mxu0 0
    %5199 = vmatpush.bf16.msra.mxu0 0
    %5200 = vmatpush.bf16.msra.mxu0 0
    %5201 = vmatpush.bf16.msra.mxu0 %v5189
    %5202 = vmatpush.bf16.msra.mxu0 %v5188
    %5203 = vmatmul.bf16.gmra.mxu0 %v5193
    %v5204 = vpop.f32.mrf.mxu0
    %v5205 = vadd.f32 %v5178, %v5204
    %v5206 = vpop.f32.mrf.mxu0
    %v5207 = vadd.f32 %v5178, %v5206
    %5208 = vdwg.mxu0
    %5209 = vst [vmem:[#allocation2] sm:$0xff] %v5205
    %5210 = vst [vmem:[#allocation2 + $0x8] sm:$0xff] %v5207
    // Predicated region
    $region106: #{transformer_forward.1} parent=1 // pred_check
      _
    $region107: #{transformer_forward.1} parent=1 // pred_check_branch
      %5212 = sbr.rel (0) target = $region109
    $region108: #{transformer_forward.1} parent=1 // pred_region
      %5214 = vsyncadd [#allocation3], 0
      %s5215 = sshll.u32 [#allocation2], 4
      %s5216 = int_to_ptr.vmem [resolvable:$true] %s5215
      %s5217 = sshll.u32 %s26, 4
      %s5218 = int_to_ptr.hbm [resolvable:$true] %s5217
      %5223 = dma.vmem_to_hbm [thread:$0]  %s5216, 256, %s5218, [#allocation3], 128, 128, 8
    $region109: #{transformer_forward.1} parent=1 // pred_fallthru
      _
    // Predicated region
    $region110: #{transformer_forward.1} parent=1 // pred_check
      _
    $region111: #{transformer_forward.1} parent=1 // pred_check_branch
      %5225 = sbr.rel (0) target = $region113
    $region112: #{transformer_forward.1} parent=1 // pred_region
      %5227 = dma.done [#allocation3], 256
    $region113: #{transformer_forward.1} parent=1 // pred_fallthru
      _
    %5228 = vsyncpa [#allocation3], 1

</llo_original>
